<compile_context>
chip_gen: v5e
topology: v5e:2x2
jax: 0.10.0
libtpu: 0.0.40
codegen_flags: <defaults>
</compile_context>

<pallas_src>
import functools

import jax
import jax.numpy as jnp
import numpy as np
from jax.experimental import pallas as pl
from jax.experimental.pallas import tpu as pltpu

_EPS = 1e-5


# --------------------------------------------------------------------------------------
# Kernel
# --------------------------------------------------------------------------------------
def _res_cbam_kernel(sw_ref, sb_ref,                                   # SMEM scalar prefetch
                     x_ref, w1_ref, b1_ref, w2_ref, b2_ref, wd_ref, bd_ref,
                     w1se_ref, w2se_ref, m1_ref, m2_ref, msa_ref,
                     o_ref, tap_ref,
                     *, n_img, p_out, w_out, cin, cout,
                     c1_planes, c1_shifts, has_downsample, sa_offsets):
    n_lanes = n_img * p_out
    off3 = tuple((dy, dx) for dy in (-1, 0, 1) for dx in (-1, 0, 1))

    def shifted(a, d, n):
        # a[..., j] -> a[..., j + d]; wrapped lanes are always zeroed by the 0/1 edge masks.
        sh = (-d) % n
        return a if sh == 0 else pltpu.roll(a, shift=sh, axis=1)

    # ---------- conv1 (+folded BN1): stack the 9 taps along K, ONE MXU matmul ----------
    for t in range(9):
        src = x_ref[pl.ds(c1_planes[t] * cin, cin), :]                  # (Cin, N) f32
        tap = shifted(src, c1_shifts[t], n_lanes) * m1_ref[pl.ds(t, 1), :]
        tap_ref[pl.ds(t * cin, cin), :] = tap.astype(tap_ref.dtype)
    h1 = jnp.dot(w1_ref[...], tap_ref[pl.ds(0, 9 * cin), :],
                 preferred_element_type=jnp.float32)
    h1 = jnp.maximum(h1 + b1_ref[...], 0.0)                             # (Cout, N) f32

    # ---------- conv2 (stride 1, +folded BN2): same stacked-tap single matmul ----------
    for t, (dy, dx) in enumerate(off3):
        tap = shifted(h1, dy * w_out + dx, n_lanes) * m2_ref[pl.ds(t, 1), :]
        tap_ref[pl.ds(t * cout, cout), :] = tap.astype(tap_ref.dtype)
    acc = jnp.dot(w2_ref[...], tap_ref[pl.ds(0, 9 * cout), :],
                  preferred_element_type=jnp.float32)

    # ---------- residual branch (plane 0 already holds x at the strided positions) -----
    if has_downsample:
        x0 = x_ref[pl.ds(0, cin), :].astype(wd_ref.dtype)
        idn = jnp.dot(wd_ref[...], x0, preferred_element_type=jnp.float32) + bd_ref[...]
    else:
        idn = x_ref[pl.ds(0, cin), :]                                    # exact identity
    s = jnp.maximum(acc + b2_ref[...] + idn, 0.0)                        # (Cout, N) CBAM input

    # ---------- CBAM (cheap VPU/XLU work), per image over aligned lane slices ----------
    w1se = w1se_ref[...]                  # (Cout, Cr)
    w2se = w2se_ref[...]                  # (Cout, Cr)
    inv_p = 1.0 / p_out
    inv_c = 1.0 / cout
    for b in range(n_img):
        lo = b * p_out
        s_i = s[:, lo:lo + p_out]                                        # (Cout, P) f32

        # channel attention: shared 2-layer SE on max- and avg-pool (no tiny MXU matmuls)
        maxp = jnp.max(s_i, axis=1, keepdims=True)                       # (Cout, 1)
        avgp = jnp.sum(s_i, axis=1, keepdims=True) * inv_p
        hse = (jnp.maximum(jnp.sum(w1se * maxp, axis=0, keepdims=True), 0.0)
               + jnp.maximum(jnp.sum(w1se * avgp, axis=0, keepdims=True), 0.0))  # (1, Cr)
        ca = jax.nn.sigmoid(jnp.sum(w2se * hse, axis=1, keepdims=True))          # (Cout, 1)

        # spatial attention: KxK conv over [max_c, mean_c] via rolls + edge masks
        att = s_i * ca
        mx = jnp.max(att, axis=0, keepdims=True)                          # (1, P)
        mn = jnp.sum(att, axis=0, keepdims=True) * inv_c
        sacc = jnp.zeros((1, p_out), jnp.float32)
        for t, (dy, dx) in enumerate(sa_offsets):
            d = dy * w_out + dx
            mk = msa_ref[pl.ds(t, 1), :]
            sacc = sacc + (shifted(mx, d, p_out) * sw_ref[0, t]
                           + shifted(mn, d, p_out) * sw_ref[1, t]) * mk
        sa = jax.nn.sigmoid(sacc + sb_ref[0])                             # (1, P)

        # out = (s*ca)*sa + s == s * (ca*sa + 1)
        o_ref[:, pl.ds(lo, p_out)] = (s_i * (ca * sa + 1.0)).astype(o_ref.dtype)


# --------------------------------------------------------------------------------------
# Wrapper helpers
# --------------------------------------------------------------------------------------
def _fold_bn(w, g, b, m, v):
    """Fold inference-mode BatchNorm into a bias-free conv weight."""
    s = g / jnp.sqrt(v + _EPS)
    return w * s[:, None, None, None], (b - m * s)[:, None]


def _stack_taps(w):
    """(Cout, Cin, 3, 3) -> (Cout, 9*Cin); column block t = ky*3 + kx matches the tap slab."""
    co, ci = w.shape[:2]
    return jnp.transpose(w, (0, 2, 3, 1)).reshape(co, 9 * ci)


def _edge_masks(h, w, offsets):
    """(T, h*w) 0/1 masks: valid iff the (dy, dx)-shifted neighbour is inside the image."""
    idx = np.arange(h * w)
    row, col = idx // w, idx % w
    rows = []
    for dy, dx in offsets:
        ok = (row + dy >= 0) & (row + dy < h) & (col + dx >= 0) & (col + dx < w)
        rows.append(ok.astype(np.float32))
    return jnp.asarray(np.stack(rows, axis=0))


def _pick_tile(batch, plane_rows, cin, cout, p_out, mxu_itemsize, batch_tile):
    """Chip-aware batch tile + scoped VMEM limit."""
    try:
        info = pltpu.get_tpu_info()
        vmem_cap = int(getattr(info, "vmem_capacity_bytes", 64 * 2**20))
    except Exception:
        vmem_cap = 64 * 2**20                              # v7x-safe fallback
    vmem_limit = max(32 * 2**20, min(int(0.75 * vmem_cap), 96 * 2**20))
    if batch_tile is None:
        budget = int(0.40 * vmem_cap)
        per_bt = p_out * (4 * 2 * plane_rows               # input block, f32, double buffered
                          + 4 * 2 * cout                   # output block, f32, double buffered
                          + 4 * 18                         # conv edge masks (single buffered)
                          + mxu_itemsize * 9 * max(cin, cout))   # tap slab scratch
        bt = int(max(1, min(batch, budget // per_bt, 8)))
        if batch >= 4:
            bt = min(bt, batch // 4)                       # >=4 grid steps -> 2 per TC on v7x
    else:
        bt = int(min(batch_tile, batch))
    bt = max(bt, 1)
    while batch % bt:
        bt -= 1
    return bt, vmem_limit


# --------------------------------------------------------------------------------------
# Pallas wrapper for the whole Res_Conv_Block_att forward
# --------------------------------------------------------------------------------------
def res_conv_block_att(x, params, *, stride, batch_tile=None, mxu_dtype=jnp.bfloat16):
    B, cin, H, W = x.shape
    cout = params["conv1_w"].shape[0]
    assert stride in (1, 2), "Res_Conv_Block_att uses stride 1 or 2"
    assert H % stride == 0 and W % stride == 0
    ho, wo = H // stride, W // stride
    p_out = ho * wo
    assert p_out % 128 == 0, "lane-dense layout requires ho*wo to be a multiple of 128"
    has_down = (stride == 2) or (cin != cout)
    mxu_dtype = np.dtype(mxu_dtype)

    # ---- fold eval-mode BN into the convs, stack the 3x3 weights along K = 9*C ----------
    w1f, b1 = _fold_bn(params["conv1_w"], params["bn1_g"], params["bn1_b"],
                       params["bn1_m"], params["bn1_v"])
    w2f, b2 = _fold_bn(params["conv2_w"], params["bn2_g"], params["bn2_b"],
                       params["bn2_m"], params["bn2_v"])
    w1st = _stack_taps(w1f).astype(mxu_dtype)
    w2st = _stack_taps(w2f).astype(mxu_dtype)
    if has_down:
        wdf, bd = _fold_bn(params["down_w"], params["bnd_g"], params["bnd_b"],
                           params["bnd_m"], params["bnd_v"])
        wd = wdf.reshape(cout, cin).astype(mxu_dtype)
    else:                                   # dummies, never read on this code path
        wd = jnp.zeros((cout, cin), mxu_dtype)
        bd = jnp.zeros((cout, 1), jnp.float32)

    # CBAM parameters (VPU path stays f32)
    w1se = params["ca_w1"].T.astype(jnp.float32)            # (Cout, Cr)
    w2se = params["ca_w2"].astype(jnp.float32)              # (Cout, Cr)
    K = params["sa_w"].shape[-1]
    assert K % 2 == 1, "spatial-attention kernel must be odd"
    r = K // 2
    sw = params["sa_w"].reshape(2, K * K).astype(jnp.float32)
    sb = params["sa_b"].astype(jnp.float32)

    off3 = [(dy, dx) for dy in (-1, 0, 1) for dx in (-1, 0, 1)]
    offk = [(dy, dx) for dy in range(-r, r + 1) for dx in range(-r, r + 1)]

    # ---- conv1 taps expressed as (source plane, roll) at OUTPUT resolution --------------
    if stride == 1:
        n_planes = 1
        x_planes = jnp.transpose(x, (1, 0, 2, 3)).reshape(cin, B * p_out)
        c1_planes = tuple(0 for _ in off3)
        c1_offs = off3
    else:
        # stride-2 polyphase decomposition: plane (p, q)[c, i, j] = x[c, 2i+p, 2j+q]
        n_planes = 4
        xr = x.reshape(B, cin, ho, 2, wo, 2)
        x_planes = jnp.transpose(xr, (3, 5, 1, 0, 2, 4)).reshape(n_planes * cin, B * p_out)
        c1_planes, c1_offs = [], []
        for dy, dx in off3:
            p, ry = (1, -1) if dy == -1 else ((0, 0) if dy == 0 else (1, 0))
            q, rx = (1, -1) if dx == -1 else ((0, 0) if dx == 0 else (1, 0))
            c1_planes.append(p * 2 + q)
            c1_offs.append((ry, rx))
        c1_planes = tuple(c1_planes)
    c1_shifts = tuple(ry * wo + rx for (ry, rx) in c1_offs)

    # ---- batch tile / VMEM budget --------------------------------------------------------
    bt, vmem_limit = _pick_tile(B, n_planes * cin, cin, cout, p_out,
                                mxu_dtype.itemsize, batch_tile)
    grid = (B // bt,)
    n_lanes = bt * p_out

    # 0/1 validity masks; conv masks tiled per image (the conv taps run tile-wide)
    m1 = jnp.tile(_edge_masks(ho, wo, c1_offs), (1, bt))
    m2 = jnp.tile(_edge_masks(ho, wo, off3), (1, bt))
    msa = _edge_masks(ho, wo, offk)                          # spatial attention runs per image

    # advisory cost estimate
    cr = w1se.shape[1]
    macs = p_out * (9 * cout * cin + 9 * cout * cout) + 2 * K * K * p_out + 4 * cout * cr
    if has_down:
        macs += p_out * cout * cin
    flops = int(2 * B * macs)
    const_bytes = sum(int(a.size) * a.dtype.itemsize
                      for a in (w1st, b1, w2st, b2, wd, bd, w1se, w2se, m1, m2, msa, sw, sb))
    bytes_accessed = int(4 * (int(x_planes.size) + B * cout * p_out) + const_bytes)
    transcendentals = int(B * (cout + p_out))

    kern = functools.partial(
        _res_cbam_kernel, n_img=bt, p_out=p_out, w_out=wo, cin=cin, cout=cout,
        c1_planes=c1_planes, c1_shifts=c1_shifts, has_downsample=has_down,
        sa_offsets=tuple(offk))

    def _call(single_buffer_consts):
        pm = pl.Buffered(1) if single_buffer_consts else None

        def const_spec(a):
            return pl.BlockSpec(a.shape, lambda b, *_: (0,) * a.ndim, pipeline_mode=pm)

        return pl.pallas_call(
            kern,
            out_shape=jax.ShapeDtypeStruct((cout, B * p_out), x.dtype),
            grid_spec=pltpu.PrefetchScalarGridSpec(
                num_scalar_prefetch=2,                 # spatial-attention weights/bias -> SMEM
                grid=grid,
                in_specs=[
                    pl.BlockSpec((n_planes * cin, n_lanes), lambda b, *_: (0, b)),
                    const_spec(w1st), const_spec(b1), const_spec(w2st), const_spec(b2),
                    const_spec(wd), const_spec(bd), const_spec(w1se), const_spec(w2se),
                    const_spec(m1), const_spec(m2), const_spec(msa),
                ],
                out_specs=pl.BlockSpec((cout, n_lanes), lambda b, *_: (0, b)),
                scratch_shapes=[pltpu.VMEM((9 * max(cin, cout), n_lanes), mxu_dtype)]),
            compiler_params=pltpu.CompilerParams(
                dimension_semantics=("parallel",),     # batch tiles are independent
                vmem_limit_bytes=vmem_limit),
            cost_estimate=pl.CostEstimate(flops=flops, transcendentals=transcendentals,
                                          bytes_accessed=bytes_accessed),
        )(sw, sb, x_planes, w1st, b1, w2st, b2, wd, bd, w1se, w2se, m1, m2, msa)

    try:
        out_flat = _call(True)            # constants single-buffered (pl.Buffered(1))
    except Exception:
        out_flat = _call(False)           # fallback: default double-buffered constants

    return jnp.transpose(out_flat.reshape(cout, B, ho, wo), (1, 0, 2, 3))


# --------------------------------------------------------------------------------------
# Plain-JAX reference (direct transcription of the PyTorch forward, eval-mode BN)
# --------------------------------------------------------------------------------------
def res_conv_block_att_ref(x, params, *, stride):
    dn = ("NCHW", "OIHW", "NCHW")
    hp = jax.lax.Precision.HIGHEST

    def conv(v, w, s, pad):
        return jax.lax.conv_general_dilated(v, w, (s, s), [(pad, pad), (pad, pad)],
                                            dimension_numbers=dn, precision=hp)

    def bn(v, g, b, m, var):
        return (v - m[None, :, None, None]) / jnp.sqrt(var + _EPS)[None, :, None, None] \
               * g[None, :, None, None] + b[None, :, None, None]

    cin = x.shape[1]
    cout = params["conv1_w"].shape[0]
    out = jax.nn.relu(bn(conv(x, params["conv1_w"], stride, 1),
                         params["bn1_g"], params["bn1_b"], params["bn1_m"], params["bn1_v"]))
    out = bn(conv(out, params["conv2_w"], 1, 1),
             params["bn2_g"], params["bn2_b"], params["bn2_m"], params["bn2_v"])
    if stride != 1 or cin != cout:
        idn = bn(conv(x, params["down_w"], stride, 0),
                 params["bnd_g"], params["bnd_b"], params["bnd_m"], params["bnd_v"])
    else:
        idn = x
    out = jax.nn.relu(out + idn)

    # CBAM
    maxp = jnp.max(out, axis=(2, 3))
    avgp = jnp.mean(out, axis=(2, 3))

    def se(v):
        return jax.nn.relu(v @ params["ca_w1"].T) @ params["ca_w2"].T

    ca = jax.nn.sigmoid(se(maxp) + se(avgp))[:, :, None, None]
    o1 = out * ca
    cat = jnp.concatenate([jnp.max(o1, axis=1, keepdims=True),
                           jnp.mean(o1, axis=1, keepdims=True)], axis=1)
    pk = params["sa_w"].shape[-1] // 2
    sa = jax.nn.sigmoid(conv(cat, params["sa_w"], 1, pk) + params["sa_b"][0])
    return o1 * sa + out


# --------------------------------------------------------------------------------------
# Deterministic synthetic parameters + self-test
# --------------------------------------------------------------------------------------
def _make_params(key, cin, cout, stride, reduction=4, sa_kernel=3):
    ks = jax.random.split(key, 20)
    cr = cout // reduction

    def nrm(k, shape, s=0.15):
        return s * jax.random.normal(k, shape, jnp.float32)

    p = {
        "conv1_w": nrm(ks[0], (cout, cin, 3, 3)),
        "bn1_g": 1.0 + nrm(ks[1], (cout,), 0.1),
        "bn1_b": nrm(ks[2], (cout,), 0.1),
        "bn1_m": nrm(ks[3], (cout,), 0.1),
        "bn1_v": jax.random.uniform(ks[4], (cout,), jnp.float32, 0.5, 1.5),
        "conv2_w": nrm(ks[5], (cout, cout, 3, 3)),
        "bn2_g": 1.0 + nrm(ks[6], (cout,), 0.1),
        "bn2_b": nrm(ks[7], (cout,), 0.1),
        "bn2_m": nrm(ks[8], (cout,), 0.1),
        "bn2_v": jax.random.uniform(ks[9], (cout,), jnp.float32, 0.5, 1.5),
        "ca_w1": nrm(ks[10], (cr, cout), 0.2),               # Conv2d(C, C//r, 1, bias=False)
        "ca_w2": nrm(ks[11], (cout, cr), 0.2),                # Conv2d(C//r, C, 1, bias=False)
        "sa_w": nrm(ks[12], (1, 2, sa_kernel, sa_kernel), 0.2),
        "sa_b": nrm(ks[13], (1,), 0.1),
    }
    if stride != 1 or cin != cout:
        p.update({
            "down_w": nrm(ks[14], (cout, cin, 1, 1), 0.2),
            "bnd_g": 1.0 + nrm(ks[15], (cout,), 0.1),
            "bnd_b": nrm(ks[16], (cout,), 0.1),
            "bnd_m": nrm(ks[17], (cout,), 0.1),
            "bnd_v": jax.random.uniform(ks[18], (cout,), jnp.float32, 0.5, 1.5),
        })
    return p


if __name__ == "__main__":
    key = jax.random.PRNGKey(0)
    configs = [
        # (B, in_ch, out_ch, H, W, stride): downsample branch (stride 2 + channel change)
        (4, 16, 32, 32, 32, 2),
        # identity branch (stride 1, in_ch == out_ch)
        (4, 32, 32, 16, 16, 1),
    ]
    for (B, cin, cout, H, W, stride) in configs:
        kx, kp, key = jax.random.split(key, 3)
        x = jax.random.normal(kx, (B, cin, H, W), dtype=jnp.float32)
        params = _make_params(kp, cin, cout, stride)
        ref = res_conv_block_att_ref(x, params, stride=stride)

        # exact-math mode (f32 MXU operands): validates the roll/mask/polyphase algebra
        out_f32 = jax.block_until_ready(
            res_conv_block_att(x, params, stride=stride, mxu_dtype=jnp.float32))
        np.testing.assert_allclose(np.asarray(out_f32), np.asarray(ref), rtol=2e-3, atol=2e-3)

        # fast mode (bf16 MXU operands, f32 accumulation): looser tolerance
        out_bf16 = jax.block_until_ready(
            res_conv_block_att(x, params, stride=stride, mxu_dtype=jnp.bfloat16))
        np.testing.assert_allclose(np.asarray(out_bf16), np.asarray(ref), rtol=1e-1, atol=1e-1)

    print("KERNEL_OK")
</pallas_src>

<mosaic_0001>
module attributes {stable_mosaic.version = 11 : i64} {
  func.func @_res_cbam_kernel(%arg0: i32, %arg1: memref<2x9xf32, #tpu.memory_space<smem>>, %arg2: memref<1xf32, #tpu.memory_space<smem>>, %arg3: memref<64x256xf32, #tpu.memory_space<vmem>>, %arg4: memref<32x144xf32, #tpu.memory_space<vmem>>, %arg5: memref<32x1xf32, #tpu.memory_space<vmem>>, %arg6: memref<32x288xf32, #tpu.memory_space<vmem>>, %arg7: memref<32x1xf32, #tpu.memory_space<vmem>>, %arg8: memref<32x16xf32, #tpu.memory_space<vmem>>, %arg9: memref<32x1xf32, #tpu.memory_space<vmem>>, %arg10: memref<32x8xf32, #tpu.memory_space<vmem>>, %arg11: memref<32x8xf32, #tpu.memory_space<vmem>>, %arg12: memref<9x256xf32, #tpu.memory_space<vmem>>, %arg13: memref<9x256xf32, #tpu.memory_space<vmem>>, %arg14: memref<9x256xf32, #tpu.memory_space<vmem>>, %arg15: memref<32x256xf32, #tpu.memory_space<vmem>>, %arg16: memref<288x256xf32, #tpu.memory_space<vmem>>) attributes {dimension_semantics = [#tpu.dimension_semantics<parallel>], iteration_bounds = array<i64: 4>, scalar_prefetch = 2 : i64, scratch_operands = 1 : i64, tpu.core_type = #tpu.core_type<tc>, window_params = [{transform_indices = @transform_0, window_bounds = array<i64: 64, 256>}, {pipeline_mode = #tpu.pipeline_mode<synchronous>, transform_indices = @transform_1, window_bounds = array<i64: 32, 144>}, {pipeline_mode = #tpu.pipeline_mode<synchronous>, transform_indices = @transform_2, window_bounds = array<i64: 32, 1>}, {pipeline_mode = #tpu.pipeline_mode<synchronous>, transform_indices = @transform_3, window_bounds = array<i64: 32, 288>}, {pipeline_mode = #tpu.pipeline_mode<synchronous>, transform_indices = @transform_4, window_bounds = array<i64: 32, 1>}, {pipeline_mode = #tpu.pipeline_mode<synchronous>, transform_indices = @transform_5, window_bounds = array<i64: 32, 16>}, {pipeline_mode = #tpu.pipeline_mode<synchronous>, transform_indices = @transform_6, window_bounds = array<i64: 32, 1>}, {pipeline_mode = #tpu.pipeline_mode<synchronous>, transform_indices = @transform_7, window_bounds = array<i64: 32, 8>}, {pipeline_mode = #tpu.pipeline_mode<synchronous>, transform_indices = @transform_8, window_bounds = array<i64: 32, 8>}, {pipeline_mode = #tpu.pipeline_mode<synchronous>, transform_indices = @transform_9, window_bounds = array<i64: 9, 256>}, {pipeline_mode = #tpu.pipeline_mode<synchronous>, transform_indices = @transform_10, window_bounds = array<i64: 9, 256>}, {pipeline_mode = #tpu.pipeline_mode<synchronous>, transform_indices = @transform_11, window_bounds = array<i64: 9, 256>}, {transform_indices = @transform_12, window_bounds = array<i64: 32, 256>}]} {
    %c48 = arith.constant 48 : index
    %c0 = arith.constant 0 : index
    %0 = vector.load %arg3[%c48, %c0] : memref<64x256xf32, #tpu.memory_space<vmem>>, vector<16x256xf32>
    %c17_i32 = arith.constant 17 : i32
    %1 = tpu.dynamic_rotate %0 by %c17_i32 dim 1 : vector<16x256xf32>, i32 -> vector<16x256xf32>
    %c0_0 = arith.constant 0 : index
    %c0_1 = arith.constant 0 : index
    %2 = vector.load %arg12[%c0_0, %c0_1] : memref<9x256xf32, #tpu.memory_space<vmem>>, vector<1x256xf32>
    %3 = vector.broadcast %2 : vector<1x256xf32> to vector<16x256xf32>
    %4 = arith.mulf %1, %3 : vector<16x256xf32>
    %c0_2 = arith.constant 0 : index
    %c0_3 = arith.constant 0 : index
    %5 = vector.load %arg16[%c0_2, %c0_3] : memref<288x256xf32, #tpu.memory_space<vmem>>, vector<16x256xf32>
    tpu.vector_store %arg16[%c0_2, %c0_3], %4 {strides = array<i32>} : memref<288x256xf32, #tpu.memory_space<vmem>>, vector<16x256xf32>,
    %c32 = arith.constant 32 : index
    %c0_4 = arith.constant 0 : index
    %6 = vector.load %arg3[%c32, %c0_4] : memref<64x256xf32, #tpu.memory_space<vmem>>, vector<16x256xf32>
    %c16_i32 = arith.constant 16 : i32
    %7 = tpu.dynamic_rotate %6 by %c16_i32 dim 1 : vector<16x256xf32>, i32 -> vector<16x256xf32>
    %c1 = arith.constant 1 : index
    %c0_5 = arith.constant 0 : index
    %8 = vector.load %arg12[%c1, %c0_5] : memref<9x256xf32, #tpu.memory_space<vmem>>, vector<1x256xf32>
    %9 = vector.broadcast %8 : vector<1x256xf32> to vector<16x256xf32>
    %10 = arith.mulf %7, %9 : vector<16x256xf32>
    %c16 = arith.constant 16 : index
    %c0_6 = arith.constant 0 : index
    %11 = vector.load %arg16[%c16, %c0_6] : memref<288x256xf32, #tpu.memory_space<vmem>>, vector<16x256xf32>
    tpu.vector_store %arg16[%c16, %c0_6], %10 {strides = array<i32>} : memref<288x256xf32, #tpu.memory_space<vmem>>, vector<16x256xf32>,
    %c48_7 = arith.constant 48 : index
    %c0_8 = arith.constant 0 : index
    %12 = vector.load %arg3[%c48_7, %c0_8] : memref<64x256xf32, #tpu.memory_space<vmem>>, vector<16x256xf32>
    %c16_i32_9 = arith.constant 16 : i32
    %13 = tpu.dynamic_rotate %12 by %c16_i32_9 dim 1 : vector<16x256xf32>, i32 -> vector<16x256xf32>
    %c2 = arith.constant 2 : index
    %c0_10 = arith.constant 0 : index
    %14 = vector.load %arg12[%c2, %c0_10] : memref<9x256xf32, #tpu.memory_space<vmem>>, vector<1x256xf32>
    %15 = vector.broadcast %14 : vector<1x256xf32> to vector<16x256xf32>
    %16 = arith.mulf %13, %15 : vector<16x256xf32>
    %c32_11 = arith.constant 32 : index
    %c0_12 = arith.constant 0 : index
    %17 = vector.load %arg16[%c32_11, %c0_12] : memref<288x256xf32, #tpu.memory_space<vmem>>, vector<16x256xf32>
    tpu.vector_store %arg16[%c32_11, %c0_12], %16 {strides = array<i32>} : memref<288x256xf32, #tpu.memory_space<vmem>>, vector<16x256xf32>,
    %c16_13 = arith.constant 16 : index
    %c0_14 = arith.constant 0 : index
    %18 = vector.load %arg3[%c16_13, %c0_14] : memref<64x256xf32, #tpu.memory_space<vmem>>, vector<16x256xf32>
    %c1_i32 = arith.constant 1 : i32
    %19 = tpu.dynamic_rotate %18 by %c1_i32 dim 1 : vector<16x256xf32>, i32 -> vector<16x256xf32>
    %c3 = arith.constant 3 : index
    %c0_15 = arith.constant 0 : index
    %20 = vector.load %arg12[%c3, %c0_15] : memref<9x256xf32, #tpu.memory_space<vmem>>, vector<1x256xf32>
    %21 = vector.broadcast %20 : vector<1x256xf32> to vector<16x256xf32>
    %22 = arith.mulf %19, %21 : vector<16x256xf32>
    %c48_16 = arith.constant 48 : index
    %c0_17 = arith.constant 0 : index
    %23 = vector.load %arg16[%c48_16, %c0_17] : memref<288x256xf32, #tpu.memory_space<vmem>>, vector<16x256xf32>
    tpu.vector_store %arg16[%c48_16, %c0_17], %22 {strides = array<i32>} : memref<288x256xf32, #tpu.memory_space<vmem>>, vector<16x256xf32>,
    %c0_18 = arith.constant 0 : index
    %c0_19 = arith.constant 0 : index
    %24 = vector.load %arg3[%c0_18, %c0_19] : memref<64x256xf32, #tpu.memory_space<vmem>>, vector<16x256xf32>
    %c4 = arith.constant 4 : index
    %c0_20 = arith.constant 0 : index
    %25 = vector.load %arg12[%c4, %c0_20] : memref<9x256xf32, #tpu.memory_space<vmem>>, vector<1x256xf32>
    %26 = vector.broadcast %25 : vector<1x256xf32> to vector<16x256xf32>
    %27 = arith.mulf %24, %26 : vector<16x256xf32>
    %c64 = arith.constant 64 : index
    %c0_21 = arith.constant 0 : index
    %28 = vector.load %arg16[%c64, %c0_21] : memref<288x256xf32, #tpu.memory_space<vmem>>, vector<16x256xf32>
    tpu.vector_store %arg16[%c64, %c0_21], %27 {strides = array<i32>} : memref<288x256xf32, #tpu.memory_space<vmem>>, vector<16x256xf32>,
    %c16_22 = arith.constant 16 : index
    %c0_23 = arith.constant 0 : index
    %29 = vector.load %arg3[%c16_22, %c0_23] : memref<64x256xf32, #tpu.memory_space<vmem>>, vector<16x256xf32>
    %c5 = arith.constant 5 : index
    %c0_24 = arith.constant 0 : index
    %30 = vector.load %arg12[%c5, %c0_24] : memref<9x256xf32, #tpu.memory_space<vmem>>, vector<1x256xf32>
    %31 = vector.broadcast %30 : vector<1x256xf32> to vector<16x256xf32>
    %32 = arith.mulf %29, %31 : vector<16x256xf32>
    %c80 = arith.constant 80 : index
    %c0_25 = arith.constant 0 : index
    %33 = vector.load %arg16[%c80, %c0_25] : memref<288x256xf32, #tpu.memory_space<vmem>>, vector<16x256xf32>
    tpu.vector_store %arg16[%c80, %c0_25], %32 {strides = array<i32>} : memref<288x256xf32, #tpu.memory_space<vmem>>, vector<16x256xf32>,
    %c48_26 = arith.constant 48 : index
    %c0_27 = arith.constant 0 : index
    %34 = vector.load %arg3[%c48_26, %c0_27] : memref<64x256xf32, #tpu.memory_space<vmem>>, vector<16x256xf32>
    %c1_i32_28 = arith.constant 1 : i32
    %35 = tpu.dynamic_rotate %34 by %c1_i32_28 dim 1 : vector<16x256xf32>, i32 -> vector<16x256xf32>
    %c6 = arith.constant 6 : index
    %c0_29 = arith.constant 0 : index
    %36 = vector.load %arg12[%c6, %c0_29] : memref<9x256xf32, #tpu.memory_space<vmem>>, vector<1x256xf32>
    %37 = vector.broadcast %36 : vector<1x256xf32> to vector<16x256xf32>
    %38 = arith.mulf %35, %37 : vector<16x256xf32>
    %c96 = arith.constant 96 : index
    %c0_30 = arith.constant 0 : index
    %39 = vector.load %arg16[%c96, %c0_30] : memref<288x256xf32, #tpu.memory_space<vmem>>, vector<16x256xf32>
    tpu.vector_store %arg16[%c96, %c0_30], %38 {strides = array<i32>} : memref<288x256xf32, #tpu.memory_space<vmem>>, vector<16x256xf32>,
    %c32_31 = arith.constant 32 : index
    %c0_32 = arith.constant 0 : index
    %40 = vector.load %arg3[%c32_31, %c0_32] : memref<64x256xf32, #tpu.memory_space<vmem>>, vector<16x256xf32>
    %c7 = arith.constant 7 : index
    %c0_33 = arith.constant 0 : index
    %41 = vector.load %arg12[%c7, %c0_33] : memref<9x256xf32, #tpu.memory_space<vmem>>, vector<1x256xf32>
    %42 = vector.broadcast %41 : vector<1x256xf32> to vector<16x256xf32>
    %43 = arith.mulf %40, %42 : vector<16x256xf32>
    %c112 = arith.constant 112 : index
    %c0_34 = arith.constant 0 : index
    %44 = vector.load %arg16[%c112, %c0_34] : memref<288x256xf32, #tpu.memory_space<vmem>>, vector<16x256xf32>
    tpu.vector_store %arg16[%c112, %c0_34], %43 {strides = array<i32>} : memref<288x256xf32, #tpu.memory_space<vmem>>, vector<16x256xf32>,
    %c48_35 = arith.constant 48 : index
    %c0_36 = arith.constant 0 : index
    %45 = vector.load %arg3[%c48_35, %c0_36] : memref<64x256xf32, #tpu.memory_space<vmem>>, vector<16x256xf32>
    %c8 = arith.constant 8 : index
    %c0_37 = arith.constant 0 : index
    %46 = vector.load %arg12[%c8, %c0_37] : memref<9x256xf32, #tpu.memory_space<vmem>>, vector<1x256xf32>
    %47 = vector.broadcast %46 : vector<1x256xf32> to vector<16x256xf32>
    %48 = arith.mulf %45, %47 : vector<16x256xf32>
    %c128 = arith.constant 128 : index
    %c0_38 = arith.constant 0 : index
    %49 = vector.load %arg16[%c128, %c0_38] : memref<288x256xf32, #tpu.memory_space<vmem>>, vector<16x256xf32>
    tpu.vector_store %arg16[%c128, %c0_38], %48 {strides = array<i32>} : memref<288x256xf32, #tpu.memory_space<vmem>>, vector<16x256xf32>,
    %c0_39 = arith.constant 0 : index
    %c0_40 = arith.constant 0 : index
    %50 = vector.load %arg4[%c0_39, %c0_40] : memref<32x144xf32, #tpu.memory_space<vmem>>, vector<32x144xf32>
    %c0_41 = arith.constant 0 : index
    %c0_42 = arith.constant 0 : index
    %51 = vector.load %arg16[%c0_41, %c0_42] : memref<288x256xf32, #tpu.memory_space<vmem>>, vector<144x256xf32>
    %cst = arith.constant dense<0.000000e+00> : vector<32x256xf32>
    %52 = tpu.matmul %50, %51, %cst {dimension_numbers = #tpu.dot_dimension_numbers<[1], [0], [0], [1], [0, 0, 1, 1], [], []>} : vector<32x144xf32>, vector<144x256xf32>, vector<32x256xf32> -> vector<32x256xf32>
    %c0_43 = arith.constant 0 : index
    %c0_44 = arith.constant 0 : index
    %53 = vector.load %arg5[%c0_43, %c0_44] : memref<32x1xf32, #tpu.memory_space<vmem>>, vector<32x1xf32>
    %54 = vector.broadcast %53 : vector<32x1xf32> to vector<32x256xf32>
    %55 = arith.addf %52, %54 : vector<32x256xf32>
    %cst_45 = arith.constant 0.000000e+00 : f32
    %56 = vector.broadcast %cst_45 : f32 to vector<32x256xf32>
    %57 = arith.maximumf %55, %56 : vector<32x256xf32>
    %c17_i32_46 = arith.constant 17 : i32
    %58 = tpu.dynamic_rotate %57 by %c17_i32_46 dim 1 : vector<32x256xf32>, i32 -> vector<32x256xf32>
    %c0_47 = arith.constant 0 : index
    %c0_48 = arith.constant 0 : index
    %59 = vector.load %arg13[%c0_47, %c0_48] : memref<9x256xf32, #tpu.memory_space<vmem>>, vector<1x256xf32>
    %60 = vector.broadcast %59 : vector<1x256xf32> to vector<32x256xf32>
    %61 = arith.mulf %58, %60 : vector<32x256xf32>
    %c0_49 = arith.constant 0 : index
    %c0_50 = arith.constant 0 : index
    %62 = vector.load %arg16[%c0_49, %c0_50] : memref<288x256xf32, #tpu.memory_space<vmem>>, vector<32x256xf32>
    tpu.vector_store %arg16[%c0_49, %c0_50], %61 {strides = array<i32>} : memref<288x256xf32, #tpu.memory_space<vmem>>, vector<32x256xf32>,
    %c16_i32_51 = arith.constant 16 : i32
    %63 = tpu.dynamic_rotate %57 by %c16_i32_51 dim 1 : vector<32x256xf32>, i32 -> vector<32x256xf32>
    %c1_52 = arith.constant 1 : index
    %c0_53 = arith.constant 0 : index
    %64 = vector.load %arg13[%c1_52, %c0_53] : memref<9x256xf32, #tpu.memory_space<vmem>>, vector<1x256xf32>
    %65 = vector.broadcast %64 : vector<1x256xf32> to vector<32x256xf32>
    %66 = arith.mulf %63, %65 : vector<32x256xf32>
    %c32_54 = arith.constant 32 : index
    %c0_55 = arith.constant 0 : index
    %67 = vector.load %arg16[%c32_54, %c0_55] : memref<288x256xf32, #tpu.memory_space<vmem>>, vector<32x256xf32>
    tpu.vector_store %arg16[%c32_54, %c0_55], %66 {strides = array<i32>} : memref<288x256xf32, #tpu.memory_space<vmem>>, vector<32x256xf32>,
    %c15_i32 = arith.constant 15 : i32
    %68 = tpu.dynamic_rotate %57 by %c15_i32 dim 1 : vector<32x256xf32>, i32 -> vector<32x256xf32>
    %c2_56 = arith.constant 2 : index
    %c0_57 = arith.constant 0 : index
    %69 = vector.load %arg13[%c2_56, %c0_57] : memref<9x256xf32, #tpu.memory_space<vmem>>, vector<1x256xf32>
    %70 = vector.broadcast %69 : vector<1x256xf32> to vector<32x256xf32>
    %71 = arith.mulf %68, %70 : vector<32x256xf32>
    %c64_58 = arith.constant 64 : index
    %c0_59 = arith.constant 0 : index
    %72 = vector.load %arg16[%c64_58, %c0_59] : memref<288x256xf32, #tpu.memory_space<vmem>>, vector<32x256xf32>
    tpu.vector_store %arg16[%c64_58, %c0_59], %71 {strides = array<i32>} : memref<288x256xf32, #tpu.memory_space<vmem>>, vector<32x256xf32>,
    %c1_i32_60 = arith.constant 1 : i32
    %73 = tpu.dynamic_rotate %57 by %c1_i32_60 dim 1 : vector<32x256xf32>, i32 -> vector<32x256xf32>
    %c3_61 = arith.constant 3 : index
    %c0_62 = arith.constant 0 : index
    %74 = vector.load %arg13[%c3_61, %c0_62] : memref<9x256xf32, #tpu.memory_space<vmem>>, vector<1x256xf32>
    %75 = vector.broadcast %74 : vector<1x256xf32> to vector<32x256xf32>
    %76 = arith.mulf %73, %75 : vector<32x256xf32>
    %c96_63 = arith.constant 96 : index
    %c0_64 = arith.constant 0 : index
    %77 = vector.load %arg16[%c96_63, %c0_64] : memref<288x256xf32, #tpu.memory_space<vmem>>, vector<32x256xf32>
    tpu.vector_store %arg16[%c96_63, %c0_64], %76 {strides = array<i32>} : memref<288x256xf32, #tpu.memory_space<vmem>>, vector<32x256xf32>,
    %c4_65 = arith.constant 4 : index
    %c0_66 = arith.constant 0 : index
    %78 = vector.load %arg13[%c4_65, %c0_66] : memref<9x256xf32, #tpu.memory_space<vmem>>, vector<1x256xf32>
    %79 = vector.broadcast %78 : vector<1x256xf32> to vector<32x256xf32>
    %80 = arith.mulf %57, %79 : vector<32x256xf32>
    %c128_67 = arith.constant 128 : index
    %c0_68 = arith.constant 0 : index
    %81 = vector.load %arg16[%c128_67, %c0_68] : memref<288x256xf32, #tpu.memory_space<vmem>>, vector<32x256xf32>
    tpu.vector_store %arg16[%c128_67, %c0_68], %80 {strides = array<i32>} : memref<288x256xf32, #tpu.memory_space<vmem>>, vector<32x256xf32>,
    %c255_i32 = arith.constant 255 : i32
    %82 = tpu.dynamic_rotate %57 by %c255_i32 dim 1 : vector<32x256xf32>, i32 -> vector<32x256xf32>
    %c5_69 = arith.constant 5 : index
    %c0_70 = arith.constant 0 : index
    %83 = vector.load %arg13[%c5_69, %c0_70] : memref<9x256xf32, #tpu.memory_space<vmem>>, vector<1x256xf32>
    %84 = vector.broadcast %83 : vector<1x256xf32> to vector<32x256xf32>
    %85 = arith.mulf %82, %84 : vector<32x256xf32>
    %c160 = arith.constant 160 : index
    %c0_71 = arith.constant 0 : index
    %86 = vector.load %arg16[%c160, %c0_71] : memref<288x256xf32, #tpu.memory_space<vmem>>, vector<32x256xf32>
    tpu.vector_store %arg16[%c160, %c0_71], %85 {strides = array<i32>} : memref<288x256xf32, #tpu.memory_space<vmem>>, vector<32x256xf32>,
    %c241_i32 = arith.constant 241 : i32
    %87 = tpu.dynamic_rotate %57 by %c241_i32 dim 1 : vector<32x256xf32>, i32 -> vector<32x256xf32>
    %c6_72 = arith.constant 6 : index
    %c0_73 = arith.constant 0 : index
    %88 = vector.load %arg13[%c6_72, %c0_73] : memref<9x256xf32, #tpu.memory_space<vmem>>, vector<1x256xf32>
    %89 = vector.broadcast %88 : vector<1x256xf32> to vector<32x256xf32>
    %90 = arith.mulf %87, %89 : vector<32x256xf32>
    %c192 = arith.constant 192 : index
    %c0_74 = arith.constant 0 : index
    %91 = vector.load %arg16[%c192, %c0_74] : memref<288x256xf32, #tpu.memory_space<vmem>>, vector<32x256xf32>
    tpu.vector_store %arg16[%c192, %c0_74], %90 {strides = array<i32>} : memref<288x256xf32, #tpu.memory_space<vmem>>, vector<32x256xf32>,
    %c240_i32 = arith.constant 240 : i32
    %92 = tpu.dynamic_rotate %57 by %c240_i32 dim 1 : vector<32x256xf32>, i32 -> vector<32x256xf32>
    %c7_75 = arith.constant 7 : index
    %c0_76 = arith.constant 0 : index
    %93 = vector.load %arg13[%c7_75, %c0_76] : memref<9x256xf32, #tpu.memory_space<vmem>>, vector<1x256xf32>
    %94 = vector.broadcast %93 : vector<1x256xf32> to vector<32x256xf32>
    %95 = arith.mulf %92, %94 : vector<32x256xf32>
    %c224 = arith.constant 224 : index
    %c0_77 = arith.constant 0 : index
    %96 = vector.load %arg16[%c224, %c0_77] : memref<288x256xf32, #tpu.memory_space<vmem>>, vector<32x256xf32>
    tpu.vector_store %arg16[%c224, %c0_77], %95 {strides = array<i32>} : memref<288x256xf32, #tpu.memory_space<vmem>>, vector<32x256xf32>,
    %c239_i32 = arith.constant 239 : i32
    %97 = tpu.dynamic_rotate %57 by %c239_i32 dim 1 : vector<32x256xf32>, i32 -> vector<32x256xf32>
    %c8_78 = arith.constant 8 : index
    %c0_79 = arith.constant 0 : index
    %98 = vector.load %arg13[%c8_78, %c0_79] : memref<9x256xf32, #tpu.memory_space<vmem>>, vector<1x256xf32>
    %99 = vector.broadcast %98 : vector<1x256xf32> to vector<32x256xf32>
    %100 = arith.mulf %97, %99 : vector<32x256xf32>
    %c256 = arith.constant 256 : index
    %c0_80 = arith.constant 0 : index
    %101 = vector.load %arg16[%c256, %c0_80] : memref<288x256xf32, #tpu.memory_space<vmem>>, vector<32x256xf32>
    tpu.vector_store %arg16[%c256, %c0_80], %100 {strides = array<i32>} : memref<288x256xf32, #tpu.memory_space<vmem>>, vector<32x256xf32>,
    %c0_81 = arith.constant 0 : index
    %c0_82 = arith.constant 0 : index
    %102 = vector.load %arg6[%c0_81, %c0_82] : memref<32x288xf32, #tpu.memory_space<vmem>>, vector<32x288xf32>
    %c0_83 = arith.constant 0 : index
    %c0_84 = arith.constant 0 : index
    %103 = vector.load %arg16[%c0_83, %c0_84] : memref<288x256xf32, #tpu.memory_space<vmem>>, vector<288x256xf32>
    %cst_85 = arith.constant dense<0.000000e+00> : vector<32x256xf32>
    %104 = tpu.matmul %102, %103, %cst_85 {dimension_numbers = #tpu.dot_dimension_numbers<[1], [0], [0], [1], [0, 0, 1, 1], [], []>} : vector<32x288xf32>, vector<288x256xf32>, vector<32x256xf32> -> vector<32x256xf32>
    %c0_86 = arith.constant 0 : index
    %c0_87 = arith.constant 0 : index
    %105 = vector.load %arg3[%c0_86, %c0_87] : memref<64x256xf32, #tpu.memory_space<vmem>>, vector<16x256xf32>
    %c0_88 = arith.constant 0 : index
    %c0_89 = arith.constant 0 : index
    %106 = vector.load %arg8[%c0_88, %c0_89] : memref<32x16xf32, #tpu.memory_space<vmem>>, vector<32x16xf32>
    %cst_90 = arith.constant dense<0.000000e+00> : vector<32x256xf32>
    %107 = tpu.matmul %106, %105, %cst_90 {dimension_numbers = #tpu.dot_dimension_numbers<[1], [0], [0], [1], [0, 0, 1, 1], [], []>} : vector<32x16xf32>, vector<16x256xf32>, vector<32x256xf32> -> vector<32x256xf32>
    %c0_91 = arith.constant 0 : index
    %c0_92 = arith.constant 0 : index
    %108 = vector.load %arg9[%c0_91, %c0_92] : memref<32x1xf32, #tpu.memory_space<vmem>>, vector<32x1xf32>
    %109 = vector.broadcast %108 : vector<32x1xf32> to vector<32x256xf32>
    %110 = arith.addf %107, %109 : vector<32x256xf32>
    %c0_93 = arith.constant 0 : index
    %c0_94 = arith.constant 0 : index
    %111 = vector.load %arg7[%c0_93, %c0_94] : memref<32x1xf32, #tpu.memory_space<vmem>>, vector<32x1xf32>
    %112 = vector.broadcast %111 : vector<32x1xf32> to vector<32x256xf32>
    %113 = arith.addf %104, %112 : vector<32x256xf32>
    %114 = arith.addf %113, %110 : vector<32x256xf32>
    %cst_95 = arith.constant 0.000000e+00 : f32
    %115 = vector.broadcast %cst_95 : f32 to vector<32x256xf32>
    %116 = arith.maximumf %114, %115 : vector<32x256xf32>
    %c0_96 = arith.constant 0 : index
    %c0_97 = arith.constant 0 : index
    %117 = vector.load %arg10[%c0_96, %c0_97] : memref<32x8xf32, #tpu.memory_space<vmem>>, vector<32x8xf32>
    %c0_98 = arith.constant 0 : index
    %c0_99 = arith.constant 0 : index
    %118 = vector.load %arg11[%c0_98, %c0_99] : memref<32x8xf32, #tpu.memory_space<vmem>>, vector<32x8xf32>
    %cst_100 = arith.constant dense<0xFF800000> : vector<32xf32>
    %119 = vector.multi_reduction <maximumf>, %116, %cst_100 [1] : vector<32x256xf32> to vector<32xf32>
    %120 = vector.shape_cast %119 : vector<32xf32> to vector<32x1xf32>
    %cst_101 = arith.constant dense<0.000000e+00> : vector<32xf32>
    %121 = vector.multi_reduction <add>, %116, %cst_101 [1] : vector<32x256xf32> to vector<32xf32>
    %122 = vector.shape_cast %121 : vector<32xf32> to vector<32x1xf32>
    %cst_102 = arith.constant 3.906250e-03 : f32
    %123 = vector.broadcast %cst_102 : f32 to vector<32x1xf32>
    %124 = arith.mulf %122, %123 : vector<32x1xf32>
    %125 = vector.broadcast %120 : vector<32x1xf32> to vector<32x8xf32>
    %126 = arith.mulf %117, %125 : vector<32x8xf32>
    %cst_103 = arith.constant dense<0.000000e+00> : vector<8xf32>
    %127 = vector.multi_reduction <add>, %126, %cst_103 [0] : vector<32x8xf32> to vector<8xf32>
    %128 = vector.shape_cast %127 : vector<8xf32> to vector<1x8xf32>
    %cst_104 = arith.constant 0.000000e+00 : f32
    %129 = vector.broadcast %cst_104 : f32 to vector<1x8xf32>
    %130 = arith.maximumf %128, %129 : vector<1x8xf32>
    %131 = vector.broadcast %124 : vector<32x1xf32> to vector<32x8xf32>
    %132 = arith.mulf %117, %131 : vector<32x8xf32>
    %cst_105 = arith.constant dense<0.000000e+00> : vector<8xf32>
    %133 = vector.multi_reduction <add>, %132, %cst_105 [0] : vector<32x8xf32> to vector<8xf32>
    %134 = vector.shape_cast %133 : vector<8xf32> to vector<1x8xf32>
    %cst_106 = arith.constant 0.000000e+00 : f32
    %135 = vector.broadcast %cst_106 : f32 to vector<1x8xf32>
    %136 = arith.maximumf %134, %135 : vector<1x8xf32>
    %137 = arith.addf %130, %136 : vector<1x8xf32>
    %138 = vector.broadcast %137 : vector<1x8xf32> to vector<32x8xf32>
    %139 = arith.mulf %118, %138 : vector<32x8xf32>
    %cst_107 = arith.constant dense<0.000000e+00> : vector<32xf32>
    %140 = vector.multi_reduction <add>, %139, %cst_107 [1] : vector<32x8xf32> to vector<32xf32>
    %141 = vector.shape_cast %140 : vector<32xf32> to vector<32x1xf32>
    %142 = arith.negf %141 : vector<32x1xf32>
    %143 = math.exp %142 : vector<32x1xf32>
    %cst_108 = arith.constant 1.000000e+00 : f32
    %144 = vector.broadcast %cst_108 : f32 to vector<32x1xf32>
    %145 = arith.addf %144, %143 : vector<32x1xf32>
    %146 = arith.divf %144, %145 : vector<32x1xf32>
    %147 = vector.broadcast %146 : vector<32x1xf32> to vector<32x256xf32>
    %148 = arith.mulf %116, %147 : vector<32x256xf32>
    %cst_109 = arith.constant dense<0xFF800000> : vector<256xf32>
    %149 = vector.multi_reduction <maximumf>, %148, %cst_109 [0] : vector<32x256xf32> to vector<256xf32>
    %150 = vector.shape_cast %149 : vector<256xf32> to vector<1x256xf32>
    %cst_110 = arith.constant dense<0.000000e+00> : vector<256xf32>
    %151 = vector.multi_reduction <add>, %148, %cst_110 [0] : vector<32x256xf32> to vector<256xf32>
    %152 = vector.shape_cast %151 : vector<256xf32> to vector<1x256xf32>
    %cst_111 = arith.constant 3.125000e-02 : f32
    %153 = vector.broadcast %cst_111 : f32 to vector<1x256xf32>
    %154 = arith.mulf %152, %153 : vector<1x256xf32>
    %cst_112 = arith.constant 0.000000e+00 : f32
    %155 = vector.broadcast %cst_112 : f32 to vector<1x256xf32>
    %c0_113 = arith.constant 0 : index
    %c0_114 = arith.constant 0 : index
    %156 = vector.load %arg14[%c0_113, %c0_114] : memref<9x256xf32, #tpu.memory_space<vmem>>, vector<1x256xf32>
    %c17_i32_115 = arith.constant 17 : i32
    %157 = tpu.dynamic_rotate %150 by %c17_i32_115 dim 1 : vector<1x256xf32>, i32 -> vector<1x256xf32>
    %c0_116 = arith.constant 0 : index
    %c0_117 = arith.constant 0 : index
    %158 = memref.load %arg1[%c0_116, %c0_117] : memref<2x9xf32, #tpu.memory_space<smem>>
    %159 = vector.broadcast %158 : f32 to vector<1x256xf32>
    %160 = arith.mulf %157, %159 : vector<1x256xf32>
    %c17_i32_118 = arith.constant 17 : i32
    %161 = tpu.dynamic_rotate %154 by %c17_i32_118 dim 1 : vector<1x256xf32>, i32 -> vector<1x256xf32>
    %c1_119 = arith.constant 1 : index
    %c0_120 = arith.constant 0 : index
    %162 = memref.load %arg1[%c1_119, %c0_120] : memref<2x9xf32, #tpu.memory_space<smem>>
    %163 = vector.broadcast %162 : f32 to vector<1x256xf32>
    %164 = arith.mulf %161, %163 : vector<1x256xf32>
    %165 = arith.addf %160, %164 : vector<1x256xf32>
    %166 = arith.mulf %165, %156 : vector<1x256xf32>
    %167 = arith.addf %155, %166 : vector<1x256xf32>
    %c1_121 = arith.constant 1 : index
    %c0_122 = arith.constant 0 : index
    %168 = vector.load %arg14[%c1_121, %c0_122] : memref<9x256xf32, #tpu.memory_space<vmem>>, vector<1x256xf32>
    %c16_i32_123 = arith.constant 16 : i32
    %169 = tpu.dynamic_rotate %150 by %c16_i32_123 dim 1 : vector<1x256xf32>, i32 -> vector<1x256xf32>
    %c0_124 = arith.constant 0 : index
    %c1_125 = arith.constant 1 : index
    %170 = memref.load %arg1[%c0_124, %c1_125] : memref<2x9xf32, #tpu.memory_space<smem>>
    %171 = vector.broadcast %170 : f32 to vector<1x256xf32>
    %172 = arith.mulf %169, %171 : vector<1x256xf32>
    %c16_i32_126 = arith.constant 16 : i32
    %173 = tpu.dynamic_rotate %154 by %c16_i32_126 dim 1 : vector<1x256xf32>, i32 -> vector<1x256xf32>
    %c1_127 = arith.constant 1 : index
    %c1_128 = arith.constant 1 : index
    %174 = memref.load %arg1[%c1_127, %c1_128] : memref<2x9xf32, #tpu.memory_space<smem>>
    %175 = vector.broadcast %174 : f32 to vector<1x256xf32>
    %176 = arith.mulf %173, %175 : vector<1x256xf32>
    %177 = arith.addf %172, %176 : vector<1x256xf32>
    %178 = arith.mulf %177, %168 : vector<1x256xf32>
    %179 = arith.addf %167, %178 : vector<1x256xf32>
    %c2_129 = arith.constant 2 : index
    %c0_130 = arith.constant 0 : index
    %180 = vector.load %arg14[%c2_129, %c0_130] : memref<9x256xf32, #tpu.memory_space<vmem>>, vector<1x256xf32>
    %c15_i32_131 = arith.constant 15 : i32
    %181 = tpu.dynamic_rotate %150 by %c15_i32_131 dim 1 : vector<1x256xf32>, i32 -> vector<1x256xf32>
    %c0_132 = arith.constant 0 : index
    %c2_133 = arith.constant 2 : index
    %182 = memref.load %arg1[%c0_132, %c2_133] : memref<2x9xf32, #tpu.memory_space<smem>>
    %183 = vector.broadcast %182 : f32 to vector<1x256xf32>
    %184 = arith.mulf %181, %183 : vector<1x256xf32>
    %c15_i32_134 = arith.constant 15 : i32
    %185 = tpu.dynamic_rotate %154 by %c15_i32_134 dim 1 : vector<1x256xf32>, i32 -> vector<1x256xf32>
    %c1_135 = arith.constant 1 : index
    %c2_136 = arith.constant 2 : index
    %186 = memref.load %arg1[%c1_135, %c2_136] : memref<2x9xf32, #tpu.memory_space<smem>>
    %187 = vector.broadcast %186 : f32 to vector<1x256xf32>
    %188 = arith.mulf %185, %187 : vector<1x256xf32>
    %189 = arith.addf %184, %188 : vector<1x256xf32>
    %190 = arith.mulf %189, %180 : vector<1x256xf32>
    %191 = arith.addf %179, %190 : vector<1x256xf32>
    %c3_137 = arith.constant 3 : index
    %c0_138 = arith.constant 0 : index
    %192 = vector.load %arg14[%c3_137, %c0_138] : memref<9x256xf32, #tpu.memory_space<vmem>>, vector<1x256xf32>
    %c1_i32_139 = arith.constant 1 : i32
    %193 = tpu.dynamic_rotate %150 by %c1_i32_139 dim 1 : vector<1x256xf32>, i32 -> vector<1x256xf32>
    %c0_140 = arith.constant 0 : index
    %c3_141 = arith.constant 3 : index
    %194 = memref.load %arg1[%c0_140, %c3_141] : memref<2x9xf32, #tpu.memory_space<smem>>
    %195 = vector.broadcast %194 : f32 to vector<1x256xf32>
    %196 = arith.mulf %193, %195 : vector<1x256xf32>
    %c1_i32_142 = arith.constant 1 : i32
    %197 = tpu.dynamic_rotate %154 by %c1_i32_142 dim 1 : vector<1x256xf32>, i32 -> vector<1x256xf32>
    %c1_143 = arith.constant 1 : index
    %c3_144 = arith.constant 3 : index
    %198 = memref.load %arg1[%c1_143, %c3_144] : memref<2x9xf32, #tpu.memory_space<smem>>
    %199 = vector.broadcast %198 : f32 to vector<1x256xf32>
    %200 = arith.mulf %197, %199 : vector<1x256xf32>
    %201 = arith.addf %196, %200 : vector<1x256xf32>
    %202 = arith.mulf %201, %192 : vector<1x256xf32>
    %203 = arith.addf %191, %202 : vector<1x256xf32>
    %c4_145 = arith.constant 4 : index
    %c0_146 = arith.constant 0 : index
    %204 = vector.load %arg14[%c4_145, %c0_146] : memref<9x256xf32, #tpu.memory_space<vmem>>, vector<1x256xf32>
    %c0_147 = arith.constant 0 : index
    %c4_148 = arith.constant 4 : index
    %205 = memref.load %arg1[%c0_147, %c4_148] : memref<2x9xf32, #tpu.memory_space<smem>>
    %206 = vector.broadcast %205 : f32 to vector<1x256xf32>
    %207 = arith.mulf %150, %206 : vector<1x256xf32>
    %c1_149 = arith.constant 1 : index
    %c4_150 = arith.constant 4 : index
    %208 = memref.load %arg1[%c1_149, %c4_150] : memref<2x9xf32, #tpu.memory_space<smem>>
    %209 = vector.broadcast %208 : f32 to vector<1x256xf32>
    %210 = arith.mulf %154, %209 : vector<1x256xf32>
    %211 = arith.addf %207, %210 : vector<1x256xf32>
    %212 = arith.mulf %211, %204 : vector<1x256xf32>
    %213 = arith.addf %203, %212 : vector<1x256xf32>
    %c5_151 = arith.constant 5 : index
    %c0_152 = arith.constant 0 : index
    %214 = vector.load %arg14[%c5_151, %c0_152] : memref<9x256xf32, #tpu.memory_space<vmem>>, vector<1x256xf32>
    %c255_i32_153 = arith.constant 255 : i32
    %215 = tpu.dynamic_rotate %150 by %c255_i32_153 dim 1 : vector<1x256xf32>, i32 -> vector<1x256xf32>
    %c0_154 = arith.constant 0 : index
    %c5_155 = arith.constant 5 : index
    %216 = memref.load %arg1[%c0_154, %c5_155] : memref<2x9xf32, #tpu.memory_space<smem>>
    %217 = vector.broadcast %216 : f32 to vector<1x256xf32>
    %218 = arith.mulf %215, %217 : vector<1x256xf32>
    %c255_i32_156 = arith.constant 255 : i32
    %219 = tpu.dynamic_rotate %154 by %c255_i32_156 dim 1 : vector<1x256xf32>, i32 -> vector<1x256xf32>
    %c1_157 = arith.constant 1 : index
    %c5_158 = arith.constant 5 : index
    %220 = memref.load %arg1[%c1_157, %c5_158] : memref<2x9xf32, #tpu.memory_space<smem>>
    %221 = vector.broadcast %220 : f32 to vector<1x256xf32>
    %222 = arith.mulf %219, %221 : vector<1x256xf32>
    %223 = arith.addf %218, %222 : vector<1x256xf32>
    %224 = arith.mulf %223, %214 : vector<1x256xf32>
    %225 = arith.addf %213, %224 : vector<1x256xf32>
    %c6_159 = arith.constant 6 : index
    %c0_160 = arith.constant 0 : index
    %226 = vector.load %arg14[%c6_159, %c0_160] : memref<9x256xf32, #tpu.memory_space<vmem>>, vector<1x256xf32>
    %c241_i32_161 = arith.constant 241 : i32
    %227 = tpu.dynamic_rotate %150 by %c241_i32_161 dim 1 : vector<1x256xf32>, i32 -> vector<1x256xf32>
    %c0_162 = arith.constant 0 : index
    %c6_163 = arith.constant 6 : index
    %228 = memref.load %arg1[%c0_162, %c6_163] : memref<2x9xf32, #tpu.memory_space<smem>>
    %229 = vector.broadcast %228 : f32 to vector<1x256xf32>
    %230 = arith.mulf %227, %229 : vector<1x256xf32>
    %c241_i32_164 = arith.constant 241 : i32
    %231 = tpu.dynamic_rotate %154 by %c241_i32_164 dim 1 : vector<1x256xf32>, i32 -> vector<1x256xf32>
    %c1_165 = arith.constant 1 : index
    %c6_166 = arith.constant 6 : index
    %232 = memref.load %arg1[%c1_165, %c6_166] : memref<2x9xf32, #tpu.memory_space<smem>>
    %233 = vector.broadcast %232 : f32 to vector<1x256xf32>
    %234 = arith.mulf %231, %233 : vector<1x256xf32>
    %235 = arith.addf %230, %234 : vector<1x256xf32>
    %236 = arith.mulf %235, %226 : vector<1x256xf32>
    %237 = arith.addf %225, %236 : vector<1x256xf32>
    %c7_167 = arith.constant 7 : index
    %c0_168 = arith.constant 0 : index
    %238 = vector.load %arg14[%c7_167, %c0_168] : memref<9x256xf32, #tpu.memory_space<vmem>>, vector<1x256xf32>
    %c240_i32_169 = arith.constant 240 : i32
    %239 = tpu.dynamic_rotate %150 by %c240_i32_169 dim 1 : vector<1x256xf32>, i32 -> vector<1x256xf32>
    %c0_170 = arith.constant 0 : index
    %c7_171 = arith.constant 7 : index
    %240 = memref.load %arg1[%c0_170, %c7_171] : memref<2x9xf32, #tpu.memory_space<smem>>
    %241 = vector.broadcast %240 : f32 to vector<1x256xf32>
    %242 = arith.mulf %239, %241 : vector<1x256xf32>
    %c240_i32_172 = arith.constant 240 : i32
    %243 = tpu.dynamic_rotate %154 by %c240_i32_172 dim 1 : vector<1x256xf32>, i32 -> vector<1x256xf32>
    %c1_173 = arith.constant 1 : index
    %c7_174 = arith.constant 7 : index
    %244 = memref.load %arg1[%c1_173, %c7_174] : memref<2x9xf32, #tpu.memory_space<smem>>
    %245 = vector.broadcast %244 : f32 to vector<1x256xf32>
    %246 = arith.mulf %243, %245 : vector<1x256xf32>
    %247 = arith.addf %242, %246 : vector<1x256xf32>
    %248 = arith.mulf %247, %238 : vector<1x256xf32>
    %249 = arith.addf %237, %248 : vector<1x256xf32>
    %c8_175 = arith.constant 8 : index
    %c0_176 = arith.constant 0 : index
    %250 = vector.load %arg14[%c8_175, %c0_176] : memref<9x256xf32, #tpu.memory_space<vmem>>, vector<1x256xf32>
    %c239_i32_177 = arith.constant 239 : i32
    %251 = tpu.dynamic_rotate %150 by %c239_i32_177 dim 1 : vector<1x256xf32>, i32 -> vector<1x256xf32>
    %c0_178 = arith.constant 0 : index
    %c8_179 = arith.constant 8 : index
    %252 = memref.load %arg1[%c0_178, %c8_179] : memref<2x9xf32, #tpu.memory_space<smem>>
    %253 = vector.broadcast %252 : f32 to vector<1x256xf32>
    %254 = arith.mulf %251, %253 : vector<1x256xf32>
    %c239_i32_180 = arith.constant 239 : i32
    %255 = tpu.dynamic_rotate %154 by %c239_i32_180 dim 1 : vector<1x256xf32>, i32 -> vector<1x256xf32>
    %c1_181 = arith.constant 1 : index
    %c8_182 = arith.constant 8 : index
    %256 = memref.load %arg1[%c1_181, %c8_182] : memref<2x9xf32, #tpu.memory_space<smem>>
    %257 = vector.broadcast %256 : f32 to vector<1x256xf32>
    %258 = arith.mulf %255, %257 : vector<1x256xf32>
    %259 = arith.addf %254, %258 : vector<1x256xf32>
    %260 = arith.mulf %259, %250 : vector<1x256xf32>
    %261 = arith.addf %249, %260 : vector<1x256xf32>
    %c0_183 = arith.constant 0 : index
    %262 = memref.load %arg2[%c0_183] : memref<1xf32, #tpu.memory_space<smem>>
    %263 = vector.broadcast %262 : f32 to vector<1x256xf32>
    %264 = arith.addf %261, %263 : vector<1x256xf32>
    %265 = arith.negf %264 : vector<1x256xf32>
    %266 = math.exp %265 : vector<1x256xf32>
    %cst_184 = arith.constant 1.000000e+00 : f32
    %267 = vector.broadcast %cst_184 : f32 to vector<1x256xf32>
    %268 = arith.addf %267, %266 : vector<1x256xf32>
    %269 = arith.divf %267, %268 : vector<1x256xf32>
    %270 = vector.broadcast %146 : vector<32x1xf32> to vector<32x256xf32>
    %271 = vector.broadcast %269 : vector<1x256xf32> to vector<32x256xf32>
    %272 = arith.mulf %270, %271 : vector<32x256xf32>
    %cst_185 = arith.constant 1.000000e+00 : f32
    %273 = vector.broadcast %cst_185 : f32 to vector<32x256xf32>
    %274 = arith.addf %272, %273 : vector<32x256xf32>
    %275 = arith.mulf %116, %274 : vector<32x256xf32>
    %c0_186 = arith.constant 0 : index
    %c0_187 = arith.constant 0 : index
    %276 = vector.load %arg15[%c0_186, %c0_187] : memref<32x256xf32, #tpu.memory_space<vmem>>, vector<32x256xf32>
    tpu.vector_store %arg15[%c0_186, %c0_187], %275 {strides = array<i32>} : memref<32x256xf32, #tpu.memory_space<vmem>>, vector<32x256xf32>,
    return
  }
  func.func @transform_0(%arg0: i32, %arg1: memref<2x9xf32, #tpu.memory_space<smem>>, %arg2: memref<1xf32, #tpu.memory_space<smem>>) -> (i32, i32) {
    %c0_i32 = arith.constant 0 : i32
    %c0_i32_0 = arith.constant 0 : i32
    return %c0_i32, %arg0 : i32, i32
  }
  func.func @transform_1(%arg0: i32, %arg1: memref<2x9xf32, #tpu.memory_space<smem>>, %arg2: memref<1xf32, #tpu.memory_space<smem>>) -> (i32, i32) {
    %c0_i32 = arith.constant 0 : i32
    %c0_i32_0 = arith.constant 0 : i32
    %c0_i32_1 = arith.constant 0 : i32
    return %c0_i32, %c0_i32_0 : i32, i32
  }
  func.func @transform_2(%arg0: i32, %arg1: memref<2x9xf32, #tpu.memory_space<smem>>, %arg2: memref<1xf32, #tpu.memory_space<smem>>) -> (i32, i32) {
    %c0_i32 = arith.constant 0 : i32
    %c0_i32_0 = arith.constant 0 : i32
    %c0_i32_1 = arith.constant 0 : i32
    return %c0_i32, %c0_i32_0 : i32, i32
  }
  func.func @transform_3(%arg0: i32, %arg1: memref<2x9xf32, #tpu.memory_space<smem>>, %arg2: memref<1xf32, #tpu.memory_space<smem>>) -> (i32, i32) {
    %c0_i32 = arith.constant 0 : i32
    %c0_i32_0 = arith.constant 0 : i32
    %c0_i32_1 = arith.constant 0 : i32
    return %c0_i32, %c0_i32_0 : i32, i32
  }
  func.func @transform_4(%arg0: i32, %arg1: memref<2x9xf32, #tpu.memory_space<smem>>, %arg2: memref<1xf32, #tpu.memory_space<smem>>) -> (i32, i32) {
    %c0_i32 = arith.constant 0 : i32
    %c0_i32_0 = arith.constant 0 : i32
    %c0_i32_1 = arith.constant 0 : i32
    return %c0_i32, %c0_i32_0 : i32, i32
  }
  func.func @transform_5(%arg0: i32, %arg1: memref<2x9xf32, #tpu.memory_space<smem>>, %arg2: memref<1xf32, #tpu.memory_space<smem>>) -> (i32, i32) {
    %c0_i32 = arith.constant 0 : i32
    %c0_i32_0 = arith.constant 0 : i32
    %c0_i32_1 = arith.constant 0 : i32
    return %c0_i32, %c0_i32_0 : i32, i32
  }
  func.func @transform_6(%arg0: i32, %arg1: memref<2x9xf32, #tpu.memory_space<smem>>, %arg2: memref<1xf32, #tpu.memory_space<smem>>) -> (i32, i32) {
    %c0_i32 = arith.constant 0 : i32
    %c0_i32_0 = arith.constant 0 : i32
    %c0_i32_1 = arith.constant 0 : i32
    return %c0_i32, %c0_i32_0 : i32, i32
  }
  func.func @transform_7(%arg0: i32, %arg1: memref<2x9xf32, #tpu.memory_space<smem>>, %arg2: memref<1xf32, #tpu.memory_space<smem>>) -> (i32, i32) {
    %c0_i32 = arith.constant 0 : i32
    %c0_i32_0 = arith.constant 0 : i32
    %c0_i32_1 = arith.constant 0 : i32
    return %c0_i32, %c0_i32_0 : i32, i32
  }
  func.func @transform_8(%arg0: i32, %arg1: memref<2x9xf32, #tpu.memory_space<smem>>, %arg2: memref<1xf32, #tpu.memory_space<smem>>) -> (i32, i32) {
    %c0_i32 = arith.constant 0 : i32
    %c0_i32_0 = arith.constant 0 : i32
    %c0_i32_1 = arith.constant 0 : i32
    return %c0_i32, %c0_i32_0 : i32, i32
  }
  func.func @transform_9(%arg0: i32, %arg1: memref<2x9xf32, #tpu.memory_space<smem>>, %arg2: memref<1xf32, #tpu.memory_space<smem>>) -> (i32, i32) {
    %c0_i32 = arith.constant 0 : i32
    %c0_i32_0 = arith.constant 0 : i32
    %c0_i32_1 = arith.constant 0 : i32
    return %c0_i32, %c0_i32_0 : i32, i32
  }
  func.func @transform_10(%arg0: i32, %arg1: memref<2x9xf32, #tpu.memory_space<smem>>, %arg2: memref<1xf32, #tpu.memory_space<smem>>) -> (i32, i32) {
    %c0_i32 = arith.constant 0 : i32
    %c0_i32_0 = arith.constant 0 : i32
    %c0_i32_1 = arith.constant 0 : i32
    return %c0_i32, %c0_i32_0 : i32, i32
  }
  func.func @transform_11(%arg0: i32, %arg1: memref<2x9xf32, #tpu.memory_space<smem>>, %arg2: memref<1xf32, #tpu.memory_space<smem>>) -> (i32, i32) {
    %c0_i32 = arith.constant 0 : i32
    %c0_i32_0 = arith.constant 0 : i32
    %c0_i32_1 = arith.constant 0 : i32
    return %c0_i32, %c0_i32_0 : i32, i32
  }
  func.func @transform_12(%arg0: i32, %arg1: memref<2x9xf32, #tpu.memory_space<smem>>, %arg2: memref<1xf32, #tpu.memory_space<smem>>) -> (i32, i32) {
    %c0_i32 = arith.constant 0 : i32
    %c0_i32_0 = arith.constant 0 : i32
    return %c0_i32, %arg0 : i32, i32
  }
}

module attributes {stable_mosaic.version = 11 : i64} {
  func.func @_res_cbam_kernel(%arg0: i32, %arg1: memref<2x9xf32, #tpu.memory_space<smem>>, %arg2: memref<1xf32, #tpu.memory_space<smem>>, %arg3: memref<64x256xf32, #tpu.memory_space<vmem>>, %arg4: memref<32x144xf32, #tpu.memory_space<vmem>>, %arg5: memref<32x1xf32, #tpu.memory_space<vmem>>, %arg6: memref<32x288xf32, #tpu.memory_space<vmem>>, %arg7: memref<32x1xf32, #tpu.memory_space<vmem>>, %arg8: memref<32x16xf32, #tpu.memory_space<vmem>>, %arg9: memref<32x1xf32, #tpu.memory_space<vmem>>, %arg10: memref<32x8xf32, #tpu.memory_space<vmem>>, %arg11: memref<32x8xf32, #tpu.memory_space<vmem>>, %arg12: memref<9x256xf32, #tpu.memory_space<vmem>>, %arg13: memref<9x256xf32, #tpu.memory_space<vmem>>, %arg14: memref<9x256xf32, #tpu.memory_space<vmem>>, %arg15: memref<32x256xf32, #tpu.memory_space<vmem>>, %arg16: memref<288x256xf32, #tpu.memory_space<vmem>>) attributes {dimension_semantics = [#tpu.dimension_semantics<parallel>], iteration_bounds = array<i64: 4>, scalar_prefetch = 2 : i64, scratch_operands = 1 : i64, tpu.core_type = #tpu.core_type<tc>, window_params = [{transform_indices = @transform_0, window_bounds = array<i64: 64, 256>}, {pipeline_mode = #tpu.pipeline_mode<synchronous>, transform_indices = @transform_1, window_bounds = array<i64: 32, 144>}, {pipeline_mode = #tpu.pipeline_mode<synchronous>, transform_indices = @transform_2, window_bounds = array<i64: 32, 1>}, {pipeline_mode = #tpu.pipeline_mode<synchronous>, transform_indices = @transform_3, window_bounds = array<i64: 32, 288>}, {pipeline_mode = #tpu.pipeline_mode<synchronous>, transform_indices = @transform_4, window_bounds = array<i64: 32, 1>}, {pipeline_mode = #tpu.pipeline_mode<synchronous>, transform_indices = @transform_5, window_bounds = array<i64: 32, 16>}, {pipeline_mode = #tpu.pipeline_mode<synchronous>, transform_indices = @transform_6, window_bounds = array<i64: 32, 1>}, {pipeline_mode = #tpu.pipeline_mode<synchronous>, transform_indices = @transform_7, window_bounds = array<i64: 32, 8>}, {pipeline_mode = #tpu.pipeline_mode<synchronous>, transform_indices = @transform_8, window_bounds = array<i64: 32, 8>}, {pipeline_mode = #tpu.pipeline_mode<synchronous>, transform_indices = @transform_9, window_bounds = array<i64: 9, 256>}, {pipeline_mode = #tpu.pipeline_mode<synchronous>, transform_indices = @transform_10, window_bounds = array<i64: 9, 256>}, {pipeline_mode = #tpu.pipeline_mode<synchronous>, transform_indices = @transform_11, window_bounds = array<i64: 9, 256>}, {transform_indices = @transform_12, window_bounds = array<i64: 32, 256>}]} {
    %c48 = arith.constant 48 : index
    %c0 = arith.constant 0 : index
    %0 = vector.load %arg3[%c48, %c0] : memref<64x256xf32, #tpu.memory_space<vmem>>, vector<16x256xf32>
    %c17_i32 = arith.constant 17 : i32
    %1 = tpu.dynamic_rotate %0 by %c17_i32 dim 1 : vector<16x256xf32>, i32 -> vector<16x256xf32>
    %c0_0 = arith.constant 0 : index
    %c0_1 = arith.constant 0 : index
    %2 = vector.load %arg12[%c0_0, %c0_1] : memref<9x256xf32, #tpu.memory_space<vmem>>, vector<1x256xf32>
    %3 = vector.broadcast %2 : vector<1x256xf32> to vector<16x256xf32>
    %4 = arith.mulf %1, %3 : vector<16x256xf32>
    %c0_2 = arith.constant 0 : index
    %c0_3 = arith.constant 0 : index
    %5 = vector.load %arg16[%c0_2, %c0_3] : memref<288x256xf32, #tpu.memory_space<vmem>>, vector<16x256xf32>
    tpu.vector_store %arg16[%c0_2, %c0_3], %4 {strides = array<i32>} : memref<288x256xf32, #tpu.memory_space<vmem>>, vector<16x256xf32>,
    %c32 = arith.constant 32 : index
    %c0_4 = arith.constant 0 : index
    %6 = vector.load %arg3[%c32, %c0_4] : memref<64x256xf32, #tpu.memory_space<vmem>>, vector<16x256xf32>
    %c16_i32 = arith.constant 16 : i32
    %7 = tpu.dynamic_rotate %6 by %c16_i32 dim 1 : vector<16x256xf32>, i32 -> vector<16x256xf32>
    %c1 = arith.constant 1 : index
    %c0_5 = arith.constant 0 : index
    %8 = vector.load %arg12[%c1, %c0_5] : memref<9x256xf32, #tpu.memory_space<vmem>>, vector<1x256xf32>
    %9 = vector.broadcast %8 : vector<1x256xf32> to vector<16x256xf32>
    %10 = arith.mulf %7, %9 : vector<16x256xf32>
    %c16 = arith.constant 16 : index
    %c0_6 = arith.constant 0 : index
    %11 = vector.load %arg16[%c16, %c0_6] : memref<288x256xf32, #tpu.memory_space<vmem>>, vector<16x256xf32>
    tpu.vector_store %arg16[%c16, %c0_6], %10 {strides = array<i32>} : memref<288x256xf32, #tpu.memory_space<vmem>>, vector<16x256xf32>,
    %c48_7 = arith.constant 48 : index
    %c0_8 = arith.constant 0 : index
    %12 = vector.load %arg3[%c48_7, %c0_8] : memref<64x256xf32, #tpu.memory_space<vmem>>, vector<16x256xf32>
    %c16_i32_9 = arith.constant 16 : i32
    %13 = tpu.dynamic_rotate %12 by %c16_i32_9 dim 1 : vector<16x256xf32>, i32 -> vector<16x256xf32>
    %c2 = arith.constant 2 : index
    %c0_10 = arith.constant 0 : index
    %14 = vector.load %arg12[%c2, %c0_10] : memref<9x256xf32, #tpu.memory_space<vmem>>, vector<1x256xf32>
    %15 = vector.broadcast %14 : vector<1x256xf32> to vector<16x256xf32>
    %16 = arith.mulf %13, %15 : vector<16x256xf32>
    %c32_11 = arith.constant 32 : index
    %c0_12 = arith.constant 0 : index
    %17 = vector.load %arg16[%c32_11, %c0_12] : memref<288x256xf32, #tpu.memory_space<vmem>>, vector<16x256xf32>
    tpu.vector_store %arg16[%c32_11, %c0_12], %16 {strides = array<i32>} : memref<288x256xf32, #tpu.memory_space<vmem>>, vector<16x256xf32>,
    %c16_13 = arith.constant 16 : index
    %c0_14 = arith.constant 0 : index
    %18 = vector.load %arg3[%c16_13, %c0_14] : memref<64x256xf32, #tpu.memory_space<vmem>>, vector<16x256xf32>
    %c1_i32 = arith.constant 1 : i32
    %19 = tpu.dynamic_rotate %18 by %c1_i32 dim 1 : vector<16x256xf32>, i32 -> vector<16x256xf32>
    %c3 = arith.constant 3 : index
    %c0_15 = arith.constant 0 : index
    %20 = vector.load %arg12[%c3, %c0_15] : memref<9x256xf32, #tpu.memory_space<vmem>>, vector<1x256xf32>
    %21 = vector.broadcast %20 : vector<1x256xf32> to vector<16x256xf32>
    %22 = arith.mulf %19, %21 : vector<16x256xf32>
    %c48_16 = arith.constant 48 : index
    %c0_17 = arith.constant 0 : index
    %23 = vector.load %arg16[%c48_16, %c0_17] : memref<288x256xf32, #tpu.memory_space<vmem>>, vector<16x256xf32>
    tpu.vector_store %arg16[%c48_16, %c0_17], %22 {strides = array<i32>} : memref<288x256xf32, #tpu.memory_space<vmem>>, vector<16x256xf32>,
    %c0_18 = arith.constant 0 : index
    %c0_19 = arith.constant 0 : index
    %24 = vector.load %arg3[%c0_18, %c0_19] : memref<64x256xf32, #tpu.memory_space<vmem>>, vector<16x256xf32>
    %c4 = arith.constant 4 : index
    %c0_20 = arith.constant 0 : index
    %25 = vector.load %arg12[%c4, %c0_20] : memref<9x256xf32, #tpu.memory_space<vmem>>, vector<1x256xf32>
    %26 = vector.broadcast %25 : vector<1x256xf32> to vector<16x256xf32>
    %27 = arith.mulf %24, %26 : vector<16x256xf32>
    %c64 = arith.constant 64 : index
    %c0_21 = arith.constant 0 : index
    %28 = vector.load %arg16[%c64, %c0_21] : memref<288x256xf32, #tpu.memory_space<vmem>>, vector<16x256xf32>
    tpu.vector_store %arg16[%c64, %c0_21], %27 {strides = array<i32>} : memref<288x256xf32, #tpu.memory_space<vmem>>, vector<16x256xf32>,
    %c16_22 = arith.constant 16 : index
    %c0_23 = arith.constant 0 : index
    %29 = vector.load %arg3[%c16_22, %c0_23] : memref<64x256xf32, #tpu.memory_space<vmem>>, vector<16x256xf32>
    %c5 = arith.constant 5 : index
    %c0_24 = arith.constant 0 : index
    %30 = vector.load %arg12[%c5, %c0_24] : memref<9x256xf32, #tpu.memory_space<vmem>>, vector<1x256xf32>
    %31 = vector.broadcast %30 : vector<1x256xf32> to vector<16x256xf32>
    %32 = arith.mulf %29, %31 : vector<16x256xf32>
    %c80 = arith.constant 80 : index
    %c0_25 = arith.constant 0 : index
    %33 = vector.load %arg16[%c80, %c0_25] : memref<288x256xf32, #tpu.memory_space<vmem>>, vector<16x256xf32>
    tpu.vector_store %arg16[%c80, %c0_25], %32 {strides = array<i32>} : memref<288x256xf32, #tpu.memory_space<vmem>>, vector<16x256xf32>,
    %c48_26 = arith.constant 48 : index
    %c0_27 = arith.constant 0 : index
    %34 = vector.load %arg3[%c48_26, %c0_27] : memref<64x256xf32, #tpu.memory_space<vmem>>, vector<16x256xf32>
    %c1_i32_28 = arith.constant 1 : i32
    %35 = tpu.dynamic_rotate %34 by %c1_i32_28 dim 1 : vector<16x256xf32>, i32 -> vector<16x256xf32>
    %c6 = arith.constant 6 : index
    %c0_29 = arith.constant 0 : index
    %36 = vector.load %arg12[%c6, %c0_29] : memref<9x256xf32, #tpu.memory_space<vmem>>, vector<1x256xf32>
    %37 = vector.broadcast %36 : vector<1x256xf32> to vector<16x256xf32>
    %38 = arith.mulf %35, %37 : vector<16x256xf32>
    %c96 = arith.constant 96 : index
    %c0_30 = arith.constant 0 : index
    %39 = vector.load %arg16[%c96, %c0_30] : memref<288x256xf32, #tpu.memory_space<vmem>>, vector<16x256xf32>
    tpu.vector_store %arg16[%c96, %c0_30], %38 {strides = array<i32>} : memref<288x256xf32, #tpu.memory_space<vmem>>, vector<16x256xf32>,
    %c32_31 = arith.constant 32 : index
    %c0_32 = arith.constant 0 : index
    %40 = vector.load %arg3[%c32_31, %c0_32] : memref<64x256xf32, #tpu.memory_space<vmem>>, vector<16x256xf32>
    %c7 = arith.constant 7 : index
    %c0_33 = arith.constant 0 : index
    %41 = vector.load %arg12[%c7, %c0_33] : memref<9x256xf32, #tpu.memory_space<vmem>>, vector<1x256xf32>
    %42 = vector.broadcast %41 : vector<1x256xf32> to vector<16x256xf32>
    %43 = arith.mulf %40, %42 : vector<16x256xf32>
    %c112 = arith.constant 112 : index
    %c0_34 = arith.constant 0 : index
    %44 = vector.load %arg16[%c112, %c0_34] : memref<288x256xf32, #tpu.memory_space<vmem>>, vector<16x256xf32>
    tpu.vector_store %arg16[%c112, %c0_34], %43 {strides = array<i32>} : memref<288x256xf32, #tpu.memory_space<vmem>>, vector<16x256xf32>,
    %c48_35 = arith.constant 48 : index
    %c0_36 = arith.constant 0 : index
    %45 = vector.load %arg3[%c48_35, %c0_36] : memref<64x256xf32, #tpu.memory_space<vmem>>, vector<16x256xf32>
    %c8 = arith.constant 8 : index
    %c0_37 = arith.constant 0 : index
    %46 = vector.load %arg12[%c8, %c0_37] : memref<9x256xf32, #tpu.memory_space<vmem>>, vector<1x256xf32>
    %47 = vector.broadcast %46 : vector<1x256xf32> to vector<16x256xf32>
    %48 = arith.mulf %45, %47 : vector<16x256xf32>
    %c128 = arith.constant 128 : index
    %c0_38 = arith.constant 0 : index
    %49 = vector.load %arg16[%c128, %c0_38] : memref<288x256xf32, #tpu.memory_space<vmem>>, vector<16x256xf32>
    tpu.vector_store %arg16[%c128, %c0_38], %48 {strides = array<i32>} : memref<288x256xf32, #tpu.memory_space<vmem>>, vector<16x256xf32>,
    %c0_39 = arith.constant 0 : index
    %c0_40 = arith.constant 0 : index
    %50 = vector.load %arg4[%c0_39, %c0_40] : memref<32x144xf32, #tpu.memory_space<vmem>>, vector<32x144xf32>
    %c0_41 = arith.constant 0 : index
    %c0_42 = arith.constant 0 : index
    %51 = vector.load %arg16[%c0_41, %c0_42] : memref<288x256xf32, #tpu.memory_space<vmem>>, vector<144x256xf32>
    %cst = arith.constant dense<0.000000e+00> : vector<32x256xf32>
    %52 = tpu.matmul %50, %51, %cst {dimension_numbers = #tpu.dot_dimension_numbers<[1], [0], [0], [1], [0, 0, 1, 1], [], []>} : vector<32x144xf32>, vector<144x256xf32>, vector<32x256xf32> -> vector<32x256xf32>
    %c0_43 = arith.constant 0 : index
    %c0_44 = arith.constant 0 : index
    %53 = vector.load %arg5[%c0_43, %c0_44] : memref<32x1xf32, #tpu.memory_space<vmem>>, vector<32x1xf32>
    %54 = vector.broadcast %53 : vector<32x1xf32> to vector<32x256xf32>
    %55 = arith.addf %52, %54 : vector<32x256xf32>
    %cst_45 = arith.constant 0.000000e+00 : f32
    %56 = vector.broadcast %cst_45 : f32 to vector<32x256xf32>
    %57 = arith.maximumf %55, %56 : vector<32x256xf32>
    %c17_i32_46 = arith.constant 17 : i32
    %58 = tpu.dynamic_rotate %57 by %c17_i32_46 dim 1 : vector<32x256xf32>, i32 -> vector<32x256xf32>
    %c0_47 = arith.constant 0 : index
    %c0_48 = arith.constant 0 : index
    %59 = vector.load %arg13[%c0_47, %c0_48] : memref<9x256xf32, #tpu.memory_space<vmem>>, vector<1x256xf32>
    %60 = vector.broadcast %59 : vector<1x256xf32> to vector<32x256xf32>
    %61 = arith.mulf %58, %60 : vector<32x256xf32>
    %c0_49 = arith.constant 0 : index
    %c0_50 = arith.constant 0 : index
    %62 = vector.load %arg16[%c0_49, %c0_50] : memref<288x256xf32, #tpu.memory_space<vmem>>, vector<32x256xf32>
    tpu.vector_store %arg16[%c0_49, %c0_50], %61 {strides = array<i32>} : memref<288x256xf32, #tpu.memory_space<vmem>>, vector<32x256xf32>,
    %c16_i32_51 = arith.constant 16 : i32
    %63 = tpu.dynamic_rotate %57 by %c16_i32_51 dim 1 : vector<32x256xf32>, i32 -> vector<32x256xf32>
    %c1_52 = arith.constant 1 : index
    %c0_53 = arith.constant 0 : index
    %64 = vector.load %arg13[%c1_52, %c0_53] : memref<9x256xf32, #tpu.memory_space<vmem>>, vector<1x256xf32>
    %65 = vector.broadcast %64 : vector<1x256xf32> to vector<32x256xf32>
    %66 = arith.mulf %63, %65 : vector<32x256xf32>
    %c32_54 = arith.constant 32 : index
    %c0_55 = arith.constant 0 : index
    %67 = vector.load %arg16[%c32_54, %c0_55] : memref<288x256xf32, #tpu.memory_space<vmem>>, vector<32x256xf32>
    tpu.vector_store %arg16[%c32_54, %c0_55], %66 {strides = array<i32>} : memref<288x256xf32, #tpu.memory_space<vmem>>, vector<32x256xf32>,
    %c15_i32 = arith.constant 15 : i32
    %68 = tpu.dynamic_rotate %57 by %c15_i32 dim 1 : vector<32x256xf32>, i32 -> vector<32x256xf32>
    %c2_56 = arith.constant 2 : index
    %c0_57 = arith.constant 0 : index
    %69 = vector.load %arg13[%c2_56, %c0_57] : memref<9x256xf32, #tpu.memory_space<vmem>>, vector<1x256xf32>
    %70 = vector.broadcast %69 : vector<1x256xf32> to vector<32x256xf32>
    %71 = arith.mulf %68, %70 : vector<32x256xf32>
    %c64_58 = arith.constant 64 : index
    %c0_59 = arith.constant 0 : index
    %72 = vector.load %arg16[%c64_58, %c0_59] : memref<288x256xf32, #tpu.memory_space<vmem>>, vector<32x256xf32>
    tpu.vector_store %arg16[%c64_58, %c0_59], %71 {strides = array<i32>} : memref<288x256xf32, #tpu.memory_space<vmem>>, vector<32x256xf32>,
    %c1_i32_60 = arith.constant 1 : i32
    %73 = tpu.dynamic_rotate %57 by %c1_i32_60 dim 1 : vector<32x256xf32>, i32 -> vector<32x256xf32>
    %c3_61 = arith.constant 3 : index
    %c0_62 = arith.constant 0 : index
    %74 = vector.load %arg13[%c3_61, %c0_62] : memref<9x256xf32, #tpu.memory_space<vmem>>, vector<1x256xf32>
    %75 = vector.broadcast %74 : vector<1x256xf32> to vector<32x256xf32>
    %76 = arith.mulf %73, %75 : vector<32x256xf32>
    %c96_63 = arith.constant 96 : index
    %c0_64 = arith.constant 0 : index
    %77 = vector.load %arg16[%c96_63, %c0_64] : memref<288x256xf32, #tpu.memory_space<vmem>>, vector<32x256xf32>
    tpu.vector_store %arg16[%c96_63, %c0_64], %76 {strides = array<i32>} : memref<288x256xf32, #tpu.memory_space<vmem>>, vector<32x256xf32>,
    %c4_65 = arith.constant 4 : index
    %c0_66 = arith.constant 0 : index
    %78 = vector.load %arg13[%c4_65, %c0_66] : memref<9x256xf32, #tpu.memory_space<vmem>>, vector<1x256xf32>
    %79 = vector.broadcast %78 : vector<1x256xf32> to vector<32x256xf32>
    %80 = arith.mulf %57, %79 : vector<32x256xf32>
    %c128_67 = arith.constant 128 : index
    %c0_68 = arith.constant 0 : index
    %81 = vector.load %arg16[%c128_67, %c0_68] : memref<288x256xf32, #tpu.memory_space<vmem>>, vector<32x256xf32>
    tpu.vector_store %arg16[%c128_67, %c0_68], %80 {strides = array<i32>} : memref<288x256xf32, #tpu.memory_space<vmem>>, vector<32x256xf32>,
    %c255_i32 = arith.constant 255 : i32
    %82 = tpu.dynamic_rotate %57 by %c255_i32 dim 1 : vector<32x256xf32>, i32 -> vector<32x256xf32>
    %c5_69 = arith.constant 5 : index
    %c0_70 = arith.constant 0 : index
    %83 = vector.load %arg13[%c5_69, %c0_70] : memref<9x256xf32, #tpu.memory_space<vmem>>, vector<1x256xf32>
    %84 = vector.broadcast %83 : vector<1x256xf32> to vector<32x256xf32>
    %85 = arith.mulf %82, %84 : vector<32x256xf32>
    %c160 = arith.constant 160 : index
    %c0_71 = arith.constant 0 : index
    %86 = vector.load %arg16[%c160, %c0_71] : memref<288x256xf32, #tpu.memory_space<vmem>>, vector<32x256xf32>
    tpu.vector_store %arg16[%c160, %c0_71], %85 {strides = array<i32>} : memref<288x256xf32, #tpu.memory_space<vmem>>, vector<32x256xf32>,
    %c241_i32 = arith.constant 241 : i32
    %87 = tpu.dynamic_rotate %57 by %c241_i32 dim 1 : vector<32x256xf32>, i32 -> vector<32x256xf32>
    %c6_72 = arith.constant 6 : index
    %c0_73 = arith.constant 0 : index
    %88 = vector.load %arg13[%c6_72, %c0_73] : memref<9x256xf32, #tpu.memory_space<vmem>>, vector<1x256xf32>
    %89 = vector.broadcast %88 : vector<1x256xf32> to vector<32x256xf32>
    %90 = arith.mulf %87, %89 : vector<32x256xf32>
    %c192 = arith.constant 192 : index
    %c0_74 = arith.constant 0 : index
    %91 = vector.load %arg16[%c192, %c0_74] : memref<288x256xf32, #tpu.memory_space<vmem>>, vector<32x256xf32>
    tpu.vector_store %arg16[%c192, %c0_74], %90 {strides = array<i32>} : memref<288x256xf32, #tpu.memory_space<vmem>>, vector<32x256xf32>,
    %c240_i32 = arith.constant 240 : i32
    %92 = tpu.dynamic_rotate %57 by %c240_i32 dim 1 : vector<32x256xf32>, i32 -> vector<32x256xf32>
    %c7_75 = arith.constant 7 : index
    %c0_76 = arith.constant 0 : index
    %93 = vector.load %arg13[%c7_75, %c0_76] : memref<9x256xf32, #tpu.memory_space<vmem>>, vector<1x256xf32>
    %94 = vector.broadcast %93 : vector<1x256xf32> to vector<32x256xf32>
    %95 = arith.mulf %92, %94 : vector<32x256xf32>
    %c224 = arith.constant 224 : index
    %c0_77 = arith.constant 0 : index
    %96 = vector.load %arg16[%c224, %c0_77] : memref<288x256xf32, #tpu.memory_space<vmem>>, vector<32x256xf32>
    tpu.vector_store %arg16[%c224, %c0_77], %95 {strides = array<i32>} : memref<288x256xf32, #tpu.memory_space<vmem>>, vector<32x256xf32>,
    %c239_i32 = arith.constant 239 : i32
    %97 = tpu.dynamic_rotate %57 by %c239_i32 dim 1 : vector<32x256xf32>, i32 -> vector<32x256xf32>
    %c8_78 = arith.constant 8 : index
    %c0_79 = arith.constant 0 : index
    %98 = vector.load %arg13[%c8_78, %c0_79] : memref<9x256xf32, #tpu.memory_space<vmem>>, vector<1x256xf32>
    %99 = vector.broadcast %98 : vector<1x256xf32> to vector<32x256xf32>
    %100 = arith.mulf %97, %99 : vector<32x256xf32>
    %c256 = arith.constant 256 : index
    %c0_80 = arith.constant 0 : index
    %101 = vector.load %arg16[%c256, %c0_80] : memref<288x256xf32, #tpu.memory_space<vmem>>, vector<32x256xf32>
    tpu.vector_store %arg16[%c256, %c0_80], %100 {strides = array<i32>} : memref<288x256xf32, #tpu.memory_space<vmem>>, vector<32x256xf32>,
    %c0_81 = arith.constant 0 : index
    %c0_82 = arith.constant 0 : index
    %102 = vector.load %arg6[%c0_81, %c0_82] : memref<32x288xf32, #tpu.memory_space<vmem>>, vector<32x288xf32>
    %c0_83 = arith.constant 0 : index
    %c0_84 = arith.constant 0 : index
    %103 = vector.load %arg16[%c0_83, %c0_84] : memref<288x256xf32, #tpu.memory_space<vmem>>, vector<288x256xf32>
    %cst_85 = arith.constant dense<0.000000e+00> : vector<32x256xf32>
    %104 = tpu.matmul %102, %103, %cst_85 {dimension_numbers = #tpu.dot_dimension_numbers<[1], [0], [0], [1], [0, 0, 1, 1], [], []>} : vector<32x288xf32>, vector<288x256xf32>, vector<32x256xf32> -> vector<32x256xf32>
    %c0_86 = arith.constant 0 : index
    %c0_87 = arith.constant 0 : index
    %105 = vector.load %arg3[%c0_86, %c0_87] : memref<64x256xf32, #tpu.memory_space<vmem>>, vector<16x256xf32>
    %c0_88 = arith.constant 0 : index
    %c0_89 = arith.constant 0 : index
    %106 = vector.load %arg8[%c0_88, %c0_89] : memref<32x16xf32, #tpu.memory_space<vmem>>, vector<32x16xf32>
    %cst_90 = arith.constant dense<0.000000e+00> : vector<32x256xf32>
    %107 = tpu.matmul %106, %105, %cst_90 {dimension_numbers = #tpu.dot_dimension_numbers<[1], [0], [0], [1], [0, 0, 1, 1], [], []>} : vector<32x16xf32>, vector<16x256xf32>, vector<32x256xf32> -> vector<32x256xf32>
    %c0_91 = arith.constant 0 : index
    %c0_92 = arith.constant 0 : index
    %108 = vector.load %arg9[%c0_91, %c0_92] : memref<32x1xf32, #tpu.memory_space<vmem>>, vector<32x1xf32>
    %109 = vector.broadcast %108 : vector<32x1xf32> to vector<32x256xf32>
    %110 = arith.addf %107, %109 : vector<32x256xf32>
    %c0_93 = arith.constant 0 : index
    %c0_94 = arith.constant 0 : index
    %111 = vector.load %arg7[%c0_93, %c0_94] : memref<32x1xf32, #tpu.memory_space<vmem>>, vector<32x1xf32>
    %112 = vector.broadcast %111 : vector<32x1xf32> to vector<32x256xf32>
    %113 = arith.addf %104, %112 : vector<32x256xf32>
    %114 = arith.addf %113, %110 : vector<32x256xf32>
    %cst_95 = arith.constant 0.000000e+00 : f32
    %115 = vector.broadcast %cst_95 : f32 to vector<32x256xf32>
    %116 = arith.maximumf %114, %115 : vector<32x256xf32>
    %c0_96 = arith.constant 0 : index
    %c0_97 = arith.constant 0 : index
    %117 = vector.load %arg10[%c0_96, %c0_97] : memref<32x8xf32, #tpu.memory_space<vmem>>, vector<32x8xf32>
    %c0_98 = arith.constant 0 : index
    %c0_99 = arith.constant 0 : index
    %118 = vector.load %arg11[%c0_98, %c0_99] : memref<32x8xf32, #tpu.memory_space<vmem>>, vector<32x8xf32>
    %cst_100 = arith.constant dense<0xFF800000> : vector<32xf32>
    %119 = vector.multi_reduction <maximumf>, %116, %cst_100 [1] : vector<32x256xf32> to vector<32xf32>
    %120 = vector.shape_cast %119 : vector<32xf32> to vector<32x1xf32>
    %cst_101 = arith.constant dense<0.000000e+00> : vector<32xf32>
    %121 = vector.multi_reduction <add>, %116, %cst_101 [1] : vector<32x256xf32> to vector<32xf32>
    %122 = vector.shape_cast %121 : vector<32xf32> to vector<32x1xf32>
    %cst_102 = arith.constant 3.906250e-03 : f32
    %123 = vector.broadcast %cst_102 : f32 to vector<32x1xf32>
    %124 = arith.mulf %122, %123 : vector<32x1xf32>
    %125 = vector.broadcast %120 : vector<32x1xf32> to vector<32x8xf32>
    %126 = arith.mulf %117, %125 : vector<32x8xf32>
    %cst_103 = arith.constant dense<0.000000e+00> : vector<8xf32>
    %127 = vector.multi_reduction <add>, %126, %cst_103 [0] : vector<32x8xf32> to vector<8xf32>
    %128 = vector.shape_cast %127 : vector<8xf32> to vector<1x8xf32>
    %cst_104 = arith.constant 0.000000e+00 : f32
    %129 = vector.broadcast %cst_104 : f32 to vector<1x8xf32>
    %130 = arith.maximumf %128, %129 : vector<1x8xf32>
    %131 = vector.broadcast %124 : vector<32x1xf32> to vector<32x8xf32>
    %132 = arith.mulf %117, %131 : vector<32x8xf32>
    %cst_105 = arith.constant dense<0.000000e+00> : vector<8xf32>
    %133 = vector.multi_reduction <add>, %132, %cst_105 [0] : vector<32x8xf32> to vector<8xf32>
    %134 = vector.shape_cast %133 : vector<8xf32> to vector<1x8xf32>
    %cst_106 = arith.constant 0.000000e+00 : f32
    %135 = vector.broadcast %cst_106 : f32 to vector<1x8xf32>
    %136 = arith.maximumf %134, %135 : vector<1x8xf32>
    %137 = arith.addf %130, %136 : vector<1x8xf32>
    %138 = vector.broadcast %137 : vector<1x8xf32> to vector<32x8xf32>
    %139 = arith.mulf %118, %138 : vector<32x8xf32>
    %cst_107 = arith.constant dense<0.000000e+00> : vector<32xf32>
    %140 = vector.multi_reduction <add>, %139, %cst_107 [1] : vector<32x8xf32> to vector<32xf32>
    %141 = vector.shape_cast %140 : vector<32xf32> to vector<32x1xf32>
    %142 = arith.negf %141 : vector<32x1xf32>
    %143 = math.exp %142 : vector<32x1xf32>
    %cst_108 = arith.constant 1.000000e+00 : f32
    %144 = vector.broadcast %cst_108 : f32 to vector<32x1xf32>
    %145 = arith.addf %144, %143 : vector<32x1xf32>
    %146 = arith.divf %144, %145 : vector<32x1xf32>
    %147 = vector.broadcast %146 : vector<32x1xf32> to vector<32x256xf32>
    %148 = arith.mulf %116, %147 : vector<32x256xf32>
    %cst_109 = arith.constant dense<0xFF800000> : vector<256xf32>
    %149 = vector.multi_reduction <maximumf>, %148, %cst_109 [0] : vector<32x256xf32> to vector<256xf32>
    %150 = vector.shape_cast %149 : vector<256xf32> to vector<1x256xf32>
    %cst_110 = arith.constant dense<0.000000e+00> : vector<256xf32>
    %151 = vector.multi_reduction <add>, %148, %cst_110 [0] : vector<32x256xf32> to vector<256xf32>
    %152 = vector.shape_cast %151 : vector<256xf32> to vector<1x256xf32>
    %cst_111 = arith.constant 3.125000e-02 : f32
    %153 = vector.broadcast %cst_111 : f32 to vector<1x256xf32>
    %154 = arith.mulf %152, %153 : vector<1x256xf32>
    %cst_112 = arith.constant 0.000000e+00 : f32
    %155 = vector.broadcast %cst_112 : f32 to vector<1x256xf32>
    %c0_113 = arith.constant 0 : index
    %c0_114 = arith.constant 0 : index
    %156 = vector.load %arg14[%c0_113, %c0_114] : memref<9x256xf32, #tpu.memory_space<vmem>>, vector<1x256xf32>
    %c17_i32_115 = arith.constant 17 : i32
    %157 = tpu.dynamic_rotate %150 by %c17_i32_115 dim 1 : vector<1x256xf32>, i32 -> vector<1x256xf32>
    %c0_116 = arith.constant 0 : index
    %c0_117 = arith.constant 0 : index
    %158 = memref.load %arg1[%c0_116, %c0_117] : memref<2x9xf32, #tpu.memory_space<smem>>
    %159 = vector.broadcast %158 : f32 to vector<1x256xf32>
    %160 = arith.mulf %157, %159 : vector<1x256xf32>
    %c17_i32_118 = arith.constant 17 : i32
    %161 = tpu.dynamic_rotate %154 by %c17_i32_118 dim 1 : vector<1x256xf32>, i32 -> vector<1x256xf32>
    %c1_119 = arith.constant 1 : index
    %c0_120 = arith.constant 0 : index
    %162 = memref.load %arg1[%c1_119, %c0_120] : memref<2x9xf32, #tpu.memory_space<smem>>
    %163 = vector.broadcast %162 : f32 to vector<1x256xf32>
    %164 = arith.mulf %161, %163 : vector<1x256xf32>
    %165 = arith.addf %160, %164 : vector<1x256xf32>
    %166 = arith.mulf %165, %156 : vector<1x256xf32>
    %167 = arith.addf %155, %166 : vector<1x256xf32>
    %c1_121 = arith.constant 1 : index
    %c0_122 = arith.constant 0 : index
    %168 = vector.load %arg14[%c1_121, %c0_122] : memref<9x256xf32, #tpu.memory_space<vmem>>, vector<1x256xf32>
    %c16_i32_123 = arith.constant 16 : i32
    %169 = tpu.dynamic_rotate %150 by %c16_i32_123 dim 1 : vector<1x256xf32>, i32 -> vector<1x256xf32>
    %c0_124 = arith.constant 0 : index
    %c1_125 = arith.constant 1 : index
    %170 = memref.load %arg1[%c0_124, %c1_125] : memref<2x9xf32, #tpu.memory_space<smem>>
    %171 = vector.broadcast %170 : f32 to vector<1x256xf32>
    %172 = arith.mulf %169, %171 : vector<1x256xf32>
    %c16_i32_126 = arith.constant 16 : i32
    %173 = tpu.dynamic_rotate %154 by %c16_i32_126 dim 1 : vector<1x256xf32>, i32 -> vector<1x256xf32>
    %c1_127 = arith.constant 1 : index
    %c1_128 = arith.constant 1 : index
    %174 = memref.load %arg1[%c1_127, %c1_128] : memref<2x9xf32, #tpu.memory_space<smem>>
    %175 = vector.broadcast %174 : f32 to vector<1x256xf32>
    %176 = arith.mulf %173, %175 : vector<1x256xf32>
    %177 = arith.addf %172, %176 : vector<1x256xf32>
    %178 = arith.mulf %177, %168 : vector<1x256xf32>
    %179 = arith.addf %167, %178 : vector<1x256xf32>
    %c2_129 = arith.constant 2 : index
    %c0_130 = arith.constant 0 : index
    %180 = vector.load %arg14[%c2_129, %c0_130] : memref<9x256xf32, #tpu.memory_space<vmem>>, vector<1x256xf32>
    %c15_i32_131 = arith.constant 15 : i32
    %181 = tpu.dynamic_rotate %150 by %c15_i32_131 dim 1 : vector<1x256xf32>, i32 -> vector<1x256xf32>
    %c0_132 = arith.constant 0 : index
    %c2_133 = arith.constant 2 : index
    %182 = memref.load %arg1[%c0_132, %c2_133] : memref<2x9xf32, #tpu.memory_space<smem>>
    %183 = vector.broadcast %182 : f32 to vector<1x256xf32>
    %184 = arith.mulf %181, %183 : vector<1x256xf32>
    %c15_i32_134 = arith.constant 15 : i32
    %185 = tpu.dynamic_rotate %154 by %c15_i32_134 dim 1 : vector<1x256xf32>, i32 -> vector<1x256xf32>
    %c1_135 = arith.constant 1 : index
    %c2_136 = arith.constant 2 : index
    %186 = memref.load %arg1[%c1_135, %c2_136] : memref<2x9xf32, #tpu.memory_space<smem>>
    %187 = vector.broadcast %186 : f32 to vector<1x256xf32>
    %188 = arith.mulf %185, %187 : vector<1x256xf32>
    %189 = arith.addf %184, %188 : vector<1x256xf32>
    %190 = arith.mulf %189, %180 : vector<1x256xf32>
    %191 = arith.addf %179, %190 : vector<1x256xf32>
    %c3_137 = arith.constant 3 : index
    %c0_138 = arith.constant 0 : index
    %192 = vector.load %arg14[%c3_137, %c0_138] : memref<9x256xf32, #tpu.memory_space<vmem>>, vector<1x256xf32>
    %c1_i32_139 = arith.constant 1 : i32
    %193 = tpu.dynamic_rotate %150 by %c1_i32_139 dim 1 : vector<1x256xf32>, i32 -> vector<1x256xf32>
    %c0_140 = arith.constant 0 : index
    %c3_141 = arith.constant 3 : index
    %194 = memref.load %arg1[%c0_140, %c3_141] : memref<2x9xf32, #tpu.memory_space<smem>>
    %195 = vector.broadcast %194 : f32 to vector<1x256xf32>
    %196 = arith.mulf %193, %195 : vector<1x256xf32>
    %c1_i32_142 = arith.constant 1 : i32
    %197 = tpu.dynamic_rotate %154 by %c1_i32_142 dim 1 : vector<1x256xf32>, i32 -> vector<1x256xf32>
    %c1_143 = arith.constant 1 : index
    %c3_144 = arith.constant 3 : index
    %198 = memref.load %arg1[%c1_143, %c3_144] : memref<2x9xf32, #tpu.memory_space<smem>>
    %199 = vector.broadcast %198 : f32 to vector<1x256xf32>
    %200 = arith.mulf %197, %199 : vector<1x256xf32>
    %201 = arith.addf %196, %200 : vector<1x256xf32>
    %202 = arith.mulf %201, %192 : vector<1x256xf32>
    %203 = arith.addf %191, %202 : vector<1x256xf32>
    %c4_145 = arith.constant 4 : index
    %c0_146 = arith.constant 0 : index
    %204 = vector.load %arg14[%c4_145, %c0_146] : memref<9x256xf32, #tpu.memory_space<vmem>>, vector<1x256xf32>
    %c0_147 = arith.constant 0 : index
    %c4_148 = arith.constant 4 : index
    %205 = memref.load %arg1[%c0_147, %c4_148] : memref<2x9xf32, #tpu.memory_space<smem>>
    %206 = vector.broadcast %205 : f32 to vector<1x256xf32>
    %207 = arith.mulf %150, %206 : vector<1x256xf32>
    %c1_149 = arith.constant 1 : index
    %c4_150 = arith.constant 4 : index
    %208 = memref.load %arg1[%c1_149, %c4_150] : memref<2x9xf32, #tpu.memory_space<smem>>
    %209 = vector.broadcast %208 : f32 to vector<1x256xf32>
    %210 = arith.mulf %154, %209 : vector<1x256xf32>
    %211 = arith.addf %207, %210 : vector<1x256xf32>
    %212 = arith.mulf %211, %204 : vector<1x256xf32>
    %213 = arith.addf %203, %212 : vector<1x256xf32>
    %c5_151 = arith.constant 5 : index
    %c0_152 = arith.constant 0 : index
    %214 = vector.load %arg14[%c5_151, %c0_152] : memref<9x256xf32, #tpu.memory_space<vmem>>, vector<1x256xf32>
    %c255_i32_153 = arith.constant 255 : i32
    %215 = tpu.dynamic_rotate %150 by %c255_i32_153 dim 1 : vector<1x256xf32>, i32 -> vector<1x256xf32>
    %c0_154 = arith.constant 0 : index
    %c5_155 = arith.constant 5 : index
    %216 = memref.load %arg1[%c0_154, %c5_155] : memref<2x9xf32, #tpu.memory_space<smem>>
    %217 = vector.broadcast %216 : f32 to vector<1x256xf32>
    %218 = arith.mulf %215, %217 : vector<1x256xf32>
    %c255_i32_156 = arith.constant 255 : i32
    %219 = tpu.dynamic_rotate %154 by %c255_i32_156 dim 1 : vector<1x256xf32>, i32 -> vector<1x256xf32>
    %c1_157 = arith.constant 1 : index
    %c5_158 = arith.constant 5 : index
    %220 = memref.load %arg1[%c1_157, %c5_158] : memref<2x9xf32, #tpu.memory_space<smem>>
    %221 = vector.broadcast %220 : f32 to vector<1x256xf32>
    %222 = arith.mulf %219, %221 : vector<1x256xf32>
    %223 = arith.addf %218, %222 : vector<1x256xf32>
    %224 = arith.mulf %223, %214 : vector<1x256xf32>
    %225 = arith.addf %213, %224 : vector<1x256xf32>
    %c6_159 = arith.constant 6 : index
    %c0_160 = arith.constant 0 : index
    %226 = vector.load %arg14[%c6_159, %c0_160] : memref<9x256xf32, #tpu.memory_space<vmem>>, vector<1x256xf32>
    %c241_i32_161 = arith.constant 241 : i32
    %227 = tpu.dynamic_rotate %150 by %c241_i32_161 dim 1 : vector<1x256xf32>, i32 -> vector<1x256xf32>
    %c0_162 = arith.constant 0 : index
    %c6_163 = arith.constant 6 : index
    %228 = memref.load %arg1[%c0_162, %c6_163] : memref<2x9xf32, #tpu.memory_space<smem>>
    %229 = vector.broadcast %228 : f32 to vector<1x256xf32>
    %230 = arith.mulf %227, %229 : vector<1x256xf32>
    %c241_i32_164 = arith.constant 241 : i32
    %231 = tpu.dynamic_rotate %154 by %c241_i32_164 dim 1 : vector<1x256xf32>, i32 -> vector<1x256xf32>
    %c1_165 = arith.constant 1 : index
    %c6_166 = arith.constant 6 : index
    %232 = memref.load %arg1[%c1_165, %c6_166] : memref<2x9xf32, #tpu.memory_space<smem>>
    %233 = vector.broadcast %232 : f32 to vector<1x256xf32>
    %234 = arith.mulf %231, %233 : vector<1x256xf32>
    %235 = arith.addf %230, %234 : vector<1x256xf32>
    %236 = arith.mulf %235, %226 : vector<1x256xf32>
    %237 = arith.addf %225, %236 : vector<1x256xf32>
    %c7_167 = arith.constant 7 : index
    %c0_168 = arith.constant 0 : index
    %238 = vector.load %arg14[%c7_167, %c0_168] : memref<9x256xf32, #tpu.memory_space<vmem>>, vector<1x256xf32>
    %c240_i32_169 = arith.constant 240 : i32
    %239 = tpu.dynamic_rotate %150 by %c240_i32_169 dim 1 : vector<1x256xf32>, i32 -> vector<1x256xf32>
    %c0_170 = arith.constant 0 : index
    %c7_171 = arith.constant 7 : index
    %240 = memref.load %arg1[%c0_170, %c7_171] : memref<2x9xf32, #tpu.memory_space<smem>>
    %241 = vector.broadcast %240 : f32 to vector<1x256xf32>
    %242 = arith.mulf %239, %241 : vector<1x256xf32>
    %c240_i32_172 = arith.constant 240 : i32
    %243 = tpu.dynamic_rotate %154 by %c240_i32_172 dim 1 : vector<1x256xf32>, i32 -> vector<1x256xf32>
    %c1_173 = arith.constant 1 : index
    %c7_174 = arith.constant 7 : index
    %244 = memref.load %arg1[%c1_173, %c7_174] : memref<2x9xf32, #tpu.memory_space<smem>>
    %245 = vector.broadcast %244 : f32 to vector<1x256xf32>
    %246 = arith.mulf %243, %245 : vector<1x256xf32>
    %247 = arith.addf %242, %246 : vector<1x256xf32>
    %248 = arith.mulf %247, %238 : vector<1x256xf32>
    %249 = arith.addf %237, %248 : vector<1x256xf32>
    %c8_175 = arith.constant 8 : index
    %c0_176 = arith.constant 0 : index
    %250 = vector.load %arg14[%c8_175, %c0_176] : memref<9x256xf32, #tpu.memory_space<vmem>>, vector<1x256xf32>
    %c239_i32_177 = arith.constant 239 : i32
    %251 = tpu.dynamic_rotate %150 by %c239_i32_177 dim 1 : vector<1x256xf32>, i32 -> vector<1x256xf32>
    %c0_178 = arith.constant 0 : index
    %c8_179 = arith.constant 8 : index
    %252 = memref.load %arg1[%c0_178, %c8_179] : memref<2x9xf32, #tpu.memory_space<smem>>
    %253 = vector.broadcast %252 : f32 to vector<1x256xf32>
    %254 = arith.mulf %251, %253 : vector<1x256xf32>
    %c239_i32_180 = arith.constant 239 : i32
    %255 = tpu.dynamic_rotate %154 by %c239_i32_180 dim 1 : vector<1x256xf32>, i32 -> vector<1x256xf32>
    %c1_181 = arith.constant 1 : index
    %c8_182 = arith.constant 8 : index
    %256 = memref.load %arg1[%c1_181, %c8_182] : memref<2x9xf32, #tpu.memory_space<smem>>
    %257 = vector.broadcast %256 : f32 to vector<1x256xf32>
    %258 = arith.mulf %255, %257 : vector<1x256xf32>
    %259 = arith.addf %254, %258 : vector<1x256xf32>
    %260 = arith.mulf %259, %250 : vector<1x256xf32>
    %261 = arith.addf %249, %260 : vector<1x256xf32>
    %c0_183 = arith.constant 0 : index
    %262 = memref.load %arg2[%c0_183] : memref<1xf32, #tpu.memory_space<smem>>
    %263 = vector.broadcast %262 : f32 to vector<1x256xf32>
    %264 = arith.addf %261, %263 : vector<1x256xf32>
    %265 = arith.negf %264 : vector<1x256xf32>
    %266 = math.exp %265 : vector<1x256xf32>
    %cst_184 = arith.constant 1.000000e+00 : f32
    %267 = vector.broadcast %cst_184 : f32 to vector<1x256xf32>
    %268 = arith.addf %267, %266 : vector<1x256xf32>
    %269 = arith.divf %267, %268 : vector<1x256xf32>
    %270 = vector.broadcast %146 : vector<32x1xf32> to vector<32x256xf32>
    %271 = vector.broadcast %269 : vector<1x256xf32> to vector<32x256xf32>
    %272 = arith.mulf %270, %271 : vector<32x256xf32>
    %cst_185 = arith.constant 1.000000e+00 : f32
    %273 = vector.broadcast %cst_185 : f32 to vector<32x256xf32>
    %274 = arith.addf %272, %273 : vector<32x256xf32>
    %275 = arith.mulf %116, %274 : vector<32x256xf32>
    %c0_186 = arith.constant 0 : index
    %c0_187 = arith.constant 0 : index
    %276 = vector.load %arg15[%c0_186, %c0_187] : memref<32x256xf32, #tpu.memory_space<vmem>>, vector<32x256xf32>
    tpu.vector_store %arg15[%c0_186, %c0_187], %275 {strides = array<i32>} : memref<32x256xf32, #tpu.memory_space<vmem>>, vector<32x256xf32>,
    return
  }
  func.func @transform_0(%arg0: i32, %arg1: memref<2x9xf32, #tpu.memory_space<smem>>, %arg2: memref<1xf32, #tpu.memory_space<smem>>) -> (i32, i32) {
    %c0_i32 = arith.constant 0 : i32
    %c0_i32_0 = arith.constant 0 : i32
    return %c0_i32, %arg0 : i32, i32
  }
  func.func @transform_1(%arg0: i32, %arg1: memref<2x9xf32, #tpu.memory_space<smem>>, %arg2: memref<1xf32, #tpu.memory_space<smem>>) -> (i32, i32) {
    %c0_i32 = arith.constant 0 : i32
    %c0_i32_0 = arith.constant 0 : i32
    %c0_i32_1 = arith.constant 0 : i32
    return %c0_i32, %c0_i32_0 : i32, i32
  }
  func.func @transform_2(%arg0: i32, %arg1: memref<2x9xf32, #tpu.memory_space<smem>>, %arg2: memref<1xf32, #tpu.memory_space<smem>>) -> (i32, i32) {
    %c0_i32 = arith.constant 0 : i32
    %c0_i32_0 = arith.constant 0 : i32
    %c0_i32_1 = arith.constant 0 : i32
    return %c0_i32, %c0_i32_0 : i32, i32
  }
  func.func @transform_3(%arg0: i32, %arg1: memref<2x9xf32, #tpu.memory_space<smem>>, %arg2: memref<1xf32, #tpu.memory_space<smem>>) -> (i32, i32) {
    %c0_i32 = arith.constant 0 : i32
    %c0_i32_0 = arith.constant 0 : i32
    %c0_i32_1 = arith.constant 0 : i32
    return %c0_i32, %c0_i32_0 : i32, i32
  }
  func.func @transform_4(%arg0: i32, %arg1: memref<2x9xf32, #tpu.memory_space<smem>>, %arg2: memref<1xf32, #tpu.memory_space<smem>>) -> (i32, i32) {
    %c0_i32 = arith.constant 0 : i32
    %c0_i32_0 = arith.constant 0 : i32
    %c0_i32_1 = arith.constant 0 : i32
    return %c0_i32, %c0_i32_0 : i32, i32
  }
  func.func @transform_5(%arg0: i32, %arg1: memref<2x9xf32, #tpu.memory_space<smem>>, %arg2: memref<1xf32, #tpu.memory_space<smem>>) -> (i32, i32) {
    %c0_i32 = arith.constant 0 : i32
    %c0_i32_0 = arith.constant 0 : i32
    %c0_i32_1 = arith.constant 0 : i32
    return %c0_i32, %c0_i32_0 : i32, i32
  }
  func.func @transform_6(%arg0: i32, %arg1: memref<2x9xf32, #tpu.memory_space<smem>>, %arg2: memref<1xf32, #tpu.memory_space<smem>>) -> (i32, i32) {
    %c0_i32 = arith.constant 0 : i32
    %c0_i32_0 = arith.constant 0 : i32
    %c0_i32_1 = arith.constant 0 : i32
    return %c0_i32, %c0_i32_0 : i32, i32
  }
  func.func @transform_7(%arg0: i32, %arg1: memref<2x9xf32, #tpu.memory_space<smem>>, %arg2: memref<1xf32, #tpu.memory_space<smem>>) -> (i32, i32) {
    %c0_i32 = arith.constant 0 : i32
    %c0_i32_0 = arith.constant 0 : i32
    %c0_i32_1 = arith.constant 0 : i32
    return %c0_i32, %c0_i32_0 : i32, i32
  }
  func.func @transform_8(%arg0: i32, %arg1: memref<2x9xf32, #tpu.memory_space<smem>>, %arg2: memref<1xf32, #tpu.memory_space<smem>>) -> (i32, i32) {
    %c0_i32 = arith.constant 0 : i32
    %c0_i32_0 = arith.constant 0 : i32
    %c0_i32_1 = arith.constant 0 : i32
    return %c0_i32, %c0_i32_0 : i32, i32
  }
  func.func @transform_9(%arg0: i32, %arg1: memref<2x9xf32, #tpu.memory_space<smem>>, %arg2: memref<1xf32, #tpu.memory_space<smem>>) -> (i32, i32) {
    %c0_i32 = arith.constant 0 : i32
    %c0_i32_0 = arith.constant 0 : i32
    %c0_i32_1 = arith.constant 0 : i32
    return %c0_i32, %c0_i32_0 : i32, i32
  }
  func.func @transform_10(%arg0: i32, %arg1: memref<2x9xf32, #tpu.memory_space<smem>>, %arg2: memref<1xf32, #tpu.memory_space<smem>>) -> (i32, i32) {
    %c0_i32 = arith.constant 0 : i32
    %c0_i32_0 = arith.constant 0 : i32
    %c0_i32_1 = arith.constant 0 : i32
    return %c0_i32, %c0_i32_0 : i32, i32
  }
  func.func @transform_11(%arg0: i32, %arg1: memref<2x9xf32, #tpu.memory_space<smem>>, %arg2: memref<1xf32, #tpu.memory_space<smem>>) -> (i32, i32) {
    %c0_i32 = arith.constant 0 : i32
    %c0_i32_0 = arith.constant 0 : i32
    %c0_i32_1 = arith.constant 0 : i32
    return %c0_i32, %c0_i32_0 : i32, i32
  }
  func.func @transform_12(%arg0: i32, %arg1: memref<2x9xf32, #tpu.memory_space<smem>>, %arg2: memref<1xf32, #tpu.memory_space<smem>>) -> (i32, i32) {
    %c0_i32 = arith.constant 0 : i32
    %c0_i32_0 = arith.constant 0 : i32
    return %c0_i32, %arg0 : i32, i32
  }
}

</mosaic_0001>

<llo_original>
// kernel: tpu_custom_call.1
$region0: #{tpu_custom_call.1}
  #allocation0 [shape = 'u32[]', space=smem, size = 0x4, offset = 0x4, fixed_abs, tag = 'smem constant byte address 0x4 - core index']
  #allocation1 [shape = 'u32[72,128]{1,0:T(1,128)}', space=vmem, size = 0x9000, scoped, tag = 'internal scratch']
  #allocation2 [shape = 'f32[288,256]{1,0:T(8,128)}', space=vmem, size = 0x48000, scoped, tag = 'scratch operand']
  #allocation3 [shape = 's32[1]{0}', space=sflag, size = 0x4, scoped, tag = 'scoped memory for tpu_custom_call.1']
  #allocation4 [shape = 'u8[1024]{0}', space=smem, size = 0x400, scoped, tag = 'prefetched SMEM operand 0']
  #allocation5 [shape = 'f32[1]{0:T(128)S(6)}', space=smem, size = 0x200, scoped, tag = 'prefetched SMEM operand 1']
  %s0 = inlined_call_operand.hbm [shape: f32[2,9], index: 0, kind: input, shape index: {}]
  %s1 = inlined_call_operand.<no memory space> [shape: f32[1], index: 1, kind: input, shape index: {}]
  %s2 = inlined_call_operand.hbm [shape: f32[64,1024], index: 2, kind: input, shape index: {}]
  %s3 = inlined_call_operand.vmem [shape: f32[32,144], index: 3, kind: input, shape index: {}]
  %s4 = inlined_call_operand.vmem [shape: f32[32,1], index: 4, kind: input, shape index: {}]
  %s5 = inlined_call_operand.vmem [shape: f32[32,288], index: 5, kind: input, shape index: {}]
  %s6 = inlined_call_operand.vmem [shape: f32[32,1], index: 6, kind: input, shape index: {}]
  %s7 = inlined_call_operand.vmem [shape: f32[32,16], index: 7, kind: input, shape index: {}]
  %s8 = inlined_call_operand.vmem [shape: f32[32,1], index: 8, kind: input, shape index: {}]
  %s9 = inlined_call_operand.vmem [shape: f32[32,8], index: 9, kind: input, shape index: {}]
  %s10 = inlined_call_operand.vmem [shape: f32[32,8], index: 10, kind: input, shape index: {}]
  %s11 = inlined_call_operand.vmem [shape: f32[9,256], index: 11, kind: input, shape index: {}]
  %s12 = inlined_call_operand.vmem [shape: f32[9,256], index: 12, kind: input, shape index: {}]
  %s13 = inlined_call_operand.hbm [shape: f32[9,256], index: 13, kind: input, shape index: {}]
  %s14 = inlined_call_operand.hbm [shape: f32[32,1024], index: 14, kind: output, shape index: {}]
  %s15 = sld [smem:[#allocation0]]
  $region89: #{tpu_custom_call.1} parent=0
    _
  %s17 = ssub.s32 1, %s15
  %s18 = scalar_select 0, %s17, %s15
  %s20 = sshll.u32 %s0, 4
  %s21 = int_to_ptr.hbm [resolvable:$true] %s20
  %23 = dma.hbm_to_smem %s21, 32, [#allocation4], [#allocation3]
  %24 = sst [smem:[#allocation5]] %s1
  %26 = dma.done [#allocation3], 32
  %27 = sfence
  $region1: #{tpu_custom_call.1} parent=0
    #allocation6 [shape = 'u8[131072]{0}', space=vmem, size = 0x20000, scoped, tag = 'input window, operand 2']
    #allocation7 [shape = 's32[2]{0}', space=sflag, size = 0x8, scoped, tag = 'scoped memory for tpu_custom_call.1']
    #allocation8 [shape = 's32[2]{0}', space=sflag, size = 0x8, scoped, tag = 'scoped memory for tpu_custom_call.1']
    #allocation9 [shape = 'u8[16384]{0}', space=vmem, size = 0x4000, scoped, tag = 'input window, operand 13, single buffered']
    #allocation10 [shape = 's32[1]{0}', space=sflag, size = 0x4, scoped, tag = 'scoped memory for tpu_custom_call.1']
    #allocation11 [shape = 'u8[65536]{0}', space=vmem, size = 0x10000, scoped, tag = 'output window, operand 0']
    %28 = vsyncpa [#allocation7], 0
    %s29 = scalar_lea.sflag [#allocation7], 1
    %30 = vsyncpa %s29, 0
    %31 = vsyncpa [#allocation10], 0
    %32 = vsyncpa [#allocation8], 0
    %s33 = scalar_lea.sflag [#allocation8], 1
    %34 = vsyncpa %s33, 0
    loop: start=0, step=1, limit=6
    $region2: #{tpu_custom_call.1} parent=1 // loop_pre_header
      _
    $region3: #{tpu_custom_call.1} parent=1 // loop_header
      %s36 = sphi 0, %s40
      %p37 = scmp.ge.s32.totalorder %s36, 6
      %s46 = sphi 0, %s48
      %s49 = sphi 0, %s46
      %s50 = sphi 0, %s49
      %s66 = sphi 0, %s50
      %s70 = sphi 0, %s70
      %s72 = sphi 0, %s70
      %s73 = sphi 0, %s72
      %s87 = sphi 0, %s73
      %s91 = sphi 0, %s91
      %s93 = sphi 0, %s91
      %s94 = sphi 0, %s93
      %s108 = sphi 0, %s94
      %s112 = sphi 0, %s112
      %s114 = sphi 0, %s112
      %s115 = sphi 0, %s114
      %s129 = sphi 0, %s115
      %s133 = sphi 0, %s133
      %s135 = sphi 0, %s133
      %s136 = sphi 0, %s135
      %s150 = sphi 0, %s136
      %s154 = sphi 0, %s154
      %s156 = sphi 0, %s154
      %s157 = sphi 0, %s156
      %s171 = sphi 0, %s157
      %s175 = sphi 0, %s175
      %s177 = sphi 0, %s175
      %s178 = sphi 0, %s177
      %s192 = sphi 0, %s178
      %s196 = sphi 0, %s196
      %s198 = sphi 0, %s196
      %s199 = sphi 0, %s198
      %s213 = sphi 0, %s199
      %s217 = sphi 0, %s217
      %s219 = sphi 0, %s217
      %s220 = sphi 0, %s219
      %s234 = sphi 0, %s220
      %s238 = sphi 0, %s238
      %s240 = sphi 0, %s238
      %s241 = sphi 0, %s240
      %s255 = sphi 0, %s241
      %s259 = sphi 0, %s259
      %s261 = sphi 0, %s259
      %s262 = sphi 0, %s261
      %s276 = sphi 0, %s262
      %s280 = sphi 0, %s280
      %s282 = sphi 0, %s280
      %s283 = sphi 0, %s282
      %s297 = sphi 0, %s283
      %s303 = sphi 0, %s305
      %s306 = sphi 0, %s303
      %s307 = sphi 0, %s306
      %s323 = sphi 0, %s307
    $region4: #{tpu_custom_call.1} parent=1 // loop_header_branch
      %39 = sbr.rel (%p37) target = $region8
    $region5: #{tpu_custom_call.1} parent=1 // loop_body
      %s41 = ssub.s32 %s36, 1
      %s42 = ssub.s32 %s36, 2
      %s43 = sadd.s32 %s36, 1
      %s44 = ssub.s32 %s36, %s43
      %p45 = scmp.eq.s32.totalorder %s44, 0
      %s47 = sadd.s32 %s46, 1
      %s48 = scalar_select %p45, %s46, %s47
      %p51 = pneg %p45
      %p52 = scmp.eq.s32.totalorder %s36, 3
      %p53 = por %p51, %p52
      %p54 = scmp.ne.s32.totalorder %s46, %s49
      %p55 = scmp.eq.s32.totalorder %s36, 0
      %p56 = por %p54, %p55
      %p57 = scmp.ne.s32.totalorder %s46, %s49
      %p58 = scmp.eq.s32.totalorder %s41, 3
      %p59 = por %p57, %p58
      %p60 = scmp.ne.s32.totalorder %s49, %s50
      %p61 = scmp.eq.s32.totalorder %s41, 0
      %p62 = por %p60, %p61
      %p63 = scmp.ne.s32.totalorder %s49, %s50
      %p64 = scmp.eq.s32.totalorder %s42, 3
      %p65 = por %p63, %p64
      %p67 = scmp.ne.s32.totalorder %s50, %s66
      %p68 = scmp.eq.s32.totalorder %s42, 0
      %p69 = por %p67, %p68
      %s71 = sadd.s32 %s70, 1
      %p74 = scmp.eq.s32.totalorder %s36, 3
      %p75 = scmp.ne.s32.totalorder %s70, %s72
      %p76 = scmp.eq.s32.totalorder %s36, 0
      %p77 = por %p75, %p76
      %p78 = scmp.ne.s32.totalorder %s70, %s72
      %p79 = scmp.eq.s32.totalorder %s41, 3
      %p80 = por %p78, %p79
      %p81 = scmp.ne.s32.totalorder %s72, %s73
      %p82 = scmp.eq.s32.totalorder %s41, 0
      %p83 = por %p81, %p82
      %p84 = scmp.ne.s32.totalorder %s72, %s73
      %p85 = scmp.eq.s32.totalorder %s42, 3
      %p86 = por %p84, %p85
      %p88 = scmp.ne.s32.totalorder %s73, %s87
      %p89 = scmp.eq.s32.totalorder %s42, 0
      %p90 = por %p88, %p89
      %s92 = sadd.s32 %s91, 1
      %p95 = scmp.eq.s32.totalorder %s36, 3
      %p96 = scmp.ne.s32.totalorder %s91, %s93
      %p97 = scmp.eq.s32.totalorder %s36, 0
      %p98 = por %p96, %p97
      %p99 = scmp.ne.s32.totalorder %s91, %s93
      %p100 = scmp.eq.s32.totalorder %s41, 3
      %p101 = por %p99, %p100
      %p102 = scmp.ne.s32.totalorder %s93, %s94
      %p103 = scmp.eq.s32.totalorder %s41, 0
      %p104 = por %p102, %p103
      %p105 = scmp.ne.s32.totalorder %s93, %s94
      %p106 = scmp.eq.s32.totalorder %s42, 3
      %p107 = por %p105, %p106
      %p109 = scmp.ne.s32.totalorder %s94, %s108
      %p110 = scmp.eq.s32.totalorder %s42, 0
      %p111 = por %p109, %p110
      %s113 = sadd.s32 %s112, 1
      %p116 = scmp.eq.s32.totalorder %s36, 3
      %p117 = scmp.ne.s32.totalorder %s112, %s114
      %p118 = scmp.eq.s32.totalorder %s36, 0
      %p119 = por %p117, %p118
      %p120 = scmp.ne.s32.totalorder %s112, %s114
      %p121 = scmp.eq.s32.totalorder %s41, 3
      %p122 = por %p120, %p121
      %p123 = scmp.ne.s32.totalorder %s114, %s115
      %p124 = scmp.eq.s32.totalorder %s41, 0
      %p125 = por %p123, %p124
      %p126 = scmp.ne.s32.totalorder %s114, %s115
      %p127 = scmp.eq.s32.totalorder %s42, 3
      %p128 = por %p126, %p127
      %p130 = scmp.ne.s32.totalorder %s115, %s129
      %p131 = scmp.eq.s32.totalorder %s42, 0
      %p132 = por %p130, %p131
      %s134 = sadd.s32 %s133, 1
      %p137 = scmp.eq.s32.totalorder %s36, 3
      %p138 = scmp.ne.s32.totalorder %s133, %s135
      %p139 = scmp.eq.s32.totalorder %s36, 0
      %p140 = por %p138, %p139
      %p141 = scmp.ne.s32.totalorder %s133, %s135
      %p142 = scmp.eq.s32.totalorder %s41, 3
      %p143 = por %p141, %p142
      %p144 = scmp.ne.s32.totalorder %s135, %s136
      %p145 = scmp.eq.s32.totalorder %s41, 0
      %p146 = por %p144, %p145
      %p147 = scmp.ne.s32.totalorder %s135, %s136
      %p148 = scmp.eq.s32.totalorder %s42, 3
      %p149 = por %p147, %p148
      %p151 = scmp.ne.s32.totalorder %s136, %s150
      %p152 = scmp.eq.s32.totalorder %s42, 0
      %p153 = por %p151, %p152
      %s155 = sadd.s32 %s154, 1
      %p158 = scmp.eq.s32.totalorder %s36, 3
      %p159 = scmp.ne.s32.totalorder %s154, %s156
      %p160 = scmp.eq.s32.totalorder %s36, 0
      %p161 = por %p159, %p160
      %p162 = scmp.ne.s32.totalorder %s154, %s156
      %p163 = scmp.eq.s32.totalorder %s41, 3
      %p164 = por %p162, %p163
      %p165 = scmp.ne.s32.totalorder %s156, %s157
      %p166 = scmp.eq.s32.totalorder %s41, 0
      %p167 = por %p165, %p166
      %p168 = scmp.ne.s32.totalorder %s156, %s157
      %p169 = scmp.eq.s32.totalorder %s42, 3
      %p170 = por %p168, %p169
      %p172 = scmp.ne.s32.totalorder %s157, %s171
      %p173 = scmp.eq.s32.totalorder %s42, 0
      %p174 = por %p172, %p173
      %s176 = sadd.s32 %s175, 1
      %p179 = scmp.eq.s32.totalorder %s36, 3
      %p180 = scmp.ne.s32.totalorder %s175, %s177
      %p181 = scmp.eq.s32.totalorder %s36, 0
      %p182 = por %p180, %p181
      %p183 = scmp.ne.s32.totalorder %s175, %s177
      %p184 = scmp.eq.s32.totalorder %s41, 3
      %p185 = por %p183, %p184
      %p186 = scmp.ne.s32.totalorder %s177, %s178
      %p187 = scmp.eq.s32.totalorder %s41, 0
      %p188 = por %p186, %p187
      %p189 = scmp.ne.s32.totalorder %s177, %s178
      %p190 = scmp.eq.s32.totalorder %s42, 3
      %p191 = por %p189, %p190
      %p193 = scmp.ne.s32.totalorder %s178, %s192
      %p194 = scmp.eq.s32.totalorder %s42, 0
      %p195 = por %p193, %p194
      %s197 = sadd.s32 %s196, 1
      %p200 = scmp.eq.s32.totalorder %s36, 3
      %p201 = scmp.ne.s32.totalorder %s196, %s198
      %p202 = scmp.eq.s32.totalorder %s36, 0
      %p203 = por %p201, %p202
      %p204 = scmp.ne.s32.totalorder %s196, %s198
      %p205 = scmp.eq.s32.totalorder %s41, 3
      %p206 = por %p204, %p205
      %p207 = scmp.ne.s32.totalorder %s198, %s199
      %p208 = scmp.eq.s32.totalorder %s41, 0
      %p209 = por %p207, %p208
      %p210 = scmp.ne.s32.totalorder %s198, %s199
      %p211 = scmp.eq.s32.totalorder %s42, 3
      %p212 = por %p210, %p211
      %p214 = scmp.ne.s32.totalorder %s199, %s213
      %p215 = scmp.eq.s32.totalorder %s42, 0
      %p216 = por %p214, %p215
      %s218 = sadd.s32 %s217, 1
      %p221 = scmp.eq.s32.totalorder %s36, 3
      %p222 = scmp.ne.s32.totalorder %s217, %s219
      %p223 = scmp.eq.s32.totalorder %s36, 0
      %p224 = por %p222, %p223
      %p225 = scmp.ne.s32.totalorder %s217, %s219
      %p226 = scmp.eq.s32.totalorder %s41, 3
      %p227 = por %p225, %p226
      %p228 = scmp.ne.s32.totalorder %s219, %s220
      %p229 = scmp.eq.s32.totalorder %s41, 0
      %p230 = por %p228, %p229
      %p231 = scmp.ne.s32.totalorder %s219, %s220
      %p232 = scmp.eq.s32.totalorder %s42, 3
      %p233 = por %p231, %p232
      %p235 = scmp.ne.s32.totalorder %s220, %s234
      %p236 = scmp.eq.s32.totalorder %s42, 0
      %p237 = por %p235, %p236
      %s239 = sadd.s32 %s238, 1
      %p242 = scmp.eq.s32.totalorder %s36, 3
      %p243 = scmp.ne.s32.totalorder %s238, %s240
      %p244 = scmp.eq.s32.totalorder %s36, 0
      %p245 = por %p243, %p244
      %p246 = scmp.ne.s32.totalorder %s238, %s240
      %p247 = scmp.eq.s32.totalorder %s41, 3
      %p248 = por %p246, %p247
      %p249 = scmp.ne.s32.totalorder %s240, %s241
      %p250 = scmp.eq.s32.totalorder %s41, 0
      %p251 = por %p249, %p250
      %p252 = scmp.ne.s32.totalorder %s240, %s241
      %p253 = scmp.eq.s32.totalorder %s42, 3
      %p254 = por %p252, %p253
      %p256 = scmp.ne.s32.totalorder %s241, %s255
      %p257 = scmp.eq.s32.totalorder %s42, 0
      %p258 = por %p256, %p257
      %s260 = sadd.s32 %s259, 1
      %p263 = scmp.eq.s32.totalorder %s36, 3
      %p264 = scmp.ne.s32.totalorder %s259, %s261
      %p265 = scmp.eq.s32.totalorder %s36, 0
      %p266 = por %p264, %p265
      %p267 = scmp.ne.s32.totalorder %s259, %s261
      %p268 = scmp.eq.s32.totalorder %s41, 3
      %p269 = por %p267, %p268
      %p270 = scmp.ne.s32.totalorder %s261, %s262
      %p271 = scmp.eq.s32.totalorder %s41, 0
      %p272 = por %p270, %p271
      %p273 = scmp.ne.s32.totalorder %s261, %s262
      %p274 = scmp.eq.s32.totalorder %s42, 3
      %p275 = por %p273, %p274
      %p277 = scmp.ne.s32.totalorder %s262, %s276
      %p278 = scmp.eq.s32.totalorder %s42, 0
      %p279 = por %p277, %p278
      %s281 = sadd.s32 %s280, 1
      %p284 = scmp.eq.s32.totalorder %s36, 3
      %p285 = scmp.ne.s32.totalorder %s280, %s282
      %p286 = scmp.eq.s32.totalorder %s36, 0
      %p287 = por %p285, %p286
      %p288 = scmp.ne.s32.totalorder %s280, %s282
      %p289 = scmp.eq.s32.totalorder %s41, 3
      %p290 = por %p288, %p289
      %p291 = scmp.ne.s32.totalorder %s282, %s283
      %p292 = scmp.eq.s32.totalorder %s41, 0
      %p293 = por %p291, %p292
      %p294 = scmp.ne.s32.totalorder %s282, %s283
      %p295 = scmp.eq.s32.totalorder %s42, 3
      %p296 = por %p294, %p295
      %p298 = scmp.ne.s32.totalorder %s283, %s297
      %p299 = scmp.eq.s32.totalorder %s42, 0
      %p300 = por %p298, %p299
      %s301 = ssub.s32 %s36, %s43
      %p302 = scmp.eq.s32.totalorder %s301, 0
      %s304 = sadd.s32 %s303, 1
      %s305 = scalar_select %p302, %s303, %s304
      %p308 = pneg %p302
      %p309 = scmp.eq.s32.totalorder %s36, 3
      %p310 = por %p308, %p309
      %p311 = scmp.ne.s32.totalorder %s303, %s306
      %p312 = scmp.eq.s32.totalorder %s36, 0
      %p313 = por %p311, %p312
      %p314 = scmp.ne.s32.totalorder %s303, %s306
      %p315 = scmp.eq.s32.totalorder %s41, 3
      %p316 = por %p314, %p315
      %p317 = scmp.ne.s32.totalorder %s306, %s307
      %p318 = scmp.eq.s32.totalorder %s41, 0
      %p319 = por %p317, %p318
      %p320 = scmp.ne.s32.totalorder %s306, %s307
      %p321 = scmp.eq.s32.totalorder %s42, 3
      %p322 = por %p320, %p321
      %p324 = scmp.ne.s32.totalorder %s307, %s323
      %p325 = scmp.eq.s32.totalorder %s42, 0
      %p326 = por %p324, %p325
      %p327 = scmp.le.s32.totalorder 1, %s36
      %p328 = scmp.lt.s32.totalorder %s36, 5
      %p329 = pnand %p327, %p328
      %p330 = pneg %p329
      // Predicated region
      $region9: #{tpu_custom_call.1} parent=5 // pred_check
        _
      $region10: #{tpu_custom_call.1} parent=5 // pred_check_branch
        %332 = sbr.rel (%p329) target = $region12
      $region11: #{tpu_custom_call.1} parent=5 // pred_region
        %s333 = ssub.s32 %s36, 1
        // Predicated region
        $region13: #{tpu_custom_call.1} parent=11 // pred_check
          %p334 = pneg %p83
        $region14: #{tpu_custom_call.1} parent=11 // pred_check_branch
          %336 = sbr.rel (%p334) target = $region16
        $region15: #{tpu_custom_call.1} parent=11 // pred_region
          _
        $region16: #{tpu_custom_call.1} parent=11 // pred_fallthru
          _
        // Predicated region
        $region17: #{tpu_custom_call.1} parent=11 // pred_check
          %p337 = pneg %p104
        $region18: #{tpu_custom_call.1} parent=11 // pred_check_branch
          %339 = sbr.rel (%p337) target = $region20
        $region19: #{tpu_custom_call.1} parent=11 // pred_region
          _
        $region20: #{tpu_custom_call.1} parent=11 // pred_fallthru
          _
        // Predicated region
        $region21: #{tpu_custom_call.1} parent=11 // pred_check
          %p340 = pneg %p125
        $region22: #{tpu_custom_call.1} parent=11 // pred_check_branch
          %342 = sbr.rel (%p340) target = $region24
        $region23: #{tpu_custom_call.1} parent=11 // pred_region
          _
        $region24: #{tpu_custom_call.1} parent=11 // pred_fallthru
          _
        // Predicated region
        $region25: #{tpu_custom_call.1} parent=11 // pred_check
          %p343 = pneg %p146
        $region26: #{tpu_custom_call.1} parent=11 // pred_check_branch
          %345 = sbr.rel (%p343) target = $region28
        $region27: #{tpu_custom_call.1} parent=11 // pred_region
          _
        $region28: #{tpu_custom_call.1} parent=11 // pred_fallthru
          _
        // Predicated region
        $region29: #{tpu_custom_call.1} parent=11 // pred_check
          %p346 = pneg %p167
        $region30: #{tpu_custom_call.1} parent=11 // pred_check_branch
          %348 = sbr.rel (%p346) target = $region32
        $region31: #{tpu_custom_call.1} parent=11 // pred_region
          _
        $region32: #{tpu_custom_call.1} parent=11 // pred_fallthru
          _
        // Predicated region
        $region33: #{tpu_custom_call.1} parent=11 // pred_check
          %p349 = pneg %p188
        $region34: #{tpu_custom_call.1} parent=11 // pred_check_branch
          %351 = sbr.rel (%p349) target = $region36
        $region35: #{tpu_custom_call.1} parent=11 // pred_region
          _
        $region36: #{tpu_custom_call.1} parent=11 // pred_fallthru
          _
        // Predicated region
        $region37: #{tpu_custom_call.1} parent=11 // pred_check
          %p352 = pneg %p209
        $region38: #{tpu_custom_call.1} parent=11 // pred_check_branch
          %354 = sbr.rel (%p352) target = $region40
        $region39: #{tpu_custom_call.1} parent=11 // pred_region
          _
        $region40: #{tpu_custom_call.1} parent=11 // pred_fallthru
          _
        // Predicated region
        $region41: #{tpu_custom_call.1} parent=11 // pred_check
          %p355 = pneg %p230
        $region42: #{tpu_custom_call.1} parent=11 // pred_check_branch
          %357 = sbr.rel (%p355) target = $region44
        $region43: #{tpu_custom_call.1} parent=11 // pred_region
          _
        $region44: #{tpu_custom_call.1} parent=11 // pred_fallthru
          _
        // Predicated region
        $region45: #{tpu_custom_call.1} parent=11 // pred_check
          %p358 = pneg %p251
        $region46: #{tpu_custom_call.1} parent=11 // pred_check_branch
          %360 = sbr.rel (%p358) target = $region48
        $region47: #{tpu_custom_call.1} parent=11 // pred_region
          _
        $region48: #{tpu_custom_call.1} parent=11 // pred_fallthru
          _
        // Predicated region
        $region49: #{tpu_custom_call.1} parent=11 // pred_check
          %p361 = pneg %p272
        $region50: #{tpu_custom_call.1} parent=11 // pred_check_branch
          %363 = sbr.rel (%p361) target = $region52
        $region51: #{tpu_custom_call.1} parent=11 // pred_region
          _
        $region52: #{tpu_custom_call.1} parent=11 // pred_fallthru
          _
        // Predicated region
        $region53: #{tpu_custom_call.1} parent=11 // pred_check
          %p364 = pneg %p293
        $region54: #{tpu_custom_call.1} parent=11 // pred_check_branch
          %366 = sbr.rel (%p364) target = $region56
        $region55: #{tpu_custom_call.1} parent=11 // pred_region
          %368 = vsyncadd [#allocation10], 0
          %s369 = sshll.u32 %s13, 4
          %s370 = int_to_ptr.hbm [resolvable:$true] %s369
          %s371 = sshll.u32 [#allocation9], 4
          %s372 = int_to_ptr.vmem [resolvable:$true] %s371
          %377 = dma.hbm_to_vmem [thread:$0]  %s370, 512, %s372, [#allocation10], 256, 256, 16
        $region56: #{tpu_custom_call.1} parent=11 // pred_fallthru
          _
      $region12: #{tpu_custom_call.1} parent=5 // pred_fallthru
        _
      %p378 = scmp.lt.s32.totalorder %s36, 4
      // Predicated region
      $region57: #{tpu_custom_call.1} parent=5 // pred_check
        %p379 = pneg %p378
      $region58: #{tpu_custom_call.1} parent=5 // pred_check_branch
        %381 = sbr.rel (%p379) target = $region60
      $region59: #{tpu_custom_call.1} parent=5 // pred_region
        // Predicated region
        $region61: #{tpu_custom_call.1} parent=59 // pred_check
          %p382 = pneg %p56
        $region62: #{tpu_custom_call.1} parent=59 // pred_check_branch
          %384 = sbr.rel (%p382) target = $region64
        $region63: #{tpu_custom_call.1} parent=59 // pred_region
          %s385 = sand.u32 %s46, 1
          %s386 = scalar_lea.sflag [#allocation7], %s385
          %s387 = sand.u32 %s46, 1
          %s388 = smul.addr %s387, 128
          %s389 = scalar_lea.vmem [#allocation6], %s388
          %s390 = smul.u32 2, %s36
          %392 = vsyncadd %s386, 0
          %s393 = smul.addr %s390, 8
          %s394 = scalar_lea.hbm %s2, %s393
          %s395 = sshll.u32 %s394, 4
          %s396 = int_to_ptr.hbm [resolvable:$true] %s395
          %s397 = sshll.u32 %s389, 4
          %s398 = int_to_ptr.vmem [resolvable:$true] %s397
          %403 = dma.hbm_to_vmem [thread:$0]  %s396, 2048, %s398, %s386, 1024, 256, 16
        $region64: #{tpu_custom_call.1} parent=59 // pred_fallthru
          _
      $region60: #{tpu_custom_call.1} parent=5 // pred_fallthru
        _
      %p404 = scmp.le.s32.totalorder 1, %s36
      %p405 = scmp.lt.s32.totalorder %s36, 5
      %p406 = pnand %p404, %p405
      %p407 = pneg %p406
      // Predicated region
      $region65: #{tpu_custom_call.1} parent=5 // pred_check
        _
      $region66: #{tpu_custom_call.1} parent=5 // pred_check_branch
        %409 = sbr.rel (%p406) target = $region68
      $region67: #{tpu_custom_call.1} parent=5 // pred_region
        %s410 = ssub.s32 %s36, 1
        %s411 = sand.u32 %s49, 1
        %s412 = scalar_lea.sflag [#allocation7], %s411
        %s413 = sand.u32 %s49, 1
        %s414 = smul.addr %s413, 128
        %s415 = scalar_lea.vmem [#allocation6], %s414
        // Predicated region
        $region69: #{tpu_custom_call.1} parent=67 // pred_check
          %p416 = pneg %p62
        $region70: #{tpu_custom_call.1} parent=67 // pred_check_branch
          %418 = sbr.rel (%p416) target = $region72
        $region71: #{tpu_custom_call.1} parent=67 // pred_region
          %420 = dma.done %s412, 2048
        $region72: #{tpu_custom_call.1} parent=67 // pred_fallthru
          _
        // Predicated region
        $region73: #{tpu_custom_call.1} parent=67 // pred_check
          %p421 = pneg %p293
        $region74: #{tpu_custom_call.1} parent=67 // pred_check_branch
          %423 = sbr.rel (%p421) target = $region76
        $region75: #{tpu_custom_call.1} parent=67 // pred_region
          %425 = dma.done [#allocation10], 512
        $region76: #{tpu_custom_call.1} parent=67 // pred_fallthru
          _
        %s426 = sand.u32 %s49, 1
        %s427 = scalar_lea.sflag [#allocation7], %s426
        %s428 = sand.u32 %s49, 1
        %s429 = smul.addr %s428, 128
        %s430 = scalar_lea.vmem [#allocation6], %s429
        %p431 = pneg %p62
        %p432 = pneg %p59
        %p433 = pneg %p83
        %p434 = pneg %p80
        %p435 = pneg %p104
        %p436 = pneg %p101
        %p437 = pneg %p125
        %p438 = pneg %p122
        %p439 = pneg %p146
        %p440 = pneg %p143
        %p441 = pneg %p167
        %p442 = pneg %p164
        %p443 = pneg %p188
        %p444 = pneg %p185
        %p445 = pneg %p209
        %p446 = pneg %p206
        %p447 = pneg %p230
        %p448 = pneg %p227
        %p449 = pneg %p251
        %p450 = pneg %p248
        %p451 = pneg %p272
        %p452 = pneg %p269
        %p453 = pneg %p293
        %p454 = pneg %p290
        %p455 = pneg %p319
        %p456 = pneg %p316
        %s457 = sand.u32 %s306, 1
        %s458 = scalar_lea.sflag [#allocation8], %s457
        %s459 = sand.u32 %s306, 1
        %s460 = smul.addr %s459, 64
        %s461 = scalar_lea.vmem [#allocation11], %s460
        %s462 = smul.u32 2, %s41
        %s463 = smul.u32 2, %s41
        %v464 = vld [vmem:[%s415 + $0x60] sm:$0xff]
        %v465 = vld [vmem:[%s415 + $0x68] sm:$0xff]
        %v466 = vld [vmem:[%s415 + $0x70] sm:$0xff]
        %v467 = vld [vmem:[%s415 + $0x78] sm:$0xff]
        %468 = vrot.lane.b32.xlu0 %v464, 17
        %v469 = vpop.permute.xlu0 %468
        %470 = vrot.lane.b32.xlu0 %v466, 17
        %v471 = vpop.permute.xlu0 %470
        %472 = vrot.lane.b32.xlu0 %v465, 17
        %v473 = vpop.permute.xlu0 %472
        %474 = vrot.lane.b32.xlu0 %v467, 17
        %v475 = vpop.permute.xlu0 %474
        %v476 = vlaneseq
        %v477 = vand.u32 %v476, 127
        %vm478 = vcmp.lt.s32.totalorder %v477, 17
        %v479 = vsel %vm478, %v469, %v473
        %v480 = vsel %vm478, %v471, %v475
        %v481 = vsel %vm478, %v473, %v469
        %v482 = vsel %vm478, %v475, %v471
        %v483 = vld [vmem:[%s11] ss:$8 sm:$0x3]
        %v485 = vperm.slane %v483, 0
        %v486 = vperm.slane %v483, 1
        %v489 = vmul.f32 %v481, %v485
        %v490 = vmul.f32 %v479, %v486
        %v491 = vmul.f32 %v482, %v485
        %v492 = vmul.f32 %v480, %v486
        %493 = vst [vmem:[#allocation2] sm:$0xff] %v489
        %494 = vst [vmem:[#allocation2 + $0x8] sm:$0xff] %v490
        %495 = vst [vmem:[#allocation2 + $0x10] sm:$0xff] %v491
        %496 = vst [vmem:[#allocation2 + $0x18] sm:$0xff] %v492
        %v497 = vld [vmem:[%s415 + $0x40] sm:$0xff]
        %v498 = vld [vmem:[%s415 + $0x48] sm:$0xff]
        %v499 = vld [vmem:[%s415 + $0x50] sm:$0xff]
        %v500 = vld [vmem:[%s415 + $0x58] sm:$0xff]
        %501 = vrot.lane.b32.xlu0 %v497, 16
        %v502 = vpop.permute.xlu0 %501
        %503 = vrot.lane.b32.xlu0 %v499, 16
        %v504 = vpop.permute.xlu0 %503
        %505 = vrot.lane.b32.xlu0 %v498, 16
        %v506 = vpop.permute.xlu0 %505
        %507 = vrot.lane.b32.xlu0 %v500, 16
        %v508 = vpop.permute.xlu0 %507
        %vm509 = vcmp.lt.s32.totalorder %v477, 16
        %v510 = vsel %vm509, %v502, %v506
        %v511 = vsel %vm509, %v504, %v508
        %v512 = vsel %vm509, %v506, %v502
        %v513 = vsel %vm509, %v508, %v504
        %s514 = scalar_lea.vmem %s11, 1
        %v515 = vld [vmem:[%s514] ss:$8 sm:$0x3]
        %v517 = vperm.slane %v515, 0
        %v518 = vperm.slane %v515, 1
        %v521 = vmul.f32 %v512, %v517
        %v522 = vmul.f32 %v510, %v518
        %v523 = vmul.f32 %v513, %v517
        %v524 = vmul.f32 %v511, %v518
        %525 = vst [vmem:[#allocation2 + $0x20] sm:$0xff] %v521
        %526 = vst [vmem:[#allocation2 + $0x28] sm:$0xff] %v522
        %527 = vst [vmem:[#allocation2 + $0x30] sm:$0xff] %v523
        %528 = vst [vmem:[#allocation2 + $0x38] sm:$0xff] %v524
        %v529 = vld [vmem:[%s415 + $0x60] sm:$0xff]
        %v530 = vld [vmem:[%s415 + $0x68] sm:$0xff]
        %v531 = vld [vmem:[%s415 + $0x70] sm:$0xff]
        %v532 = vld [vmem:[%s415 + $0x78] sm:$0xff]
        %533 = vrot.lane.b32.xlu0 %v529, 16
        %v534 = vpop.permute.xlu0 %533
        %535 = vrot.lane.b32.xlu0 %v531, 16
        %v536 = vpop.permute.xlu0 %535
        %537 = vrot.lane.b32.xlu0 %v530, 16
        %v538 = vpop.permute.xlu0 %537
        %539 = vrot.lane.b32.xlu0 %v532, 16
        %v540 = vpop.permute.xlu0 %539
        %v541 = vsel %vm509, %v534, %v538
        %v542 = vsel %vm509, %v536, %v540
        %v543 = vsel %vm509, %v538, %v534
        %v544 = vsel %vm509, %v540, %v536
        %s545 = scalar_lea.vmem %s11, 2
        %v546 = vld [vmem:[%s545] ss:$8 sm:$0x3]
        %v548 = vperm.slane %v546, 0
        %v549 = vperm.slane %v546, 1
        %v552 = vmul.f32 %v543, %v548
        %v553 = vmul.f32 %v541, %v549
        %v554 = vmul.f32 %v544, %v548
        %v555 = vmul.f32 %v542, %v549
        %556 = vst [vmem:[#allocation2 + $0x40] sm:$0xff] %v552
        %557 = vst [vmem:[#allocation2 + $0x48] sm:$0xff] %v553
        %558 = vst [vmem:[#allocation2 + $0x50] sm:$0xff] %v554
        %559 = vst [vmem:[#allocation2 + $0x58] sm:$0xff] %v555
        %v560 = vld [vmem:[%s415 + $0x20] sm:$0xff]
        %v561 = vld [vmem:[%s415 + $0x28] sm:$0xff]
        %v562 = vld [vmem:[%s415 + $0x30] sm:$0xff]
        %v563 = vld [vmem:[%s415 + $0x38] sm:$0xff]
        %564 = vrot.lane.b32.xlu0 %v560, 1
        %v565 = vpop.permute.xlu0 %564
        %566 = vrot.lane.b32.xlu0 %v562, 1
        %v567 = vpop.permute.xlu0 %566
        %568 = vrot.lane.b32.xlu0 %v561, 1
        %v569 = vpop.permute.xlu0 %568
        %570 = vrot.lane.b32.xlu0 %v563, 1
        %v571 = vpop.permute.xlu0 %570
        %vm572 = vcmp.lt.s32.totalorder %v477, 1
        %v573 = vsel %vm572, %v565, %v569
        %v574 = vsel %vm572, %v567, %v571
        %v575 = vsel %vm572, %v569, %v565
        %v576 = vsel %vm572, %v571, %v567
        %s577 = scalar_lea.vmem %s11, 3
        %v578 = vld [vmem:[%s577] ss:$8 sm:$0x3]
        %v580 = vperm.slane %v578, 0
        %v581 = vperm.slane %v578, 1
        %v584 = vmul.f32 %v575, %v580
        %v585 = vmul.f32 %v573, %v581
        %v586 = vmul.f32 %v576, %v580
        %v587 = vmul.f32 %v574, %v581
        %588 = vst [vmem:[#allocation2 + $0x60] sm:$0xff] %v584
        %589 = vst [vmem:[#allocation2 + $0x68] sm:$0xff] %v585
        %590 = vst [vmem:[#allocation2 + $0x70] sm:$0xff] %v586
        %591 = vst [vmem:[#allocation2 + $0x78] sm:$0xff] %v587
        %v592 = vld [vmem:[%s415] sm:$0xff]
        %v593 = vld [vmem:[%s415 + $0x8] sm:$0xff]
        %v594 = vld [vmem:[%s415 + $0x10] sm:$0xff]
        %v595 = vld [vmem:[%s415 + $0x18] sm:$0xff]
        %s596 = scalar_lea.vmem %s11, 4
        %v597 = vld [vmem:[%s596] ss:$8 sm:$0x3]
        %v599 = vperm.slane %v597, 0
        %v600 = vperm.slane %v597, 1
        %v603 = vmul.f32 %v592, %v599
        %v604 = vmul.f32 %v593, %v600
        %v605 = vmul.f32 %v594, %v599
        %v606 = vmul.f32 %v595, %v600
        %607 = vst [vmem:[#allocation2 + $0x80] sm:$0xff] %v603
        %608 = vst [vmem:[#allocation2 + $0x88] sm:$0xff] %v604
        %609 = vst [vmem:[#allocation2 + $0x90] sm:$0xff] %v605
        %610 = vst [vmem:[#allocation2 + $0x98] sm:$0xff] %v606
        %v611 = vld [vmem:[%s415 + $0x20] sm:$0xff]
        %v612 = vld [vmem:[%s415 + $0x28] sm:$0xff]
        %v613 = vld [vmem:[%s415 + $0x30] sm:$0xff]
        %v614 = vld [vmem:[%s415 + $0x38] sm:$0xff]
        %s615 = scalar_lea.vmem %s11, 5
        %v616 = vld [vmem:[%s615] ss:$8 sm:$0x3]
        %v618 = vperm.slane %v616, 0
        %v619 = vperm.slane %v616, 1
        %v622 = vmul.f32 %v611, %v618
        %v623 = vmul.f32 %v612, %v619
        %v624 = vmul.f32 %v613, %v618
        %v625 = vmul.f32 %v614, %v619
        %626 = vst [vmem:[#allocation2 + $0xa0] sm:$0xff] %v622
        %627 = vst [vmem:[#allocation2 + $0xa8] sm:$0xff] %v623
        %628 = vst [vmem:[#allocation2 + $0xb0] sm:$0xff] %v624
        %629 = vst [vmem:[#allocation2 + $0xb8] sm:$0xff] %v625
        %v630 = vld [vmem:[%s415 + $0x60] sm:$0xff]
        %v631 = vld [vmem:[%s415 + $0x68] sm:$0xff]
        %v632 = vld [vmem:[%s415 + $0x70] sm:$0xff]
        %v633 = vld [vmem:[%s415 + $0x78] sm:$0xff]
        %634 = vrot.lane.b32.xlu0 %v630, 1
        %v635 = vpop.permute.xlu0 %634
        %636 = vrot.lane.b32.xlu0 %v632, 1
        %v637 = vpop.permute.xlu0 %636
        %638 = vrot.lane.b32.xlu0 %v631, 1
        %v639 = vpop.permute.xlu0 %638
        %640 = vrot.lane.b32.xlu0 %v633, 1
        %v641 = vpop.permute.xlu0 %640
        %v642 = vsel %vm572, %v635, %v639
        %v643 = vsel %vm572, %v637, %v641
        %v644 = vsel %vm572, %v639, %v635
        %v645 = vsel %vm572, %v641, %v637
        %s646 = scalar_lea.vmem %s11, 6
        %v647 = vld [vmem:[%s646] ss:$8 sm:$0x3]
        %v649 = vperm.slane %v647, 0
        %v650 = vperm.slane %v647, 1
        %v653 = vmul.f32 %v644, %v649
        %v654 = vmul.f32 %v642, %v650
        %v655 = vmul.f32 %v645, %v649
        %v656 = vmul.f32 %v643, %v650
        %657 = vst [vmem:[#allocation2 + $0xc0] sm:$0xff] %v653
        %658 = vst [vmem:[#allocation2 + $0xc8] sm:$0xff] %v654
        %659 = vst [vmem:[#allocation2 + $0xd0] sm:$0xff] %v655
        %660 = vst [vmem:[#allocation2 + $0xd8] sm:$0xff] %v656
        %v661 = vld [vmem:[%s415 + $0x40] sm:$0xff]
        %v662 = vld [vmem:[%s415 + $0x48] sm:$0xff]
        %v663 = vld [vmem:[%s415 + $0x50] sm:$0xff]
        %v664 = vld [vmem:[%s415 + $0x58] sm:$0xff]
        %s665 = scalar_lea.vmem %s11, 7
        %v666 = vld [vmem:[%s665] ss:$8 sm:$0x3]
        %v668 = vperm.slane %v666, 0
        %v669 = vperm.slane %v666, 1
        %v672 = vmul.f32 %v661, %v668
        %v673 = vmul.f32 %v662, %v669
        %v674 = vmul.f32 %v663, %v668
        %v675 = vmul.f32 %v664, %v669
        %676 = vst [vmem:[#allocation2 + $0xe0] sm:$0xff] %v672
        %677 = vst [vmem:[#allocation2 + $0xe8] sm:$0xff] %v673
        %678 = vst [vmem:[#allocation2 + $0xf0] sm:$0xff] %v674
        %679 = vst [vmem:[#allocation2 + $0xf8] sm:$0xff] %v675
        %v680 = vld [vmem:[%s415 + $0x60] sm:$0xff]
        %v681 = vld [vmem:[%s415 + $0x68] sm:$0xff]
        %v682 = vld [vmem:[%s415 + $0x70] sm:$0xff]
        %v683 = vld [vmem:[%s415 + $0x78] sm:$0xff]
        %s684 = scalar_lea.vmem %s11, 16
        %v685 = vld [vmem:[%s684] ss:$8 sm:$0x3]
        %v687 = vperm.slane %v685, 0
        %v688 = vperm.slane %v685, 1
        %v691 = vmul.f32 %v680, %v687
        %v692 = vmul.f32 %v681, %v688
        %v693 = vmul.f32 %v682, %v687
        %v694 = vmul.f32 %v683, %v688
        %695 = vst [vmem:[#allocation2 + $0x100] sm:$0xff] %v691
        %696 = vst [vmem:[#allocation2 + $0x108] sm:$0xff] %v692
        %697 = vst [vmem:[#allocation2 + $0x110] sm:$0xff] %v693
        %698 = vst [vmem:[#allocation2 + $0x118] sm:$0xff] %v694
        %v699 = vld [vmem:[%s3] sm:$0xff]
        %v700 = vld [vmem:[%s3 + $0x8] sm:$0xff]
        %v701 = vld [vmem:[%s3 + $0x10] sm:$0xff]
        %v702 = vld [vmem:[%s3 + $0x18] sm:$0xff]
        %v703 = vld [vmem:[%s3 + $0x20] sm:$0xff]
        %v704 = vld [vmem:[%s3 + $0x28] sm:$0xff]
        %v705 = vld [vmem:[%s3 + $0x30] sm:$0xff]
        %v706 = vld [vmem:[%s3 + $0x38] sm:$0xff]
        %v707 = vld [vmem:[#allocation2] sm:$0xff]
        %v708 = vld [vmem:[#allocation2 + $0x8] sm:$0xff]
        %v709 = vld [vmem:[#allocation2 + $0x10] sm:$0xff]
        %v710 = vld [vmem:[#allocation2 + $0x18] sm:$0xff]
        %v711 = vld [vmem:[#allocation2 + $0x20] sm:$0xff]
        %v712 = vld [vmem:[#allocation2 + $0x28] sm:$0xff]
        %v713 = vld [vmem:[#allocation2 + $0x30] sm:$0xff]
        %v714 = vld [vmem:[#allocation2 + $0x38] sm:$0xff]
        %v715 = vld [vmem:[#allocation2 + $0x40] sm:$0xff]
        %v716 = vld [vmem:[#allocation2 + $0x48] sm:$0xff]
        %v717 = vld [vmem:[#allocation2 + $0x50] sm:$0xff]
        %v718 = vld [vmem:[#allocation2 + $0x58] sm:$0xff]
        %v719 = vld [vmem:[#allocation2 + $0x60] sm:$0xff]
        %v720 = vld [vmem:[#allocation2 + $0x68] sm:$0xff]
        %v721 = vld [vmem:[#allocation2 + $0x70] sm:$0xff]
        %v722 = vld [vmem:[#allocation2 + $0x78] sm:$0xff]
        %v723 = vld [vmem:[#allocation2 + $0x80] sm:$0xff]
        %v724 = vld [vmem:[#allocation2 + $0x88] sm:$0xff]
        %v725 = vld [vmem:[#allocation2 + $0x90] sm:$0xff]
        %v726 = vld [vmem:[#allocation2 + $0x98] sm:$0xff]
        %v727 = vld [vmem:[#allocation2 + $0xa0] sm:$0xff]
        %v728 = vld [vmem:[#allocation2 + $0xa8] sm:$0xff]
        %v729 = vld [vmem:[#allocation2 + $0xb0] sm:$0xff]
        %v730 = vld [vmem:[#allocation2 + $0xb8] sm:$0xff]
        %v731 = vld [vmem:[#allocation2 + $0xc0] sm:$0xff]
        %v732 = vld [vmem:[#allocation2 + $0xc8] sm:$0xff]
        %v733 = vld [vmem:[#allocation2 + $0xd0] sm:$0xff]
        %v734 = vld [vmem:[#allocation2 + $0xd8] sm:$0xff]
        %v735 = vld [vmem:[#allocation2 + $0xe0] sm:$0xff]
        %v736 = vld [vmem:[#allocation2 + $0xe8] sm:$0xff]
        %v737 = vld [vmem:[#allocation2 + $0xf0] sm:$0xff]
        %v738 = vld [vmem:[#allocation2 + $0xf8] sm:$0xff]
        %v739 = vld [vmem:[#allocation2 + $0x100] sm:$0xff]
        %v740 = vld [vmem:[#allocation2 + $0x108] sm:$0xff]
        %v741 = vld [vmem:[#allocation2 + $0x110] sm:$0xff]
        %v742 = vld [vmem:[#allocation2 + $0x118] sm:$0xff]
        %v743 = vld [vmem:[%s4] sm:$0xff]
        %v744 = vld [vmem:[%s4 + $0x8] sm:$0xff]
        %v745 = vld [vmem:[%s4 + $0x10] sm:$0xff]
        %v746 = vld [vmem:[%s4 + $0x18] sm:$0xff]
        %748 = vset.pattern.permute.xlu0 0
        %749 = vperm.xlu0 %748, %v743
        %v750 = vpop.permute.xlu0 %749
        %753 = vset.pattern.permute.xlu0 0
        %754 = vperm.xlu0 %753, %v744
        %v755 = vpop.permute.xlu0 %754
        %758 = vset.pattern.permute.xlu0 0
        %759 = vperm.xlu0 %758, %v745
        %v760 = vpop.permute.xlu0 %759
        %763 = vset.pattern.permute.xlu0 0
        %764 = vperm.xlu0 %763, %v746
        %v765 = vpop.permute.xlu0 %764
        %vm767 = vcmask 130048
        %v769 = vsel %vm767, %v700, 0
        %v772 = vsel %vm767, %v702, 0
        %v775 = vsel %vm767, %v704, 0
        %v778 = vsel %vm767, %v706, 0
        %780 = vmatpush.msra.mxu0 %v737
        %781 = vmatpush.msra.mxu0 %v735
        %782 = vmatpush.msra.mxu0 %v733
        %783 = vmatpush.msra.mxu0 %v731
        %784 = vmatpush.msra.mxu0 %v729
        %785 = vmatpush.msra.mxu0 %v727
        %786 = vmatpush.msra.mxu0 %v725
        %787 = vmatpush.msra.mxu0 %v723
        %788 = vmatpush.msra.mxu0 %v721
        %789 = vmatpush.msra.mxu0 %v719
        %790 = vmatpush.msra.mxu0 %v717
        %791 = vmatpush.msra.mxu0 %v715
        %792 = vmatpush.msra.mxu0 %v713
        %793 = vmatpush.msra.mxu0 %v711
        %794 = vmatpush.msra.mxu0 %v709
        %795 = vmatpush.msra.mxu0 %v707
        %796 = vmatmul.f32.gmra.mxu0 %v699
        %v797 = vpop.f32.mrf.mxu0
        %v798 = vadd.f32 %v750, %v797
        %799 = vmatmul.f32.gmra.mxu0 %v701
        %v800 = vpop.f32.mrf.mxu0
        %v801 = vadd.f32 %v755, %v800
        %802 = vmatmul.f32.gmra.mxu0 %v703
        %v803 = vpop.f32.mrf.mxu0
        %v804 = vadd.f32 %v760, %v803
        %805 = vmatmul.f32.gmra.mxu0 %v705
        %v806 = vpop.f32.mrf.mxu0
        %v807 = vadd.f32 %v765, %v806
        %808 = vdwg.mxu0
        %809 = vmatpush.msra.mxu0 0.0
        %810 = vmatpush.msra.mxu0 0.0
        %811 = vmatpush.msra.mxu0 0.0
        %812 = vmatpush.msra.mxu0 0.0
        %813 = vmatpush.msra.mxu0 0.0
        %814 = vmatpush.msra.mxu0 0.0
        %815 = vmatpush.msra.mxu0 0.0
        %816 = vmatpush.msra.mxu0 0.0
        %817 = vmatpush.msra.mxu0 0.0
        %818 = vmatpush.msra.mxu0 0.0
        %819 = vmatpush.msra.mxu0 0.0
        %820 = vmatpush.msra.mxu0 0.0
        %821 = vmatpush.msra.mxu0 0.0
        %822 = vmatpush.msra.mxu0 0.0
        %823 = vmatpush.msra.mxu0 %v741
        %824 = vmatpush.msra.mxu0 %v739
        %825 = vmatmul.f32.gmra.mxu0 %v769
        %v826 = vpop.f32.mrf.mxu0
        %v827 = vadd.f32 %v798, %v826
        %828 = vmatmul.f32.gmra.mxu0 %v772
        %v829 = vpop.f32.mrf.mxu0
        %v830 = vadd.f32 %v801, %v829
        %831 = vmatmul.f32.gmra.mxu0 %v775
        %v832 = vpop.f32.mrf.mxu0
        %v833 = vadd.f32 %v804, %v832
        %834 = vmatmul.f32.gmra.mxu0 %v778
        %v835 = vpop.f32.mrf.mxu0
        %v836 = vadd.f32 %v807, %v835
        %837 = vdwg.mxu0
        %838 = vmatpush.msra.mxu0 %v738
        %839 = vmatpush.msra.mxu0 %v736
        %840 = vmatpush.msra.mxu0 %v734
        %841 = vmatpush.msra.mxu0 %v732
        %842 = vmatpush.msra.mxu0 %v730
        %843 = vmatpush.msra.mxu0 %v728
        %844 = vmatpush.msra.mxu0 %v726
        %845 = vmatpush.msra.mxu0 %v724
        %846 = vmatpush.msra.mxu0 %v722
        %847 = vmatpush.msra.mxu0 %v720
        %848 = vmatpush.msra.mxu0 %v718
        %849 = vmatpush.msra.mxu0 %v716
        %850 = vmatpush.msra.mxu0 %v714
        %851 = vmatpush.msra.mxu0 %v712
        %852 = vmatpush.msra.mxu0 %v710
        %853 = vmatpush.msra.mxu0 %v708
        %854 = vmatmul.f32.gmra.mxu0 %v699
        %v855 = vpop.f32.mrf.mxu0
        %v856 = vadd.f32 %v750, %v855
        %857 = vmatmul.f32.gmra.mxu0 %v701
        %v858 = vpop.f32.mrf.mxu0
        %v859 = vadd.f32 %v755, %v858
        %860 = vmatmul.f32.gmra.mxu0 %v703
        %v861 = vpop.f32.mrf.mxu0
        %v862 = vadd.f32 %v760, %v861
        %863 = vmatmul.f32.gmra.mxu0 %v705
        %v864 = vpop.f32.mrf.mxu0
        %v865 = vadd.f32 %v765, %v864
        %866 = vdwg.mxu0
        %867 = vmatpush.msra.mxu0 0.0
        %868 = vmatpush.msra.mxu0 0.0
        %869 = vmatpush.msra.mxu0 0.0
        %870 = vmatpush.msra.mxu0 0.0
        %871 = vmatpush.msra.mxu0 0.0
        %872 = vmatpush.msra.mxu0 0.0
        %873 = vmatpush.msra.mxu0 0.0
        %874 = vmatpush.msra.mxu0 0.0
        %875 = vmatpush.msra.mxu0 0.0
        %876 = vmatpush.msra.mxu0 0.0
        %877 = vmatpush.msra.mxu0 0.0
        %878 = vmatpush.msra.mxu0 0.0
        %879 = vmatpush.msra.mxu0 0.0
        %880 = vmatpush.msra.mxu0 0.0
        %881 = vmatpush.msra.mxu0 %v742
        %882 = vmatpush.msra.mxu0 %v740
        %883 = vmatmul.f32.gmra.mxu0 %v769
        %v884 = vpop.f32.mrf.mxu0
        %v885 = vadd.f32 %v856, %v884
        %886 = vmatmul.f32.gmra.mxu0 %v772
        %v887 = vpop.f32.mrf.mxu0
        %v888 = vadd.f32 %v859, %v887
        %889 = vmatmul.f32.gmra.mxu0 %v775
        %v890 = vpop.f32.mrf.mxu0
        %v891 = vadd.f32 %v862, %v890
        %892 = vmatmul.f32.gmra.mxu0 %v778
        %v893 = vpop.f32.mrf.mxu0
        %v894 = vadd.f32 %v865, %v893
        %895 = vdwg.mxu0
        %v896 = vmax.f32 %v827, 0.0
        %v897 = vmax.f32 %v885, 0.0
        %v898 = vmax.f32 %v830, 0.0
        %v899 = vmax.f32 %v888, 0.0
        %v900 = vmax.f32 %v833, 0.0
        %v901 = vmax.f32 %v891, 0.0
        %v902 = vmax.f32 %v836, 0.0
        %v903 = vmax.f32 %v894, 0.0
        %904 = vrot.lane.b32.xlu0 %v896, 17
        %v905 = vpop.permute.xlu0 %904
        %906 = vrot.lane.b32.xlu0 %v898, 17
        %v907 = vpop.permute.xlu0 %906
        %908 = vrot.lane.b32.xlu0 %v900, 17
        %v909 = vpop.permute.xlu0 %908
        %910 = vrot.lane.b32.xlu0 %v902, 17
        %v911 = vpop.permute.xlu0 %910
        %912 = vrot.lane.b32.xlu0 %v897, 17
        %v913 = vpop.permute.xlu0 %912
        %914 = vrot.lane.b32.xlu0 %v899, 17
        %v915 = vpop.permute.xlu0 %914
        %916 = vrot.lane.b32.xlu0 %v901, 17
        %v917 = vpop.permute.xlu0 %916
        %918 = vrot.lane.b32.xlu0 %v903, 17
        %v919 = vpop.permute.xlu0 %918
        %v920 = vsel %vm478, %v905, %v913
        %v921 = vsel %vm478, %v907, %v915
        %v922 = vsel %vm478, %v909, %v917
        %v923 = vsel %vm478, %v911, %v919
        %v924 = vsel %vm478, %v913, %v905
        %v925 = vsel %vm478, %v915, %v907
        %v926 = vsel %vm478, %v917, %v909
        %v927 = vsel %vm478, %v919, %v911
        %v928 = vld [vmem:[%s12] ss:$8 sm:$0x3]
        %v930 = vperm.slane %v928, 0
        %v931 = vperm.slane %v928, 1
        %v934 = vmul.f32 %v924, %v930
        %v935 = vmul.f32 %v920, %v931
        %v936 = vmul.f32 %v925, %v930
        %v937 = vmul.f32 %v921, %v931
        %v938 = vmul.f32 %v926, %v930
        %v939 = vmul.f32 %v922, %v931
        %v940 = vmul.f32 %v927, %v930
        %v941 = vmul.f32 %v923, %v931
        %942 = vst [vmem:[#allocation2] sm:$0xff] %v934
        %943 = vst [vmem:[#allocation2 + $0x8] sm:$0xff] %v935
        %944 = vst [vmem:[#allocation2 + $0x10] sm:$0xff] %v936
        %945 = vst [vmem:[#allocation2 + $0x18] sm:$0xff] %v937
        %946 = vst [vmem:[#allocation2 + $0x20] sm:$0xff] %v938
        %947 = vst [vmem:[#allocation2 + $0x28] sm:$0xff] %v939
        %948 = vst [vmem:[#allocation2 + $0x30] sm:$0xff] %v940
        %949 = vst [vmem:[#allocation2 + $0x38] sm:$0xff] %v941
        %950 = vrot.lane.b32.xlu0 %v896, 16
        %v951 = vpop.permute.xlu0 %950
        %952 = vrot.lane.b32.xlu0 %v898, 16
        %v953 = vpop.permute.xlu0 %952
        %954 = vrot.lane.b32.xlu0 %v900, 16
        %v955 = vpop.permute.xlu0 %954
        %956 = vrot.lane.b32.xlu0 %v902, 16
        %v957 = vpop.permute.xlu0 %956
        %958 = vrot.lane.b32.xlu0 %v897, 16
        %v959 = vpop.permute.xlu0 %958
        %960 = vrot.lane.b32.xlu0 %v899, 16
        %v961 = vpop.permute.xlu0 %960
        %962 = vrot.lane.b32.xlu0 %v901, 16
        %v963 = vpop.permute.xlu0 %962
        %964 = vrot.lane.b32.xlu0 %v903, 16
        %v965 = vpop.permute.xlu0 %964
        %v966 = vsel %vm509, %v951, %v959
        %v967 = vsel %vm509, %v953, %v961
        %v968 = vsel %vm509, %v955, %v963
        %v969 = vsel %vm509, %v957, %v965
        %v970 = vsel %vm509, %v959, %v951
        %v971 = vsel %vm509, %v961, %v953
        %v972 = vsel %vm509, %v963, %v955
        %v973 = vsel %vm509, %v965, %v957
        %s974 = scalar_lea.vmem %s12, 1
        %v975 = vld [vmem:[%s974] ss:$8 sm:$0x3]
        %v977 = vperm.slane %v975, 0
        %v978 = vperm.slane %v975, 1
        %v981 = vmul.f32 %v970, %v977
        %v982 = vmul.f32 %v966, %v978
        %v983 = vmul.f32 %v971, %v977
        %v984 = vmul.f32 %v967, %v978
        %v985 = vmul.f32 %v972, %v977
        %v986 = vmul.f32 %v968, %v978
        %v987 = vmul.f32 %v973, %v977
        %v988 = vmul.f32 %v969, %v978
        %989 = vst [vmem:[#allocation2 + $0x40] sm:$0xff] %v981
        %990 = vst [vmem:[#allocation2 + $0x48] sm:$0xff] %v982
        %991 = vst [vmem:[#allocation2 + $0x50] sm:$0xff] %v983
        %992 = vst [vmem:[#allocation2 + $0x58] sm:$0xff] %v984
        %993 = vst [vmem:[#allocation2 + $0x60] sm:$0xff] %v985
        %994 = vst [vmem:[#allocation2 + $0x68] sm:$0xff] %v986
        %995 = vst [vmem:[#allocation2 + $0x70] sm:$0xff] %v987
        %996 = vst [vmem:[#allocation2 + $0x78] sm:$0xff] %v988
        %997 = vrot.lane.b32.xlu0 %v896, 15
        %v998 = vpop.permute.xlu0 %997
        %999 = vrot.lane.b32.xlu0 %v898, 15
        %v1000 = vpop.permute.xlu0 %999
        %1001 = vrot.lane.b32.xlu0 %v900, 15
        %v1002 = vpop.permute.xlu0 %1001
        %1003 = vrot.lane.b32.xlu0 %v902, 15
        %v1004 = vpop.permute.xlu0 %1003
        %1005 = vrot.lane.b32.xlu0 %v897, 15
        %v1006 = vpop.permute.xlu0 %1005
        %1007 = vrot.lane.b32.xlu0 %v899, 15
        %v1008 = vpop.permute.xlu0 %1007
        %1009 = vrot.lane.b32.xlu0 %v901, 15
        %v1010 = vpop.permute.xlu0 %1009
        %1011 = vrot.lane.b32.xlu0 %v903, 15
        %v1012 = vpop.permute.xlu0 %1011
        %vm1013 = vcmp.lt.s32.totalorder %v477, 15
        %v1014 = vsel %vm1013, %v998, %v1006
        %v1015 = vsel %vm1013, %v1000, %v1008
        %v1016 = vsel %vm1013, %v1002, %v1010
        %v1017 = vsel %vm1013, %v1004, %v1012
        %v1018 = vsel %vm1013, %v1006, %v998
        %v1019 = vsel %vm1013, %v1008, %v1000
        %v1020 = vsel %vm1013, %v1010, %v1002
        %v1021 = vsel %vm1013, %v1012, %v1004
        %s1022 = scalar_lea.vmem %s12, 2
        %v1023 = vld [vmem:[%s1022] ss:$8 sm:$0x3]
        %v1025 = vperm.slane %v1023, 0
        %v1026 = vperm.slane %v1023, 1
        %v1029 = vmul.f32 %v1018, %v1025
        %v1030 = vmul.f32 %v1014, %v1026
        %v1031 = vmul.f32 %v1019, %v1025
        %v1032 = vmul.f32 %v1015, %v1026
        %v1033 = vmul.f32 %v1020, %v1025
        %v1034 = vmul.f32 %v1016, %v1026
        %v1035 = vmul.f32 %v1021, %v1025
        %v1036 = vmul.f32 %v1017, %v1026
        %1037 = vst [vmem:[#allocation2 + $0x80] sm:$0xff] %v1029
        %1038 = vst [vmem:[#allocation2 + $0x88] sm:$0xff] %v1030
        %1039 = vst [vmem:[#allocation2 + $0x90] sm:$0xff] %v1031
        %1040 = vst [vmem:[#allocation2 + $0x98] sm:$0xff] %v1032
        %1041 = vst [vmem:[#allocation2 + $0xa0] sm:$0xff] %v1033
        %1042 = vst [vmem:[#allocation2 + $0xa8] sm:$0xff] %v1034
        %1043 = vst [vmem:[#allocation2 + $0xb0] sm:$0xff] %v1035
        %1044 = vst [vmem:[#allocation2 + $0xb8] sm:$0xff] %v1036
        %1045 = vrot.lane.b32.xlu0 %v896, 1
        %v1046 = vpop.permute.xlu0 %1045
        %1047 = vrot.lane.b32.xlu0 %v898, 1
        %v1048 = vpop.permute.xlu0 %1047
        %1049 = vrot.lane.b32.xlu0 %v900, 1
        %v1050 = vpop.permute.xlu0 %1049
        %1051 = vrot.lane.b32.xlu0 %v902, 1
        %v1052 = vpop.permute.xlu0 %1051
        %1053 = vrot.lane.b32.xlu0 %v897, 1
        %v1054 = vpop.permute.xlu0 %1053
        %1055 = vrot.lane.b32.xlu0 %v899, 1
        %v1056 = vpop.permute.xlu0 %1055
        %1057 = vrot.lane.b32.xlu0 %v901, 1
        %v1058 = vpop.permute.xlu0 %1057
        %1059 = vrot.lane.b32.xlu0 %v903, 1
        %v1060 = vpop.permute.xlu0 %1059
        %v1061 = vsel %vm572, %v1046, %v1054
        %v1062 = vsel %vm572, %v1048, %v1056
        %v1063 = vsel %vm572, %v1050, %v1058
        %v1064 = vsel %vm572, %v1052, %v1060
        %v1065 = vsel %vm572, %v1054, %v1046
        %v1066 = vsel %vm572, %v1056, %v1048
        %v1067 = vsel %vm572, %v1058, %v1050
        %v1068 = vsel %vm572, %v1060, %v1052
        %s1069 = scalar_lea.vmem %s12, 3
        %v1070 = vld [vmem:[%s1069] ss:$8 sm:$0x3]
        %v1072 = vperm.slane %v1070, 0
        %v1073 = vperm.slane %v1070, 1
        %v1076 = vmul.f32 %v1065, %v1072
        %v1077 = vmul.f32 %v1061, %v1073
        %v1078 = vmul.f32 %v1066, %v1072
        %v1079 = vmul.f32 %v1062, %v1073
        %v1080 = vmul.f32 %v1067, %v1072
        %v1081 = vmul.f32 %v1063, %v1073
        %v1082 = vmul.f32 %v1068, %v1072
        %v1083 = vmul.f32 %v1064, %v1073
        %1084 = vst [vmem:[#allocation2 + $0xc0] sm:$0xff] %v1076
        %1085 = vst [vmem:[#allocation2 + $0xc8] sm:$0xff] %v1077
        %1086 = vst [vmem:[#allocation2 + $0xd0] sm:$0xff] %v1078
        %1087 = vst [vmem:[#allocation2 + $0xd8] sm:$0xff] %v1079
        %1088 = vst [vmem:[#allocation2 + $0xe0] sm:$0xff] %v1080
        %1089 = vst [vmem:[#allocation2 + $0xe8] sm:$0xff] %v1081
        %1090 = vst [vmem:[#allocation2 + $0xf0] sm:$0xff] %v1082
        %1091 = vst [vmem:[#allocation2 + $0xf8] sm:$0xff] %v1083
        %s1092 = scalar_lea.vmem %s12, 4
        %v1093 = vld [vmem:[%s1092] ss:$8 sm:$0x3]
        %v1095 = vperm.slane %v1093, 0
        %v1096 = vperm.slane %v1093, 1
        %v1099 = vmul.f32 %v896, %v1095
        %v1100 = vmul.f32 %v897, %v1096
        %v1101 = vmul.f32 %v898, %v1095
        %v1102 = vmul.f32 %v899, %v1096
        %v1103 = vmul.f32 %v900, %v1095
        %v1104 = vmul.f32 %v901, %v1096
        %v1105 = vmul.f32 %v902, %v1095
        %v1106 = vmul.f32 %v903, %v1096
        %1107 = vst [vmem:[#allocation2 + $0x100] sm:$0xff] %v1099
        %1108 = vst [vmem:[#allocation2 + $0x108] sm:$0xff] %v1100
        %1109 = vst [vmem:[#allocation2 + $0x110] sm:$0xff] %v1101
        %1110 = vst [vmem:[#allocation2 + $0x118] sm:$0xff] %v1102
        %1111 = vst [vmem:[#allocation2 + $0x120] sm:$0xff] %v1103
        %1112 = vst [vmem:[#allocation2 + $0x128] sm:$0xff] %v1104
        %1113 = vst [vmem:[#allocation2 + $0x130] sm:$0xff] %v1105
        %1114 = vst [vmem:[#allocation2 + $0x138] sm:$0xff] %v1106
        %1115 = vrot.lane.b32.xlu0 %v896, 127
        %v1116 = vpop.permute.xlu0 %1115
        %1117 = vrot.lane.b32.xlu0 %v898, 127
        %v1118 = vpop.permute.xlu0 %1117
        %1119 = vrot.lane.b32.xlu0 %v900, 127
        %v1120 = vpop.permute.xlu0 %1119
        %1121 = vrot.lane.b32.xlu0 %v902, 127
        %v1122 = vpop.permute.xlu0 %1121
        %1123 = vrot.lane.b32.xlu0 %v897, 127
        %v1124 = vpop.permute.xlu0 %1123
        %1125 = vrot.lane.b32.xlu0 %v899, 127
        %v1126 = vpop.permute.xlu0 %1125
        %1127 = vrot.lane.b32.xlu0 %v901, 127
        %v1128 = vpop.permute.xlu0 %1127
        %1129 = vrot.lane.b32.xlu0 %v903, 127
        %v1130 = vpop.permute.xlu0 %1129
        %vm1131 = vcmp.lt.s32.totalorder %v477, 127
        %v1132 = vsel %vm1131, %v1116, %v1124
        %v1133 = vsel %vm1131, %v1118, %v1126
        %v1134 = vsel %vm1131, %v1120, %v1128
        %v1135 = vsel %vm1131, %v1122, %v1130
        %v1136 = vsel %vm1131, %v1124, %v1116
        %v1137 = vsel %vm1131, %v1126, %v1118
        %v1138 = vsel %vm1131, %v1128, %v1120
        %v1139 = vsel %vm1131, %v1130, %v1122
        %s1140 = scalar_lea.vmem %s12, 5
        %v1141 = vld [vmem:[%s1140] ss:$8 sm:$0x3]
        %v1143 = vperm.slane %v1141, 0
        %v1144 = vperm.slane %v1141, 1
        %v1147 = vmul.f32 %v1132, %v1143
        %v1148 = vmul.f32 %v1136, %v1144
        %v1149 = vmul.f32 %v1133, %v1143
        %v1150 = vmul.f32 %v1137, %v1144
        %v1151 = vmul.f32 %v1134, %v1143
        %v1152 = vmul.f32 %v1138, %v1144
        %v1153 = vmul.f32 %v1135, %v1143
        %v1154 = vmul.f32 %v1139, %v1144
        %1155 = vst [vmem:[#allocation2 + $0x140] sm:$0xff] %v1147
        %1156 = vst [vmem:[#allocation2 + $0x148] sm:$0xff] %v1148
        %1157 = vst [vmem:[#allocation2 + $0x150] sm:$0xff] %v1149
        %1158 = vst [vmem:[#allocation2 + $0x158] sm:$0xff] %v1150
        %1159 = vst [vmem:[#allocation2 + $0x160] sm:$0xff] %v1151
        %1160 = vst [vmem:[#allocation2 + $0x168] sm:$0xff] %v1152
        %1161 = vst [vmem:[#allocation2 + $0x170] sm:$0xff] %v1153
        %1162 = vst [vmem:[#allocation2 + $0x178] sm:$0xff] %v1154
        %1163 = vrot.lane.b32.xlu0 %v896, 113
        %v1164 = vpop.permute.xlu0 %1163
        %1165 = vrot.lane.b32.xlu0 %v898, 113
        %v1166 = vpop.permute.xlu0 %1165
        %1167 = vrot.lane.b32.xlu0 %v900, 113
        %v1168 = vpop.permute.xlu0 %1167
        %1169 = vrot.lane.b32.xlu0 %v902, 113
        %v1170 = vpop.permute.xlu0 %1169
        %1171 = vrot.lane.b32.xlu0 %v897, 113
        %v1172 = vpop.permute.xlu0 %1171
        %1173 = vrot.lane.b32.xlu0 %v899, 113
        %v1174 = vpop.permute.xlu0 %1173
        %1175 = vrot.lane.b32.xlu0 %v901, 113
        %v1176 = vpop.permute.xlu0 %1175
        %1177 = vrot.lane.b32.xlu0 %v903, 113
        %v1178 = vpop.permute.xlu0 %1177
        %vm1179 = vcmp.lt.s32.totalorder %v477, 113
        %v1180 = vsel %vm1179, %v1164, %v1172
        %v1181 = vsel %vm1179, %v1166, %v1174
        %v1182 = vsel %vm1179, %v1168, %v1176
        %v1183 = vsel %vm1179, %v1170, %v1178
        %v1184 = vsel %vm1179, %v1172, %v1164
        %v1185 = vsel %vm1179, %v1174, %v1166
        %v1186 = vsel %vm1179, %v1176, %v1168
        %v1187 = vsel %vm1179, %v1178, %v1170
        %s1188 = scalar_lea.vmem %s12, 6
        %v1189 = vld [vmem:[%s1188] ss:$8 sm:$0x3]
        %v1191 = vperm.slane %v1189, 0
        %v1192 = vperm.slane %v1189, 1
        %v1195 = vmul.f32 %v1180, %v1191
        %v1196 = vmul.f32 %v1184, %v1192
        %v1197 = vmul.f32 %v1181, %v1191
        %v1198 = vmul.f32 %v1185, %v1192
        %v1199 = vmul.f32 %v1182, %v1191
        %v1200 = vmul.f32 %v1186, %v1192
        %v1201 = vmul.f32 %v1183, %v1191
        %v1202 = vmul.f32 %v1187, %v1192
        %1203 = vst [vmem:[#allocation2 + $0x180] sm:$0xff] %v1195
        %1204 = vst [vmem:[#allocation2 + $0x188] sm:$0xff] %v1196
        %1205 = vst [vmem:[#allocation2 + $0x190] sm:$0xff] %v1197
        %1206 = vst [vmem:[#allocation2 + $0x198] sm:$0xff] %v1198
        %1207 = vst [vmem:[#allocation2 + $0x1a0] sm:$0xff] %v1199
        %1208 = vst [vmem:[#allocation2 + $0x1a8] sm:$0xff] %v1200
        %1209 = vst [vmem:[#allocation2 + $0x1b0] sm:$0xff] %v1201
        %1210 = vst [vmem:[#allocation2 + $0x1b8] sm:$0xff] %v1202
        %1211 = vrot.lane.b32.xlu0 %v896, 112
        %v1212 = vpop.permute.xlu0 %1211
        %1213 = vrot.lane.b32.xlu0 %v898, 112
        %v1214 = vpop.permute.xlu0 %1213
        %1215 = vrot.lane.b32.xlu0 %v900, 112
        %v1216 = vpop.permute.xlu0 %1215
        %1217 = vrot.lane.b32.xlu0 %v902, 112
        %v1218 = vpop.permute.xlu0 %1217
        %1219 = vrot.lane.b32.xlu0 %v897, 112
        %v1220 = vpop.permute.xlu0 %1219
        %1221 = vrot.lane.b32.xlu0 %v899, 112
        %v1222 = vpop.permute.xlu0 %1221
        %1223 = vrot.lane.b32.xlu0 %v901, 112
        %v1224 = vpop.permute.xlu0 %1223
        %1225 = vrot.lane.b32.xlu0 %v903, 112
        %v1226 = vpop.permute.xlu0 %1225
        %vm1227 = vcmp.lt.s32.totalorder %v477, 112
        %v1228 = vsel %vm1227, %v1212, %v1220
        %v1229 = vsel %vm1227, %v1214, %v1222
        %v1230 = vsel %vm1227, %v1216, %v1224
        %v1231 = vsel %vm1227, %v1218, %v1226
        %v1232 = vsel %vm1227, %v1220, %v1212
        %v1233 = vsel %vm1227, %v1222, %v1214
        %v1234 = vsel %vm1227, %v1224, %v1216
        %v1235 = vsel %vm1227, %v1226, %v1218
        %s1236 = scalar_lea.vmem %s12, 7
        %v1237 = vld [vmem:[%s1236] ss:$8 sm:$0x3]
        %v1239 = vperm.slane %v1237, 0
        %v1240 = vperm.slane %v1237, 1
        %v1243 = vmul.f32 %v1228, %v1239
        %v1244 = vmul.f32 %v1232, %v1240
        %v1245 = vmul.f32 %v1229, %v1239
        %v1246 = vmul.f32 %v1233, %v1240
        %v1247 = vmul.f32 %v1230, %v1239
        %v1248 = vmul.f32 %v1234, %v1240
        %v1249 = vmul.f32 %v1231, %v1239
        %v1250 = vmul.f32 %v1235, %v1240
        %1251 = vst [vmem:[#allocation2 + $0x1c0] sm:$0xff] %v1243
        %1252 = vst [vmem:[#allocation2 + $0x1c8] sm:$0xff] %v1244
        %1253 = vst [vmem:[#allocation2 + $0x1d0] sm:$0xff] %v1245
        %1254 = vst [vmem:[#allocation2 + $0x1d8] sm:$0xff] %v1246
        %1255 = vst [vmem:[#allocation2 + $0x1e0] sm:$0xff] %v1247
        %1256 = vst [vmem:[#allocation2 + $0x1e8] sm:$0xff] %v1248
        %1257 = vst [vmem:[#allocation2 + $0x1f0] sm:$0xff] %v1249
        %1258 = vst [vmem:[#allocation2 + $0x1f8] sm:$0xff] %v1250
        %1259 = vrot.lane.b32.xlu0 %v896, 111
        %v1260 = vpop.permute.xlu0 %1259
        %1261 = vrot.lane.b32.xlu0 %v898, 111
        %v1262 = vpop.permute.xlu0 %1261
        %1263 = vrot.lane.b32.xlu0 %v900, 111
        %v1264 = vpop.permute.xlu0 %1263
        %1265 = vrot.lane.b32.xlu0 %v902, 111
        %v1266 = vpop.permute.xlu0 %1265
        %1267 = vrot.lane.b32.xlu0 %v897, 111
        %v1268 = vpop.permute.xlu0 %1267
        %1269 = vrot.lane.b32.xlu0 %v899, 111
        %v1270 = vpop.permute.xlu0 %1269
        %1271 = vrot.lane.b32.xlu0 %v901, 111
        %v1272 = vpop.permute.xlu0 %1271
        %1273 = vrot.lane.b32.xlu0 %v903, 111
        %v1274 = vpop.permute.xlu0 %1273
        %vm1275 = vcmp.lt.s32.totalorder %v477, 111
        %v1276 = vsel %vm1275, %v1260, %v1268
        %v1277 = vsel %vm1275, %v1262, %v1270
        %v1278 = vsel %vm1275, %v1264, %v1272
        %v1279 = vsel %vm1275, %v1266, %v1274
        %v1280 = vsel %vm1275, %v1268, %v1260
        %v1281 = vsel %vm1275, %v1270, %v1262
        %v1282 = vsel %vm1275, %v1272, %v1264
        %v1283 = vsel %vm1275, %v1274, %v1266
        %s1284 = scalar_lea.vmem %s12, 16
        %v1285 = vld [vmem:[%s1284] ss:$8 sm:$0x3]
        %v1287 = vperm.slane %v1285, 0
        %v1288 = vperm.slane %v1285, 1
        %v1291 = vmul.f32 %v1276, %v1287
        %v1292 = vmul.f32 %v1280, %v1288
        %v1293 = vmul.f32 %v1277, %v1287
        %v1294 = vmul.f32 %v1281, %v1288
        %v1295 = vmul.f32 %v1278, %v1287
        %v1296 = vmul.f32 %v1282, %v1288
        %v1297 = vmul.f32 %v1279, %v1287
        %v1298 = vmul.f32 %v1283, %v1288
        %1299 = vst [vmem:[#allocation2 + $0x200] sm:$0xff] %v1291
        %1300 = vst [vmem:[#allocation2 + $0x208] sm:$0xff] %v1292
        %1301 = vst [vmem:[#allocation2 + $0x210] sm:$0xff] %v1293
        %1302 = vst [vmem:[#allocation2 + $0x218] sm:$0xff] %v1294
        %1303 = vst [vmem:[#allocation2 + $0x220] sm:$0xff] %v1295
        %1304 = vst [vmem:[#allocation2 + $0x228] sm:$0xff] %v1296
        %1305 = vst [vmem:[#allocation2 + $0x230] sm:$0xff] %v1297
        %1306 = vst [vmem:[#allocation2 + $0x238] sm:$0xff] %v1298
        %v1307 = vld [vmem:[%s5] sm:$0xff]
        %v1308 = vld [vmem:[%s5 + $0x8] sm:$0xff]
        %v1309 = vld [vmem:[%s5 + $0x10] sm:$0xff]
        %v1310 = vld [vmem:[%s5 + $0x18] sm:$0xff]
        %v1311 = vld [vmem:[%s5 + $0x20] sm:$0xff]
        %v1312 = vld [vmem:[%s5 + $0x28] sm:$0xff]
        %v1313 = vld [vmem:[%s5 + $0x30] sm:$0xff]
        %v1314 = vld [vmem:[%s5 + $0x38] sm:$0xff]
        %v1315 = vld [vmem:[%s5 + $0x40] sm:$0xff]
        %v1316 = vld [vmem:[%s5 + $0x48] sm:$0xff]
        %v1317 = vld [vmem:[%s5 + $0x50] sm:$0xff]
        %v1318 = vld [vmem:[%s5 + $0x58] sm:$0xff]
        %v1319 = vld [vmem:[#allocation2] sm:$0xff]
        %v1320 = vld [vmem:[#allocation2 + $0x8] sm:$0xff]
        %v1321 = vld [vmem:[#allocation2 + $0x10] sm:$0xff]
        %v1322 = vld [vmem:[#allocation2 + $0x18] sm:$0xff]
        %v1323 = vld [vmem:[#allocation2 + $0x20] sm:$0xff]
        %v1324 = vld [vmem:[#allocation2 + $0x28] sm:$0xff]
        %v1325 = vld [vmem:[#allocation2 + $0x30] sm:$0xff]
        %v1326 = vld [vmem:[#allocation2 + $0x38] sm:$0xff]
        %v1327 = vld [vmem:[#allocation2 + $0x40] sm:$0xff]
        %v1328 = vld [vmem:[#allocation2 + $0x48] sm:$0xff]
        %v1329 = vld [vmem:[#allocation2 + $0x50] sm:$0xff]
        %v1330 = vld [vmem:[#allocation2 + $0x58] sm:$0xff]
        %v1331 = vld [vmem:[#allocation2 + $0x60] sm:$0xff]
        %v1332 = vld [vmem:[#allocation2 + $0x68] sm:$0xff]
        %v1333 = vld [vmem:[#allocation2 + $0x70] sm:$0xff]
        %v1334 = vld [vmem:[#allocation2 + $0x78] sm:$0xff]
        %v1335 = vld [vmem:[#allocation2 + $0x80] sm:$0xff]
        %v1336 = vld [vmem:[#allocation2 + $0x88] sm:$0xff]
        %v1337 = vld [vmem:[#allocation2 + $0x90] sm:$0xff]
        %v1338 = vld [vmem:[#allocation2 + $0x98] sm:$0xff]
        %v1339 = vld [vmem:[#allocation2 + $0xa0] sm:$0xff]
        %v1340 = vld [vmem:[#allocation2 + $0xa8] sm:$0xff]
        %v1341 = vld [vmem:[#allocation2 + $0xb0] sm:$0xff]
        %v1342 = vld [vmem:[#allocation2 + $0xb8] sm:$0xff]
        %v1343 = vld [vmem:[#allocation2 + $0xc0] sm:$0xff]
        %v1344 = vld [vmem:[#allocation2 + $0xc8] sm:$0xff]
        %v1345 = vld [vmem:[#allocation2 + $0xd0] sm:$0xff]
        %v1346 = vld [vmem:[#allocation2 + $0xd8] sm:$0xff]
        %v1347 = vld [vmem:[#allocation2 + $0xe0] sm:$0xff]
        %v1348 = vld [vmem:[#allocation2 + $0xe8] sm:$0xff]
        %v1349 = vld [vmem:[#allocation2 + $0xf0] sm:$0xff]
        %v1350 = vld [vmem:[#allocation2 + $0xf8] sm:$0xff]
        %v1351 = vld [vmem:[#allocation2 + $0x100] sm:$0xff]
        %v1352 = vld [vmem:[#allocation2 + $0x108] sm:$0xff]
        %v1353 = vld [vmem:[#allocation2 + $0x110] sm:$0xff]
        %v1354 = vld [vmem:[#allocation2 + $0x118] sm:$0xff]
        %v1355 = vld [vmem:[#allocation2 + $0x120] sm:$0xff]
        %v1356 = vld [vmem:[#allocation2 + $0x128] sm:$0xff]
        %v1357 = vld [vmem:[#allocation2 + $0x130] sm:$0xff]
        %v1358 = vld [vmem:[#allocation2 + $0x138] sm:$0xff]
        %v1359 = vld [vmem:[#allocation2 + $0x140] sm:$0xff]
        %v1360 = vld [vmem:[#allocation2 + $0x148] sm:$0xff]
        %v1361 = vld [vmem:[#allocation2 + $0x150] sm:$0xff]
        %v1362 = vld [vmem:[#allocation2 + $0x158] sm:$0xff]
        %v1363 = vld [vmem:[#allocation2 + $0x160] sm:$0xff]
        %v1364 = vld [vmem:[#allocation2 + $0x168] sm:$0xff]
        %v1365 = vld [vmem:[#allocation2 + $0x170] sm:$0xff]
        %v1366 = vld [vmem:[#allocation2 + $0x178] sm:$0xff]
        %v1367 = vld [vmem:[#allocation2 + $0x180] sm:$0xff]
        %v1368 = vld [vmem:[#allocation2 + $0x188] sm:$0xff]
        %v1369 = vld [vmem:[#allocation2 + $0x190] sm:$0xff]
        %v1370 = vld [vmem:[#allocation2 + $0x198] sm:$0xff]
        %v1371 = vld [vmem:[#allocation2 + $0x1a0] sm:$0xff]
        %v1372 = vld [vmem:[#allocation2 + $0x1a8] sm:$0xff]
        %v1373 = vld [vmem:[#allocation2 + $0x1b0] sm:$0xff]
        %v1374 = vld [vmem:[#allocation2 + $0x1b8] sm:$0xff]
        %v1375 = vld [vmem:[#allocation2 + $0x1c0] sm:$0xff]
        %v1376 = vld [vmem:[#allocation2 + $0x1c8] sm:$0xff]
        %v1377 = vld [vmem:[#allocation2 + $0x1d0] sm:$0xff]
        %v1378 = vld [vmem:[#allocation2 + $0x1d8] sm:$0xff]
        %v1379 = vld [vmem:[#allocation2 + $0x1e0] sm:$0xff]
        %v1380 = vld [vmem:[#allocation2 + $0x1e8] sm:$0xff]
        %v1381 = vld [vmem:[#allocation2 + $0x1f0] sm:$0xff]
        %v1382 = vld [vmem:[#allocation2 + $0x1f8] sm:$0xff]
        %v1383 = vld [vmem:[#allocation2 + $0x200] sm:$0xff]
        %v1384 = vld [vmem:[#allocation2 + $0x208] sm:$0xff]
        %v1385 = vld [vmem:[#allocation2 + $0x210] sm:$0xff]
        %v1386 = vld [vmem:[#allocation2 + $0x218] sm:$0xff]
        %v1387 = vld [vmem:[#allocation2 + $0x220] sm:$0xff]
        %v1388 = vld [vmem:[#allocation2 + $0x228] sm:$0xff]
        %v1389 = vld [vmem:[#allocation2 + $0x230] sm:$0xff]
        %v1390 = vld [vmem:[#allocation2 + $0x238] sm:$0xff]
        %v1391 = vld [vmem:[%s415] sm:$0xff]
        %v1392 = vld [vmem:[%s415 + $0x8] sm:$0xff]
        %v1393 = vld [vmem:[%s415 + $0x10] sm:$0xff]
        %v1394 = vld [vmem:[%s415 + $0x18] sm:$0xff]
        %v1395 = vld [vmem:[%s7] sm:$0xff]
        %v1396 = vld [vmem:[%s7 + $0x8] sm:$0xff]
        %v1397 = vld [vmem:[%s7 + $0x10] sm:$0xff]
        %v1398 = vld [vmem:[%s7 + $0x18] sm:$0xff]
        %v1399 = vld [vmem:[%s8] sm:$0xff]
        %v1400 = vld [vmem:[%s8 + $0x8] sm:$0xff]
        %v1401 = vld [vmem:[%s8 + $0x10] sm:$0xff]
        %v1402 = vld [vmem:[%s8 + $0x18] sm:$0xff]
        %1404 = vset.pattern.permute.xlu0 0
        %1405 = vperm.xlu0 %1404, %v1399
        %v1406 = vpop.permute.xlu0 %1405
        %1409 = vset.pattern.permute.xlu0 0
        %1410 = vperm.xlu0 %1409, %v1400
        %v1411 = vpop.permute.xlu0 %1410
        %1414 = vset.pattern.permute.xlu0 0
        %1415 = vperm.xlu0 %1414, %v1401
        %v1416 = vpop.permute.xlu0 %1415
        %1419 = vset.pattern.permute.xlu0 0
        %1420 = vperm.xlu0 %1419, %v1402
        %v1421 = vpop.permute.xlu0 %1420
        %v1424 = vsel %vm767, %v1395, 0
        %v1427 = vsel %vm767, %v1396, 0
        %v1430 = vsel %vm767, %v1397, 0
        %v1433 = vsel %vm767, %v1398, 0
        %1435 = vmatpush.msra.mxu0 0.0
        %1436 = vmatpush.msra.mxu0 0.0
        %1437 = vmatpush.msra.mxu0 0.0
        %1438 = vmatpush.msra.mxu0 0.0
        %1439 = vmatpush.msra.mxu0 0.0
        %1440 = vmatpush.msra.mxu0 0.0
        %1441 = vmatpush.msra.mxu0 0.0
        %1442 = vmatpush.msra.mxu0 0.0
        %1443 = vmatpush.msra.mxu0 0.0
        %1444 = vmatpush.msra.mxu0 0.0
        %1445 = vmatpush.msra.mxu0 0.0
        %1446 = vmatpush.msra.mxu0 0.0
        %1447 = vmatpush.msra.mxu0 0.0
        %1448 = vmatpush.msra.mxu0 0.0
        %1449 = vmatpush.msra.mxu0 %v1393
        %1450 = vmatpush.msra.mxu0 %v1391
        %1451 = vmatmul.f32.gmra.mxu0 %v1424
        %v1452 = vpop.f32.mrf.mxu0
        %v1453 = vadd.f32 %v1406, %v1452
        %1454 = vmatmul.f32.gmra.mxu0 %v1427
        %v1455 = vpop.f32.mrf.mxu0
        %v1456 = vadd.f32 %v1411, %v1455
        %1457 = vmatmul.f32.gmra.mxu0 %v1430
        %v1458 = vpop.f32.mrf.mxu0
        %v1459 = vadd.f32 %v1416, %v1458
        %1460 = vmatmul.f32.gmra.mxu0 %v1433
        %v1461 = vpop.f32.mrf.mxu0
        %v1462 = vadd.f32 %v1421, %v1461
        %1463 = vdwg.mxu0
        %1464 = vmatpush.msra.mxu0 0.0
        %1465 = vmatpush.msra.mxu0 0.0
        %1466 = vmatpush.msra.mxu0 0.0
        %1467 = vmatpush.msra.mxu0 0.0
        %1468 = vmatpush.msra.mxu0 0.0
        %1469 = vmatpush.msra.mxu0 0.0
        %1470 = vmatpush.msra.mxu0 0.0
        %1471 = vmatpush.msra.mxu0 0.0
        %1472 = vmatpush.msra.mxu0 0.0
        %1473 = vmatpush.msra.mxu0 0.0
        %1474 = vmatpush.msra.mxu0 0.0
        %1475 = vmatpush.msra.mxu0 0.0
        %1476 = vmatpush.msra.mxu0 0.0
        %1477 = vmatpush.msra.mxu0 0.0
        %1478 = vmatpush.msra.mxu0 %v1394
        %1479 = vmatpush.msra.mxu0 %v1392
        %1480 = vmatmul.f32.gmra.mxu0 %v1424
        %v1481 = vpop.f32.mrf.mxu0
        %v1482 = vadd.f32 %v1406, %v1481
        %1483 = vmatmul.f32.gmra.mxu0 %v1427
        %v1484 = vpop.f32.mrf.mxu0
        %v1485 = vadd.f32 %v1411, %v1484
        %1486 = vmatmul.f32.gmra.mxu0 %v1430
        %v1487 = vpop.f32.mrf.mxu0
        %v1488 = vadd.f32 %v1416, %v1487
        %1489 = vmatmul.f32.gmra.mxu0 %v1433
        %v1490 = vpop.f32.mrf.mxu0
        %v1491 = vadd.f32 %v1421, %v1490
        %1492 = vdwg.mxu0
        %v1493 = vld [vmem:[%s6] sm:$0xff]
        %v1494 = vld [vmem:[%s6 + $0x8] sm:$0xff]
        %v1495 = vld [vmem:[%s6 + $0x10] sm:$0xff]
        %v1496 = vld [vmem:[%s6 + $0x18] sm:$0xff]
        %1498 = vset.pattern.permute.xlu0 0
        %1499 = vperm.xlu0 %1498, %v1493
        %v1500 = vpop.permute.xlu0 %1499
        %1503 = vset.pattern.permute.xlu0 0
        %1504 = vperm.xlu0 %1503, %v1494
        %v1505 = vpop.permute.xlu0 %1504
        %1508 = vset.pattern.permute.xlu0 0
        %1509 = vperm.xlu0 %1508, %v1495
        %v1510 = vpop.permute.xlu0 %1509
        %1513 = vset.pattern.permute.xlu0 0
        %1514 = vperm.xlu0 %1513, %v1496
        %v1515 = vpop.permute.xlu0 %1514
        %vm1517 = vcmask 261120
        %v1519 = vsel %vm1517, %v1309, 0
        %v1522 = vsel %vm1517, %v1312, 0
        %v1525 = vsel %vm1517, %v1315, 0
        %v1528 = vsel %vm1517, %v1318, 0
        %1530 = vmatpush.msra.mxu0 %v1349
        %1531 = vmatpush.msra.mxu0 %v1347
        %1532 = vmatpush.msra.mxu0 %v1345
        %1533 = vmatpush.msra.mxu0 %v1343
        %1534 = vmatpush.msra.mxu0 %v1341
        %1535 = vmatpush.msra.mxu0 %v1339
        %1536 = vmatpush.msra.mxu0 %v1337
        %1537 = vmatpush.msra.mxu0 %v1335
        %1538 = vmatpush.msra.mxu0 %v1333
        %1539 = vmatpush.msra.mxu0 %v1331
        %1540 = vmatpush.msra.mxu0 %v1329
        %1541 = vmatpush.msra.mxu0 %v1327
        %1542 = vmatpush.msra.mxu0 %v1325
        %1543 = vmatpush.msra.mxu0 %v1323
        %1544 = vmatpush.msra.mxu0 %v1321
        %1545 = vmatpush.msra.mxu0 %v1319
        %1546 = vmatmul.f32.gmra.mxu0 %v1307
        %v1547 = vpop.f32.mrf.mxu0
        %v1548 = vadd.f32 %v1500, %v1547
        %1549 = vmatmul.f32.gmra.mxu0 %v1310
        %v1550 = vpop.f32.mrf.mxu0
        %v1551 = vadd.f32 %v1505, %v1550
        %1552 = vmatmul.f32.gmra.mxu0 %v1313
        %v1553 = vpop.f32.mrf.mxu0
        %v1554 = vadd.f32 %v1510, %v1553
        %1555 = vmatmul.f32.gmra.mxu0 %v1316
        %v1556 = vpop.f32.mrf.mxu0
        %v1557 = vadd.f32 %v1515, %v1556
        %1558 = vdwg.mxu0
        %1559 = vmatpush.msra.mxu0 %v1381
        %1560 = vmatpush.msra.mxu0 %v1379
        %1561 = vmatpush.msra.mxu0 %v1377
        %1562 = vmatpush.msra.mxu0 %v1375
        %1563 = vmatpush.msra.mxu0 %v1373
        %1564 = vmatpush.msra.mxu0 %v1371
        %1565 = vmatpush.msra.mxu0 %v1369
        %1566 = vmatpush.msra.mxu0 %v1367
        %1567 = vmatpush.msra.mxu0 %v1365
        %1568 = vmatpush.msra.mxu0 %v1363
        %1569 = vmatpush.msra.mxu0 %v1361
        %1570 = vmatpush.msra.mxu0 %v1359
        %1571 = vmatpush.msra.mxu0 %v1357
        %1572 = vmatpush.msra.mxu0 %v1355
        %1573 = vmatpush.msra.mxu0 %v1353
        %1574 = vmatpush.msra.mxu0 %v1351
        %1575 = vmatmul.f32.gmra.mxu0 %v1308
        %v1576 = vpop.f32.mrf.mxu0
        %v1577 = vadd.f32 %v1548, %v1576
        %1578 = vmatmul.f32.gmra.mxu0 %v1311
        %v1579 = vpop.f32.mrf.mxu0
        %v1580 = vadd.f32 %v1551, %v1579
        %1581 = vmatmul.f32.gmra.mxu0 %v1314
        %v1582 = vpop.f32.mrf.mxu0
        %v1583 = vadd.f32 %v1554, %v1582
        %1584 = vmatmul.f32.gmra.mxu0 %v1317
        %v1585 = vpop.f32.mrf.mxu0
        %v1586 = vadd.f32 %v1557, %v1585
        %1587 = vdwg.mxu0
        %1588 = vmatpush.msra.mxu0 0.0
        %1589 = vmatpush.msra.mxu0 0.0
        %1590 = vmatpush.msra.mxu0 0.0
        %1591 = vmatpush.msra.mxu0 0.0
        %1592 = vmatpush.msra.mxu0 0.0
        %1593 = vmatpush.msra.mxu0 0.0
        %1594 = vmatpush.msra.mxu0 0.0
        %1595 = vmatpush.msra.mxu0 0.0
        %1596 = vmatpush.msra.mxu0 0.0
        %1597 = vmatpush.msra.mxu0 0.0
        %1598 = vmatpush.msra.mxu0 0.0
        %1599 = vmatpush.msra.mxu0 0.0
        %1600 = vmatpush.msra.mxu0 %v1389
        %1601 = vmatpush.msra.mxu0 %v1387
        %1602 = vmatpush.msra.mxu0 %v1385
        %1603 = vmatpush.msra.mxu0 %v1383
        %1604 = vmatmul.f32.gmra.mxu0 %v1519
        %v1605 = vpop.f32.mrf.mxu0
        %v1606 = vadd.f32 %v1577, %v1605
        %1607 = vmatmul.f32.gmra.mxu0 %v1522
        %v1608 = vpop.f32.mrf.mxu0
        %v1609 = vadd.f32 %v1580, %v1608
        %1610 = vmatmul.f32.gmra.mxu0 %v1525
        %v1611 = vpop.f32.mrf.mxu0
        %v1612 = vadd.f32 %v1583, %v1611
        %1613 = vmatmul.f32.gmra.mxu0 %v1528
        %v1614 = vpop.f32.mrf.mxu0
        %v1615 = vadd.f32 %v1586, %v1614
        %1616 = vdwg.mxu0
        %1617 = vmatpush.msra.mxu0 %v1350
        %1618 = vmatpush.msra.mxu0 %v1348
        %1619 = vmatpush.msra.mxu0 %v1346
        %1620 = vmatpush.msra.mxu0 %v1344
        %1621 = vmatpush.msra.mxu0 %v1342
        %1622 = vmatpush.msra.mxu0 %v1340
        %1623 = vmatpush.msra.mxu0 %v1338
        %1624 = vmatpush.msra.mxu0 %v1336
        %1625 = vmatpush.msra.mxu0 %v1334
        %1626 = vmatpush.msra.mxu0 %v1332
        %1627 = vmatpush.msra.mxu0 %v1330
        %1628 = vmatpush.msra.mxu0 %v1328
        %1629 = vmatpush.msra.mxu0 %v1326
        %1630 = vmatpush.msra.mxu0 %v1324
        %1631 = vmatpush.msra.mxu0 %v1322
        %1632 = vmatpush.msra.mxu0 %v1320
        %1633 = vmatmul.f32.gmra.mxu0 %v1307
        %v1634 = vpop.f32.mrf.mxu0
        %v1635 = vadd.f32 %v1500, %v1634
        %1636 = vmatmul.f32.gmra.mxu0 %v1310
        %v1637 = vpop.f32.mrf.mxu0
        %v1638 = vadd.f32 %v1505, %v1637
        %1639 = vmatmul.f32.gmra.mxu0 %v1313
        %v1640 = vpop.f32.mrf.mxu0
        %v1641 = vadd.f32 %v1510, %v1640
        %1642 = vmatmul.f32.gmra.mxu0 %v1316
        %v1643 = vpop.f32.mrf.mxu0
        %v1644 = vadd.f32 %v1515, %v1643
        %1645 = vdwg.mxu0
        %1646 = vmatpush.msra.mxu0 %v1382
        %1647 = vmatpush.msra.mxu0 %v1380
        %1648 = vmatpush.msra.mxu0 %v1378
        %1649 = vmatpush.msra.mxu0 %v1376
        %1650 = vmatpush.msra.mxu0 %v1374
        %1651 = vmatpush.msra.mxu0 %v1372
        %1652 = vmatpush.msra.mxu0 %v1370
        %1653 = vmatpush.msra.mxu0 %v1368
        %1654 = vmatpush.msra.mxu0 %v1366
        %1655 = vmatpush.msra.mxu0 %v1364
        %1656 = vmatpush.msra.mxu0 %v1362
        %1657 = vmatpush.msra.mxu0 %v1360
        %1658 = vmatpush.msra.mxu0 %v1358
        %1659 = vmatpush.msra.mxu0 %v1356
        %1660 = vmatpush.msra.mxu0 %v1354
        %1661 = vmatpush.msra.mxu0 %v1352
        %1662 = vmatmul.f32.gmra.mxu0 %v1308
        %v1663 = vpop.f32.mrf.mxu0
        %v1664 = vadd.f32 %v1635, %v1663
        %1665 = vmatmul.f32.gmra.mxu0 %v1311
        %v1666 = vpop.f32.mrf.mxu0
        %v1667 = vadd.f32 %v1638, %v1666
        %1668 = vmatmul.f32.gmra.mxu0 %v1314
        %v1669 = vpop.f32.mrf.mxu0
        %v1670 = vadd.f32 %v1641, %v1669
        %1671 = vmatmul.f32.gmra.mxu0 %v1317
        %v1672 = vpop.f32.mrf.mxu0
        %v1673 = vadd.f32 %v1644, %v1672
        %1674 = vdwg.mxu0
        %1675 = vmatpush.msra.mxu0 0.0
        %1676 = vmatpush.msra.mxu0 0.0
        %1677 = vmatpush.msra.mxu0 0.0
        %1678 = vmatpush.msra.mxu0 0.0
        %1679 = vmatpush.msra.mxu0 0.0
        %1680 = vmatpush.msra.mxu0 0.0
        %1681 = vmatpush.msra.mxu0 0.0
        %1682 = vmatpush.msra.mxu0 0.0
        %1683 = vmatpush.msra.mxu0 0.0
        %1684 = vmatpush.msra.mxu0 0.0
        %1685 = vmatpush.msra.mxu0 0.0
        %1686 = vmatpush.msra.mxu0 0.0
        %1687 = vmatpush.msra.mxu0 %v1390
        %1688 = vmatpush.msra.mxu0 %v1388
        %1689 = vmatpush.msra.mxu0 %v1386
        %1690 = vmatpush.msra.mxu0 %v1384
        %1691 = vmatmul.f32.gmra.mxu0 %v1519
        %v1692 = vpop.f32.mrf.mxu0
        %v1693 = vadd.f32 %v1664, %v1692
        %1694 = vmatmul.f32.gmra.mxu0 %v1522
        %v1695 = vpop.f32.mrf.mxu0
        %v1696 = vadd.f32 %v1667, %v1695
        %1697 = vmatmul.f32.gmra.mxu0 %v1525
        %v1698 = vpop.f32.mrf.mxu0
        %v1699 = vadd.f32 %v1670, %v1698
        %1700 = vmatmul.f32.gmra.mxu0 %v1528
        %v1701 = vpop.f32.mrf.mxu0
        %v1702 = vadd.f32 %v1673, %v1701
        %1703 = vdwg.mxu0
        %v1704 = vadd.f32 %v1606, %v1453
        %v1705 = vadd.f32 %v1693, %v1482
        %v1706 = vadd.f32 %v1609, %v1456
        %v1707 = vadd.f32 %v1696, %v1485
        %v1708 = vadd.f32 %v1612, %v1459
        %v1709 = vadd.f32 %v1699, %v1488
        %v1710 = vadd.f32 %v1615, %v1462
        %v1711 = vadd.f32 %v1702, %v1491
        %v1712 = vmax.f32 %v1704, 0.0
        %v1713 = vmax.f32 %v1705, 0.0
        %v1714 = vmax.f32 %v1706, 0.0
        %v1715 = vmax.f32 %v1707, 0.0
        %v1716 = vmax.f32 %v1708, 0.0
        %v1717 = vmax.f32 %v1709, 0.0
        %v1718 = vmax.f32 %v1710, 0.0
        %v1719 = vmax.f32 %v1711, 0.0
        %v1720 = vld [vmem:[%s9] sm:$0xff]
        %v1721 = vld [vmem:[%s9 + $0x8] sm:$0xff]
        %v1722 = vld [vmem:[%s9 + $0x10] sm:$0xff]
        %v1723 = vld [vmem:[%s9 + $0x18] sm:$0xff]
        %v1724 = vld [vmem:[%s10] sm:$0xff]
        %v1725 = vld [vmem:[%s10 + $0x8] sm:$0xff]
        %v1726 = vld [vmem:[%s10 + $0x10] sm:$0xff]
        %v1727 = vld [vmem:[%s10 + $0x18] sm:$0xff]
        %v1728 = vmax.f32 %v1712, %v1713
        %1729 = vmax.xlane.f32.xlu0 %v1728
        %v1730 = vpop.xlane.xlu0 %1729
        %v1731 = vmax.f32 %v1714, %v1715
        %1732 = vmax.xlane.f32.xlu0 %v1731
        %v1733 = vpop.xlane.xlu0 %1732
        %v1734 = vmax.f32 %v1716, %v1717
        %1735 = vmax.xlane.f32.xlu0 %v1734
        %v1736 = vpop.xlane.xlu0 %1735
        %v1737 = vmax.f32 %v1718, %v1719
        %1738 = vmax.xlane.f32.xlu0 %v1737
        %v1739 = vpop.xlane.xlu0 %1738
        %v1740 = vadd.f32 %v1712, %v1713
        %1741 = vadd.xlane.f32.xlu0 %v1740
        %v1742 = vpop.xlane.xlu0 %1741
        %v1743 = vadd.f32 %v1714, %v1715
        %1744 = vadd.xlane.f32.xlu0 %v1743
        %v1745 = vpop.xlane.xlu0 %1744
        %v1746 = vadd.f32 %v1716, %v1717
        %1747 = vadd.xlane.f32.xlu0 %v1746
        %v1748 = vpop.xlane.xlu0 %1747
        %v1749 = vadd.f32 %v1718, %v1719
        %1750 = vadd.xlane.f32.xlu0 %v1749
        %v1751 = vpop.xlane.xlu0 %1750
        %v1752 = vmul.f32 %v1742, 0.00390625
        %v1753 = vmul.f32 %v1745, 0.00390625
        %v1754 = vmul.f32 %v1748, 0.00390625
        %v1755 = vmul.f32 %v1751, 0.00390625
        %v1756 = vmul.f32 %v1720, %v1730
        %v1757 = vmul.f32 %v1721, %v1733
        %v1758 = vmul.f32 %v1722, %v1736
        %v1759 = vmul.f32 %v1723, %v1739
        %vm1760 = vcmask 64512
        %v1761 = vsel %vm1760, %v1756, 0.0
        %v1762 = vsel %vm1760, %v1757, 0.0
        %v1763 = vadd.f32 %v1761, %v1762
        %v1764 = vsel %vm1760, %v1758, 0.0
        %v1765 = vadd.f32 %v1763, %v1764
        %v1766 = vsel %vm1760, %v1759, 0.0
        %v1767 = vadd.f32 %v1765, %v1766
        %v1768 = vrot.slane %v1767, 4
        %v1769 = vadd.f32 %v1767, %v1768
        %v1770 = vrot.slane %v1769, 2
        %v1771 = vadd.f32 %v1769, %v1770
        %v1772 = vrot.slane %v1771, 1
        %v1773 = vadd.f32 %v1771, %v1772
        %v1774 = vmax.f32 %v1773, 0.0
        %v1775 = vmul.f32 %v1720, %v1752
        %v1776 = vmul.f32 %v1721, %v1753
        %v1777 = vmul.f32 %v1722, %v1754
        %v1778 = vmul.f32 %v1723, %v1755
        %v1779 = vsel %vm1760, %v1775, 0.0
        %v1780 = vsel %vm1760, %v1776, 0.0
        %v1781 = vadd.f32 %v1779, %v1780
        %v1782 = vsel %vm1760, %v1777, 0.0
        %v1783 = vadd.f32 %v1781, %v1782
        %v1784 = vsel %vm1760, %v1778, 0.0
        %v1785 = vadd.f32 %v1783, %v1784
        %v1786 = vrot.slane %v1785, 4
        %v1787 = vadd.f32 %v1785, %v1786
        %v1788 = vrot.slane %v1787, 2
        %v1789 = vadd.f32 %v1787, %v1788
        %v1790 = vrot.slane %v1789, 1
        %v1791 = vadd.f32 %v1789, %v1790
        %v1792 = vmax.f32 %v1791, 0.0
        %v1793 = vadd.f32 %v1774, %v1792
        %v1794 = vmul.f32 %v1724, %v1793
        %v1795 = vmul.f32 %v1725, %v1793
        %v1796 = vmul.f32 %v1726, %v1793
        %v1797 = vmul.f32 %v1727, %v1793
        %v1798 = vsel %vm1760, %v1794, 0.0
        %1799 = vadd.xlane.f32.xlu0 %v1798
        %v1800 = vpop.xlane.xlu0 %1799
        %v1801 = vsel %vm1760, %v1795, 0.0
        %1802 = vadd.xlane.f32.xlu0 %v1801
        %v1803 = vpop.xlane.xlu0 %1802
        %v1804 = vsel %vm1760, %v1796, 0.0
        %1805 = vadd.xlane.f32.xlu0 %v1804
        %v1806 = vpop.xlane.xlu0 %1805
        %v1807 = vsel %vm1760, %v1797, 0.0
        %1808 = vadd.xlane.f32.xlu0 %v1807
        %v1809 = vpop.xlane.xlu0 %1808
        %v1810 = vxor.u32 %v1800, 2147483648
        %v1811 = vxor.u32 %v1803, 2147483648
        %v1812 = vxor.u32 %v1806, 2147483648
        %v1813 = vxor.u32 %v1809, 2147483648
        %v1814 = vmul.f32 %v1810, 1.442695
        %v1815 = vpow.pop %v1814
        %v1816 = vmul.f32 %v1811, 1.442695
        %v1817 = vpow.pop %v1816
        %v1818 = vmul.f32 %v1812, 1.442695
        %v1819 = vpow.pop %v1818
        %v1820 = vmul.f32 %v1813, 1.442695
        %v1821 = vpow.pop %v1820
        %v1822 = vadd.f32 %v1815, 1.0
        %v1823 = vadd.f32 %v1817, 1.0
        %v1824 = vadd.f32 %v1819, 1.0
        %v1825 = vadd.f32 %v1821, 1.0
        %v1826 = vrcp.pop %v1822
        %v1827 = vmul.f32 %v1822, %v1826
        %v1828 = vsub.f32 1.0, %v1827
        %v1829 = vmul.f32 %v1826, %v1828
        %v1830 = vadd.f32 %v1826, %v1829
        %vm1831 = vweird.f32 %v1822
        %vm1832 = vweird.f32 %v1826
        %vm1833 = vmor %vm1831, %vm1832
        %v1834 = vsel %vm1833, %v1826, %v1830
        %v1835 = vand.u32 2147483647, %v1822
        %vm1836 = vcmp.eq.f32.partialorder %v1835, 8.507059e+37
        %v1837 = vand.u32 %v1822, 2147483648
        %v1838 = vor.u32 1.1754944e-38, %v1837
        %v1839 = vsel %vm1836, %v1838, %v1834
        %v1840 = vmul.f32 1.0, %v1839
        %v1841 = vrcp.pop %v1823
        %v1842 = vmul.f32 %v1823, %v1841
        %v1843 = vsub.f32 1.0, %v1842
        %v1844 = vmul.f32 %v1841, %v1843
        %v1845 = vadd.f32 %v1841, %v1844
        %vm1846 = vweird.f32 %v1823
        %vm1847 = vweird.f32 %v1841
        %vm1848 = vmor %vm1846, %vm1847
        %v1849 = vsel %vm1848, %v1841, %v1845
        %v1850 = vand.u32 2147483647, %v1823
        %vm1851 = vcmp.eq.f32.partialorder %v1850, 8.507059e+37
        %v1852 = vand.u32 %v1823, 2147483648
        %v1853 = vor.u32 1.1754944e-38, %v1852
        %v1854 = vsel %vm1851, %v1853, %v1849
        %v1855 = vmul.f32 1.0, %v1854
        %v1856 = vrcp.pop %v1824
        %v1857 = vmul.f32 %v1824, %v1856
        %v1858 = vsub.f32 1.0, %v1857
        %v1859 = vmul.f32 %v1856, %v1858
        %v1860 = vadd.f32 %v1856, %v1859
        %vm1861 = vweird.f32 %v1824
        %vm1862 = vweird.f32 %v1856
        %vm1863 = vmor %vm1861, %vm1862
        %v1864 = vsel %vm1863, %v1856, %v1860
        %v1865 = vand.u32 2147483647, %v1824
        %vm1866 = vcmp.eq.f32.partialorder %v1865, 8.507059e+37
        %v1867 = vand.u32 %v1824, 2147483648
        %v1868 = vor.u32 1.1754944e-38, %v1867
        %v1869 = vsel %vm1866, %v1868, %v1864
        %v1870 = vmul.f32 1.0, %v1869
        %v1871 = vrcp.pop %v1825
        %v1872 = vmul.f32 %v1825, %v1871
        %v1873 = vsub.f32 1.0, %v1872
        %v1874 = vmul.f32 %v1871, %v1873
        %v1875 = vadd.f32 %v1871, %v1874
        %vm1876 = vweird.f32 %v1825
        %vm1877 = vweird.f32 %v1871
        %vm1878 = vmor %vm1876, %vm1877
        %v1879 = vsel %vm1878, %v1871, %v1875
        %v1880 = vand.u32 2147483647, %v1825
        %vm1881 = vcmp.eq.f32.partialorder %v1880, 8.507059e+37
        %v1882 = vand.u32 %v1825, 2147483648
        %v1883 = vor.u32 1.1754944e-38, %v1882
        %v1884 = vsel %vm1881, %v1883, %v1879
        %v1885 = vmul.f32 1.0, %v1884
        %v1886 = vmul.f32 %v1712, %v1840
        %v1887 = vmul.f32 %v1713, %v1840
        %v1888 = vmul.f32 %v1714, %v1855
        %v1889 = vmul.f32 %v1715, %v1855
        %v1890 = vmul.f32 %v1716, %v1870
        %v1891 = vmul.f32 %v1717, %v1870
        %v1892 = vmul.f32 %v1718, %v1885
        %v1893 = vmul.f32 %v1719, %v1885
        %v1894 = vmax.f32 %v1886, %v1890
        %v1895 = vmax.f32 %v1888, %v1892
        %v1896 = vmax.f32 %v1894, %v1895
        %v1897 = vrot.slane %v1896, 4
        %v1898 = vmax.f32 %v1896, %v1897
        %v1899 = vrot.slane %v1898, 2
        %v1900 = vmax.f32 %v1898, %v1899
        %v1901 = vrot.slane %v1900, 1
        %v1902 = vmax.f32 %v1900, %v1901
        %v1903 = vmax.f32 %v1887, %v1891
        %v1904 = vmax.f32 %v1889, %v1893
        %v1905 = vmax.f32 %v1903, %v1904
        %v1906 = vrot.slane %v1905, 4
        %v1907 = vmax.f32 %v1905, %v1906
        %v1908 = vrot.slane %v1907, 2
        %v1909 = vmax.f32 %v1907, %v1908
        %v1910 = vrot.slane %v1909, 1
        %v1911 = vmax.f32 %v1909, %v1910
        %v1912 = vadd.f32 %v1886, %v1888
        %v1913 = vadd.f32 %v1912, %v1890
        %v1914 = vadd.f32 %v1913, %v1892
        %v1915 = vrot.slane %v1914, 4
        %v1916 = vadd.f32 %v1914, %v1915
        %v1917 = vrot.slane %v1916, 2
        %v1918 = vadd.f32 %v1916, %v1917
        %v1919 = vrot.slane %v1918, 1
        %v1920 = vadd.f32 %v1918, %v1919
        %v1921 = vadd.f32 %v1887, %v1889
        %v1922 = vadd.f32 %v1921, %v1891
        %v1923 = vadd.f32 %v1922, %v1893
        %v1924 = vrot.slane %v1923, 4
        %v1925 = vadd.f32 %v1923, %v1924
        %v1926 = vrot.slane %v1925, 2
        %v1927 = vadd.f32 %v1925, %v1926
        %v1928 = vrot.slane %v1927, 1
        %v1929 = vadd.f32 %v1927, %v1928
        %v1930 = vmul.f32 %v1920, 0.03125
        %v1931 = vmul.f32 %v1929, 0.03125
        %v1932 = vld [vmem:[#allocation9] ss:$8 sm:$0x3]
        %1933 = vrot.lane.b32.xlu0 %v1902, 17
        %v1934 = vpop.permute.xlu0 %1933
        %1935 = vrot.lane.b32.xlu0 %v1911, 17
        %v1936 = vpop.permute.xlu0 %1935
        %v1937 = vsel %vm478, %v1934, %v1936
        %v1938 = vsel %vm478, %v1936, %v1934
        %s1939 = sld [smem:[#allocation4]]
        %v1940 = vstv %s1939
        %v1941 = vmul.f32 %v1938, %v1940
        %v1942 = vmul.f32 %v1937, %v1940
        %1943 = vrot.lane.b32.xlu0 %v1930, 17
        %v1944 = vpop.permute.xlu0 %1943
        %1945 = vrot.lane.b32.xlu0 %v1931, 17
        %v1946 = vpop.permute.xlu0 %1945
        %v1947 = vsel %vm478, %v1944, %v1946
        %v1948 = vsel %vm478, %v1946, %v1944
        %s1949 = sld [smem:[#allocation4 + $0x80]]
        %v1950 = vstv %s1949
        %v1951 = vmul.f32 %v1948, %v1950
        %v1952 = vmul.f32 %v1947, %v1950
        %v1953 = vadd.f32 %v1941, %v1951
        %v1954 = vadd.f32 %v1942, %v1952
        %v1956 = vperm.slane %v1932, 0
        %v1957 = vperm.slane %v1932, 1
        %v1960 = vmul.f32 %v1953, %v1956
        %v1961 = vmul.f32 %v1954, %v1957
        %v1962 = vadd.f32 %v1960, 0.0
        %v1963 = vadd.f32 %v1961, 0.0
        %s1964 = scalar_lea.vmem [#allocation9], 1
        %v1965 = vld [vmem:[%s1964] ss:$8 sm:$0x3]
        %1966 = vrot.lane.b32.xlu0 %v1902, 16
        %v1967 = vpop.permute.xlu0 %1966
        %1968 = vrot.lane.b32.xlu0 %v1911, 16
        %v1969 = vpop.permute.xlu0 %1968
        %v1970 = vsel %vm509, %v1967, %v1969
        %v1971 = vsel %vm509, %v1969, %v1967
        %s1972 = sld [smem:[#allocation4 + $0x1]]
        %v1973 = vstv %s1972
        %v1974 = vmul.f32 %v1971, %v1973
        %v1975 = vmul.f32 %v1970, %v1973
        %1976 = vrot.lane.b32.xlu0 %v1930, 16
        %v1977 = vpop.permute.xlu0 %1976
        %1978 = vrot.lane.b32.xlu0 %v1931, 16
        %v1979 = vpop.permute.xlu0 %1978
        %v1980 = vsel %vm509, %v1977, %v1979
        %v1981 = vsel %vm509, %v1979, %v1977
        %s1982 = sld [smem:[#allocation4 + $0x81]]
        %v1983 = vstv %s1982
        %v1984 = vmul.f32 %v1981, %v1983
        %v1985 = vmul.f32 %v1980, %v1983
        %v1986 = vadd.f32 %v1974, %v1984
        %v1987 = vadd.f32 %v1975, %v1985
        %v1989 = vperm.slane %v1965, 0
        %v1990 = vperm.slane %v1965, 1
        %v1993 = vmul.f32 %v1986, %v1989
        %v1994 = vmul.f32 %v1987, %v1990
        %v1995 = vadd.f32 %v1962, %v1993
        %v1996 = vadd.f32 %v1963, %v1994
        %s1997 = scalar_lea.vmem [#allocation9], 2
        %v1998 = vld [vmem:[%s1997] ss:$8 sm:$0x3]
        %1999 = vrot.lane.b32.xlu0 %v1902, 15
        %v2000 = vpop.permute.xlu0 %1999
        %2001 = vrot.lane.b32.xlu0 %v1911, 15
        %v2002 = vpop.permute.xlu0 %2001
        %v2003 = vsel %vm1013, %v2000, %v2002
        %v2004 = vsel %vm1013, %v2002, %v2000
        %s2005 = sld [smem:[#allocation4 + $0x2]]
        %v2006 = vstv %s2005
        %v2007 = vmul.f32 %v2004, %v2006
        %v2008 = vmul.f32 %v2003, %v2006
        %2009 = vrot.lane.b32.xlu0 %v1930, 15
        %v2010 = vpop.permute.xlu0 %2009
        %2011 = vrot.lane.b32.xlu0 %v1931, 15
        %v2012 = vpop.permute.xlu0 %2011
        %v2013 = vsel %vm1013, %v2010, %v2012
        %v2014 = vsel %vm1013, %v2012, %v2010
        %s2015 = sld [smem:[#allocation4 + $0x82]]
        %v2016 = vstv %s2015
        %v2017 = vmul.f32 %v2014, %v2016
        %v2018 = vmul.f32 %v2013, %v2016
        %v2019 = vadd.f32 %v2007, %v2017
        %v2020 = vadd.f32 %v2008, %v2018
        %v2022 = vperm.slane %v1998, 0
        %v2023 = vperm.slane %v1998, 1
        %v2026 = vmul.f32 %v2019, %v2022
        %v2027 = vmul.f32 %v2020, %v2023
        %v2028 = vadd.f32 %v1995, %v2026
        %v2029 = vadd.f32 %v1996, %v2027
        %s2030 = scalar_lea.vmem [#allocation9], 3
        %v2031 = vld [vmem:[%s2030] ss:$8 sm:$0x3]
        %2032 = vrot.lane.b32.xlu0 %v1902, 1
        %v2033 = vpop.permute.xlu0 %2032
        %2034 = vrot.lane.b32.xlu0 %v1911, 1
        %v2035 = vpop.permute.xlu0 %2034
        %v2036 = vsel %vm572, %v2033, %v2035
        %v2037 = vsel %vm572, %v2035, %v2033
        %s2038 = sld [smem:[#allocation4 + $0x3]]
        %v2039 = vstv %s2038
        %v2040 = vmul.f32 %v2037, %v2039
        %v2041 = vmul.f32 %v2036, %v2039
        %2042 = vrot.lane.b32.xlu0 %v1930, 1
        %v2043 = vpop.permute.xlu0 %2042
        %2044 = vrot.lane.b32.xlu0 %v1931, 1
        %v2045 = vpop.permute.xlu0 %2044
        %v2046 = vsel %vm572, %v2043, %v2045
        %v2047 = vsel %vm572, %v2045, %v2043
        %s2048 = sld [smem:[#allocation4 + $0x83]]
        %v2049 = vstv %s2048
        %v2050 = vmul.f32 %v2047, %v2049
        %v2051 = vmul.f32 %v2046, %v2049
        %v2052 = vadd.f32 %v2040, %v2050
        %v2053 = vadd.f32 %v2041, %v2051
        %v2055 = vperm.slane %v2031, 0
        %v2056 = vperm.slane %v2031, 1
        %v2059 = vmul.f32 %v2052, %v2055
        %v2060 = vmul.f32 %v2053, %v2056
        %v2061 = vadd.f32 %v2028, %v2059
        %v2062 = vadd.f32 %v2029, %v2060
        %s2063 = scalar_lea.vmem [#allocation9], 4
        %v2064 = vld [vmem:[%s2063] ss:$8 sm:$0x3]
        %s2065 = sld [smem:[#allocation4 + $0x4]]
        %v2066 = vstv %s2065
        %v2067 = vmul.f32 %v1902, %v2066
        %v2068 = vmul.f32 %v1911, %v2066
        %s2069 = sld [smem:[#allocation4 + $0x84]]
        %v2070 = vstv %s2069
        %v2071 = vmul.f32 %v1930, %v2070
        %v2072 = vmul.f32 %v1931, %v2070
        %v2073 = vadd.f32 %v2067, %v2071
        %v2074 = vadd.f32 %v2068, %v2072
        %v2076 = vperm.slane %v2064, 0
        %v2077 = vperm.slane %v2064, 1
        %v2080 = vmul.f32 %v2073, %v2076
        %v2081 = vmul.f32 %v2074, %v2077
        %v2082 = vadd.f32 %v2061, %v2080
        %v2083 = vadd.f32 %v2062, %v2081
        %s2084 = scalar_lea.vmem [#allocation9], 5
        %v2085 = vld [vmem:[%s2084] ss:$8 sm:$0x3]
        %2086 = vrot.lane.b32.xlu0 %v1902, 127
        %v2087 = vpop.permute.xlu0 %2086
        %2088 = vrot.lane.b32.xlu0 %v1911, 127
        %v2089 = vpop.permute.xlu0 %2088
        %v2090 = vsel %vm1131, %v2087, %v2089
        %v2091 = vsel %vm1131, %v2089, %v2087
        %s2092 = sld [smem:[#allocation4 + $0x5]]
        %v2093 = vstv %s2092
        %v2094 = vmul.f32 %v2090, %v2093
        %v2095 = vmul.f32 %v2091, %v2093
        %2096 = vrot.lane.b32.xlu0 %v1930, 127
        %v2097 = vpop.permute.xlu0 %2096
        %2098 = vrot.lane.b32.xlu0 %v1931, 127
        %v2099 = vpop.permute.xlu0 %2098
        %v2100 = vsel %vm1131, %v2097, %v2099
        %v2101 = vsel %vm1131, %v2099, %v2097
        %s2102 = sld [smem:[#allocation4 + $0x85]]
        %v2103 = vstv %s2102
        %v2104 = vmul.f32 %v2100, %v2103
        %v2105 = vmul.f32 %v2101, %v2103
        %v2106 = vadd.f32 %v2094, %v2104
        %v2107 = vadd.f32 %v2095, %v2105
        %v2109 = vperm.slane %v2085, 0
        %v2110 = vperm.slane %v2085, 1
        %v2113 = vmul.f32 %v2106, %v2109
        %v2114 = vmul.f32 %v2107, %v2110
        %v2115 = vadd.f32 %v2082, %v2113
        %v2116 = vadd.f32 %v2083, %v2114
        %s2117 = scalar_lea.vmem [#allocation9], 6
        %v2118 = vld [vmem:[%s2117] ss:$8 sm:$0x3]
        %2119 = vrot.lane.b32.xlu0 %v1902, 113
        %v2120 = vpop.permute.xlu0 %2119
        %2121 = vrot.lane.b32.xlu0 %v1911, 113
        %v2122 = vpop.permute.xlu0 %2121
        %v2123 = vsel %vm1179, %v2120, %v2122
        %v2124 = vsel %vm1179, %v2122, %v2120
        %s2125 = sld [smem:[#allocation4 + $0x6]]
        %v2126 = vstv %s2125
        %v2127 = vmul.f32 %v2123, %v2126
        %v2128 = vmul.f32 %v2124, %v2126
        %2129 = vrot.lane.b32.xlu0 %v1930, 113
        %v2130 = vpop.permute.xlu0 %2129
        %2131 = vrot.lane.b32.xlu0 %v1931, 113
        %v2132 = vpop.permute.xlu0 %2131
        %v2133 = vsel %vm1179, %v2130, %v2132
        %v2134 = vsel %vm1179, %v2132, %v2130
        %s2135 = sld [smem:[#allocation4 + $0x86]]
        %v2136 = vstv %s2135
        %v2137 = vmul.f32 %v2133, %v2136
        %v2138 = vmul.f32 %v2134, %v2136
        %v2139 = vadd.f32 %v2127, %v2137
        %v2140 = vadd.f32 %v2128, %v2138
        %v2142 = vperm.slane %v2118, 0
        %v2143 = vperm.slane %v2118, 1
        %v2146 = vmul.f32 %v2139, %v2142
        %v2147 = vmul.f32 %v2140, %v2143
        %v2148 = vadd.f32 %v2115, %v2146
        %v2149 = vadd.f32 %v2116, %v2147
        %s2150 = scalar_lea.vmem [#allocation9], 7
        %v2151 = vld [vmem:[%s2150] ss:$8 sm:$0x3]
        %2152 = vrot.lane.b32.xlu0 %v1902, 112
        %v2153 = vpop.permute.xlu0 %2152
        %2154 = vrot.lane.b32.xlu0 %v1911, 112
        %v2155 = vpop.permute.xlu0 %2154
        %v2156 = vsel %vm1227, %v2153, %v2155
        %v2157 = vsel %vm1227, %v2155, %v2153
        %s2158 = sld [smem:[#allocation4 + $0x7]]
        %v2159 = vstv %s2158
        %v2160 = vmul.f32 %v2156, %v2159
        %v2161 = vmul.f32 %v2157, %v2159
        %2162 = vrot.lane.b32.xlu0 %v1930, 112
        %v2163 = vpop.permute.xlu0 %2162
        %2164 = vrot.lane.b32.xlu0 %v1931, 112
        %v2165 = vpop.permute.xlu0 %2164
        %v2166 = vsel %vm1227, %v2163, %v2165
        %v2167 = vsel %vm1227, %v2165, %v2163
        %s2168 = sld [smem:[#allocation4 + $0x87]]
        %v2169 = vstv %s2168
        %v2170 = vmul.f32 %v2166, %v2169
        %v2171 = vmul.f32 %v2167, %v2169
        %v2172 = vadd.f32 %v2160, %v2170
        %v2173 = vadd.f32 %v2161, %v2171
        %v2175 = vperm.slane %v2151, 0
        %v2176 = vperm.slane %v2151, 1
        %v2179 = vmul.f32 %v2172, %v2175
        %v2180 = vmul.f32 %v2173, %v2176
        %v2181 = vadd.f32 %v2148, %v2179
        %v2182 = vadd.f32 %v2149, %v2180
        %s2183 = scalar_lea.vmem [#allocation9], 16
        %v2184 = vld [vmem:[%s2183] ss:$8 sm:$0x3]
        %2185 = vrot.lane.b32.xlu0 %v1902, 111
        %v2186 = vpop.permute.xlu0 %2185
        %2187 = vrot.lane.b32.xlu0 %v1911, 111
        %v2188 = vpop.permute.xlu0 %2187
        %v2189 = vsel %vm1275, %v2186, %v2188
        %v2190 = vsel %vm1275, %v2188, %v2186
        %s2191 = sld [smem:[#allocation4 + $0x8]]
        %v2192 = vstv %s2191
        %v2193 = vmul.f32 %v2189, %v2192
        %v2194 = vmul.f32 %v2190, %v2192
        %2195 = vrot.lane.b32.xlu0 %v1930, 111
        %v2196 = vpop.permute.xlu0 %2195
        %2197 = vrot.lane.b32.xlu0 %v1931, 111
        %v2198 = vpop.permute.xlu0 %2197
        %v2199 = vsel %vm1275, %v2196, %v2198
        %v2200 = vsel %vm1275, %v2198, %v2196
        %s2201 = sld [smem:[#allocation4 + $0x88]]
        %v2202 = vstv %s2201
        %v2203 = vmul.f32 %v2199, %v2202
        %v2204 = vmul.f32 %v2200, %v2202
        %v2205 = vadd.f32 %v2193, %v2203
        %v2206 = vadd.f32 %v2194, %v2204
        %v2208 = vperm.slane %v2184, 0
        %v2209 = vperm.slane %v2184, 1
        %v2212 = vmul.f32 %v2205, %v2208
        %v2213 = vmul.f32 %v2206, %v2209
        %v2214 = vadd.f32 %v2181, %v2212
        %v2215 = vadd.f32 %v2182, %v2213
        %s2216 = sld [smem:[#allocation5]]
        %v2217 = vstv %s2216
        %v2218 = vadd.f32 %v2214, %v2217
        %v2219 = vadd.f32 %v2215, %v2217
        %v2220 = vxor.u32 %v2218, 2147483648
        %v2221 = vxor.u32 %v2219, 2147483648
        %v2222 = vmul.f32 %v2220, 1.442695
        %v2223 = vpow.pop %v2222
        %v2224 = vmul.f32 %v2221, 1.442695
        %v2225 = vpow.pop %v2224
        %v2226 = vadd.f32 %v2223, 1.0
        %v2227 = vadd.f32 %v2225, 1.0
        %v2228 = vrcp.pop %v2226
        %v2229 = vmul.f32 %v2226, %v2228
        %v2230 = vsub.f32 1.0, %v2229
        %v2231 = vmul.f32 %v2228, %v2230
        %v2232 = vadd.f32 %v2228, %v2231
        %vm2233 = vweird.f32 %v2226
        %vm2234 = vweird.f32 %v2228
        %vm2235 = vmor %vm2233, %vm2234
        %v2236 = vsel %vm2235, %v2228, %v2232
        %v2237 = vand.u32 2147483647, %v2226
        %vm2238 = vcmp.eq.f32.partialorder %v2237, 8.507059e+37
        %v2239 = vand.u32 %v2226, 2147483648
        %v2240 = vor.u32 1.1754944e-38, %v2239
        %v2241 = vsel %vm2238, %v2240, %v2236
        %v2242 = vmul.f32 1.0, %v2241
        %v2243 = vrcp.pop %v2227
        %v2244 = vmul.f32 %v2227, %v2243
        %v2245 = vsub.f32 1.0, %v2244
        %v2246 = vmul.f32 %v2243, %v2245
        %v2247 = vadd.f32 %v2243, %v2246
        %vm2248 = vweird.f32 %v2227
        %vm2249 = vweird.f32 %v2243
        %vm2250 = vmor %vm2248, %vm2249
        %v2251 = vsel %vm2250, %v2243, %v2247
        %v2252 = vand.u32 2147483647, %v2227
        %vm2253 = vcmp.eq.f32.partialorder %v2252, 8.507059e+37
        %v2254 = vand.u32 %v2227, 2147483648
        %v2255 = vor.u32 1.1754944e-38, %v2254
        %v2256 = vsel %vm2253, %v2255, %v2251
        %v2257 = vmul.f32 1.0, %v2256
        %v2258 = vperm.slane %v2242, 0
        %v2259 = vperm.slane %v2257, 0
        %v2260 = vmul.f32 %v1840, %v2258
        %v2261 = vmul.f32 %v1840, %v2259
        %v2262 = vmul.f32 %v1855, %v2258
        %v2263 = vmul.f32 %v1855, %v2259
        %v2264 = vmul.f32 %v1870, %v2258
        %v2265 = vmul.f32 %v1870, %v2259
        %v2266 = vmul.f32 %v1885, %v2258
        %v2267 = vmul.f32 %v1885, %v2259
        %v2268 = vadd.f32 %v2260, 1.0
        %v2269 = vadd.f32 %v2261, 1.0
        %v2270 = vadd.f32 %v2262, 1.0
        %v2271 = vadd.f32 %v2263, 1.0
        %v2272 = vadd.f32 %v2264, 1.0
        %v2273 = vadd.f32 %v2265, 1.0
        %v2274 = vadd.f32 %v2266, 1.0
        %v2275 = vadd.f32 %v2267, 1.0
        %v2276 = vmul.f32 %v1712, %v2268
        %v2277 = vmul.f32 %v1713, %v2269
        %v2278 = vmul.f32 %v1714, %v2270
        %v2279 = vmul.f32 %v1715, %v2271
        %v2280 = vmul.f32 %v1716, %v2272
        %v2281 = vmul.f32 %v1717, %v2273
        %v2282 = vmul.f32 %v1718, %v2274
        %v2283 = vmul.f32 %v1719, %v2275
        %2284 = vst [vmem:[%s461] sm:$0xff] %v2276
        %2285 = vst [vmem:[%s461 + $0x8] sm:$0xff] %v2277
        %2286 = vst [vmem:[%s461 + $0x10] sm:$0xff] %v2278
        %2287 = vst [vmem:[%s461 + $0x18] sm:$0xff] %v2279
        %2288 = vst [vmem:[%s461 + $0x20] sm:$0xff] %v2280
        %2289 = vst [vmem:[%s461 + $0x28] sm:$0xff] %v2281
        %2290 = vst [vmem:[%s461 + $0x30] sm:$0xff] %v2282
        %2291 = vst [vmem:[%s461 + $0x38] sm:$0xff] %v2283
        %s2292 = sand.u32 %s306, 1
        %s2293 = scalar_lea.sflag [#allocation8], %s2292
        %s2294 = sand.u32 %s306, 1
        %s2295 = smul.addr %s2294, 64
        %s2296 = scalar_lea.vmem [#allocation11], %s2295
        // Predicated region
        $region77: #{tpu_custom_call.1} parent=67 // pred_check
          %p2297 = pneg %p316
        $region78: #{tpu_custom_call.1} parent=67 // pred_check_branch
          %2299 = sbr.rel (%p2297) target = $region80
        $region79: #{tpu_custom_call.1} parent=67 // pred_region
          %s2300 = smul.u32 2, %s41
          %2302 = vsyncadd %s2293, 0
          %s2303 = smul.addr %s2300, 8
          %s2304 = scalar_lea.hbm %s14, %s2303
          %s2305 = sshll.u32 %s2296, 4
          %s2306 = int_to_ptr.vmem [resolvable:$true] %s2305
          %s2307 = sshll.u32 %s2304, 4
          %s2308 = int_to_ptr.hbm [resolvable:$true] %s2307
          %2313 = dma.vmem_to_hbm [thread:$0]  %s2306, 1024, %s2308, %s2293, 256, 1024, 16
        $region80: #{tpu_custom_call.1} parent=67 // pred_fallthru
          _
      $region68: #{tpu_custom_call.1} parent=5 // pred_fallthru
        _
      %p2314 = scmp.le.s32.totalorder 2, %s36
      // Predicated region
      $region81: #{tpu_custom_call.1} parent=5 // pred_check
        %p2315 = pneg %p2314
      $region82: #{tpu_custom_call.1} parent=5 // pred_check_branch
        %2317 = sbr.rel (%p2315) target = $region84
      $region83: #{tpu_custom_call.1} parent=5 // pred_region
        %s2318 = ssub.s32 %s36, 2
        // Predicated region
        $region85: #{tpu_custom_call.1} parent=83 // pred_check
          %p2319 = pneg %p322
        $region86: #{tpu_custom_call.1} parent=83 // pred_check_branch
          %2321 = sbr.rel (%p2319) target = $region88
        $region87: #{tpu_custom_call.1} parent=83 // pred_region
          %s2322 = sand.u32 %s307, 1
          %s2323 = scalar_lea.sflag [#allocation8], %s2322
          %s2324 = sand.u32 %s307, 1
          %s2325 = smul.addr %s2324, 64
          %s2326 = scalar_lea.vmem [#allocation11], %s2325
          %2328 = dma.done %s2323, 1024
        $region88: #{tpu_custom_call.1} parent=83 // pred_fallthru
          _
      $region84: #{tpu_custom_call.1} parent=5 // pred_fallthru
        _
    $region6: #{tpu_custom_call.1} parent=1 // loop_footer
      %s40 = sadd.s32 1, %s36
    $region7: #{tpu_custom_call.1} parent=1 // loop_footer_branch
      %35 = sbr.rel target = $region3
    $region8: #{tpu_custom_call.1} parent=1 // loop_exit
      _
    %2329 = vsyncpa [#allocation7], 1
    %s2330 = scalar_lea.sflag [#allocation7], 1
    %2331 = vsyncpa %s2330, 1
    %2332 = vsyncpa [#allocation10], 1
    %2333 = vsyncpa [#allocation8], 1
    %s2334 = scalar_lea.sflag [#allocation8], 1
    %2335 = vsyncpa %s2334, 1

// kernel: tpu_custom_call.1
$region0: #{tpu_custom_call.1}
  #allocation0 [shape = 'u32[]', space=smem, size = 0x4, offset = 0x4, fixed_abs, tag = 'smem constant byte address 0x4 - core index']
  #allocation1 [shape = 'u32[72,128]{1,0:T(1,128)}', space=vmem, size = 0x9000, scoped, tag = 'internal scratch']
  #allocation2 [shape = 'f32[288,256]{1,0:T(8,128)}', space=vmem, size = 0x48000, scoped, tag = 'scratch operand']
  #allocation3 [shape = 's32[1]{0}', space=sflag, size = 0x4, scoped, tag = 'scoped memory for tpu_custom_call.1']
  #allocation4 [shape = 'u8[1024]{0}', space=smem, size = 0x400, scoped, tag = 'prefetched SMEM operand 0']
  #allocation5 [shape = 'f32[1]{0:T(128)S(6)}', space=smem, size = 0x200, scoped, tag = 'prefetched SMEM operand 1']
  %s0 = inlined_call_operand.hbm [shape: f32[2,9], index: 0, kind: input, shape index: {}]
  %s1 = inlined_call_operand.<no memory space> [shape: f32[1], index: 1, kind: input, shape index: {}]
  %s2 = inlined_call_operand.hbm [shape: f32[64,1024], index: 2, kind: input, shape index: {}]
  %s3 = inlined_call_operand.vmem [shape: f32[32,144], index: 3, kind: input, shape index: {}]
  %s4 = inlined_call_operand.vmem [shape: f32[32,1], index: 4, kind: input, shape index: {}]
  %s5 = inlined_call_operand.vmem [shape: f32[32,288], index: 5, kind: input, shape index: {}]
  %s6 = inlined_call_operand.vmem [shape: f32[32,1], index: 6, kind: input, shape index: {}]
  %s7 = inlined_call_operand.vmem [shape: f32[32,16], index: 7, kind: input, shape index: {}]
  %s8 = inlined_call_operand.vmem [shape: f32[32,1], index: 8, kind: input, shape index: {}]
  %s9 = inlined_call_operand.vmem [shape: f32[32,8], index: 9, kind: input, shape index: {}]
  %s10 = inlined_call_operand.vmem [shape: f32[32,8], index: 10, kind: input, shape index: {}]
  %s11 = inlined_call_operand.vmem [shape: f32[9,256], index: 11, kind: input, shape index: {}]
  %s12 = inlined_call_operand.vmem [shape: f32[9,256], index: 12, kind: input, shape index: {}]
  %s13 = inlined_call_operand.hbm [shape: f32[9,256], index: 13, kind: input, shape index: {}]
  %s14 = inlined_call_operand.hbm [shape: f32[32,1024], index: 14, kind: output, shape index: {}]
  %s15 = sld [smem:[#allocation0]]
  $region89: #{tpu_custom_call.1} parent=0
    _
  %s17 = ssub.s32 1, %s15
  %s18 = scalar_select 0, %s17, %s15
  %s20 = sshll.u32 %s0, 4
  %s21 = int_to_ptr.hbm [resolvable:$true] %s20
  %23 = dma.hbm_to_smem %s21, 32, [#allocation4], [#allocation3]
  %24 = sst [smem:[#allocation5]] %s1
  %26 = dma.done [#allocation3], 32
  %27 = sfence
  $region1: #{tpu_custom_call.1} parent=0
    #allocation6 [shape = 'u8[131072]{0}', space=vmem, size = 0x20000, scoped, tag = 'input window, operand 2']
    #allocation7 [shape = 's32[2]{0}', space=sflag, size = 0x8, scoped, tag = 'scoped memory for tpu_custom_call.1']
    #allocation8 [shape = 's32[2]{0}', space=sflag, size = 0x8, scoped, tag = 'scoped memory for tpu_custom_call.1']
    #allocation9 [shape = 'u8[16384]{0}', space=vmem, size = 0x4000, scoped, tag = 'input window, operand 13, single buffered']
    #allocation10 [shape = 's32[1]{0}', space=sflag, size = 0x4, scoped, tag = 'scoped memory for tpu_custom_call.1']
    #allocation11 [shape = 'u8[65536]{0}', space=vmem, size = 0x10000, scoped, tag = 'output window, operand 0']
    %28 = vsyncpa [#allocation7], 0
    %s29 = scalar_lea.sflag [#allocation7], 1
    %30 = vsyncpa %s29, 0
    %31 = vsyncpa [#allocation10], 0
    %32 = vsyncpa [#allocation8], 0
    %s33 = scalar_lea.sflag [#allocation8], 1
    %34 = vsyncpa %s33, 0
    loop: start=0, step=1, limit=6
    $region2: #{tpu_custom_call.1} parent=1 // loop_pre_header
      _
    $region3: #{tpu_custom_call.1} parent=1 // loop_header
      %s36 = sphi 0, %s40
      %p37 = scmp.ge.s32.totalorder %s36, 6
      %s46 = sphi 0, %s48
      %s49 = sphi 0, %s46
      %s50 = sphi 0, %s49
      %s66 = sphi 0, %s50
      %s70 = sphi 0, %s70
      %s72 = sphi 0, %s70
      %s73 = sphi 0, %s72
      %s87 = sphi 0, %s73
      %s91 = sphi 0, %s91
      %s93 = sphi 0, %s91
      %s94 = sphi 0, %s93
      %s108 = sphi 0, %s94
      %s112 = sphi 0, %s112
      %s114 = sphi 0, %s112
      %s115 = sphi 0, %s114
      %s129 = sphi 0, %s115
      %s133 = sphi 0, %s133
      %s135 = sphi 0, %s133
      %s136 = sphi 0, %s135
      %s150 = sphi 0, %s136
      %s154 = sphi 0, %s154
      %s156 = sphi 0, %s154
      %s157 = sphi 0, %s156
      %s171 = sphi 0, %s157
      %s175 = sphi 0, %s175
      %s177 = sphi 0, %s175
      %s178 = sphi 0, %s177
      %s192 = sphi 0, %s178
      %s196 = sphi 0, %s196
      %s198 = sphi 0, %s196
      %s199 = sphi 0, %s198
      %s213 = sphi 0, %s199
      %s217 = sphi 0, %s217
      %s219 = sphi 0, %s217
      %s220 = sphi 0, %s219
      %s234 = sphi 0, %s220
      %s238 = sphi 0, %s238
      %s240 = sphi 0, %s238
      %s241 = sphi 0, %s240
      %s255 = sphi 0, %s241
      %s259 = sphi 0, %s259
      %s261 = sphi 0, %s259
      %s262 = sphi 0, %s261
      %s276 = sphi 0, %s262
      %s280 = sphi 0, %s280
      %s282 = sphi 0, %s280
      %s283 = sphi 0, %s282
      %s297 = sphi 0, %s283
      %s303 = sphi 0, %s305
      %s306 = sphi 0, %s303
      %s307 = sphi 0, %s306
      %s323 = sphi 0, %s307
    $region4: #{tpu_custom_call.1} parent=1 // loop_header_branch
      %39 = sbr.rel (%p37) target = $region8
    $region5: #{tpu_custom_call.1} parent=1 // loop_body
      %s41 = ssub.s32 %s36, 1
      %s42 = ssub.s32 %s36, 2
      %s43 = sadd.s32 %s36, 1
      %s44 = ssub.s32 %s36, %s43
      %p45 = scmp.eq.s32.totalorder %s44, 0
      %s47 = sadd.s32 %s46, 1
      %s48 = scalar_select %p45, %s46, %s47
      %p51 = pneg %p45
      %p52 = scmp.eq.s32.totalorder %s36, 3
      %p53 = por %p51, %p52
      %p54 = scmp.ne.s32.totalorder %s46, %s49
      %p55 = scmp.eq.s32.totalorder %s36, 0
      %p56 = por %p54, %p55
      %p57 = scmp.ne.s32.totalorder %s46, %s49
      %p58 = scmp.eq.s32.totalorder %s41, 3
      %p59 = por %p57, %p58
      %p60 = scmp.ne.s32.totalorder %s49, %s50
      %p61 = scmp.eq.s32.totalorder %s41, 0
      %p62 = por %p60, %p61
      %p63 = scmp.ne.s32.totalorder %s49, %s50
      %p64 = scmp.eq.s32.totalorder %s42, 3
      %p65 = por %p63, %p64
      %p67 = scmp.ne.s32.totalorder %s50, %s66
      %p68 = scmp.eq.s32.totalorder %s42, 0
      %p69 = por %p67, %p68
      %s71 = sadd.s32 %s70, 1
      %p74 = scmp.eq.s32.totalorder %s36, 3
      %p75 = scmp.ne.s32.totalorder %s70, %s72
      %p76 = scmp.eq.s32.totalorder %s36, 0
      %p77 = por %p75, %p76
      %p78 = scmp.ne.s32.totalorder %s70, %s72
      %p79 = scmp.eq.s32.totalorder %s41, 3
      %p80 = por %p78, %p79
      %p81 = scmp.ne.s32.totalorder %s72, %s73
      %p82 = scmp.eq.s32.totalorder %s41, 0
      %p83 = por %p81, %p82
      %p84 = scmp.ne.s32.totalorder %s72, %s73
      %p85 = scmp.eq.s32.totalorder %s42, 3
      %p86 = por %p84, %p85
      %p88 = scmp.ne.s32.totalorder %s73, %s87
      %p89 = scmp.eq.s32.totalorder %s42, 0
      %p90 = por %p88, %p89
      %s92 = sadd.s32 %s91, 1
      %p95 = scmp.eq.s32.totalorder %s36, 3
      %p96 = scmp.ne.s32.totalorder %s91, %s93
      %p97 = scmp.eq.s32.totalorder %s36, 0
      %p98 = por %p96, %p97
      %p99 = scmp.ne.s32.totalorder %s91, %s93
      %p100 = scmp.eq.s32.totalorder %s41, 3
      %p101 = por %p99, %p100
      %p102 = scmp.ne.s32.totalorder %s93, %s94
      %p103 = scmp.eq.s32.totalorder %s41, 0
      %p104 = por %p102, %p103
      %p105 = scmp.ne.s32.totalorder %s93, %s94
      %p106 = scmp.eq.s32.totalorder %s42, 3
      %p107 = por %p105, %p106
      %p109 = scmp.ne.s32.totalorder %s94, %s108
      %p110 = scmp.eq.s32.totalorder %s42, 0
      %p111 = por %p109, %p110
      %s113 = sadd.s32 %s112, 1
      %p116 = scmp.eq.s32.totalorder %s36, 3
      %p117 = scmp.ne.s32.totalorder %s112, %s114
      %p118 = scmp.eq.s32.totalorder %s36, 0
      %p119 = por %p117, %p118
      %p120 = scmp.ne.s32.totalorder %s112, %s114
      %p121 = scmp.eq.s32.totalorder %s41, 3
      %p122 = por %p120, %p121
      %p123 = scmp.ne.s32.totalorder %s114, %s115
      %p124 = scmp.eq.s32.totalorder %s41, 0
      %p125 = por %p123, %p124
      %p126 = scmp.ne.s32.totalorder %s114, %s115
      %p127 = scmp.eq.s32.totalorder %s42, 3
      %p128 = por %p126, %p127
      %p130 = scmp.ne.s32.totalorder %s115, %s129
      %p131 = scmp.eq.s32.totalorder %s42, 0
      %p132 = por %p130, %p131
      %s134 = sadd.s32 %s133, 1
      %p137 = scmp.eq.s32.totalorder %s36, 3
      %p138 = scmp.ne.s32.totalorder %s133, %s135
      %p139 = scmp.eq.s32.totalorder %s36, 0
      %p140 = por %p138, %p139
      %p141 = scmp.ne.s32.totalorder %s133, %s135
      %p142 = scmp.eq.s32.totalorder %s41, 3
      %p143 = por %p141, %p142
      %p144 = scmp.ne.s32.totalorder %s135, %s136
      %p145 = scmp.eq.s32.totalorder %s41, 0
      %p146 = por %p144, %p145
      %p147 = scmp.ne.s32.totalorder %s135, %s136
      %p148 = scmp.eq.s32.totalorder %s42, 3
      %p149 = por %p147, %p148
      %p151 = scmp.ne.s32.totalorder %s136, %s150
      %p152 = scmp.eq.s32.totalorder %s42, 0
      %p153 = por %p151, %p152
      %s155 = sadd.s32 %s154, 1
      %p158 = scmp.eq.s32.totalorder %s36, 3
      %p159 = scmp.ne.s32.totalorder %s154, %s156
      %p160 = scmp.eq.s32.totalorder %s36, 0
      %p161 = por %p159, %p160
      %p162 = scmp.ne.s32.totalorder %s154, %s156
      %p163 = scmp.eq.s32.totalorder %s41, 3
      %p164 = por %p162, %p163
      %p165 = scmp.ne.s32.totalorder %s156, %s157
      %p166 = scmp.eq.s32.totalorder %s41, 0
      %p167 = por %p165, %p166
      %p168 = scmp.ne.s32.totalorder %s156, %s157
      %p169 = scmp.eq.s32.totalorder %s42, 3
      %p170 = por %p168, %p169
      %p172 = scmp.ne.s32.totalorder %s157, %s171
      %p173 = scmp.eq.s32.totalorder %s42, 0
      %p174 = por %p172, %p173
      %s176 = sadd.s32 %s175, 1
      %p179 = scmp.eq.s32.totalorder %s36, 3
      %p180 = scmp.ne.s32.totalorder %s175, %s177
      %p181 = scmp.eq.s32.totalorder %s36, 0
      %p182 = por %p180, %p181
      %p183 = scmp.ne.s32.totalorder %s175, %s177
      %p184 = scmp.eq.s32.totalorder %s41, 3
      %p185 = por %p183, %p184
      %p186 = scmp.ne.s32.totalorder %s177, %s178
      %p187 = scmp.eq.s32.totalorder %s41, 0
      %p188 = por %p186, %p187
      %p189 = scmp.ne.s32.totalorder %s177, %s178
      %p190 = scmp.eq.s32.totalorder %s42, 3
      %p191 = por %p189, %p190
      %p193 = scmp.ne.s32.totalorder %s178, %s192
      %p194 = scmp.eq.s32.totalorder %s42, 0
      %p195 = por %p193, %p194
      %s197 = sadd.s32 %s196, 1
      %p200 = scmp.eq.s32.totalorder %s36, 3
      %p201 = scmp.ne.s32.totalorder %s196, %s198
      %p202 = scmp.eq.s32.totalorder %s36, 0
      %p203 = por %p201, %p202
      %p204 = scmp.ne.s32.totalorder %s196, %s198
      %p205 = scmp.eq.s32.totalorder %s41, 3
      %p206 = por %p204, %p205
      %p207 = scmp.ne.s32.totalorder %s198, %s199
      %p208 = scmp.eq.s32.totalorder %s41, 0
      %p209 = por %p207, %p208
      %p210 = scmp.ne.s32.totalorder %s198, %s199
      %p211 = scmp.eq.s32.totalorder %s42, 3
      %p212 = por %p210, %p211
      %p214 = scmp.ne.s32.totalorder %s199, %s213
      %p215 = scmp.eq.s32.totalorder %s42, 0
      %p216 = por %p214, %p215
      %s218 = sadd.s32 %s217, 1
      %p221 = scmp.eq.s32.totalorder %s36, 3
      %p222 = scmp.ne.s32.totalorder %s217, %s219
      %p223 = scmp.eq.s32.totalorder %s36, 0
      %p224 = por %p222, %p223
      %p225 = scmp.ne.s32.totalorder %s217, %s219
      %p226 = scmp.eq.s32.totalorder %s41, 3
      %p227 = por %p225, %p226
      %p228 = scmp.ne.s32.totalorder %s219, %s220
      %p229 = scmp.eq.s32.totalorder %s41, 0
      %p230 = por %p228, %p229
      %p231 = scmp.ne.s32.totalorder %s219, %s220
      %p232 = scmp.eq.s32.totalorder %s42, 3
      %p233 = por %p231, %p232
      %p235 = scmp.ne.s32.totalorder %s220, %s234
      %p236 = scmp.eq.s32.totalorder %s42, 0
      %p237 = por %p235, %p236
      %s239 = sadd.s32 %s238, 1
      %p242 = scmp.eq.s32.totalorder %s36, 3
      %p243 = scmp.ne.s32.totalorder %s238, %s240
      %p244 = scmp.eq.s32.totalorder %s36, 0
      %p245 = por %p243, %p244
      %p246 = scmp.ne.s32.totalorder %s238, %s240
      %p247 = scmp.eq.s32.totalorder %s41, 3
      %p248 = por %p246, %p247
      %p249 = scmp.ne.s32.totalorder %s240, %s241
      %p250 = scmp.eq.s32.totalorder %s41, 0
      %p251 = por %p249, %p250
      %p252 = scmp.ne.s32.totalorder %s240, %s241
      %p253 = scmp.eq.s32.totalorder %s42, 3
      %p254 = por %p252, %p253
      %p256 = scmp.ne.s32.totalorder %s241, %s255
      %p257 = scmp.eq.s32.totalorder %s42, 0
      %p258 = por %p256, %p257
      %s260 = sadd.s32 %s259, 1
      %p263 = scmp.eq.s32.totalorder %s36, 3
      %p264 = scmp.ne.s32.totalorder %s259, %s261
      %p265 = scmp.eq.s32.totalorder %s36, 0
      %p266 = por %p264, %p265
      %p267 = scmp.ne.s32.totalorder %s259, %s261
      %p268 = scmp.eq.s32.totalorder %s41, 3
      %p269 = por %p267, %p268
      %p270 = scmp.ne.s32.totalorder %s261, %s262
      %p271 = scmp.eq.s32.totalorder %s41, 0
      %p272 = por %p270, %p271
      %p273 = scmp.ne.s32.totalorder %s261, %s262
      %p274 = scmp.eq.s32.totalorder %s42, 3
      %p275 = por %p273, %p274
      %p277 = scmp.ne.s32.totalorder %s262, %s276
      %p278 = scmp.eq.s32.totalorder %s42, 0
      %p279 = por %p277, %p278
      %s281 = sadd.s32 %s280, 1
      %p284 = scmp.eq.s32.totalorder %s36, 3
      %p285 = scmp.ne.s32.totalorder %s280, %s282
      %p286 = scmp.eq.s32.totalorder %s36, 0
      %p287 = por %p285, %p286
      %p288 = scmp.ne.s32.totalorder %s280, %s282
      %p289 = scmp.eq.s32.totalorder %s41, 3
      %p290 = por %p288, %p289
      %p291 = scmp.ne.s32.totalorder %s282, %s283
      %p292 = scmp.eq.s32.totalorder %s41, 0
      %p293 = por %p291, %p292
      %p294 = scmp.ne.s32.totalorder %s282, %s283
      %p295 = scmp.eq.s32.totalorder %s42, 3
      %p296 = por %p294, %p295
      %p298 = scmp.ne.s32.totalorder %s283, %s297
      %p299 = scmp.eq.s32.totalorder %s42, 0
      %p300 = por %p298, %p299
      %s301 = ssub.s32 %s36, %s43
      %p302 = scmp.eq.s32.totalorder %s301, 0
      %s304 = sadd.s32 %s303, 1
      %s305 = scalar_select %p302, %s303, %s304
      %p308 = pneg %p302
      %p309 = scmp.eq.s32.totalorder %s36, 3
      %p310 = por %p308, %p309
      %p311 = scmp.ne.s32.totalorder %s303, %s306
      %p312 = scmp.eq.s32.totalorder %s36, 0
      %p313 = por %p311, %p312
      %p314 = scmp.ne.s32.totalorder %s303, %s306
      %p315 = scmp.eq.s32.totalorder %s41, 3
      %p316 = por %p314, %p315
      %p317 = scmp.ne.s32.totalorder %s306, %s307
      %p318 = scmp.eq.s32.totalorder %s41, 0
      %p319 = por %p317, %p318
      %p320 = scmp.ne.s32.totalorder %s306, %s307
      %p321 = scmp.eq.s32.totalorder %s42, 3
      %p322 = por %p320, %p321
      %p324 = scmp.ne.s32.totalorder %s307, %s323
      %p325 = scmp.eq.s32.totalorder %s42, 0
      %p326 = por %p324, %p325
      %p327 = scmp.le.s32.totalorder 1, %s36
      %p328 = scmp.lt.s32.totalorder %s36, 5
      %p329 = pnand %p327, %p328
      %p330 = pneg %p329
      // Predicated region
      $region9: #{tpu_custom_call.1} parent=5 // pred_check
        _
      $region10: #{tpu_custom_call.1} parent=5 // pred_check_branch
        %332 = sbr.rel (%p329) target = $region12
      $region11: #{tpu_custom_call.1} parent=5 // pred_region
        %s333 = ssub.s32 %s36, 1
        // Predicated region
        $region13: #{tpu_custom_call.1} parent=11 // pred_check
          %p334 = pneg %p83
        $region14: #{tpu_custom_call.1} parent=11 // pred_check_branch
          %336 = sbr.rel (%p334) target = $region16
        $region15: #{tpu_custom_call.1} parent=11 // pred_region
          _
        $region16: #{tpu_custom_call.1} parent=11 // pred_fallthru
          _
        // Predicated region
        $region17: #{tpu_custom_call.1} parent=11 // pred_check
          %p337 = pneg %p104
        $region18: #{tpu_custom_call.1} parent=11 // pred_check_branch
          %339 = sbr.rel (%p337) target = $region20
        $region19: #{tpu_custom_call.1} parent=11 // pred_region
          _
        $region20: #{tpu_custom_call.1} parent=11 // pred_fallthru
          _
        // Predicated region
        $region21: #{tpu_custom_call.1} parent=11 // pred_check
          %p340 = pneg %p125
        $region22: #{tpu_custom_call.1} parent=11 // pred_check_branch
          %342 = sbr.rel (%p340) target = $region24
        $region23: #{tpu_custom_call.1} parent=11 // pred_region
          _
        $region24: #{tpu_custom_call.1} parent=11 // pred_fallthru
          _
        // Predicated region
        $region25: #{tpu_custom_call.1} parent=11 // pred_check
          %p343 = pneg %p146
        $region26: #{tpu_custom_call.1} parent=11 // pred_check_branch
          %345 = sbr.rel (%p343) target = $region28
        $region27: #{tpu_custom_call.1} parent=11 // pred_region
          _
        $region28: #{tpu_custom_call.1} parent=11 // pred_fallthru
          _
        // Predicated region
        $region29: #{tpu_custom_call.1} parent=11 // pred_check
          %p346 = pneg %p167
        $region30: #{tpu_custom_call.1} parent=11 // pred_check_branch
          %348 = sbr.rel (%p346) target = $region32
        $region31: #{tpu_custom_call.1} parent=11 // pred_region
          _
        $region32: #{tpu_custom_call.1} parent=11 // pred_fallthru
          _
        // Predicated region
        $region33: #{tpu_custom_call.1} parent=11 // pred_check
          %p349 = pneg %p188
        $region34: #{tpu_custom_call.1} parent=11 // pred_check_branch
          %351 = sbr.rel (%p349) target = $region36
        $region35: #{tpu_custom_call.1} parent=11 // pred_region
          _
        $region36: #{tpu_custom_call.1} parent=11 // pred_fallthru
          _
        // Predicated region
        $region37: #{tpu_custom_call.1} parent=11 // pred_check
          %p352 = pneg %p209
        $region38: #{tpu_custom_call.1} parent=11 // pred_check_branch
          %354 = sbr.rel (%p352) target = $region40
        $region39: #{tpu_custom_call.1} parent=11 // pred_region
          _
        $region40: #{tpu_custom_call.1} parent=11 // pred_fallthru
          _
        // Predicated region
        $region41: #{tpu_custom_call.1} parent=11 // pred_check
          %p355 = pneg %p230
        $region42: #{tpu_custom_call.1} parent=11 // pred_check_branch
          %357 = sbr.rel (%p355) target = $region44
        $region43: #{tpu_custom_call.1} parent=11 // pred_region
          _
        $region44: #{tpu_custom_call.1} parent=11 // pred_fallthru
          _
        // Predicated region
        $region45: #{tpu_custom_call.1} parent=11 // pred_check
          %p358 = pneg %p251
        $region46: #{tpu_custom_call.1} parent=11 // pred_check_branch
          %360 = sbr.rel (%p358) target = $region48
        $region47: #{tpu_custom_call.1} parent=11 // pred_region
          _
        $region48: #{tpu_custom_call.1} parent=11 // pred_fallthru
          _
        // Predicated region
        $region49: #{tpu_custom_call.1} parent=11 // pred_check
          %p361 = pneg %p272
        $region50: #{tpu_custom_call.1} parent=11 // pred_check_branch
          %363 = sbr.rel (%p361) target = $region52
        $region51: #{tpu_custom_call.1} parent=11 // pred_region
          _
        $region52: #{tpu_custom_call.1} parent=11 // pred_fallthru
          _
        // Predicated region
        $region53: #{tpu_custom_call.1} parent=11 // pred_check
          %p364 = pneg %p293
        $region54: #{tpu_custom_call.1} parent=11 // pred_check_branch
          %366 = sbr.rel (%p364) target = $region56
        $region55: #{tpu_custom_call.1} parent=11 // pred_region
          %368 = vsyncadd [#allocation10], 0
          %s369 = sshll.u32 %s13, 4
          %s370 = int_to_ptr.hbm [resolvable:$true] %s369
          %s371 = sshll.u32 [#allocation9], 4
          %s372 = int_to_ptr.vmem [resolvable:$true] %s371
          %377 = dma.hbm_to_vmem [thread:$0]  %s370, 512, %s372, [#allocation10], 256, 256, 16
        $region56: #{tpu_custom_call.1} parent=11 // pred_fallthru
          _
      $region12: #{tpu_custom_call.1} parent=5 // pred_fallthru
        _
      %p378 = scmp.lt.s32.totalorder %s36, 4
      // Predicated region
      $region57: #{tpu_custom_call.1} parent=5 // pred_check
        %p379 = pneg %p378
      $region58: #{tpu_custom_call.1} parent=5 // pred_check_branch
        %381 = sbr.rel (%p379) target = $region60
      $region59: #{tpu_custom_call.1} parent=5 // pred_region
        // Predicated region
        $region61: #{tpu_custom_call.1} parent=59 // pred_check
          %p382 = pneg %p56
        $region62: #{tpu_custom_call.1} parent=59 // pred_check_branch
          %384 = sbr.rel (%p382) target = $region64
        $region63: #{tpu_custom_call.1} parent=59 // pred_region
          %s385 = sand.u32 %s46, 1
          %s386 = scalar_lea.sflag [#allocation7], %s385
          %s387 = sand.u32 %s46, 1
          %s388 = smul.addr %s387, 128
          %s389 = scalar_lea.vmem [#allocation6], %s388
          %s390 = smul.u32 2, %s36
          %392 = vsyncadd %s386, 0
          %s393 = smul.addr %s390, 8
          %s394 = scalar_lea.hbm %s2, %s393
          %s395 = sshll.u32 %s394, 4
          %s396 = int_to_ptr.hbm [resolvable:$true] %s395
          %s397 = sshll.u32 %s389, 4
          %s398 = int_to_ptr.vmem [resolvable:$true] %s397
          %403 = dma.hbm_to_vmem [thread:$0]  %s396, 2048, %s398, %s386, 1024, 256, 16
        $region64: #{tpu_custom_call.1} parent=59 // pred_fallthru
          _
      $region60: #{tpu_custom_call.1} parent=5 // pred_fallthru
        _
      %p404 = scmp.le.s32.totalorder 1, %s36
      %p405 = scmp.lt.s32.totalorder %s36, 5
      %p406 = pnand %p404, %p405
      %p407 = pneg %p406
      // Predicated region
      $region65: #{tpu_custom_call.1} parent=5 // pred_check
        _
      $region66: #{tpu_custom_call.1} parent=5 // pred_check_branch
        %409 = sbr.rel (%p406) target = $region68
      $region67: #{tpu_custom_call.1} parent=5 // pred_region
        %s410 = ssub.s32 %s36, 1
        %s411 = sand.u32 %s49, 1
        %s412 = scalar_lea.sflag [#allocation7], %s411
        %s413 = sand.u32 %s49, 1
        %s414 = smul.addr %s413, 128
        %s415 = scalar_lea.vmem [#allocation6], %s414
        // Predicated region
        $region69: #{tpu_custom_call.1} parent=67 // pred_check
          %p416 = pneg %p62
        $region70: #{tpu_custom_call.1} parent=67 // pred_check_branch
          %418 = sbr.rel (%p416) target = $region72
        $region71: #{tpu_custom_call.1} parent=67 // pred_region
          %420 = dma.done %s412, 2048
        $region72: #{tpu_custom_call.1} parent=67 // pred_fallthru
          _
        // Predicated region
        $region73: #{tpu_custom_call.1} parent=67 // pred_check
          %p421 = pneg %p293
        $region74: #{tpu_custom_call.1} parent=67 // pred_check_branch
          %423 = sbr.rel (%p421) target = $region76
        $region75: #{tpu_custom_call.1} parent=67 // pred_region
          %425 = dma.done [#allocation10], 512
        $region76: #{tpu_custom_call.1} parent=67 // pred_fallthru
          _
        %s426 = sand.u32 %s49, 1
        %s427 = scalar_lea.sflag [#allocation7], %s426
        %s428 = sand.u32 %s49, 1
        %s429 = smul.addr %s428, 128
        %s430 = scalar_lea.vmem [#allocation6], %s429
        %p431 = pneg %p62
        %p432 = pneg %p59
        %p433 = pneg %p83
        %p434 = pneg %p80
        %p435 = pneg %p104
        %p436 = pneg %p101
        %p437 = pneg %p125
        %p438 = pneg %p122
        %p439 = pneg %p146
        %p440 = pneg %p143
        %p441 = pneg %p167
        %p442 = pneg %p164
        %p443 = pneg %p188
        %p444 = pneg %p185
        %p445 = pneg %p209
        %p446 = pneg %p206
        %p447 = pneg %p230
        %p448 = pneg %p227
        %p449 = pneg %p251
        %p450 = pneg %p248
        %p451 = pneg %p272
        %p452 = pneg %p269
        %p453 = pneg %p293
        %p454 = pneg %p290
        %p455 = pneg %p319
        %p456 = pneg %p316
        %s457 = sand.u32 %s306, 1
        %s458 = scalar_lea.sflag [#allocation8], %s457
        %s459 = sand.u32 %s306, 1
        %s460 = smul.addr %s459, 64
        %s461 = scalar_lea.vmem [#allocation11], %s460
        %s462 = smul.u32 2, %s41
        %s463 = smul.u32 2, %s41
        %v464 = vld [vmem:[%s415 + $0x60] sm:$0xff]
        %v465 = vld [vmem:[%s415 + $0x68] sm:$0xff]
        %v466 = vld [vmem:[%s415 + $0x70] sm:$0xff]
        %v467 = vld [vmem:[%s415 + $0x78] sm:$0xff]
        %468 = vrot.lane.b32.xlu0 %v464, 17
        %v469 = vpop.permute.xlu0 %468
        %470 = vrot.lane.b32.xlu0 %v466, 17
        %v471 = vpop.permute.xlu0 %470
        %472 = vrot.lane.b32.xlu0 %v465, 17
        %v473 = vpop.permute.xlu0 %472
        %474 = vrot.lane.b32.xlu0 %v467, 17
        %v475 = vpop.permute.xlu0 %474
        %v476 = vlaneseq
        %v477 = vand.u32 %v476, 127
        %vm478 = vcmp.lt.s32.totalorder %v477, 17
        %v479 = vsel %vm478, %v469, %v473
        %v480 = vsel %vm478, %v471, %v475
        %v481 = vsel %vm478, %v473, %v469
        %v482 = vsel %vm478, %v475, %v471
        %v483 = vld [vmem:[%s11] ss:$8 sm:$0x3]
        %v485 = vperm.slane %v483, 0
        %v486 = vperm.slane %v483, 1
        %v489 = vmul.f32 %v481, %v485
        %v490 = vmul.f32 %v479, %v486
        %v491 = vmul.f32 %v482, %v485
        %v492 = vmul.f32 %v480, %v486
        %493 = vst [vmem:[#allocation2] sm:$0xff] %v489
        %494 = vst [vmem:[#allocation2 + $0x8] sm:$0xff] %v490
        %495 = vst [vmem:[#allocation2 + $0x10] sm:$0xff] %v491
        %496 = vst [vmem:[#allocation2 + $0x18] sm:$0xff] %v492
        %v497 = vld [vmem:[%s415 + $0x40] sm:$0xff]
        %v498 = vld [vmem:[%s415 + $0x48] sm:$0xff]
        %v499 = vld [vmem:[%s415 + $0x50] sm:$0xff]
        %v500 = vld [vmem:[%s415 + $0x58] sm:$0xff]
        %501 = vrot.lane.b32.xlu0 %v497, 16
        %v502 = vpop.permute.xlu0 %501
        %503 = vrot.lane.b32.xlu0 %v499, 16
        %v504 = vpop.permute.xlu0 %503
        %505 = vrot.lane.b32.xlu0 %v498, 16
        %v506 = vpop.permute.xlu0 %505
        %507 = vrot.lane.b32.xlu0 %v500, 16
        %v508 = vpop.permute.xlu0 %507
        %vm509 = vcmp.lt.s32.totalorder %v477, 16
        %v510 = vsel %vm509, %v502, %v506
        %v511 = vsel %vm509, %v504, %v508
        %v512 = vsel %vm509, %v506, %v502
        %v513 = vsel %vm509, %v508, %v504
        %s514 = scalar_lea.vmem %s11, 1
        %v515 = vld [vmem:[%s514] ss:$8 sm:$0x3]
        %v517 = vperm.slane %v515, 0
        %v518 = vperm.slane %v515, 1
        %v521 = vmul.f32 %v512, %v517
        %v522 = vmul.f32 %v510, %v518
        %v523 = vmul.f32 %v513, %v517
        %v524 = vmul.f32 %v511, %v518
        %525 = vst [vmem:[#allocation2 + $0x20] sm:$0xff] %v521
        %526 = vst [vmem:[#allocation2 + $0x28] sm:$0xff] %v522
        %527 = vst [vmem:[#allocation2 + $0x30] sm:$0xff] %v523
        %528 = vst [vmem:[#allocation2 + $0x38] sm:$0xff] %v524
        %v529 = vld [vmem:[%s415 + $0x60] sm:$0xff]
        %v530 = vld [vmem:[%s415 + $0x68] sm:$0xff]
        %v531 = vld [vmem:[%s415 + $0x70] sm:$0xff]
        %v532 = vld [vmem:[%s415 + $0x78] sm:$0xff]
        %533 = vrot.lane.b32.xlu0 %v529, 16
        %v534 = vpop.permute.xlu0 %533
        %535 = vrot.lane.b32.xlu0 %v531, 16
        %v536 = vpop.permute.xlu0 %535
        %537 = vrot.lane.b32.xlu0 %v530, 16
        %v538 = vpop.permute.xlu0 %537
        %539 = vrot.lane.b32.xlu0 %v532, 16
        %v540 = vpop.permute.xlu0 %539
        %v541 = vsel %vm509, %v534, %v538
        %v542 = vsel %vm509, %v536, %v540
        %v543 = vsel %vm509, %v538, %v534
        %v544 = vsel %vm509, %v540, %v536
        %s545 = scalar_lea.vmem %s11, 2
        %v546 = vld [vmem:[%s545] ss:$8 sm:$0x3]
        %v548 = vperm.slane %v546, 0
        %v549 = vperm.slane %v546, 1
        %v552 = vmul.f32 %v543, %v548
        %v553 = vmul.f32 %v541, %v549
        %v554 = vmul.f32 %v544, %v548
        %v555 = vmul.f32 %v542, %v549
        %556 = vst [vmem:[#allocation2 + $0x40] sm:$0xff] %v552
        %557 = vst [vmem:[#allocation2 + $0x48] sm:$0xff] %v553
        %558 = vst [vmem:[#allocation2 + $0x50] sm:$0xff] %v554
        %559 = vst [vmem:[#allocation2 + $0x58] sm:$0xff] %v555
        %v560 = vld [vmem:[%s415 + $0x20] sm:$0xff]
        %v561 = vld [vmem:[%s415 + $0x28] sm:$0xff]
        %v562 = vld [vmem:[%s415 + $0x30] sm:$0xff]
        %v563 = vld [vmem:[%s415 + $0x38] sm:$0xff]
        %564 = vrot.lane.b32.xlu0 %v560, 1
        %v565 = vpop.permute.xlu0 %564
        %566 = vrot.lane.b32.xlu0 %v562, 1
        %v567 = vpop.permute.xlu0 %566
        %568 = vrot.lane.b32.xlu0 %v561, 1
        %v569 = vpop.permute.xlu0 %568
        %570 = vrot.lane.b32.xlu0 %v563, 1
        %v571 = vpop.permute.xlu0 %570
        %vm572 = vcmp.lt.s32.totalorder %v477, 1
        %v573 = vsel %vm572, %v565, %v569
        %v574 = vsel %vm572, %v567, %v571
        %v575 = vsel %vm572, %v569, %v565
        %v576 = vsel %vm572, %v571, %v567
        %s577 = scalar_lea.vmem %s11, 3
        %v578 = vld [vmem:[%s577] ss:$8 sm:$0x3]
        %v580 = vperm.slane %v578, 0
        %v581 = vperm.slane %v578, 1
        %v584 = vmul.f32 %v575, %v580
        %v585 = vmul.f32 %v573, %v581
        %v586 = vmul.f32 %v576, %v580
        %v587 = vmul.f32 %v574, %v581
        %588 = vst [vmem:[#allocation2 + $0x60] sm:$0xff] %v584
        %589 = vst [vmem:[#allocation2 + $0x68] sm:$0xff] %v585
        %590 = vst [vmem:[#allocation2 + $0x70] sm:$0xff] %v586
        %591 = vst [vmem:[#allocation2 + $0x78] sm:$0xff] %v587
        %v592 = vld [vmem:[%s415] sm:$0xff]
        %v593 = vld [vmem:[%s415 + $0x8] sm:$0xff]
        %v594 = vld [vmem:[%s415 + $0x10] sm:$0xff]
        %v595 = vld [vmem:[%s415 + $0x18] sm:$0xff]
        %s596 = scalar_lea.vmem %s11, 4
        %v597 = vld [vmem:[%s596] ss:$8 sm:$0x3]
        %v599 = vperm.slane %v597, 0
        %v600 = vperm.slane %v597, 1
        %v603 = vmul.f32 %v592, %v599
        %v604 = vmul.f32 %v593, %v600
        %v605 = vmul.f32 %v594, %v599
        %v606 = vmul.f32 %v595, %v600
        %607 = vst [vmem:[#allocation2 + $0x80] sm:$0xff] %v603
        %608 = vst [vmem:[#allocation2 + $0x88] sm:$0xff] %v604
        %609 = vst [vmem:[#allocation2 + $0x90] sm:$0xff] %v605
        %610 = vst [vmem:[#allocation2 + $0x98] sm:$0xff] %v606
        %v611 = vld [vmem:[%s415 + $0x20] sm:$0xff]
        %v612 = vld [vmem:[%s415 + $0x28] sm:$0xff]
        %v613 = vld [vmem:[%s415 + $0x30] sm:$0xff]
        %v614 = vld [vmem:[%s415 + $0x38] sm:$0xff]
        %s615 = scalar_lea.vmem %s11, 5
        %v616 = vld [vmem:[%s615] ss:$8 sm:$0x3]
        %v618 = vperm.slane %v616, 0
        %v619 = vperm.slane %v616, 1
        %v622 = vmul.f32 %v611, %v618
        %v623 = vmul.f32 %v612, %v619
        %v624 = vmul.f32 %v613, %v618
        %v625 = vmul.f32 %v614, %v619
        %626 = vst [vmem:[#allocation2 + $0xa0] sm:$0xff] %v622
        %627 = vst [vmem:[#allocation2 + $0xa8] sm:$0xff] %v623
        %628 = vst [vmem:[#allocation2 + $0xb0] sm:$0xff] %v624
        %629 = vst [vmem:[#allocation2 + $0xb8] sm:$0xff] %v625
        %v630 = vld [vmem:[%s415 + $0x60] sm:$0xff]
        %v631 = vld [vmem:[%s415 + $0x68] sm:$0xff]
        %v632 = vld [vmem:[%s415 + $0x70] sm:$0xff]
        %v633 = vld [vmem:[%s415 + $0x78] sm:$0xff]
        %634 = vrot.lane.b32.xlu0 %v630, 1
        %v635 = vpop.permute.xlu0 %634
        %636 = vrot.lane.b32.xlu0 %v632, 1
        %v637 = vpop.permute.xlu0 %636
        %638 = vrot.lane.b32.xlu0 %v631, 1
        %v639 = vpop.permute.xlu0 %638
        %640 = vrot.lane.b32.xlu0 %v633, 1
        %v641 = vpop.permute.xlu0 %640
        %v642 = vsel %vm572, %v635, %v639
        %v643 = vsel %vm572, %v637, %v641
        %v644 = vsel %vm572, %v639, %v635
        %v645 = vsel %vm572, %v641, %v637
        %s646 = scalar_lea.vmem %s11, 6
        %v647 = vld [vmem:[%s646] ss:$8 sm:$0x3]
        %v649 = vperm.slane %v647, 0
        %v650 = vperm.slane %v647, 1
        %v653 = vmul.f32 %v644, %v649
        %v654 = vmul.f32 %v642, %v650
        %v655 = vmul.f32 %v645, %v649
        %v656 = vmul.f32 %v643, %v650
        %657 = vst [vmem:[#allocation2 + $0xc0] sm:$0xff] %v653
        %658 = vst [vmem:[#allocation2 + $0xc8] sm:$0xff] %v654
        %659 = vst [vmem:[#allocation2 + $0xd0] sm:$0xff] %v655
        %660 = vst [vmem:[#allocation2 + $0xd8] sm:$0xff] %v656
        %v661 = vld [vmem:[%s415 + $0x40] sm:$0xff]
        %v662 = vld [vmem:[%s415 + $0x48] sm:$0xff]
        %v663 = vld [vmem:[%s415 + $0x50] sm:$0xff]
        %v664 = vld [vmem:[%s415 + $0x58] sm:$0xff]
        %s665 = scalar_lea.vmem %s11, 7
        %v666 = vld [vmem:[%s665] ss:$8 sm:$0x3]
        %v668 = vperm.slane %v666, 0
        %v669 = vperm.slane %v666, 1
        %v672 = vmul.f32 %v661, %v668
        %v673 = vmul.f32 %v662, %v669
        %v674 = vmul.f32 %v663, %v668
        %v675 = vmul.f32 %v664, %v669
        %676 = vst [vmem:[#allocation2 + $0xe0] sm:$0xff] %v672
        %677 = vst [vmem:[#allocation2 + $0xe8] sm:$0xff] %v673
        %678 = vst [vmem:[#allocation2 + $0xf0] sm:$0xff] %v674
        %679 = vst [vmem:[#allocation2 + $0xf8] sm:$0xff] %v675
        %v680 = vld [vmem:[%s415 + $0x60] sm:$0xff]
        %v681 = vld [vmem:[%s415 + $0x68] sm:$0xff]
        %v682 = vld [vmem:[%s415 + $0x70] sm:$0xff]
        %v683 = vld [vmem:[%s415 + $0x78] sm:$0xff]
        %s684 = scalar_lea.vmem %s11, 16
        %v685 = vld [vmem:[%s684] ss:$8 sm:$0x3]
        %v687 = vperm.slane %v685, 0
        %v688 = vperm.slane %v685, 1
        %v691 = vmul.f32 %v680, %v687
        %v692 = vmul.f32 %v681, %v688
        %v693 = vmul.f32 %v682, %v687
        %v694 = vmul.f32 %v683, %v688
        %695 = vst [vmem:[#allocation2 + $0x100] sm:$0xff] %v691
        %696 = vst [vmem:[#allocation2 + $0x108] sm:$0xff] %v692
        %697 = vst [vmem:[#allocation2 + $0x110] sm:$0xff] %v693
        %698 = vst [vmem:[#allocation2 + $0x118] sm:$0xff] %v694
        %v699 = vld [vmem:[%s3] sm:$0xff]
        %v700 = vld [vmem:[%s3 + $0x8] sm:$0xff]
        %v701 = vld [vmem:[%s3 + $0x10] sm:$0xff]
        %v702 = vld [vmem:[%s3 + $0x18] sm:$0xff]
        %v703 = vld [vmem:[%s3 + $0x20] sm:$0xff]
        %v704 = vld [vmem:[%s3 + $0x28] sm:$0xff]
        %v705 = vld [vmem:[%s3 + $0x30] sm:$0xff]
        %v706 = vld [vmem:[%s3 + $0x38] sm:$0xff]
        %v707 = vld [vmem:[#allocation2] sm:$0xff]
        %v708 = vld [vmem:[#allocation2 + $0x8] sm:$0xff]
        %v709 = vld [vmem:[#allocation2 + $0x10] sm:$0xff]
        %v710 = vld [vmem:[#allocation2 + $0x18] sm:$0xff]
        %v711 = vld [vmem:[#allocation2 + $0x20] sm:$0xff]
        %v712 = vld [vmem:[#allocation2 + $0x28] sm:$0xff]
        %v713 = vld [vmem:[#allocation2 + $0x30] sm:$0xff]
        %v714 = vld [vmem:[#allocation2 + $0x38] sm:$0xff]
        %v715 = vld [vmem:[#allocation2 + $0x40] sm:$0xff]
        %v716 = vld [vmem:[#allocation2 + $0x48] sm:$0xff]
        %v717 = vld [vmem:[#allocation2 + $0x50] sm:$0xff]
        %v718 = vld [vmem:[#allocation2 + $0x58] sm:$0xff]
        %v719 = vld [vmem:[#allocation2 + $0x60] sm:$0xff]
        %v720 = vld [vmem:[#allocation2 + $0x68] sm:$0xff]
        %v721 = vld [vmem:[#allocation2 + $0x70] sm:$0xff]
        %v722 = vld [vmem:[#allocation2 + $0x78] sm:$0xff]
        %v723 = vld [vmem:[#allocation2 + $0x80] sm:$0xff]
        %v724 = vld [vmem:[#allocation2 + $0x88] sm:$0xff]
        %v725 = vld [vmem:[#allocation2 + $0x90] sm:$0xff]
        %v726 = vld [vmem:[#allocation2 + $0x98] sm:$0xff]
        %v727 = vld [vmem:[#allocation2 + $0xa0] sm:$0xff]
        %v728 = vld [vmem:[#allocation2 + $0xa8] sm:$0xff]
        %v729 = vld [vmem:[#allocation2 + $0xb0] sm:$0xff]
        %v730 = vld [vmem:[#allocation2 + $0xb8] sm:$0xff]
        %v731 = vld [vmem:[#allocation2 + $0xc0] sm:$0xff]
        %v732 = vld [vmem:[#allocation2 + $0xc8] sm:$0xff]
        %v733 = vld [vmem:[#allocation2 + $0xd0] sm:$0xff]
        %v734 = vld [vmem:[#allocation2 + $0xd8] sm:$0xff]
        %v735 = vld [vmem:[#allocation2 + $0xe0] sm:$0xff]
        %v736 = vld [vmem:[#allocation2 + $0xe8] sm:$0xff]
        %v737 = vld [vmem:[#allocation2 + $0xf0] sm:$0xff]
        %v738 = vld [vmem:[#allocation2 + $0xf8] sm:$0xff]
        %v739 = vld [vmem:[#allocation2 + $0x100] sm:$0xff]
        %v740 = vld [vmem:[#allocation2 + $0x108] sm:$0xff]
        %v741 = vld [vmem:[#allocation2 + $0x110] sm:$0xff]
        %v742 = vld [vmem:[#allocation2 + $0x118] sm:$0xff]
        %v743 = vld [vmem:[%s4] sm:$0xff]
        %v744 = vld [vmem:[%s4 + $0x8] sm:$0xff]
        %v745 = vld [vmem:[%s4 + $0x10] sm:$0xff]
        %v746 = vld [vmem:[%s4 + $0x18] sm:$0xff]
        %748 = vset.pattern.permute.xlu0 0
        %749 = vperm.xlu0 %748, %v743
        %v750 = vpop.permute.xlu0 %749
        %753 = vset.pattern.permute.xlu0 0
        %754 = vperm.xlu0 %753, %v744
        %v755 = vpop.permute.xlu0 %754
        %758 = vset.pattern.permute.xlu0 0
        %759 = vperm.xlu0 %758, %v745
        %v760 = vpop.permute.xlu0 %759
        %763 = vset.pattern.permute.xlu0 0
        %764 = vperm.xlu0 %763, %v746
        %v765 = vpop.permute.xlu0 %764
        %vm767 = vcmask 130048
        %v769 = vsel %vm767, %v700, 0
        %v772 = vsel %vm767, %v702, 0
        %v775 = vsel %vm767, %v704, 0
        %v778 = vsel %vm767, %v706, 0
        %780 = vmatpush.msra.mxu0 %v737
        %781 = vmatpush.msra.mxu0 %v735
        %782 = vmatpush.msra.mxu0 %v733
        %783 = vmatpush.msra.mxu0 %v731
        %784 = vmatpush.msra.mxu0 %v729
        %785 = vmatpush.msra.mxu0 %v727
        %786 = vmatpush.msra.mxu0 %v725
        %787 = vmatpush.msra.mxu0 %v723
        %788 = vmatpush.msra.mxu0 %v721
        %789 = vmatpush.msra.mxu0 %v719
        %790 = vmatpush.msra.mxu0 %v717
        %791 = vmatpush.msra.mxu0 %v715
        %792 = vmatpush.msra.mxu0 %v713
        %793 = vmatpush.msra.mxu0 %v711
        %794 = vmatpush.msra.mxu0 %v709
        %795 = vmatpush.msra.mxu0 %v707
        %796 = vmatmul.f32.gmra.mxu0 %v699
        %v797 = vpop.f32.mrf.mxu0
        %v798 = vadd.f32 %v750, %v797
        %799 = vmatmul.f32.gmra.mxu0 %v701
        %v800 = vpop.f32.mrf.mxu0
        %v801 = vadd.f32 %v755, %v800
        %802 = vmatmul.f32.gmra.mxu0 %v703
        %v803 = vpop.f32.mrf.mxu0
        %v804 = vadd.f32 %v760, %v803
        %805 = vmatmul.f32.gmra.mxu0 %v705
        %v806 = vpop.f32.mrf.mxu0
        %v807 = vadd.f32 %v765, %v806
        %808 = vdwg.mxu0
        %809 = vmatpush.msra.mxu0 0.0
        %810 = vmatpush.msra.mxu0 0.0
        %811 = vmatpush.msra.mxu0 0.0
        %812 = vmatpush.msra.mxu0 0.0
        %813 = vmatpush.msra.mxu0 0.0
        %814 = vmatpush.msra.mxu0 0.0
        %815 = vmatpush.msra.mxu0 0.0
        %816 = vmatpush.msra.mxu0 0.0
        %817 = vmatpush.msra.mxu0 0.0
        %818 = vmatpush.msra.mxu0 0.0
        %819 = vmatpush.msra.mxu0 0.0
        %820 = vmatpush.msra.mxu0 0.0
        %821 = vmatpush.msra.mxu0 0.0
        %822 = vmatpush.msra.mxu0 0.0
        %823 = vmatpush.msra.mxu0 %v741
        %824 = vmatpush.msra.mxu0 %v739
        %825 = vmatmul.f32.gmra.mxu0 %v769
        %v826 = vpop.f32.mrf.mxu0
        %v827 = vadd.f32 %v798, %v826
        %828 = vmatmul.f32.gmra.mxu0 %v772
        %v829 = vpop.f32.mrf.mxu0
        %v830 = vadd.f32 %v801, %v829
        %831 = vmatmul.f32.gmra.mxu0 %v775
        %v832 = vpop.f32.mrf.mxu0
        %v833 = vadd.f32 %v804, %v832
        %834 = vmatmul.f32.gmra.mxu0 %v778
        %v835 = vpop.f32.mrf.mxu0
        %v836 = vadd.f32 %v807, %v835
        %837 = vdwg.mxu0
        %838 = vmatpush.msra.mxu0 %v738
        %839 = vmatpush.msra.mxu0 %v736
        %840 = vmatpush.msra.mxu0 %v734
        %841 = vmatpush.msra.mxu0 %v732
        %842 = vmatpush.msra.mxu0 %v730
        %843 = vmatpush.msra.mxu0 %v728
        %844 = vmatpush.msra.mxu0 %v726
        %845 = vmatpush.msra.mxu0 %v724
        %846 = vmatpush.msra.mxu0 %v722
        %847 = vmatpush.msra.mxu0 %v720
        %848 = vmatpush.msra.mxu0 %v718
        %849 = vmatpush.msra.mxu0 %v716
        %850 = vmatpush.msra.mxu0 %v714
        %851 = vmatpush.msra.mxu0 %v712
        %852 = vmatpush.msra.mxu0 %v710
        %853 = vmatpush.msra.mxu0 %v708
        %854 = vmatmul.f32.gmra.mxu0 %v699
        %v855 = vpop.f32.mrf.mxu0
        %v856 = vadd.f32 %v750, %v855
        %857 = vmatmul.f32.gmra.mxu0 %v701
        %v858 = vpop.f32.mrf.mxu0
        %v859 = vadd.f32 %v755, %v858
        %860 = vmatmul.f32.gmra.mxu0 %v703
        %v861 = vpop.f32.mrf.mxu0
        %v862 = vadd.f32 %v760, %v861
        %863 = vmatmul.f32.gmra.mxu0 %v705
        %v864 = vpop.f32.mrf.mxu0
        %v865 = vadd.f32 %v765, %v864
        %866 = vdwg.mxu0
        %867 = vmatpush.msra.mxu0 0.0
        %868 = vmatpush.msra.mxu0 0.0
        %869 = vmatpush.msra.mxu0 0.0
        %870 = vmatpush.msra.mxu0 0.0
        %871 = vmatpush.msra.mxu0 0.0
        %872 = vmatpush.msra.mxu0 0.0
        %873 = vmatpush.msra.mxu0 0.0
        %874 = vmatpush.msra.mxu0 0.0
        %875 = vmatpush.msra.mxu0 0.0
        %876 = vmatpush.msra.mxu0 0.0
        %877 = vmatpush.msra.mxu0 0.0
        %878 = vmatpush.msra.mxu0 0.0
        %879 = vmatpush.msra.mxu0 0.0
        %880 = vmatpush.msra.mxu0 0.0
        %881 = vmatpush.msra.mxu0 %v742
        %882 = vmatpush.msra.mxu0 %v740
        %883 = vmatmul.f32.gmra.mxu0 %v769
        %v884 = vpop.f32.mrf.mxu0
        %v885 = vadd.f32 %v856, %v884
        %886 = vmatmul.f32.gmra.mxu0 %v772
        %v887 = vpop.f32.mrf.mxu0
        %v888 = vadd.f32 %v859, %v887
        %889 = vmatmul.f32.gmra.mxu0 %v775
        %v890 = vpop.f32.mrf.mxu0
        %v891 = vadd.f32 %v862, %v890
        %892 = vmatmul.f32.gmra.mxu0 %v778
        %v893 = vpop.f32.mrf.mxu0
        %v894 = vadd.f32 %v865, %v893
        %895 = vdwg.mxu0
        %v896 = vmax.f32 %v827, 0.0
        %v897 = vmax.f32 %v885, 0.0
        %v898 = vmax.f32 %v830, 0.0
        %v899 = vmax.f32 %v888, 0.0
        %v900 = vmax.f32 %v833, 0.0
        %v901 = vmax.f32 %v891, 0.0
        %v902 = vmax.f32 %v836, 0.0
        %v903 = vmax.f32 %v894, 0.0
        %904 = vrot.lane.b32.xlu0 %v896, 17
        %v905 = vpop.permute.xlu0 %904
        %906 = vrot.lane.b32.xlu0 %v898, 17
        %v907 = vpop.permute.xlu0 %906
        %908 = vrot.lane.b32.xlu0 %v900, 17
        %v909 = vpop.permute.xlu0 %908
        %910 = vrot.lane.b32.xlu0 %v902, 17
        %v911 = vpop.permute.xlu0 %910
        %912 = vrot.lane.b32.xlu0 %v897, 17
        %v913 = vpop.permute.xlu0 %912
        %914 = vrot.lane.b32.xlu0 %v899, 17
        %v915 = vpop.permute.xlu0 %914
        %916 = vrot.lane.b32.xlu0 %v901, 17
        %v917 = vpop.permute.xlu0 %916
        %918 = vrot.lane.b32.xlu0 %v903, 17
        %v919 = vpop.permute.xlu0 %918
        %v920 = vsel %vm478, %v905, %v913
        %v921 = vsel %vm478, %v907, %v915
        %v922 = vsel %vm478, %v909, %v917
        %v923 = vsel %vm478, %v911, %v919
        %v924 = vsel %vm478, %v913, %v905
        %v925 = vsel %vm478, %v915, %v907
        %v926 = vsel %vm478, %v917, %v909
        %v927 = vsel %vm478, %v919, %v911
        %v928 = vld [vmem:[%s12] ss:$8 sm:$0x3]
        %v930 = vperm.slane %v928, 0
        %v931 = vperm.slane %v928, 1
        %v934 = vmul.f32 %v924, %v930
        %v935 = vmul.f32 %v920, %v931
        %v936 = vmul.f32 %v925, %v930
        %v937 = vmul.f32 %v921, %v931
        %v938 = vmul.f32 %v926, %v930
        %v939 = vmul.f32 %v922, %v931
        %v940 = vmul.f32 %v927, %v930
        %v941 = vmul.f32 %v923, %v931
        %942 = vst [vmem:[#allocation2] sm:$0xff] %v934
        %943 = vst [vmem:[#allocation2 + $0x8] sm:$0xff] %v935
        %944 = vst [vmem:[#allocation2 + $0x10] sm:$0xff] %v936
        %945 = vst [vmem:[#allocation2 + $0x18] sm:$0xff] %v937
        %946 = vst [vmem:[#allocation2 + $0x20] sm:$0xff] %v938
        %947 = vst [vmem:[#allocation2 + $0x28] sm:$0xff] %v939
        %948 = vst [vmem:[#allocation2 + $0x30] sm:$0xff] %v940
        %949 = vst [vmem:[#allocation2 + $0x38] sm:$0xff] %v941
        %950 = vrot.lane.b32.xlu0 %v896, 16
        %v951 = vpop.permute.xlu0 %950
        %952 = vrot.lane.b32.xlu0 %v898, 16
        %v953 = vpop.permute.xlu0 %952
        %954 = vrot.lane.b32.xlu0 %v900, 16
        %v955 = vpop.permute.xlu0 %954
        %956 = vrot.lane.b32.xlu0 %v902, 16
        %v957 = vpop.permute.xlu0 %956
        %958 = vrot.lane.b32.xlu0 %v897, 16
        %v959 = vpop.permute.xlu0 %958
        %960 = vrot.lane.b32.xlu0 %v899, 16
        %v961 = vpop.permute.xlu0 %960
        %962 = vrot.lane.b32.xlu0 %v901, 16
        %v963 = vpop.permute.xlu0 %962
        %964 = vrot.lane.b32.xlu0 %v903, 16
        %v965 = vpop.permute.xlu0 %964
        %v966 = vsel %vm509, %v951, %v959
        %v967 = vsel %vm509, %v953, %v961
        %v968 = vsel %vm509, %v955, %v963
        %v969 = vsel %vm509, %v957, %v965
        %v970 = vsel %vm509, %v959, %v951
        %v971 = vsel %vm509, %v961, %v953
        %v972 = vsel %vm509, %v963, %v955
        %v973 = vsel %vm509, %v965, %v957
        %s974 = scalar_lea.vmem %s12, 1
        %v975 = vld [vmem:[%s974] ss:$8 sm:$0x3]
        %v977 = vperm.slane %v975, 0
        %v978 = vperm.slane %v975, 1
        %v981 = vmul.f32 %v970, %v977
        %v982 = vmul.f32 %v966, %v978
        %v983 = vmul.f32 %v971, %v977
        %v984 = vmul.f32 %v967, %v978
        %v985 = vmul.f32 %v972, %v977
        %v986 = vmul.f32 %v968, %v978
        %v987 = vmul.f32 %v973, %v977
        %v988 = vmul.f32 %v969, %v978
        %989 = vst [vmem:[#allocation2 + $0x40] sm:$0xff] %v981
        %990 = vst [vmem:[#allocation2 + $0x48] sm:$0xff] %v982
        %991 = vst [vmem:[#allocation2 + $0x50] sm:$0xff] %v983
        %992 = vst [vmem:[#allocation2 + $0x58] sm:$0xff] %v984
        %993 = vst [vmem:[#allocation2 + $0x60] sm:$0xff] %v985
        %994 = vst [vmem:[#allocation2 + $0x68] sm:$0xff] %v986
        %995 = vst [vmem:[#allocation2 + $0x70] sm:$0xff] %v987
        %996 = vst [vmem:[#allocation2 + $0x78] sm:$0xff] %v988
        %997 = vrot.lane.b32.xlu0 %v896, 15
        %v998 = vpop.permute.xlu0 %997
        %999 = vrot.lane.b32.xlu0 %v898, 15
        %v1000 = vpop.permute.xlu0 %999
        %1001 = vrot.lane.b32.xlu0 %v900, 15
        %v1002 = vpop.permute.xlu0 %1001
        %1003 = vrot.lane.b32.xlu0 %v902, 15
        %v1004 = vpop.permute.xlu0 %1003
        %1005 = vrot.lane.b32.xlu0 %v897, 15
        %v1006 = vpop.permute.xlu0 %1005
        %1007 = vrot.lane.b32.xlu0 %v899, 15
        %v1008 = vpop.permute.xlu0 %1007
        %1009 = vrot.lane.b32.xlu0 %v901, 15
        %v1010 = vpop.permute.xlu0 %1009
        %1011 = vrot.lane.b32.xlu0 %v903, 15
        %v1012 = vpop.permute.xlu0 %1011
        %vm1013 = vcmp.lt.s32.totalorder %v477, 15
        %v1014 = vsel %vm1013, %v998, %v1006
        %v1015 = vsel %vm1013, %v1000, %v1008
        %v1016 = vsel %vm1013, %v1002, %v1010
        %v1017 = vsel %vm1013, %v1004, %v1012
        %v1018 = vsel %vm1013, %v1006, %v998
        %v1019 = vsel %vm1013, %v1008, %v1000
        %v1020 = vsel %vm1013, %v1010, %v1002
        %v1021 = vsel %vm1013, %v1012, %v1004
        %s1022 = scalar_lea.vmem %s12, 2
        %v1023 = vld [vmem:[%s1022] ss:$8 sm:$0x3]
        %v1025 = vperm.slane %v1023, 0
        %v1026 = vperm.slane %v1023, 1
        %v1029 = vmul.f32 %v1018, %v1025
        %v1030 = vmul.f32 %v1014, %v1026
        %v1031 = vmul.f32 %v1019, %v1025
        %v1032 = vmul.f32 %v1015, %v1026
        %v1033 = vmul.f32 %v1020, %v1025
        %v1034 = vmul.f32 %v1016, %v1026
        %v1035 = vmul.f32 %v1021, %v1025
        %v1036 = vmul.f32 %v1017, %v1026
        %1037 = vst [vmem:[#allocation2 + $0x80] sm:$0xff] %v1029
        %1038 = vst [vmem:[#allocation2 + $0x88] sm:$0xff] %v1030
        %1039 = vst [vmem:[#allocation2 + $0x90] sm:$0xff] %v1031
        %1040 = vst [vmem:[#allocation2 + $0x98] sm:$0xff] %v1032
        %1041 = vst [vmem:[#allocation2 + $0xa0] sm:$0xff] %v1033
        %1042 = vst [vmem:[#allocation2 + $0xa8] sm:$0xff] %v1034
        %1043 = vst [vmem:[#allocation2 + $0xb0] sm:$0xff] %v1035
        %1044 = vst [vmem:[#allocation2 + $0xb8] sm:$0xff] %v1036
        %1045 = vrot.lane.b32.xlu0 %v896, 1
        %v1046 = vpop.permute.xlu0 %1045
        %1047 = vrot.lane.b32.xlu0 %v898, 1
        %v1048 = vpop.permute.xlu0 %1047
        %1049 = vrot.lane.b32.xlu0 %v900, 1
        %v1050 = vpop.permute.xlu0 %1049
        %1051 = vrot.lane.b32.xlu0 %v902, 1
        %v1052 = vpop.permute.xlu0 %1051
        %1053 = vrot.lane.b32.xlu0 %v897, 1
        %v1054 = vpop.permute.xlu0 %1053
        %1055 = vrot.lane.b32.xlu0 %v899, 1
        %v1056 = vpop.permute.xlu0 %1055
        %1057 = vrot.lane.b32.xlu0 %v901, 1
        %v1058 = vpop.permute.xlu0 %1057
        %1059 = vrot.lane.b32.xlu0 %v903, 1
        %v1060 = vpop.permute.xlu0 %1059
        %v1061 = vsel %vm572, %v1046, %v1054
        %v1062 = vsel %vm572, %v1048, %v1056
        %v1063 = vsel %vm572, %v1050, %v1058
        %v1064 = vsel %vm572, %v1052, %v1060
        %v1065 = vsel %vm572, %v1054, %v1046
        %v1066 = vsel %vm572, %v1056, %v1048
        %v1067 = vsel %vm572, %v1058, %v1050
        %v1068 = vsel %vm572, %v1060, %v1052
        %s1069 = scalar_lea.vmem %s12, 3
        %v1070 = vld [vmem:[%s1069] ss:$8 sm:$0x3]
        %v1072 = vperm.slane %v1070, 0
        %v1073 = vperm.slane %v1070, 1
        %v1076 = vmul.f32 %v1065, %v1072
        %v1077 = vmul.f32 %v1061, %v1073
        %v1078 = vmul.f32 %v1066, %v1072
        %v1079 = vmul.f32 %v1062, %v1073
        %v1080 = vmul.f32 %v1067, %v1072
        %v1081 = vmul.f32 %v1063, %v1073
        %v1082 = vmul.f32 %v1068, %v1072
        %v1083 = vmul.f32 %v1064, %v1073
        %1084 = vst [vmem:[#allocation2 + $0xc0] sm:$0xff] %v1076
        %1085 = vst [vmem:[#allocation2 + $0xc8] sm:$0xff] %v1077
        %1086 = vst [vmem:[#allocation2 + $0xd0] sm:$0xff] %v1078
        %1087 = vst [vmem:[#allocation2 + $0xd8] sm:$0xff] %v1079
        %1088 = vst [vmem:[#allocation2 + $0xe0] sm:$0xff] %v1080
        %1089 = vst [vmem:[#allocation2 + $0xe8] sm:$0xff] %v1081
        %1090 = vst [vmem:[#allocation2 + $0xf0] sm:$0xff] %v1082
        %1091 = vst [vmem:[#allocation2 + $0xf8] sm:$0xff] %v1083
        %s1092 = scalar_lea.vmem %s12, 4
        %v1093 = vld [vmem:[%s1092] ss:$8 sm:$0x3]
        %v1095 = vperm.slane %v1093, 0
        %v1096 = vperm.slane %v1093, 1
        %v1099 = vmul.f32 %v896, %v1095
        %v1100 = vmul.f32 %v897, %v1096
        %v1101 = vmul.f32 %v898, %v1095
        %v1102 = vmul.f32 %v899, %v1096
        %v1103 = vmul.f32 %v900, %v1095
        %v1104 = vmul.f32 %v901, %v1096
        %v1105 = vmul.f32 %v902, %v1095
        %v1106 = vmul.f32 %v903, %v1096
        %1107 = vst [vmem:[#allocation2 + $0x100] sm:$0xff] %v1099
        %1108 = vst [vmem:[#allocation2 + $0x108] sm:$0xff] %v1100
        %1109 = vst [vmem:[#allocation2 + $0x110] sm:$0xff] %v1101
        %1110 = vst [vmem:[#allocation2 + $0x118] sm:$0xff] %v1102
        %1111 = vst [vmem:[#allocation2 + $0x120] sm:$0xff] %v1103
        %1112 = vst [vmem:[#allocation2 + $0x128] sm:$0xff] %v1104
        %1113 = vst [vmem:[#allocation2 + $0x130] sm:$0xff] %v1105
        %1114 = vst [vmem:[#allocation2 + $0x138] sm:$0xff] %v1106
        %1115 = vrot.lane.b32.xlu0 %v896, 127
        %v1116 = vpop.permute.xlu0 %1115
        %1117 = vrot.lane.b32.xlu0 %v898, 127
        %v1118 = vpop.permute.xlu0 %1117
        %1119 = vrot.lane.b32.xlu0 %v900, 127
        %v1120 = vpop.permute.xlu0 %1119
        %1121 = vrot.lane.b32.xlu0 %v902, 127
        %v1122 = vpop.permute.xlu0 %1121
        %1123 = vrot.lane.b32.xlu0 %v897, 127
        %v1124 = vpop.permute.xlu0 %1123
        %1125 = vrot.lane.b32.xlu0 %v899, 127
        %v1126 = vpop.permute.xlu0 %1125
        %1127 = vrot.lane.b32.xlu0 %v901, 127
        %v1128 = vpop.permute.xlu0 %1127
        %1129 = vrot.lane.b32.xlu0 %v903, 127
        %v1130 = vpop.permute.xlu0 %1129
        %vm1131 = vcmp.lt.s32.totalorder %v477, 127
        %v1132 = vsel %vm1131, %v1116, %v1124
        %v1133 = vsel %vm1131, %v1118, %v1126
        %v1134 = vsel %vm1131, %v1120, %v1128
        %v1135 = vsel %vm1131, %v1122, %v1130
        %v1136 = vsel %vm1131, %v1124, %v1116
        %v1137 = vsel %vm1131, %v1126, %v1118
        %v1138 = vsel %vm1131, %v1128, %v1120
        %v1139 = vsel %vm1131, %v1130, %v1122
        %s1140 = scalar_lea.vmem %s12, 5
        %v1141 = vld [vmem:[%s1140] ss:$8 sm:$0x3]
        %v1143 = vperm.slane %v1141, 0
        %v1144 = vperm.slane %v1141, 1
        %v1147 = vmul.f32 %v1132, %v1143
        %v1148 = vmul.f32 %v1136, %v1144
        %v1149 = vmul.f32 %v1133, %v1143
        %v1150 = vmul.f32 %v1137, %v1144
        %v1151 = vmul.f32 %v1134, %v1143
        %v1152 = vmul.f32 %v1138, %v1144
        %v1153 = vmul.f32 %v1135, %v1143
        %v1154 = vmul.f32 %v1139, %v1144
        %1155 = vst [vmem:[#allocation2 + $0x140] sm:$0xff] %v1147
        %1156 = vst [vmem:[#allocation2 + $0x148] sm:$0xff] %v1148
        %1157 = vst [vmem:[#allocation2 + $0x150] sm:$0xff] %v1149
        %1158 = vst [vmem:[#allocation2 + $0x158] sm:$0xff] %v1150
        %1159 = vst [vmem:[#allocation2 + $0x160] sm:$0xff] %v1151
        %1160 = vst [vmem:[#allocation2 + $0x168] sm:$0xff] %v1152
        %1161 = vst [vmem:[#allocation2 + $0x170] sm:$0xff] %v1153
        %1162 = vst [vmem:[#allocation2 + $0x178] sm:$0xff] %v1154
        %1163 = vrot.lane.b32.xlu0 %v896, 113
        %v1164 = vpop.permute.xlu0 %1163
        %1165 = vrot.lane.b32.xlu0 %v898, 113
        %v1166 = vpop.permute.xlu0 %1165
        %1167 = vrot.lane.b32.xlu0 %v900, 113
        %v1168 = vpop.permute.xlu0 %1167
        %1169 = vrot.lane.b32.xlu0 %v902, 113
        %v1170 = vpop.permute.xlu0 %1169
        %1171 = vrot.lane.b32.xlu0 %v897, 113
        %v1172 = vpop.permute.xlu0 %1171
        %1173 = vrot.lane.b32.xlu0 %v899, 113
        %v1174 = vpop.permute.xlu0 %1173
        %1175 = vrot.lane.b32.xlu0 %v901, 113
        %v1176 = vpop.permute.xlu0 %1175
        %1177 = vrot.lane.b32.xlu0 %v903, 113
        %v1178 = vpop.permute.xlu0 %1177
        %vm1179 = vcmp.lt.s32.totalorder %v477, 113
        %v1180 = vsel %vm1179, %v1164, %v1172
        %v1181 = vsel %vm1179, %v1166, %v1174
        %v1182 = vsel %vm1179, %v1168, %v1176
        %v1183 = vsel %vm1179, %v1170, %v1178
        %v1184 = vsel %vm1179, %v1172, %v1164
        %v1185 = vsel %vm1179, %v1174, %v1166
        %v1186 = vsel %vm1179, %v1176, %v1168
        %v1187 = vsel %vm1179, %v1178, %v1170
        %s1188 = scalar_lea.vmem %s12, 6
        %v1189 = vld [vmem:[%s1188] ss:$8 sm:$0x3]
        %v1191 = vperm.slane %v1189, 0
        %v1192 = vperm.slane %v1189, 1
        %v1195 = vmul.f32 %v1180, %v1191
        %v1196 = vmul.f32 %v1184, %v1192
        %v1197 = vmul.f32 %v1181, %v1191
        %v1198 = vmul.f32 %v1185, %v1192
        %v1199 = vmul.f32 %v1182, %v1191
        %v1200 = vmul.f32 %v1186, %v1192
        %v1201 = vmul.f32 %v1183, %v1191
        %v1202 = vmul.f32 %v1187, %v1192
        %1203 = vst [vmem:[#allocation2 + $0x180] sm:$0xff] %v1195
        %1204 = vst [vmem:[#allocation2 + $0x188] sm:$0xff] %v1196
        %1205 = vst [vmem:[#allocation2 + $0x190] sm:$0xff] %v1197
        %1206 = vst [vmem:[#allocation2 + $0x198] sm:$0xff] %v1198
        %1207 = vst [vmem:[#allocation2 + $0x1a0] sm:$0xff] %v1199
        %1208 = vst [vmem:[#allocation2 + $0x1a8] sm:$0xff] %v1200
        %1209 = vst [vmem:[#allocation2 + $0x1b0] sm:$0xff] %v1201
        %1210 = vst [vmem:[#allocation2 + $0x1b8] sm:$0xff] %v1202
        %1211 = vrot.lane.b32.xlu0 %v896, 112
        %v1212 = vpop.permute.xlu0 %1211
        %1213 = vrot.lane.b32.xlu0 %v898, 112
        %v1214 = vpop.permute.xlu0 %1213
        %1215 = vrot.lane.b32.xlu0 %v900, 112
        %v1216 = vpop.permute.xlu0 %1215
        %1217 = vrot.lane.b32.xlu0 %v902, 112
        %v1218 = vpop.permute.xlu0 %1217
        %1219 = vrot.lane.b32.xlu0 %v897, 112
        %v1220 = vpop.permute.xlu0 %1219
        %1221 = vrot.lane.b32.xlu0 %v899, 112
        %v1222 = vpop.permute.xlu0 %1221
        %1223 = vrot.lane.b32.xlu0 %v901, 112
        %v1224 = vpop.permute.xlu0 %1223
        %1225 = vrot.lane.b32.xlu0 %v903, 112
        %v1226 = vpop.permute.xlu0 %1225
        %vm1227 = vcmp.lt.s32.totalorder %v477, 112
        %v1228 = vsel %vm1227, %v1212, %v1220
        %v1229 = vsel %vm1227, %v1214, %v1222
        %v1230 = vsel %vm1227, %v1216, %v1224
        %v1231 = vsel %vm1227, %v1218, %v1226
        %v1232 = vsel %vm1227, %v1220, %v1212
        %v1233 = vsel %vm1227, %v1222, %v1214
        %v1234 = vsel %vm1227, %v1224, %v1216
        %v1235 = vsel %vm1227, %v1226, %v1218
        %s1236 = scalar_lea.vmem %s12, 7
        %v1237 = vld [vmem:[%s1236] ss:$8 sm:$0x3]
        %v1239 = vperm.slane %v1237, 0
        %v1240 = vperm.slane %v1237, 1
        %v1243 = vmul.f32 %v1228, %v1239
        %v1244 = vmul.f32 %v1232, %v1240
        %v1245 = vmul.f32 %v1229, %v1239
        %v1246 = vmul.f32 %v1233, %v1240
        %v1247 = vmul.f32 %v1230, %v1239
        %v1248 = vmul.f32 %v1234, %v1240
        %v1249 = vmul.f32 %v1231, %v1239
        %v1250 = vmul.f32 %v1235, %v1240
        %1251 = vst [vmem:[#allocation2 + $0x1c0] sm:$0xff] %v1243
        %1252 = vst [vmem:[#allocation2 + $0x1c8] sm:$0xff] %v1244
        %1253 = vst [vmem:[#allocation2 + $0x1d0] sm:$0xff] %v1245
        %1254 = vst [vmem:[#allocation2 + $0x1d8] sm:$0xff] %v1246
        %1255 = vst [vmem:[#allocation2 + $0x1e0] sm:$0xff] %v1247
        %1256 = vst [vmem:[#allocation2 + $0x1e8] sm:$0xff] %v1248
        %1257 = vst [vmem:[#allocation2 + $0x1f0] sm:$0xff] %v1249
        %1258 = vst [vmem:[#allocation2 + $0x1f8] sm:$0xff] %v1250
        %1259 = vrot.lane.b32.xlu0 %v896, 111
        %v1260 = vpop.permute.xlu0 %1259
        %1261 = vrot.lane.b32.xlu0 %v898, 111
        %v1262 = vpop.permute.xlu0 %1261
        %1263 = vrot.lane.b32.xlu0 %v900, 111
        %v1264 = vpop.permute.xlu0 %1263
        %1265 = vrot.lane.b32.xlu0 %v902, 111
        %v1266 = vpop.permute.xlu0 %1265
        %1267 = vrot.lane.b32.xlu0 %v897, 111
        %v1268 = vpop.permute.xlu0 %1267
        %1269 = vrot.lane.b32.xlu0 %v899, 111
        %v1270 = vpop.permute.xlu0 %1269
        %1271 = vrot.lane.b32.xlu0 %v901, 111
        %v1272 = vpop.permute.xlu0 %1271
        %1273 = vrot.lane.b32.xlu0 %v903, 111
        %v1274 = vpop.permute.xlu0 %1273
        %vm1275 = vcmp.lt.s32.totalorder %v477, 111
        %v1276 = vsel %vm1275, %v1260, %v1268
        %v1277 = vsel %vm1275, %v1262, %v1270
        %v1278 = vsel %vm1275, %v1264, %v1272
        %v1279 = vsel %vm1275, %v1266, %v1274
        %v1280 = vsel %vm1275, %v1268, %v1260
        %v1281 = vsel %vm1275, %v1270, %v1262
        %v1282 = vsel %vm1275, %v1272, %v1264
        %v1283 = vsel %vm1275, %v1274, %v1266
        %s1284 = scalar_lea.vmem %s12, 16
        %v1285 = vld [vmem:[%s1284] ss:$8 sm:$0x3]
        %v1287 = vperm.slane %v1285, 0
        %v1288 = vperm.slane %v1285, 1
        %v1291 = vmul.f32 %v1276, %v1287
        %v1292 = vmul.f32 %v1280, %v1288
        %v1293 = vmul.f32 %v1277, %v1287
        %v1294 = vmul.f32 %v1281, %v1288
        %v1295 = vmul.f32 %v1278, %v1287
        %v1296 = vmul.f32 %v1282, %v1288
        %v1297 = vmul.f32 %v1279, %v1287
        %v1298 = vmul.f32 %v1283, %v1288
        %1299 = vst [vmem:[#allocation2 + $0x200] sm:$0xff] %v1291
        %1300 = vst [vmem:[#allocation2 + $0x208] sm:$0xff] %v1292
        %1301 = vst [vmem:[#allocation2 + $0x210] sm:$0xff] %v1293
        %1302 = vst [vmem:[#allocation2 + $0x218] sm:$0xff] %v1294
        %1303 = vst [vmem:[#allocation2 + $0x220] sm:$0xff] %v1295
        %1304 = vst [vmem:[#allocation2 + $0x228] sm:$0xff] %v1296
        %1305 = vst [vmem:[#allocation2 + $0x230] sm:$0xff] %v1297
        %1306 = vst [vmem:[#allocation2 + $0x238] sm:$0xff] %v1298
        %v1307 = vld [vmem:[%s5] sm:$0xff]
        %v1308 = vld [vmem:[%s5 + $0x8] sm:$0xff]
        %v1309 = vld [vmem:[%s5 + $0x10] sm:$0xff]
        %v1310 = vld [vmem:[%s5 + $0x18] sm:$0xff]
        %v1311 = vld [vmem:[%s5 + $0x20] sm:$0xff]
        %v1312 = vld [vmem:[%s5 + $0x28] sm:$0xff]
        %v1313 = vld [vmem:[%s5 + $0x30] sm:$0xff]
        %v1314 = vld [vmem:[%s5 + $0x38] sm:$0xff]
        %v1315 = vld [vmem:[%s5 + $0x40] sm:$0xff]
        %v1316 = vld [vmem:[%s5 + $0x48] sm:$0xff]
        %v1317 = vld [vmem:[%s5 + $0x50] sm:$0xff]
        %v1318 = vld [vmem:[%s5 + $0x58] sm:$0xff]
        %v1319 = vld [vmem:[#allocation2] sm:$0xff]
        %v1320 = vld [vmem:[#allocation2 + $0x8] sm:$0xff]
        %v1321 = vld [vmem:[#allocation2 + $0x10] sm:$0xff]
        %v1322 = vld [vmem:[#allocation2 + $0x18] sm:$0xff]
        %v1323 = vld [vmem:[#allocation2 + $0x20] sm:$0xff]
        %v1324 = vld [vmem:[#allocation2 + $0x28] sm:$0xff]
        %v1325 = vld [vmem:[#allocation2 + $0x30] sm:$0xff]
        %v1326 = vld [vmem:[#allocation2 + $0x38] sm:$0xff]
        %v1327 = vld [vmem:[#allocation2 + $0x40] sm:$0xff]
        %v1328 = vld [vmem:[#allocation2 + $0x48] sm:$0xff]
        %v1329 = vld [vmem:[#allocation2 + $0x50] sm:$0xff]
        %v1330 = vld [vmem:[#allocation2 + $0x58] sm:$0xff]
        %v1331 = vld [vmem:[#allocation2 + $0x60] sm:$0xff]
        %v1332 = vld [vmem:[#allocation2 + $0x68] sm:$0xff]
        %v1333 = vld [vmem:[#allocation2 + $0x70] sm:$0xff]
        %v1334 = vld [vmem:[#allocation2 + $0x78] sm:$0xff]
        %v1335 = vld [vmem:[#allocation2 + $0x80] sm:$0xff]
        %v1336 = vld [vmem:[#allocation2 + $0x88] sm:$0xff]
        %v1337 = vld [vmem:[#allocation2 + $0x90] sm:$0xff]
        %v1338 = vld [vmem:[#allocation2 + $0x98] sm:$0xff]
        %v1339 = vld [vmem:[#allocation2 + $0xa0] sm:$0xff]
        %v1340 = vld [vmem:[#allocation2 + $0xa8] sm:$0xff]
        %v1341 = vld [vmem:[#allocation2 + $0xb0] sm:$0xff]
        %v1342 = vld [vmem:[#allocation2 + $0xb8] sm:$0xff]
        %v1343 = vld [vmem:[#allocation2 + $0xc0] sm:$0xff]
        %v1344 = vld [vmem:[#allocation2 + $0xc8] sm:$0xff]
        %v1345 = vld [vmem:[#allocation2 + $0xd0] sm:$0xff]
        %v1346 = vld [vmem:[#allocation2 + $0xd8] sm:$0xff]
        %v1347 = vld [vmem:[#allocation2 + $0xe0] sm:$0xff]
        %v1348 = vld [vmem:[#allocation2 + $0xe8] sm:$0xff]
        %v1349 = vld [vmem:[#allocation2 + $0xf0] sm:$0xff]
        %v1350 = vld [vmem:[#allocation2 + $0xf8] sm:$0xff]
        %v1351 = vld [vmem:[#allocation2 + $0x100] sm:$0xff]
        %v1352 = vld [vmem:[#allocation2 + $0x108] sm:$0xff]
        %v1353 = vld [vmem:[#allocation2 + $0x110] sm:$0xff]
        %v1354 = vld [vmem:[#allocation2 + $0x118] sm:$0xff]
        %v1355 = vld [vmem:[#allocation2 + $0x120] sm:$0xff]
        %v1356 = vld [vmem:[#allocation2 + $0x128] sm:$0xff]
        %v1357 = vld [vmem:[#allocation2 + $0x130] sm:$0xff]
        %v1358 = vld [vmem:[#allocation2 + $0x138] sm:$0xff]
        %v1359 = vld [vmem:[#allocation2 + $0x140] sm:$0xff]
        %v1360 = vld [vmem:[#allocation2 + $0x148] sm:$0xff]
        %v1361 = vld [vmem:[#allocation2 + $0x150] sm:$0xff]
        %v1362 = vld [vmem:[#allocation2 + $0x158] sm:$0xff]
        %v1363 = vld [vmem:[#allocation2 + $0x160] sm:$0xff]
        %v1364 = vld [vmem:[#allocation2 + $0x168] sm:$0xff]
        %v1365 = vld [vmem:[#allocation2 + $0x170] sm:$0xff]
        %v1366 = vld [vmem:[#allocation2 + $0x178] sm:$0xff]
        %v1367 = vld [vmem:[#allocation2 + $0x180] sm:$0xff]
        %v1368 = vld [vmem:[#allocation2 + $0x188] sm:$0xff]
        %v1369 = vld [vmem:[#allocation2 + $0x190] sm:$0xff]
        %v1370 = vld [vmem:[#allocation2 + $0x198] sm:$0xff]
        %v1371 = vld [vmem:[#allocation2 + $0x1a0] sm:$0xff]
        %v1372 = vld [vmem:[#allocation2 + $0x1a8] sm:$0xff]
        %v1373 = vld [vmem:[#allocation2 + $0x1b0] sm:$0xff]
        %v1374 = vld [vmem:[#allocation2 + $0x1b8] sm:$0xff]
        %v1375 = vld [vmem:[#allocation2 + $0x1c0] sm:$0xff]
        %v1376 = vld [vmem:[#allocation2 + $0x1c8] sm:$0xff]
        %v1377 = vld [vmem:[#allocation2 + $0x1d0] sm:$0xff]
        %v1378 = vld [vmem:[#allocation2 + $0x1d8] sm:$0xff]
        %v1379 = vld [vmem:[#allocation2 + $0x1e0] sm:$0xff]
        %v1380 = vld [vmem:[#allocation2 + $0x1e8] sm:$0xff]
        %v1381 = vld [vmem:[#allocation2 + $0x1f0] sm:$0xff]
        %v1382 = vld [vmem:[#allocation2 + $0x1f8] sm:$0xff]
        %v1383 = vld [vmem:[#allocation2 + $0x200] sm:$0xff]
        %v1384 = vld [vmem:[#allocation2 + $0x208] sm:$0xff]
        %v1385 = vld [vmem:[#allocation2 + $0x210] sm:$0xff]
        %v1386 = vld [vmem:[#allocation2 + $0x218] sm:$0xff]
        %v1387 = vld [vmem:[#allocation2 + $0x220] sm:$0xff]
        %v1388 = vld [vmem:[#allocation2 + $0x228] sm:$0xff]
        %v1389 = vld [vmem:[#allocation2 + $0x230] sm:$0xff]
        %v1390 = vld [vmem:[#allocation2 + $0x238] sm:$0xff]
        %v1391 = vld [vmem:[%s415] sm:$0xff]
        %v1392 = vld [vmem:[%s415 + $0x8] sm:$0xff]
        %v1393 = vld [vmem:[%s415 + $0x10] sm:$0xff]
        %v1394 = vld [vmem:[%s415 + $0x18] sm:$0xff]
        %v1395 = vld [vmem:[%s7] sm:$0xff]
        %v1396 = vld [vmem:[%s7 + $0x8] sm:$0xff]
        %v1397 = vld [vmem:[%s7 + $0x10] sm:$0xff]
        %v1398 = vld [vmem:[%s7 + $0x18] sm:$0xff]
        %v1399 = vld [vmem:[%s8] sm:$0xff]
        %v1400 = vld [vmem:[%s8 + $0x8] sm:$0xff]
        %v1401 = vld [vmem:[%s8 + $0x10] sm:$0xff]
        %v1402 = vld [vmem:[%s8 + $0x18] sm:$0xff]
        %1404 = vset.pattern.permute.xlu0 0
        %1405 = vperm.xlu0 %1404, %v1399
        %v1406 = vpop.permute.xlu0 %1405
        %1409 = vset.pattern.permute.xlu0 0
        %1410 = vperm.xlu0 %1409, %v1400
        %v1411 = vpop.permute.xlu0 %1410
        %1414 = vset.pattern.permute.xlu0 0
        %1415 = vperm.xlu0 %1414, %v1401
        %v1416 = vpop.permute.xlu0 %1415
        %1419 = vset.pattern.permute.xlu0 0
        %1420 = vperm.xlu0 %1419, %v1402
        %v1421 = vpop.permute.xlu0 %1420
        %v1424 = vsel %vm767, %v1395, 0
        %v1427 = vsel %vm767, %v1396, 0
        %v1430 = vsel %vm767, %v1397, 0
        %v1433 = vsel %vm767, %v1398, 0
        %1435 = vmatpush.msra.mxu0 0.0
        %1436 = vmatpush.msra.mxu0 0.0
        %1437 = vmatpush.msra.mxu0 0.0
        %1438 = vmatpush.msra.mxu0 0.0
        %1439 = vmatpush.msra.mxu0 0.0
        %1440 = vmatpush.msra.mxu0 0.0
        %1441 = vmatpush.msra.mxu0 0.0
        %1442 = vmatpush.msra.mxu0 0.0
        %1443 = vmatpush.msra.mxu0 0.0
        %1444 = vmatpush.msra.mxu0 0.0
        %1445 = vmatpush.msra.mxu0 0.0
        %1446 = vmatpush.msra.mxu0 0.0
        %1447 = vmatpush.msra.mxu0 0.0
        %1448 = vmatpush.msra.mxu0 0.0
        %1449 = vmatpush.msra.mxu0 %v1393
        %1450 = vmatpush.msra.mxu0 %v1391
        %1451 = vmatmul.f32.gmra.mxu0 %v1424
        %v1452 = vpop.f32.mrf.mxu0
        %v1453 = vadd.f32 %v1406, %v1452
        %1454 = vmatmul.f32.gmra.mxu0 %v1427
        %v1455 = vpop.f32.mrf.mxu0
        %v1456 = vadd.f32 %v1411, %v1455
        %1457 = vmatmul.f32.gmra.mxu0 %v1430
        %v1458 = vpop.f32.mrf.mxu0
        %v1459 = vadd.f32 %v1416, %v1458
        %1460 = vmatmul.f32.gmra.mxu0 %v1433
        %v1461 = vpop.f32.mrf.mxu0
        %v1462 = vadd.f32 %v1421, %v1461
        %1463 = vdwg.mxu0
        %1464 = vmatpush.msra.mxu0 0.0
        %1465 = vmatpush.msra.mxu0 0.0
        %1466 = vmatpush.msra.mxu0 0.0
        %1467 = vmatpush.msra.mxu0 0.0
        %1468 = vmatpush.msra.mxu0 0.0
        %1469 = vmatpush.msra.mxu0 0.0
        %1470 = vmatpush.msra.mxu0 0.0
        %1471 = vmatpush.msra.mxu0 0.0
        %1472 = vmatpush.msra.mxu0 0.0
        %1473 = vmatpush.msra.mxu0 0.0
        %1474 = vmatpush.msra.mxu0 0.0
        %1475 = vmatpush.msra.mxu0 0.0
        %1476 = vmatpush.msra.mxu0 0.0
        %1477 = vmatpush.msra.mxu0 0.0
        %1478 = vmatpush.msra.mxu0 %v1394
        %1479 = vmatpush.msra.mxu0 %v1392
        %1480 = vmatmul.f32.gmra.mxu0 %v1424
        %v1481 = vpop.f32.mrf.mxu0
        %v1482 = vadd.f32 %v1406, %v1481
        %1483 = vmatmul.f32.gmra.mxu0 %v1427
        %v1484 = vpop.f32.mrf.mxu0
        %v1485 = vadd.f32 %v1411, %v1484
        %1486 = vmatmul.f32.gmra.mxu0 %v1430
        %v1487 = vpop.f32.mrf.mxu0
        %v1488 = vadd.f32 %v1416, %v1487
        %1489 = vmatmul.f32.gmra.mxu0 %v1433
        %v1490 = vpop.f32.mrf.mxu0
        %v1491 = vadd.f32 %v1421, %v1490
        %1492 = vdwg.mxu0
        %v1493 = vld [vmem:[%s6] sm:$0xff]
        %v1494 = vld [vmem:[%s6 + $0x8] sm:$0xff]
        %v1495 = vld [vmem:[%s6 + $0x10] sm:$0xff]
        %v1496 = vld [vmem:[%s6 + $0x18] sm:$0xff]
        %1498 = vset.pattern.permute.xlu0 0
        %1499 = vperm.xlu0 %1498, %v1493
        %v1500 = vpop.permute.xlu0 %1499
        %1503 = vset.pattern.permute.xlu0 0
        %1504 = vperm.xlu0 %1503, %v1494
        %v1505 = vpop.permute.xlu0 %1504
        %1508 = vset.pattern.permute.xlu0 0
        %1509 = vperm.xlu0 %1508, %v1495
        %v1510 = vpop.permute.xlu0 %1509
        %1513 = vset.pattern.permute.xlu0 0
        %1514 = vperm.xlu0 %1513, %v1496
        %v1515 = vpop.permute.xlu0 %1514
        %vm1517 = vcmask 261120
        %v1519 = vsel %vm1517, %v1309, 0
        %v1522 = vsel %vm1517, %v1312, 0
        %v1525 = vsel %vm1517, %v1315, 0
        %v1528 = vsel %vm1517, %v1318, 0
        %1530 = vmatpush.msra.mxu0 %v1349
        %1531 = vmatpush.msra.mxu0 %v1347
        %1532 = vmatpush.msra.mxu0 %v1345
        %1533 = vmatpush.msra.mxu0 %v1343
        %1534 = vmatpush.msra.mxu0 %v1341
        %1535 = vmatpush.msra.mxu0 %v1339
        %1536 = vmatpush.msra.mxu0 %v1337
        %1537 = vmatpush.msra.mxu0 %v1335
        %1538 = vmatpush.msra.mxu0 %v1333
        %1539 = vmatpush.msra.mxu0 %v1331
        %1540 = vmatpush.msra.mxu0 %v1329
        %1541 = vmatpush.msra.mxu0 %v1327
        %1542 = vmatpush.msra.mxu0 %v1325
        %1543 = vmatpush.msra.mxu0 %v1323
        %1544 = vmatpush.msra.mxu0 %v1321
        %1545 = vmatpush.msra.mxu0 %v1319
        %1546 = vmatmul.f32.gmra.mxu0 %v1307
        %v1547 = vpop.f32.mrf.mxu0
        %v1548 = vadd.f32 %v1500, %v1547
        %1549 = vmatmul.f32.gmra.mxu0 %v1310
        %v1550 = vpop.f32.mrf.mxu0
        %v1551 = vadd.f32 %v1505, %v1550
        %1552 = vmatmul.f32.gmra.mxu0 %v1313
        %v1553 = vpop.f32.mrf.mxu0
        %v1554 = vadd.f32 %v1510, %v1553
        %1555 = vmatmul.f32.gmra.mxu0 %v1316
        %v1556 = vpop.f32.mrf.mxu0
        %v1557 = vadd.f32 %v1515, %v1556
        %1558 = vdwg.mxu0
        %1559 = vmatpush.msra.mxu0 %v1381
        %1560 = vmatpush.msra.mxu0 %v1379
        %1561 = vmatpush.msra.mxu0 %v1377
        %1562 = vmatpush.msra.mxu0 %v1375
        %1563 = vmatpush.msra.mxu0 %v1373
        %1564 = vmatpush.msra.mxu0 %v1371
        %1565 = vmatpush.msra.mxu0 %v1369
        %1566 = vmatpush.msra.mxu0 %v1367
        %1567 = vmatpush.msra.mxu0 %v1365
        %1568 = vmatpush.msra.mxu0 %v1363
        %1569 = vmatpush.msra.mxu0 %v1361
        %1570 = vmatpush.msra.mxu0 %v1359
        %1571 = vmatpush.msra.mxu0 %v1357
        %1572 = vmatpush.msra.mxu0 %v1355
        %1573 = vmatpush.msra.mxu0 %v1353
        %1574 = vmatpush.msra.mxu0 %v1351
        %1575 = vmatmul.f32.gmra.mxu0 %v1308
        %v1576 = vpop.f32.mrf.mxu0
        %v1577 = vadd.f32 %v1548, %v1576
        %1578 = vmatmul.f32.gmra.mxu0 %v1311
        %v1579 = vpop.f32.mrf.mxu0
        %v1580 = vadd.f32 %v1551, %v1579
        %1581 = vmatmul.f32.gmra.mxu0 %v1314
        %v1582 = vpop.f32.mrf.mxu0
        %v1583 = vadd.f32 %v1554, %v1582
        %1584 = vmatmul.f32.gmra.mxu0 %v1317
        %v1585 = vpop.f32.mrf.mxu0
        %v1586 = vadd.f32 %v1557, %v1585
        %1587 = vdwg.mxu0
        %1588 = vmatpush.msra.mxu0 0.0
        %1589 = vmatpush.msra.mxu0 0.0
        %1590 = vmatpush.msra.mxu0 0.0
        %1591 = vmatpush.msra.mxu0 0.0
        %1592 = vmatpush.msra.mxu0 0.0
        %1593 = vmatpush.msra.mxu0 0.0
        %1594 = vmatpush.msra.mxu0 0.0
        %1595 = vmatpush.msra.mxu0 0.0
        %1596 = vmatpush.msra.mxu0 0.0
        %1597 = vmatpush.msra.mxu0 0.0
        %1598 = vmatpush.msra.mxu0 0.0
        %1599 = vmatpush.msra.mxu0 0.0
        %1600 = vmatpush.msra.mxu0 %v1389
        %1601 = vmatpush.msra.mxu0 %v1387
        %1602 = vmatpush.msra.mxu0 %v1385
        %1603 = vmatpush.msra.mxu0 %v1383
        %1604 = vmatmul.f32.gmra.mxu0 %v1519
        %v1605 = vpop.f32.mrf.mxu0
        %v1606 = vadd.f32 %v1577, %v1605
        %1607 = vmatmul.f32.gmra.mxu0 %v1522
        %v1608 = vpop.f32.mrf.mxu0
        %v1609 = vadd.f32 %v1580, %v1608
        %1610 = vmatmul.f32.gmra.mxu0 %v1525
        %v1611 = vpop.f32.mrf.mxu0
        %v1612 = vadd.f32 %v1583, %v1611
        %1613 = vmatmul.f32.gmra.mxu0 %v1528
        %v1614 = vpop.f32.mrf.mxu0
        %v1615 = vadd.f32 %v1586, %v1614
        %1616 = vdwg.mxu0
        %1617 = vmatpush.msra.mxu0 %v1350
        %1618 = vmatpush.msra.mxu0 %v1348
        %1619 = vmatpush.msra.mxu0 %v1346
        %1620 = vmatpush.msra.mxu0 %v1344
        %1621 = vmatpush.msra.mxu0 %v1342
        %1622 = vmatpush.msra.mxu0 %v1340
        %1623 = vmatpush.msra.mxu0 %v1338
        %1624 = vmatpush.msra.mxu0 %v1336
        %1625 = vmatpush.msra.mxu0 %v1334
        %1626 = vmatpush.msra.mxu0 %v1332
        %1627 = vmatpush.msra.mxu0 %v1330
        %1628 = vmatpush.msra.mxu0 %v1328
        %1629 = vmatpush.msra.mxu0 %v1326
        %1630 = vmatpush.msra.mxu0 %v1324
        %1631 = vmatpush.msra.mxu0 %v1322
        %1632 = vmatpush.msra.mxu0 %v1320
        %1633 = vmatmul.f32.gmra.mxu0 %v1307
        %v1634 = vpop.f32.mrf.mxu0
        %v1635 = vadd.f32 %v1500, %v1634
        %1636 = vmatmul.f32.gmra.mxu0 %v1310
        %v1637 = vpop.f32.mrf.mxu0
        %v1638 = vadd.f32 %v1505, %v1637
        %1639 = vmatmul.f32.gmra.mxu0 %v1313
        %v1640 = vpop.f32.mrf.mxu0
        %v1641 = vadd.f32 %v1510, %v1640
        %1642 = vmatmul.f32.gmra.mxu0 %v1316
        %v1643 = vpop.f32.mrf.mxu0
        %v1644 = vadd.f32 %v1515, %v1643
        %1645 = vdwg.mxu0
        %1646 = vmatpush.msra.mxu0 %v1382
        %1647 = vmatpush.msra.mxu0 %v1380
        %1648 = vmatpush.msra.mxu0 %v1378
        %1649 = vmatpush.msra.mxu0 %v1376
        %1650 = vmatpush.msra.mxu0 %v1374
        %1651 = vmatpush.msra.mxu0 %v1372
        %1652 = vmatpush.msra.mxu0 %v1370
        %1653 = vmatpush.msra.mxu0 %v1368
        %1654 = vmatpush.msra.mxu0 %v1366
        %1655 = vmatpush.msra.mxu0 %v1364
        %1656 = vmatpush.msra.mxu0 %v1362
        %1657 = vmatpush.msra.mxu0 %v1360
        %1658 = vmatpush.msra.mxu0 %v1358
        %1659 = vmatpush.msra.mxu0 %v1356
        %1660 = vmatpush.msra.mxu0 %v1354
        %1661 = vmatpush.msra.mxu0 %v1352
        %1662 = vmatmul.f32.gmra.mxu0 %v1308
        %v1663 = vpop.f32.mrf.mxu0
        %v1664 = vadd.f32 %v1635, %v1663
        %1665 = vmatmul.f32.gmra.mxu0 %v1311
        %v1666 = vpop.f32.mrf.mxu0
        %v1667 = vadd.f32 %v1638, %v1666
        %1668 = vmatmul.f32.gmra.mxu0 %v1314
        %v1669 = vpop.f32.mrf.mxu0
        %v1670 = vadd.f32 %v1641, %v1669
        %1671 = vmatmul.f32.gmra.mxu0 %v1317
        %v1672 = vpop.f32.mrf.mxu0
        %v1673 = vadd.f32 %v1644, %v1672
        %1674 = vdwg.mxu0
        %1675 = vmatpush.msra.mxu0 0.0
        %1676 = vmatpush.msra.mxu0 0.0
        %1677 = vmatpush.msra.mxu0 0.0
        %1678 = vmatpush.msra.mxu0 0.0
        %1679 = vmatpush.msra.mxu0 0.0
        %1680 = vmatpush.msra.mxu0 0.0
        %1681 = vmatpush.msra.mxu0 0.0
        %1682 = vmatpush.msra.mxu0 0.0
        %1683 = vmatpush.msra.mxu0 0.0
        %1684 = vmatpush.msra.mxu0 0.0
        %1685 = vmatpush.msra.mxu0 0.0
        %1686 = vmatpush.msra.mxu0 0.0
        %1687 = vmatpush.msra.mxu0 %v1390
        %1688 = vmatpush.msra.mxu0 %v1388
        %1689 = vmatpush.msra.mxu0 %v1386
        %1690 = vmatpush.msra.mxu0 %v1384
        %1691 = vmatmul.f32.gmra.mxu0 %v1519
        %v1692 = vpop.f32.mrf.mxu0
        %v1693 = vadd.f32 %v1664, %v1692
        %1694 = vmatmul.f32.gmra.mxu0 %v1522
        %v1695 = vpop.f32.mrf.mxu0
        %v1696 = vadd.f32 %v1667, %v1695
        %1697 = vmatmul.f32.gmra.mxu0 %v1525
        %v1698 = vpop.f32.mrf.mxu0
        %v1699 = vadd.f32 %v1670, %v1698
        %1700 = vmatmul.f32.gmra.mxu0 %v1528
        %v1701 = vpop.f32.mrf.mxu0
        %v1702 = vadd.f32 %v1673, %v1701
        %1703 = vdwg.mxu0
        %v1704 = vadd.f32 %v1606, %v1453
        %v1705 = vadd.f32 %v1693, %v1482
        %v1706 = vadd.f32 %v1609, %v1456
        %v1707 = vadd.f32 %v1696, %v1485
        %v1708 = vadd.f32 %v1612, %v1459
        %v1709 = vadd.f32 %v1699, %v1488
        %v1710 = vadd.f32 %v1615, %v1462
        %v1711 = vadd.f32 %v1702, %v1491
        %v1712 = vmax.f32 %v1704, 0.0
        %v1713 = vmax.f32 %v1705, 0.0
        %v1714 = vmax.f32 %v1706, 0.0
        %v1715 = vmax.f32 %v1707, 0.0
        %v1716 = vmax.f32 %v1708, 0.0
        %v1717 = vmax.f32 %v1709, 0.0
        %v1718 = vmax.f32 %v1710, 0.0
        %v1719 = vmax.f32 %v1711, 0.0
        %v1720 = vld [vmem:[%s9] sm:$0xff]
        %v1721 = vld [vmem:[%s9 + $0x8] sm:$0xff]
        %v1722 = vld [vmem:[%s9 + $0x10] sm:$0xff]
        %v1723 = vld [vmem:[%s9 + $0x18] sm:$0xff]
        %v1724 = vld [vmem:[%s10] sm:$0xff]
        %v1725 = vld [vmem:[%s10 + $0x8] sm:$0xff]
        %v1726 = vld [vmem:[%s10 + $0x10] sm:$0xff]
        %v1727 = vld [vmem:[%s10 + $0x18] sm:$0xff]
        %v1728 = vmax.f32 %v1712, %v1713
        %1729 = vmax.xlane.f32.xlu0 %v1728
        %v1730 = vpop.xlane.xlu0 %1729
        %v1731 = vmax.f32 %v1714, %v1715
        %1732 = vmax.xlane.f32.xlu0 %v1731
        %v1733 = vpop.xlane.xlu0 %1732
        %v1734 = vmax.f32 %v1716, %v1717
        %1735 = vmax.xlane.f32.xlu0 %v1734
        %v1736 = vpop.xlane.xlu0 %1735
        %v1737 = vmax.f32 %v1718, %v1719
        %1738 = vmax.xlane.f32.xlu0 %v1737
        %v1739 = vpop.xlane.xlu0 %1738
        %v1740 = vadd.f32 %v1712, %v1713
        %1741 = vadd.xlane.f32.xlu0 %v1740
        %v1742 = vpop.xlane.xlu0 %1741
        %v1743 = vadd.f32 %v1714, %v1715
        %1744 = vadd.xlane.f32.xlu0 %v1743
        %v1745 = vpop.xlane.xlu0 %1744
        %v1746 = vadd.f32 %v1716, %v1717
        %1747 = vadd.xlane.f32.xlu0 %v1746
        %v1748 = vpop.xlane.xlu0 %1747
        %v1749 = vadd.f32 %v1718, %v1719
        %1750 = vadd.xlane.f32.xlu0 %v1749
        %v1751 = vpop.xlane.xlu0 %1750
        %v1752 = vmul.f32 %v1742, 0.00390625
        %v1753 = vmul.f32 %v1745, 0.00390625
        %v1754 = vmul.f32 %v1748, 0.00390625
        %v1755 = vmul.f32 %v1751, 0.00390625
        %v1756 = vmul.f32 %v1720, %v1730
        %v1757 = vmul.f32 %v1721, %v1733
        %v1758 = vmul.f32 %v1722, %v1736
        %v1759 = vmul.f32 %v1723, %v1739
        %vm1760 = vcmask 64512
        %v1761 = vsel %vm1760, %v1756, 0.0
        %v1762 = vsel %vm1760, %v1757, 0.0
        %v1763 = vadd.f32 %v1761, %v1762
        %v1764 = vsel %vm1760, %v1758, 0.0
        %v1765 = vadd.f32 %v1763, %v1764
        %v1766 = vsel %vm1760, %v1759, 0.0
        %v1767 = vadd.f32 %v1765, %v1766
        %v1768 = vrot.slane %v1767, 4
        %v1769 = vadd.f32 %v1767, %v1768
        %v1770 = vrot.slane %v1769, 2
        %v1771 = vadd.f32 %v1769, %v1770
        %v1772 = vrot.slane %v1771, 1
        %v1773 = vadd.f32 %v1771, %v1772
        %v1774 = vmax.f32 %v1773, 0.0
        %v1775 = vmul.f32 %v1720, %v1752
        %v1776 = vmul.f32 %v1721, %v1753
        %v1777 = vmul.f32 %v1722, %v1754
        %v1778 = vmul.f32 %v1723, %v1755
        %v1779 = vsel %vm1760, %v1775, 0.0
        %v1780 = vsel %vm1760, %v1776, 0.0
        %v1781 = vadd.f32 %v1779, %v1780
        %v1782 = vsel %vm1760, %v1777, 0.0
        %v1783 = vadd.f32 %v1781, %v1782
        %v1784 = vsel %vm1760, %v1778, 0.0
        %v1785 = vadd.f32 %v1783, %v1784
        %v1786 = vrot.slane %v1785, 4
        %v1787 = vadd.f32 %v1785, %v1786
        %v1788 = vrot.slane %v1787, 2
        %v1789 = vadd.f32 %v1787, %v1788
        %v1790 = vrot.slane %v1789, 1
        %v1791 = vadd.f32 %v1789, %v1790
        %v1792 = vmax.f32 %v1791, 0.0
        %v1793 = vadd.f32 %v1774, %v1792
        %v1794 = vmul.f32 %v1724, %v1793
        %v1795 = vmul.f32 %v1725, %v1793
        %v1796 = vmul.f32 %v1726, %v1793
        %v1797 = vmul.f32 %v1727, %v1793
        %v1798 = vsel %vm1760, %v1794, 0.0
        %1799 = vadd.xlane.f32.xlu0 %v1798
        %v1800 = vpop.xlane.xlu0 %1799
        %v1801 = vsel %vm1760, %v1795, 0.0
        %1802 = vadd.xlane.f32.xlu0 %v1801
        %v1803 = vpop.xlane.xlu0 %1802
        %v1804 = vsel %vm1760, %v1796, 0.0
        %1805 = vadd.xlane.f32.xlu0 %v1804
        %v1806 = vpop.xlane.xlu0 %1805
        %v1807 = vsel %vm1760, %v1797, 0.0
        %1808 = vadd.xlane.f32.xlu0 %v1807
        %v1809 = vpop.xlane.xlu0 %1808
        %v1810 = vxor.u32 %v1800, 2147483648
        %v1811 = vxor.u32 %v1803, 2147483648
        %v1812 = vxor.u32 %v1806, 2147483648
        %v1813 = vxor.u32 %v1809, 2147483648
        %v1814 = vmul.f32 %v1810, 1.442695
        %v1815 = vpow.pop %v1814
        %v1816 = vmul.f32 %v1811, 1.442695
        %v1817 = vpow.pop %v1816
        %v1818 = vmul.f32 %v1812, 1.442695
        %v1819 = vpow.pop %v1818
        %v1820 = vmul.f32 %v1813, 1.442695
        %v1821 = vpow.pop %v1820
        %v1822 = vadd.f32 %v1815, 1.0
        %v1823 = vadd.f32 %v1817, 1.0
        %v1824 = vadd.f32 %v1819, 1.0
        %v1825 = vadd.f32 %v1821, 1.0
        %v1826 = vrcp.pop %v1822
        %v1827 = vmul.f32 %v1822, %v1826
        %v1828 = vsub.f32 1.0, %v1827
        %v1829 = vmul.f32 %v1826, %v1828
        %v1830 = vadd.f32 %v1826, %v1829
        %vm1831 = vweird.f32 %v1822
        %vm1832 = vweird.f32 %v1826
        %vm1833 = vmor %vm1831, %vm1832
        %v1834 = vsel %vm1833, %v1826, %v1830
        %v1835 = vand.u32 2147483647, %v1822
        %vm1836 = vcmp.eq.f32.partialorder %v1835, 8.507059e+37
        %v1837 = vand.u32 %v1822, 2147483648
        %v1838 = vor.u32 1.1754944e-38, %v1837
        %v1839 = vsel %vm1836, %v1838, %v1834
        %v1840 = vmul.f32 1.0, %v1839
        %v1841 = vrcp.pop %v1823
        %v1842 = vmul.f32 %v1823, %v1841
        %v1843 = vsub.f32 1.0, %v1842
        %v1844 = vmul.f32 %v1841, %v1843
        %v1845 = vadd.f32 %v1841, %v1844
        %vm1846 = vweird.f32 %v1823
        %vm1847 = vweird.f32 %v1841
        %vm1848 = vmor %vm1846, %vm1847
        %v1849 = vsel %vm1848, %v1841, %v1845
        %v1850 = vand.u32 2147483647, %v1823
        %vm1851 = vcmp.eq.f32.partialorder %v1850, 8.507059e+37
        %v1852 = vand.u32 %v1823, 2147483648
        %v1853 = vor.u32 1.1754944e-38, %v1852
        %v1854 = vsel %vm1851, %v1853, %v1849
        %v1855 = vmul.f32 1.0, %v1854
        %v1856 = vrcp.pop %v1824
        %v1857 = vmul.f32 %v1824, %v1856
        %v1858 = vsub.f32 1.0, %v1857
        %v1859 = vmul.f32 %v1856, %v1858
        %v1860 = vadd.f32 %v1856, %v1859
        %vm1861 = vweird.f32 %v1824
        %vm1862 = vweird.f32 %v1856
        %vm1863 = vmor %vm1861, %vm1862
        %v1864 = vsel %vm1863, %v1856, %v1860
        %v1865 = vand.u32 2147483647, %v1824
        %vm1866 = vcmp.eq.f32.partialorder %v1865, 8.507059e+37
        %v1867 = vand.u32 %v1824, 2147483648
        %v1868 = vor.u32 1.1754944e-38, %v1867
        %v1869 = vsel %vm1866, %v1868, %v1864
        %v1870 = vmul.f32 1.0, %v1869
        %v1871 = vrcp.pop %v1825
        %v1872 = vmul.f32 %v1825, %v1871
        %v1873 = vsub.f32 1.0, %v1872
        %v1874 = vmul.f32 %v1871, %v1873
        %v1875 = vadd.f32 %v1871, %v1874
        %vm1876 = vweird.f32 %v1825
        %vm1877 = vweird.f32 %v1871
        %vm1878 = vmor %vm1876, %vm1877
        %v1879 = vsel %vm1878, %v1871, %v1875
        %v1880 = vand.u32 2147483647, %v1825
        %vm1881 = vcmp.eq.f32.partialorder %v1880, 8.507059e+37
        %v1882 = vand.u32 %v1825, 2147483648
        %v1883 = vor.u32 1.1754944e-38, %v1882
        %v1884 = vsel %vm1881, %v1883, %v1879
        %v1885 = vmul.f32 1.0, %v1884
        %v1886 = vmul.f32 %v1712, %v1840
        %v1887 = vmul.f32 %v1713, %v1840
        %v1888 = vmul.f32 %v1714, %v1855
        %v1889 = vmul.f32 %v1715, %v1855
        %v1890 = vmul.f32 %v1716, %v1870
        %v1891 = vmul.f32 %v1717, %v1870
        %v1892 = vmul.f32 %v1718, %v1885
        %v1893 = vmul.f32 %v1719, %v1885
        %v1894 = vmax.f32 %v1886, %v1890
        %v1895 = vmax.f32 %v1888, %v1892
        %v1896 = vmax.f32 %v1894, %v1895
        %v1897 = vrot.slane %v1896, 4
        %v1898 = vmax.f32 %v1896, %v1897
        %v1899 = vrot.slane %v1898, 2
        %v1900 = vmax.f32 %v1898, %v1899
        %v1901 = vrot.slane %v1900, 1
        %v1902 = vmax.f32 %v1900, %v1901
        %v1903 = vmax.f32 %v1887, %v1891
        %v1904 = vmax.f32 %v1889, %v1893
        %v1905 = vmax.f32 %v1903, %v1904
        %v1906 = vrot.slane %v1905, 4
        %v1907 = vmax.f32 %v1905, %v1906
        %v1908 = vrot.slane %v1907, 2
        %v1909 = vmax.f32 %v1907, %v1908
        %v1910 = vrot.slane %v1909, 1
        %v1911 = vmax.f32 %v1909, %v1910
        %v1912 = vadd.f32 %v1886, %v1888
        %v1913 = vadd.f32 %v1912, %v1890
        %v1914 = vadd.f32 %v1913, %v1892
        %v1915 = vrot.slane %v1914, 4
        %v1916 = vadd.f32 %v1914, %v1915
        %v1917 = vrot.slane %v1916, 2
        %v1918 = vadd.f32 %v1916, %v1917
        %v1919 = vrot.slane %v1918, 1
        %v1920 = vadd.f32 %v1918, %v1919
        %v1921 = vadd.f32 %v1887, %v1889
        %v1922 = vadd.f32 %v1921, %v1891
        %v1923 = vadd.f32 %v1922, %v1893
        %v1924 = vrot.slane %v1923, 4
        %v1925 = vadd.f32 %v1923, %v1924
        %v1926 = vrot.slane %v1925, 2
        %v1927 = vadd.f32 %v1925, %v1926
        %v1928 = vrot.slane %v1927, 1
        %v1929 = vadd.f32 %v1927, %v1928
        %v1930 = vmul.f32 %v1920, 0.03125
        %v1931 = vmul.f32 %v1929, 0.03125
        %v1932 = vld [vmem:[#allocation9] ss:$8 sm:$0x3]
        %1933 = vrot.lane.b32.xlu0 %v1902, 17
        %v1934 = vpop.permute.xlu0 %1933
        %1935 = vrot.lane.b32.xlu0 %v1911, 17
        %v1936 = vpop.permute.xlu0 %1935
        %v1937 = vsel %vm478, %v1934, %v1936
        %v1938 = vsel %vm478, %v1936, %v1934
        %s1939 = sld [smem:[#allocation4]]
        %v1940 = vstv %s1939
        %v1941 = vmul.f32 %v1938, %v1940
        %v1942 = vmul.f32 %v1937, %v1940
        %1943 = vrot.lane.b32.xlu0 %v1930, 17
        %v1944 = vpop.permute.xlu0 %1943
        %1945 = vrot.lane.b32.xlu0 %v1931, 17
        %v1946 = vpop.permute.xlu0 %1945
        %v1947 = vsel %vm478, %v1944, %v1946
        %v1948 = vsel %vm478, %v1946, %v1944
        %s1949 = sld [smem:[#allocation4 + $0x80]]
        %v1950 = vstv %s1949
        %v1951 = vmul.f32 %v1948, %v1950
        %v1952 = vmul.f32 %v1947, %v1950
        %v1953 = vadd.f32 %v1941, %v1951
        %v1954 = vadd.f32 %v1942, %v1952
        %v1956 = vperm.slane %v1932, 0
        %v1957 = vperm.slane %v1932, 1
        %v1960 = vmul.f32 %v1953, %v1956
        %v1961 = vmul.f32 %v1954, %v1957
        %v1962 = vadd.f32 %v1960, 0.0
        %v1963 = vadd.f32 %v1961, 0.0
        %s1964 = scalar_lea.vmem [#allocation9], 1
        %v1965 = vld [vmem:[%s1964] ss:$8 sm:$0x3]
        %1966 = vrot.lane.b32.xlu0 %v1902, 16
        %v1967 = vpop.permute.xlu0 %1966
        %1968 = vrot.lane.b32.xlu0 %v1911, 16
        %v1969 = vpop.permute.xlu0 %1968
        %v1970 = vsel %vm509, %v1967, %v1969
        %v1971 = vsel %vm509, %v1969, %v1967
        %s1972 = sld [smem:[#allocation4 + $0x1]]
        %v1973 = vstv %s1972
        %v1974 = vmul.f32 %v1971, %v1973
        %v1975 = vmul.f32 %v1970, %v1973
        %1976 = vrot.lane.b32.xlu0 %v1930, 16
        %v1977 = vpop.permute.xlu0 %1976
        %1978 = vrot.lane.b32.xlu0 %v1931, 16
        %v1979 = vpop.permute.xlu0 %1978
        %v1980 = vsel %vm509, %v1977, %v1979
        %v1981 = vsel %vm509, %v1979, %v1977
        %s1982 = sld [smem:[#allocation4 + $0x81]]
        %v1983 = vstv %s1982
        %v1984 = vmul.f32 %v1981, %v1983
        %v1985 = vmul.f32 %v1980, %v1983
        %v1986 = vadd.f32 %v1974, %v1984
        %v1987 = vadd.f32 %v1975, %v1985
        %v1989 = vperm.slane %v1965, 0
        %v1990 = vperm.slane %v1965, 1
        %v1993 = vmul.f32 %v1986, %v1989
        %v1994 = vmul.f32 %v1987, %v1990
        %v1995 = vadd.f32 %v1962, %v1993
        %v1996 = vadd.f32 %v1963, %v1994
        %s1997 = scalar_lea.vmem [#allocation9], 2
        %v1998 = vld [vmem:[%s1997] ss:$8 sm:$0x3]
        %1999 = vrot.lane.b32.xlu0 %v1902, 15
        %v2000 = vpop.permute.xlu0 %1999
        %2001 = vrot.lane.b32.xlu0 %v1911, 15
        %v2002 = vpop.permute.xlu0 %2001
        %v2003 = vsel %vm1013, %v2000, %v2002
        %v2004 = vsel %vm1013, %v2002, %v2000
        %s2005 = sld [smem:[#allocation4 + $0x2]]
        %v2006 = vstv %s2005
        %v2007 = vmul.f32 %v2004, %v2006
        %v2008 = vmul.f32 %v2003, %v2006
        %2009 = vrot.lane.b32.xlu0 %v1930, 15
        %v2010 = vpop.permute.xlu0 %2009
        %2011 = vrot.lane.b32.xlu0 %v1931, 15
        %v2012 = vpop.permute.xlu0 %2011
        %v2013 = vsel %vm1013, %v2010, %v2012
        %v2014 = vsel %vm1013, %v2012, %v2010
        %s2015 = sld [smem:[#allocation4 + $0x82]]
        %v2016 = vstv %s2015
        %v2017 = vmul.f32 %v2014, %v2016
        %v2018 = vmul.f32 %v2013, %v2016
        %v2019 = vadd.f32 %v2007, %v2017
        %v2020 = vadd.f32 %v2008, %v2018
        %v2022 = vperm.slane %v1998, 0
        %v2023 = vperm.slane %v1998, 1
        %v2026 = vmul.f32 %v2019, %v2022
        %v2027 = vmul.f32 %v2020, %v2023
        %v2028 = vadd.f32 %v1995, %v2026
        %v2029 = vadd.f32 %v1996, %v2027
        %s2030 = scalar_lea.vmem [#allocation9], 3
        %v2031 = vld [vmem:[%s2030] ss:$8 sm:$0x3]
        %2032 = vrot.lane.b32.xlu0 %v1902, 1
        %v2033 = vpop.permute.xlu0 %2032
        %2034 = vrot.lane.b32.xlu0 %v1911, 1
        %v2035 = vpop.permute.xlu0 %2034
        %v2036 = vsel %vm572, %v2033, %v2035
        %v2037 = vsel %vm572, %v2035, %v2033
        %s2038 = sld [smem:[#allocation4 + $0x3]]
        %v2039 = vstv %s2038
        %v2040 = vmul.f32 %v2037, %v2039
        %v2041 = vmul.f32 %v2036, %v2039
        %2042 = vrot.lane.b32.xlu0 %v1930, 1
        %v2043 = vpop.permute.xlu0 %2042
        %2044 = vrot.lane.b32.xlu0 %v1931, 1
        %v2045 = vpop.permute.xlu0 %2044
        %v2046 = vsel %vm572, %v2043, %v2045
        %v2047 = vsel %vm572, %v2045, %v2043
        %s2048 = sld [smem:[#allocation4 + $0x83]]
        %v2049 = vstv %s2048
        %v2050 = vmul.f32 %v2047, %v2049
        %v2051 = vmul.f32 %v2046, %v2049
        %v2052 = vadd.f32 %v2040, %v2050
        %v2053 = vadd.f32 %v2041, %v2051
        %v2055 = vperm.slane %v2031, 0
        %v2056 = vperm.slane %v2031, 1
        %v2059 = vmul.f32 %v2052, %v2055
        %v2060 = vmul.f32 %v2053, %v2056
        %v2061 = vadd.f32 %v2028, %v2059
        %v2062 = vadd.f32 %v2029, %v2060
        %s2063 = scalar_lea.vmem [#allocation9], 4
        %v2064 = vld [vmem:[%s2063] ss:$8 sm:$0x3]
        %s2065 = sld [smem:[#allocation4 + $0x4]]
        %v2066 = vstv %s2065
        %v2067 = vmul.f32 %v1902, %v2066
        %v2068 = vmul.f32 %v1911, %v2066
        %s2069 = sld [smem:[#allocation4 + $0x84]]
        %v2070 = vstv %s2069
        %v2071 = vmul.f32 %v1930, %v2070
        %v2072 = vmul.f32 %v1931, %v2070
        %v2073 = vadd.f32 %v2067, %v2071
        %v2074 = vadd.f32 %v2068, %v2072
        %v2076 = vperm.slane %v2064, 0
        %v2077 = vperm.slane %v2064, 1
        %v2080 = vmul.f32 %v2073, %v2076
        %v2081 = vmul.f32 %v2074, %v2077
        %v2082 = vadd.f32 %v2061, %v2080
        %v2083 = vadd.f32 %v2062, %v2081
        %s2084 = scalar_lea.vmem [#allocation9], 5
        %v2085 = vld [vmem:[%s2084] ss:$8 sm:$0x3]
        %2086 = vrot.lane.b32.xlu0 %v1902, 127
        %v2087 = vpop.permute.xlu0 %2086
        %2088 = vrot.lane.b32.xlu0 %v1911, 127
        %v2089 = vpop.permute.xlu0 %2088
        %v2090 = vsel %vm1131, %v2087, %v2089
        %v2091 = vsel %vm1131, %v2089, %v2087
        %s2092 = sld [smem:[#allocation4 + $0x5]]
        %v2093 = vstv %s2092
        %v2094 = vmul.f32 %v2090, %v2093
        %v2095 = vmul.f32 %v2091, %v2093
        %2096 = vrot.lane.b32.xlu0 %v1930, 127
        %v2097 = vpop.permute.xlu0 %2096
        %2098 = vrot.lane.b32.xlu0 %v1931, 127
        %v2099 = vpop.permute.xlu0 %2098
        %v2100 = vsel %vm1131, %v2097, %v2099
        %v2101 = vsel %vm1131, %v2099, %v2097
        %s2102 = sld [smem:[#allocation4 + $0x85]]
        %v2103 = vstv %s2102
        %v2104 = vmul.f32 %v2100, %v2103
        %v2105 = vmul.f32 %v2101, %v2103
        %v2106 = vadd.f32 %v2094, %v2104
        %v2107 = vadd.f32 %v2095, %v2105
        %v2109 = vperm.slane %v2085, 0
        %v2110 = vperm.slane %v2085, 1
        %v2113 = vmul.f32 %v2106, %v2109
        %v2114 = vmul.f32 %v2107, %v2110
        %v2115 = vadd.f32 %v2082, %v2113
        %v2116 = vadd.f32 %v2083, %v2114
        %s2117 = scalar_lea.vmem [#allocation9], 6
        %v2118 = vld [vmem:[%s2117] ss:$8 sm:$0x3]
        %2119 = vrot.lane.b32.xlu0 %v1902, 113
        %v2120 = vpop.permute.xlu0 %2119
        %2121 = vrot.lane.b32.xlu0 %v1911, 113
        %v2122 = vpop.permute.xlu0 %2121
        %v2123 = vsel %vm1179, %v2120, %v2122
        %v2124 = vsel %vm1179, %v2122, %v2120
        %s2125 = sld [smem:[#allocation4 + $0x6]]
        %v2126 = vstv %s2125
        %v2127 = vmul.f32 %v2123, %v2126
        %v2128 = vmul.f32 %v2124, %v2126
        %2129 = vrot.lane.b32.xlu0 %v1930, 113
        %v2130 = vpop.permute.xlu0 %2129
        %2131 = vrot.lane.b32.xlu0 %v1931, 113
        %v2132 = vpop.permute.xlu0 %2131
        %v2133 = vsel %vm1179, %v2130, %v2132
        %v2134 = vsel %vm1179, %v2132, %v2130
        %s2135 = sld [smem:[#allocation4 + $0x86]]
        %v2136 = vstv %s2135
        %v2137 = vmul.f32 %v2133, %v2136
        %v2138 = vmul.f32 %v2134, %v2136
        %v2139 = vadd.f32 %v2127, %v2137
        %v2140 = vadd.f32 %v2128, %v2138
        %v2142 = vperm.slane %v2118, 0
        %v2143 = vperm.slane %v2118, 1
        %v2146 = vmul.f32 %v2139, %v2142
        %v2147 = vmul.f32 %v2140, %v2143
        %v2148 = vadd.f32 %v2115, %v2146
        %v2149 = vadd.f32 %v2116, %v2147
        %s2150 = scalar_lea.vmem [#allocation9], 7
        %v2151 = vld [vmem:[%s2150] ss:$8 sm:$0x3]
        %2152 = vrot.lane.b32.xlu0 %v1902, 112
        %v2153 = vpop.permute.xlu0 %2152
        %2154 = vrot.lane.b32.xlu0 %v1911, 112
        %v2155 = vpop.permute.xlu0 %2154
        %v2156 = vsel %vm1227, %v2153, %v2155
        %v2157 = vsel %vm1227, %v2155, %v2153
        %s2158 = sld [smem:[#allocation4 + $0x7]]
        %v2159 = vstv %s2158
        %v2160 = vmul.f32 %v2156, %v2159
        %v2161 = vmul.f32 %v2157, %v2159
        %2162 = vrot.lane.b32.xlu0 %v1930, 112
        %v2163 = vpop.permute.xlu0 %2162
        %2164 = vrot.lane.b32.xlu0 %v1931, 112
        %v2165 = vpop.permute.xlu0 %2164
        %v2166 = vsel %vm1227, %v2163, %v2165
        %v2167 = vsel %vm1227, %v2165, %v2163
        %s2168 = sld [smem:[#allocation4 + $0x87]]
        %v2169 = vstv %s2168
        %v2170 = vmul.f32 %v2166, %v2169
        %v2171 = vmul.f32 %v2167, %v2169
        %v2172 = vadd.f32 %v2160, %v2170
        %v2173 = vadd.f32 %v2161, %v2171
        %v2175 = vperm.slane %v2151, 0
        %v2176 = vperm.slane %v2151, 1
        %v2179 = vmul.f32 %v2172, %v2175
        %v2180 = vmul.f32 %v2173, %v2176
        %v2181 = vadd.f32 %v2148, %v2179
        %v2182 = vadd.f32 %v2149, %v2180
        %s2183 = scalar_lea.vmem [#allocation9], 16
        %v2184 = vld [vmem:[%s2183] ss:$8 sm:$0x3]
        %2185 = vrot.lane.b32.xlu0 %v1902, 111
        %v2186 = vpop.permute.xlu0 %2185
        %2187 = vrot.lane.b32.xlu0 %v1911, 111
        %v2188 = vpop.permute.xlu0 %2187
        %v2189 = vsel %vm1275, %v2186, %v2188
        %v2190 = vsel %vm1275, %v2188, %v2186
        %s2191 = sld [smem:[#allocation4 + $0x8]]
        %v2192 = vstv %s2191
        %v2193 = vmul.f32 %v2189, %v2192
        %v2194 = vmul.f32 %v2190, %v2192
        %2195 = vrot.lane.b32.xlu0 %v1930, 111
        %v2196 = vpop.permute.xlu0 %2195
        %2197 = vrot.lane.b32.xlu0 %v1931, 111
        %v2198 = vpop.permute.xlu0 %2197
        %v2199 = vsel %vm1275, %v2196, %v2198
        %v2200 = vsel %vm1275, %v2198, %v2196
        %s2201 = sld [smem:[#allocation4 + $0x88]]
        %v2202 = vstv %s2201
        %v2203 = vmul.f32 %v2199, %v2202
        %v2204 = vmul.f32 %v2200, %v2202
        %v2205 = vadd.f32 %v2193, %v2203
        %v2206 = vadd.f32 %v2194, %v2204
        %v2208 = vperm.slane %v2184, 0
        %v2209 = vperm.slane %v2184, 1
        %v2212 = vmul.f32 %v2205, %v2208
        %v2213 = vmul.f32 %v2206, %v2209
        %v2214 = vadd.f32 %v2181, %v2212
        %v2215 = vadd.f32 %v2182, %v2213
        %s2216 = sld [smem:[#allocation5]]
        %v2217 = vstv %s2216
        %v2218 = vadd.f32 %v2214, %v2217
        %v2219 = vadd.f32 %v2215, %v2217
        %v2220 = vxor.u32 %v2218, 2147483648
        %v2221 = vxor.u32 %v2219, 2147483648
        %v2222 = vmul.f32 %v2220, 1.442695
        %v2223 = vpow.pop %v2222
        %v2224 = vmul.f32 %v2221, 1.442695
        %v2225 = vpow.pop %v2224
        %v2226 = vadd.f32 %v2223, 1.0
        %v2227 = vadd.f32 %v2225, 1.0
        %v2228 = vrcp.pop %v2226
        %v2229 = vmul.f32 %v2226, %v2228
        %v2230 = vsub.f32 1.0, %v2229
        %v2231 = vmul.f32 %v2228, %v2230
        %v2232 = vadd.f32 %v2228, %v2231
        %vm2233 = vweird.f32 %v2226
        %vm2234 = vweird.f32 %v2228
        %vm2235 = vmor %vm2233, %vm2234
        %v2236 = vsel %vm2235, %v2228, %v2232
        %v2237 = vand.u32 2147483647, %v2226
        %vm2238 = vcmp.eq.f32.partialorder %v2237, 8.507059e+37
        %v2239 = vand.u32 %v2226, 2147483648
        %v2240 = vor.u32 1.1754944e-38, %v2239
        %v2241 = vsel %vm2238, %v2240, %v2236
        %v2242 = vmul.f32 1.0, %v2241
        %v2243 = vrcp.pop %v2227
        %v2244 = vmul.f32 %v2227, %v2243
        %v2245 = vsub.f32 1.0, %v2244
        %v2246 = vmul.f32 %v2243, %v2245
        %v2247 = vadd.f32 %v2243, %v2246
        %vm2248 = vweird.f32 %v2227
        %vm2249 = vweird.f32 %v2243
        %vm2250 = vmor %vm2248, %vm2249
        %v2251 = vsel %vm2250, %v2243, %v2247
        %v2252 = vand.u32 2147483647, %v2227
        %vm2253 = vcmp.eq.f32.partialorder %v2252, 8.507059e+37
        %v2254 = vand.u32 %v2227, 2147483648
        %v2255 = vor.u32 1.1754944e-38, %v2254
        %v2256 = vsel %vm2253, %v2255, %v2251
        %v2257 = vmul.f32 1.0, %v2256
        %v2258 = vperm.slane %v2242, 0
        %v2259 = vperm.slane %v2257, 0
        %v2260 = vmul.f32 %v1840, %v2258
        %v2261 = vmul.f32 %v1840, %v2259
        %v2262 = vmul.f32 %v1855, %v2258
        %v2263 = vmul.f32 %v1855, %v2259
        %v2264 = vmul.f32 %v1870, %v2258
        %v2265 = vmul.f32 %v1870, %v2259
        %v2266 = vmul.f32 %v1885, %v2258
        %v2267 = vmul.f32 %v1885, %v2259
        %v2268 = vadd.f32 %v2260, 1.0
        %v2269 = vadd.f32 %v2261, 1.0
        %v2270 = vadd.f32 %v2262, 1.0
        %v2271 = vadd.f32 %v2263, 1.0
        %v2272 = vadd.f32 %v2264, 1.0
        %v2273 = vadd.f32 %v2265, 1.0
        %v2274 = vadd.f32 %v2266, 1.0
        %v2275 = vadd.f32 %v2267, 1.0
        %v2276 = vmul.f32 %v1712, %v2268
        %v2277 = vmul.f32 %v1713, %v2269
        %v2278 = vmul.f32 %v1714, %v2270
        %v2279 = vmul.f32 %v1715, %v2271
        %v2280 = vmul.f32 %v1716, %v2272
        %v2281 = vmul.f32 %v1717, %v2273
        %v2282 = vmul.f32 %v1718, %v2274
        %v2283 = vmul.f32 %v1719, %v2275
        %2284 = vst [vmem:[%s461] sm:$0xff] %v2276
        %2285 = vst [vmem:[%s461 + $0x8] sm:$0xff] %v2277
        %2286 = vst [vmem:[%s461 + $0x10] sm:$0xff] %v2278
        %2287 = vst [vmem:[%s461 + $0x18] sm:$0xff] %v2279
        %2288 = vst [vmem:[%s461 + $0x20] sm:$0xff] %v2280
        %2289 = vst [vmem:[%s461 + $0x28] sm:$0xff] %v2281
        %2290 = vst [vmem:[%s461 + $0x30] sm:$0xff] %v2282
        %2291 = vst [vmem:[%s461 + $0x38] sm:$0xff] %v2283
        %s2292 = sand.u32 %s306, 1
        %s2293 = scalar_lea.sflag [#allocation8], %s2292
        %s2294 = sand.u32 %s306, 1
        %s2295 = smul.addr %s2294, 64
        %s2296 = scalar_lea.vmem [#allocation11], %s2295
        // Predicated region
        $region77: #{tpu_custom_call.1} parent=67 // pred_check
          %p2297 = pneg %p316
        $region78: #{tpu_custom_call.1} parent=67 // pred_check_branch
          %2299 = sbr.rel (%p2297) target = $region80
        $region79: #{tpu_custom_call.1} parent=67 // pred_region
          %s2300 = smul.u32 2, %s41
          %2302 = vsyncadd %s2293, 0
          %s2303 = smul.addr %s2300, 8
          %s2304 = scalar_lea.hbm %s14, %s2303
          %s2305 = sshll.u32 %s2296, 4
          %s2306 = int_to_ptr.vmem [resolvable:$true] %s2305
          %s2307 = sshll.u32 %s2304, 4
          %s2308 = int_to_ptr.hbm [resolvable:$true] %s2307
          %2313 = dma.vmem_to_hbm [thread:$0]  %s2306, 1024, %s2308, %s2293, 256, 1024, 16
        $region80: #{tpu_custom_call.1} parent=67 // pred_fallthru
          _
      $region68: #{tpu_custom_call.1} parent=5 // pred_fallthru
        _
      %p2314 = scmp.le.s32.totalorder 2, %s36
      // Predicated region
      $region81: #{tpu_custom_call.1} parent=5 // pred_check
        %p2315 = pneg %p2314
      $region82: #{tpu_custom_call.1} parent=5 // pred_check_branch
        %2317 = sbr.rel (%p2315) target = $region84
      $region83: #{tpu_custom_call.1} parent=5 // pred_region
        %s2318 = ssub.s32 %s36, 2
        // Predicated region
        $region85: #{tpu_custom_call.1} parent=83 // pred_check
          %p2319 = pneg %p322
        $region86: #{tpu_custom_call.1} parent=83 // pred_check_branch
          %2321 = sbr.rel (%p2319) target = $region88
        $region87: #{tpu_custom_call.1} parent=83 // pred_region
          %s2322 = sand.u32 %s307, 1
          %s2323 = scalar_lea.sflag [#allocation8], %s2322
          %s2324 = sand.u32 %s307, 1
          %s2325 = smul.addr %s2324, 64
          %s2326 = scalar_lea.vmem [#allocation11], %s2325
          %2328 = dma.done %s2323, 1024
        $region88: #{tpu_custom_call.1} parent=83 // pred_fallthru
          _
      $region84: #{tpu_custom_call.1} parent=5 // pred_fallthru
        _
    $region6: #{tpu_custom_call.1} parent=1 // loop_footer
      %s40 = sadd.s32 1, %s36
    $region7: #{tpu_custom_call.1} parent=1 // loop_footer_branch
      %35 = sbr.rel target = $region3
    $region8: #{tpu_custom_call.1} parent=1 // loop_exit
      _
    %2329 = vsyncpa [#allocation7], 1
    %s2330 = scalar_lea.sflag [#allocation7], 1
    %2331 = vsyncpa %s2330, 1
    %2332 = vsyncpa [#allocation10], 1
    %2333 = vsyncpa [#allocation8], 1
    %s2334 = scalar_lea.sflag [#allocation8], 1
    %2335 = vsyncpa %s2334, 1

</llo_original>
